<compile_context>
chip_gen: v6e
topology: v6e:2x2x1
jax: 0.10.0
libtpu: 0.0.40
codegen_flags: <defaults>
</compile_context>

<pallas_src>
import jax
import jax.numpy as jnp
from jax import lax
from jax.experimental import pallas as pl
from jax.experimental.pallas import tpu as pltpu

N_EMBD = 384
N_HEAD = 6
HEAD_SIZE = N_EMBD // N_HEAD   # 64
LN_EPS = 1e-5


def _layernorm(x, gamma, beta):
    mu = jnp.mean(x, axis=-1, keepdims=True)
    var = jnp.mean((x - mu) ** 2, axis=-1, keepdims=True)
    return (x - mu) * lax.rsqrt(var + LN_EPS) * gamma + beta


def block_kernel(x_ref,
                 ln1_g_ref, ln1_b_ref,
                 wqkv_ref, bp_ref, wp_ref,
                 ln2_g_ref, ln2_b_ref,
                 w1_ref, b1_ref, w2_ref, b2_ref,
                 o_ref):
    Bt, T, C = x_ref.shape
    M = Bt * T

    x = x_ref[...].reshape(M, C).astype(jnp.float32)          # (M, C) f32

    # ---- LayerNorm 1 (f32) ----
    xn = _layernorm(x, ln1_g_ref[0], ln1_b_ref[0])
    xn16 = xn.astype(jnp.bfloat16)

    # ---- Fused QKV projection: one bf16 matmul, f32 accumulation ----
    qkv = jnp.dot(xn16, wqkv_ref[...],
                  preferred_element_type=jnp.float32)          # (M, 3C)
    qkv16 = qkv.astype(jnp.bfloat16)

    # ---- Multi-head causal self-attention ----
    scale = HEAD_SIZE ** (-0.5)
    row = lax.broadcasted_iota(jnp.int32, (T, T), 0)
    col = lax.broadcasted_iota(jnp.int32, (T, T), 1)
    causal = row >= col                                        # (T, T) bool

    seq_outs = []
    for b in range(Bt):                                        # static, small
        r0 = b * T
        acc = jnp.zeros((T, C), jnp.float32)                   # per-seq projected out
        for h in range(N_HEAD):                                # static, 6
            q0 = h * HEAD_SIZE
            k0 = C + h * HEAD_SIZE
            v0 = 2 * C + h * HEAD_SIZE
            qh = qkv16[r0:r0 + T, q0:q0 + HEAD_SIZE]           # (T, hs) bf16
            kh = qkv16[r0:r0 + T, k0:k0 + HEAD_SIZE]
            vh = qkv16[r0:r0 + T, v0:v0 + HEAD_SIZE]

            wei = jnp.einsum('td,sd->ts', qh, kh,
                             preferred_element_type=jnp.float32) * scale
            wei = jnp.where(causal, wei, -jnp.inf)
            wei = jnp.exp(wei - jnp.max(wei, axis=-1, keepdims=True))
            denom = jnp.sum(wei, axis=-1, keepdims=True)
            wei = wei * pl.reciprocal(denom, approx=True)      # f32 softmax

            oh = jnp.dot(wei.astype(jnp.bfloat16), vh,
                         preferred_element_type=jnp.float32)   # (T, hs)
            # accumulate per-head partial of the output projection (hs, C)
            acc = acc + jnp.dot(oh.astype(jnp.bfloat16), wp_ref[h],
                                preferred_element_type=jnp.float32)
        seq_outs.append(acc)
    sa = seq_outs[0] if Bt == 1 else jnp.concatenate(seq_outs, axis=0)  # (M, C)

    x1 = x + sa + bp_ref[0]                                    # residual 1 (f32)

    # ---- LayerNorm 2 + FeedForward (bf16 matmuls, f32 accumulate) ----
    x2n = _layernorm(x1, ln2_g_ref[0], ln2_b_ref[0]).astype(jnp.bfloat16)
    h1 = jnp.dot(x2n, w1_ref[...],
                 preferred_element_type=jnp.float32) + b1_ref[0]
    h1 = jnp.maximum(h1, 0.0).astype(jnp.bfloat16)             # ReLU
    ff = jnp.dot(h1, w2_ref[...],
                 preferred_element_type=jnp.float32) + b2_ref[0]

    o_ref[...] = (x1 + ff).reshape(Bt, T, C).astype(o_ref.dtype)   # residual 2


def _pick_batch_tile(B, T, max_rows=512):
    """Largest divisor of B such that the per-step row count stays bounded."""
    bt = 1
    for cand in range(1, B + 1):
        if B % cand == 0 and cand * T <= max_rows:
            bt = cand
    return bt


def prepare_params(params):
    """Convert reference-layout f32 params into kernel layout (bf16 weights)."""
    (ln1_g, ln1_b, wk, wq, wv, wp, bp, ln2_g, ln2_b, w1, b1, w2, b2) = params
    wqkv = jnp.concatenate([wq, wk, wv], axis=1).astype(jnp.bfloat16)   # (C, 3C)
    wp_h = wp.reshape(N_HEAD, HEAD_SIZE, N_EMBD).astype(jnp.bfloat16)   # (H, hs, C)
    return (ln1_g, ln1_b, wqkv, bp, wp_h, ln2_g, ln2_b,
            w1.astype(jnp.bfloat16), b1, w2.astype(jnp.bfloat16), b2)


def block_forward(x, params):
    B, T, C = x.shape
    assert C == N_EMBD
    kp = prepare_params(params)
    (ln1_g, ln1_b, wqkv, bp, wp_h, ln2_g, ln2_b, w1, b1, w2, b2) = kp

    bt = _pick_batch_tile(B, T)
    grid = (B // bt,)

    def full(shape):
        return pl.BlockSpec(shape, lambda i, _n=len(shape): (0,) * _n)

    in_specs = [
        pl.BlockSpec((bt, T, C), lambda i: (i, 0, 0)),   # x (batch-tiled)
        full(ln1_g.shape), full(ln1_b.shape),            # ln1 gamma/beta
        full(wqkv.shape),                                # fused Wqkv (C, 3C) bf16
        full(bp.shape),                                  # proj bias
        full(wp_h.shape),                                # Wproj per-head (H, hs, C) bf16
        full(ln2_g.shape), full(ln2_b.shape),            # ln2 gamma/beta
        full(w1.shape), full(b1.shape),                  # W1 bf16, b1
        full(w2.shape), full(b2.shape),                  # W2 bf16, b2
    ]

    return pl.pallas_call(
        block_kernel,
        out_shape=jax.ShapeDtypeStruct((B, T, C), x.dtype),
        grid_spec=pltpu.PrefetchScalarGridSpec(
            num_scalar_prefetch=0,
            grid=grid,
            in_specs=in_specs,
            out_specs=pl.BlockSpec((bt, T, C), lambda i: (i, 0, 0)),
        ),
        compiler_params=pltpu.CompilerParams(
            dimension_semantics=("parallel",),
            vmem_limit_bytes=32 << 20,
        ),
    )(x, *kp)


def init_params(key):
    C = N_EMBD
    ks = jax.random.split(key, 6)
    scale = 0.02
    ln1_g = jnp.ones((1, C), jnp.float32)
    ln1_b = jnp.zeros((1, C), jnp.float32)
    wk = scale * jax.random.normal(ks[0], (C, C), jnp.float32)
    wq = scale * jax.random.normal(ks[1], (C, C), jnp.float32)
    wv = scale * jax.random.normal(ks[2], (C, C), jnp.float32)
    wp = scale * jax.random.normal(ks[3], (C, C), jnp.float32)
    bp = jnp.zeros((1, C), jnp.float32)
    ln2_g = jnp.ones((1, C), jnp.float32)
    ln2_b = jnp.zeros((1, C), jnp.float32)
    w1 = scale * jax.random.normal(ks[4], (C, 4 * C), jnp.float32)
    b1 = jnp.zeros((1, 4 * C), jnp.float32)
    w2 = scale * jax.random.normal(ks[5], (4 * C, C), jnp.float32)
    b2 = jnp.zeros((1, C), jnp.float32)
    return (ln1_g, ln1_b, wk, wq, wv, wp, bp, ln2_g, ln2_b, w1, b1, w2, b2)


def block_reference(x, params):
    """Pure-JAX f32 reference mirroring the PyTorch module (eval mode)."""
    (ln1_g, ln1_b, wk, wq, wv, wp, bp, ln2_g, ln2_b, w1, b1, w2, b2) = params
    B, T, C = x.shape
    xn = _layernorm(x, ln1_g[0], ln1_b[0])
    k = xn @ wk
    q = xn @ wq
    v = xn @ wv
    kh = k.reshape(B, T, N_HEAD, HEAD_SIZE)
    qh = q.reshape(B, T, N_HEAD, HEAD_SIZE)
    vh = v.reshape(B, T, N_HEAD, HEAD_SIZE)
    wei = jnp.einsum("bthd,bshd->bhts", qh, kh) * HEAD_SIZE ** (-0.5)
    mask = jnp.tril(jnp.ones((T, T), bool))
    wei = jnp.where(mask[None, None], wei, -jnp.inf)
    wei = jax.nn.softmax(wei, axis=-1)
    att = jnp.einsum("bhts,bshd->bthd", wei, vh).reshape(B, T, C)
    x1 = x + att @ wp + bp[0]
    x2n = _layernorm(x1, ln2_g[0], ln2_b[0])
    ff = jnp.maximum(x2n @ w1 + b1[0], 0.0) @ w2 + b2[0]
    return x1 + ff


if __name__ == "__main__":
    key = jax.random.PRNGKey(0)
    kx, kp = jax.random.split(key)
    B, T = 2, 16                       # small batch / seq (T <= block_size=256)
    x = jax.random.normal(kx, (B, T, N_EMBD), jnp.float32)
    params = init_params(kp)

    # TODO(synk): dropout (p=0.2) is identity here (eval-mode forward).
    out = block_forward(x, params)
    out = jax.block_until_ready(out)

    ref = block_reference(x, params)
    max_err = float(jnp.max(jnp.abs(out - ref)))
    # bf16 matmul operands (f32 accumulation) -> relaxed tolerance vs f32 ref.
    assert jnp.allclose(out, ref, atol=3e-2, rtol=3e-2), max_err
    print("KERNEL_OK")
</pallas_src>

<mosaic_0001>
module attributes {stable_mosaic.version = 11 : i64} {
  func.func @block_kernel(%arg0: i32, %arg1: memref<2x16x384xf32, #tpu.memory_space<vmem>>, %arg2: memref<1x384xf32, #tpu.memory_space<vmem>>, %arg3: memref<1x384xf32, #tpu.memory_space<vmem>>, %arg4: memref<384x1152xbf16, #tpu.memory_space<vmem>>, %arg5: memref<1x384xf32, #tpu.memory_space<vmem>>, %arg6: memref<6x64x384xbf16, #tpu.memory_space<vmem>>, %arg7: memref<1x384xf32, #tpu.memory_space<vmem>>, %arg8: memref<1x384xf32, #tpu.memory_space<vmem>>, %arg9: memref<384x1536xbf16, #tpu.memory_space<vmem>>, %arg10: memref<1x1536xf32, #tpu.memory_space<vmem>>, %arg11: memref<1536x384xbf16, #tpu.memory_space<vmem>>, %arg12: memref<1x384xf32, #tpu.memory_space<vmem>>, %arg13: memref<2x16x384xf32, #tpu.memory_space<vmem>>) attributes {dimension_semantics = [#tpu.dimension_semantics<parallel>], iteration_bounds = array<i64: 1>, scalar_prefetch = 0 : i64, scratch_operands = 0 : i64, tpu.core_type = #tpu.core_type<tc>, window_params = [{transform_indices = @transform_0, window_bounds = array<i64: 2, 16, 384>}, {pipeline_mode = #tpu.pipeline_mode<synchronous>, transform_indices = @transform_1, window_bounds = array<i64: 1, 384>}, {pipeline_mode = #tpu.pipeline_mode<synchronous>, transform_indices = @transform_2, window_bounds = array<i64: 1, 384>}, {pipeline_mode = #tpu.pipeline_mode<synchronous>, transform_indices = @transform_3, window_bounds = array<i64: 384, 1152>}, {pipeline_mode = #tpu.pipeline_mode<synchronous>, transform_indices = @transform_4, window_bounds = array<i64: 1, 384>}, {pipeline_mode = #tpu.pipeline_mode<synchronous>, transform_indices = @transform_5, window_bounds = array<i64: 6, 64, 384>}, {pipeline_mode = #tpu.pipeline_mode<synchronous>, transform_indices = @transform_6, window_bounds = array<i64: 1, 384>}, {pipeline_mode = #tpu.pipeline_mode<synchronous>, transform_indices = @transform_7, window_bounds = array<i64: 1, 384>}, {pipeline_mode = #tpu.pipeline_mode<synchronous>, transform_indices = @transform_8, window_bounds = array<i64: 384, 1536>}, {pipeline_mode = #tpu.pipeline_mode<synchronous>, transform_indices = @transform_9, window_bounds = array<i64: 1, 1536>}, {pipeline_mode = #tpu.pipeline_mode<synchronous>, transform_indices = @transform_10, window_bounds = array<i64: 1536, 384>}, {pipeline_mode = #tpu.pipeline_mode<synchronous>, transform_indices = @transform_11, window_bounds = array<i64: 1, 384>}, {transform_indices = @transform_12, window_bounds = array<i64: 2, 16, 384>}]} {
    %c0 = arith.constant 0 : index
    %c0_0 = arith.constant 0 : index
    %c0_1 = arith.constant 0 : index
    %0 = vector.load %arg1[%c0, %c0_0, %c0_1] : memref<2x16x384xf32, #tpu.memory_space<vmem>>, vector<2x16x384xf32>
    %1 = vector.shape_cast %0 : vector<2x16x384xf32> to vector<32x384xf32>
    %c0_2 = arith.constant 0 : index
    %c0_3 = arith.constant 0 : index
    %2 = vector.load %arg2[%c0_2, %c0_3] : memref<1x384xf32, #tpu.memory_space<vmem>>, vector<1x384xf32>
    %3 = vector.shape_cast %2 : vector<1x384xf32> to vector<384xf32>
    %c0_4 = arith.constant 0 : index
    %c0_5 = arith.constant 0 : index
    %4 = vector.load %arg3[%c0_4, %c0_5] : memref<1x384xf32, #tpu.memory_space<vmem>>, vector<1x384xf32>
    %5 = vector.shape_cast %4 : vector<1x384xf32> to vector<384xf32>
    %cst = arith.constant dense<0.000000e+00> : vector<32xf32>
    %6 = vector.multi_reduction <add>, %1, %cst [1] : vector<32x384xf32> to vector<32xf32>
    %7 = vector.shape_cast %6 : vector<32xf32> to vector<32x1xf32>
    %cst_6 = arith.constant 3.840000e+02 : f32
    %8 = vector.broadcast %cst_6 : f32 to vector<32x1xf32>
    %9 = arith.divf %7, %8 : vector<32x1xf32>
    %10 = vector.broadcast %9 : vector<32x1xf32> to vector<32x384xf32>
    %11 = arith.subf %1, %10 : vector<32x384xf32>
    %12 = arith.mulf %11, %11 : vector<32x384xf32>
    %cst_7 = arith.constant dense<0.000000e+00> : vector<32xf32>
    %13 = vector.multi_reduction <add>, %12, %cst_7 [1] : vector<32x384xf32> to vector<32xf32>
    %14 = vector.shape_cast %13 : vector<32xf32> to vector<32x1xf32>
    %cst_8 = arith.constant 3.840000e+02 : f32
    %15 = vector.broadcast %cst_8 : f32 to vector<32x1xf32>
    %16 = arith.divf %14, %15 : vector<32x1xf32>
    %17 = vector.broadcast %9 : vector<32x1xf32> to vector<32x384xf32>
    %18 = arith.subf %1, %17 : vector<32x384xf32>
    %cst_9 = arith.constant 9.99999974E-6 : f32
    %19 = vector.broadcast %cst_9 : f32 to vector<32x1xf32>
    %20 = arith.addf %16, %19 : vector<32x1xf32>
    %21 = math.rsqrt %20 : vector<32x1xf32>
    %22 = vector.broadcast %21 : vector<32x1xf32> to vector<32x384xf32>
    %23 = arith.mulf %18, %22 : vector<32x384xf32>
    %24 = vector.shape_cast %3 : vector<384xf32> to vector<1x384xf32>
    %25 = vector.broadcast %24 : vector<1x384xf32> to vector<32x384xf32>
    %26 = arith.mulf %23, %25 : vector<32x384xf32>
    %27 = vector.shape_cast %5 : vector<384xf32> to vector<1x384xf32>
    %28 = vector.broadcast %27 : vector<1x384xf32> to vector<32x384xf32>
    %29 = arith.addf %26, %28 : vector<32x384xf32>
    %30 = arith.truncf %29 : vector<32x384xf32> to vector<32x384xbf16>
    %c0_10 = arith.constant 0 : index
    %c0_11 = arith.constant 0 : index
    %31 = vector.load %arg4[%c0_10, %c0_11] : memref<384x1152xbf16, #tpu.memory_space<vmem>>, vector<384x1152xbf16>
    %cst_12 = arith.constant dense<0.000000e+00> : vector<32x1152xf32>
    %32 = tpu.matmul %30, %31, %cst_12 {dimension_numbers = #tpu.dot_dimension_numbers<[1], [0], [0], [1], [0, 0, 1, 1], [], []>} : vector<32x384xbf16>, vector<384x1152xbf16>, vector<32x1152xf32> -> vector<32x1152xf32>
    %33 = arith.truncf %32 : vector<32x1152xf32> to vector<32x1152xbf16>
    %34 = tpu.iota {dimensions = array<i32: 0>} : vector<16x16xi32>
    %35 = tpu.iota {dimensions = array<i32: 1>} : vector<16x16xi32>
    %36 = arith.cmpi sge, %34, %35 : vector<16x16xi32>
    %cst_13 = arith.constant 0.000000e+00 : f32
    %37 = vector.broadcast %cst_13 : f32 to vector<16x384xf32>
    %38 = vector.extract_strided_slice %33 {offsets = [0, 0], sizes = [16, 64], strides = [1, 1]} : vector<32x1152xbf16> to vector<16x64xbf16>
    %39 = vector.extract_strided_slice %33 {offsets = [0, 384], sizes = [16, 64], strides = [1, 1]} : vector<32x1152xbf16> to vector<16x64xbf16>
    %40 = vector.extract_strided_slice %33 {offsets = [0, 768], sizes = [16, 64], strides = [1, 1]} : vector<32x1152xbf16> to vector<16x64xbf16>
    "tpu.trace_start"() <{level = 10 : i32, message = "td,sd->ts"}> : () -> ()
    %cst_14 = arith.constant dense<0.000000e+00> : vector<16x16xf32>
    %41 = tpu.matmul %38, %39, %cst_14 {dimension_numbers = #tpu.dot_dimension_numbers<[1], [1], [0], [0], [0, 0, 1, 0], [], []>} : vector<16x64xbf16>, vector<16x64xbf16>, vector<16x16xf32> -> vector<16x16xf32>
    "tpu.trace_stop"() : () -> ()
    %cst_15 = arith.constant 1.250000e-01 : f32
    %42 = vector.broadcast %cst_15 : f32 to vector<16x16xf32>
    %43 = arith.mulf %41, %42 : vector<16x16xf32>
    %cst_16 = arith.constant 0xFF800000 : f32
    %44 = vector.broadcast %cst_16 : f32 to vector<16x16xf32>
    %45 = arith.select %36, %43, %44 : vector<16x16xi1>, vector<16x16xf32>
    %cst_17 = arith.constant dense<0xFF800000> : vector<16xf32>
    %46 = vector.multi_reduction <maximumf>, %45, %cst_17 [1] : vector<16x16xf32> to vector<16xf32>
    %47 = vector.shape_cast %46 : vector<16xf32> to vector<16x1xf32>
    %48 = vector.broadcast %47 : vector<16x1xf32> to vector<16x16xf32>
    %49 = arith.subf %45, %48 : vector<16x16xf32>
    %50 = math.exp %49 : vector<16x16xf32>
    %cst_18 = arith.constant dense<0.000000e+00> : vector<16xf32>
    %51 = vector.multi_reduction <add>, %50, %cst_18 [1] : vector<16x16xf32> to vector<16xf32>
    %52 = vector.shape_cast %51 : vector<16xf32> to vector<16x1xf32>
    %53 = tpu.reciprocal %52 {approx = true} : vector<16x1xf32> -> vector<16x1xf32>
    %54 = vector.broadcast %53 : vector<16x1xf32> to vector<16x16xf32>
    %55 = arith.mulf %50, %54 : vector<16x16xf32>
    %56 = arith.truncf %55 : vector<16x16xf32> to vector<16x16xbf16>
    %cst_19 = arith.constant dense<0.000000e+00> : vector<16x64xf32>
    %57 = tpu.matmul %56, %40, %cst_19 {dimension_numbers = #tpu.dot_dimension_numbers<[1], [0], [0], [1], [0, 0, 1, 1], [], []>} : vector<16x16xbf16>, vector<16x64xbf16>, vector<16x64xf32> -> vector<16x64xf32>
    %58 = arith.truncf %57 : vector<16x64xf32> to vector<16x64xbf16>
    %c0_20 = arith.constant 0 : index
    %c0_21 = arith.constant 0 : index
    %c0_22 = arith.constant 0 : index
    %59 = vector.load %arg6[%c0_20, %c0_21, %c0_22] : memref<6x64x384xbf16, #tpu.memory_space<vmem>>, vector<1x64x384xbf16>
    %60 = vector.shape_cast %59 : vector<1x64x384xbf16> to vector<64x384xbf16>
    %cst_23 = arith.constant dense<0.000000e+00> : vector<16x384xf32>
    %61 = tpu.matmul %58, %60, %cst_23 {dimension_numbers = #tpu.dot_dimension_numbers<[1], [0], [0], [1], [0, 0, 1, 1], [], []>} : vector<16x64xbf16>, vector<64x384xbf16>, vector<16x384xf32> -> vector<16x384xf32>
    %62 = arith.addf %37, %61 : vector<16x384xf32>
    %63 = vector.extract_strided_slice %33 {offsets = [0, 64], sizes = [16, 64], strides = [1, 1]} : vector<32x1152xbf16> to vector<16x64xbf16>
    %64 = vector.extract_strided_slice %33 {offsets = [0, 448], sizes = [16, 64], strides = [1, 1]} : vector<32x1152xbf16> to vector<16x64xbf16>
    %65 = vector.extract_strided_slice %33 {offsets = [0, 832], sizes = [16, 64], strides = [1, 1]} : vector<32x1152xbf16> to vector<16x64xbf16>
    "tpu.trace_start"() <{level = 10 : i32, message = "td,sd->ts"}> : () -> ()
    %cst_24 = arith.constant dense<0.000000e+00> : vector<16x16xf32>
    %66 = tpu.matmul %63, %64, %cst_24 {dimension_numbers = #tpu.dot_dimension_numbers<[1], [1], [0], [0], [0, 0, 1, 0], [], []>} : vector<16x64xbf16>, vector<16x64xbf16>, vector<16x16xf32> -> vector<16x16xf32>
    "tpu.trace_stop"() : () -> ()
    %cst_25 = arith.constant 1.250000e-01 : f32
    %67 = vector.broadcast %cst_25 : f32 to vector<16x16xf32>
    %68 = arith.mulf %66, %67 : vector<16x16xf32>
    %cst_26 = arith.constant 0xFF800000 : f32
    %69 = vector.broadcast %cst_26 : f32 to vector<16x16xf32>
    %70 = arith.select %36, %68, %69 : vector<16x16xi1>, vector<16x16xf32>
    %cst_27 = arith.constant dense<0xFF800000> : vector<16xf32>
    %71 = vector.multi_reduction <maximumf>, %70, %cst_27 [1] : vector<16x16xf32> to vector<16xf32>
    %72 = vector.shape_cast %71 : vector<16xf32> to vector<16x1xf32>
    %73 = vector.broadcast %72 : vector<16x1xf32> to vector<16x16xf32>
    %74 = arith.subf %70, %73 : vector<16x16xf32>
    %75 = math.exp %74 : vector<16x16xf32>
    %cst_28 = arith.constant dense<0.000000e+00> : vector<16xf32>
    %76 = vector.multi_reduction <add>, %75, %cst_28 [1] : vector<16x16xf32> to vector<16xf32>
    %77 = vector.shape_cast %76 : vector<16xf32> to vector<16x1xf32>
    %78 = tpu.reciprocal %77 {approx = true} : vector<16x1xf32> -> vector<16x1xf32>
    %79 = vector.broadcast %78 : vector<16x1xf32> to vector<16x16xf32>
    %80 = arith.mulf %75, %79 : vector<16x16xf32>
    %81 = arith.truncf %80 : vector<16x16xf32> to vector<16x16xbf16>
    %cst_29 = arith.constant dense<0.000000e+00> : vector<16x64xf32>
    %82 = tpu.matmul %81, %65, %cst_29 {dimension_numbers = #tpu.dot_dimension_numbers<[1], [0], [0], [1], [0, 0, 1, 1], [], []>} : vector<16x16xbf16>, vector<16x64xbf16>, vector<16x64xf32> -> vector<16x64xf32>
    %83 = arith.truncf %82 : vector<16x64xf32> to vector<16x64xbf16>
    %c1 = arith.constant 1 : index
    %c0_30 = arith.constant 0 : index
    %c0_31 = arith.constant 0 : index
    %84 = vector.load %arg6[%c1, %c0_30, %c0_31] : memref<6x64x384xbf16, #tpu.memory_space<vmem>>, vector<1x64x384xbf16>
    %85 = vector.shape_cast %84 : vector<1x64x384xbf16> to vector<64x384xbf16>
    %cst_32 = arith.constant dense<0.000000e+00> : vector<16x384xf32>
    %86 = tpu.matmul %83, %85, %cst_32 {dimension_numbers = #tpu.dot_dimension_numbers<[1], [0], [0], [1], [0, 0, 1, 1], [], []>} : vector<16x64xbf16>, vector<64x384xbf16>, vector<16x384xf32> -> vector<16x384xf32>
    %87 = arith.addf %62, %86 : vector<16x384xf32>
    %88 = vector.extract_strided_slice %33 {offsets = [0, 128], sizes = [16, 64], strides = [1, 1]} : vector<32x1152xbf16> to vector<16x64xbf16>
    %89 = vector.extract_strided_slice %33 {offsets = [0, 512], sizes = [16, 64], strides = [1, 1]} : vector<32x1152xbf16> to vector<16x64xbf16>
    %90 = vector.extract_strided_slice %33 {offsets = [0, 896], sizes = [16, 64], strides = [1, 1]} : vector<32x1152xbf16> to vector<16x64xbf16>
    "tpu.trace_start"() <{level = 10 : i32, message = "td,sd->ts"}> : () -> ()
    %cst_33 = arith.constant dense<0.000000e+00> : vector<16x16xf32>
    %91 = tpu.matmul %88, %89, %cst_33 {dimension_numbers = #tpu.dot_dimension_numbers<[1], [1], [0], [0], [0, 0, 1, 0], [], []>} : vector<16x64xbf16>, vector<16x64xbf16>, vector<16x16xf32> -> vector<16x16xf32>
    "tpu.trace_stop"() : () -> ()
    %cst_34 = arith.constant 1.250000e-01 : f32
    %92 = vector.broadcast %cst_34 : f32 to vector<16x16xf32>
    %93 = arith.mulf %91, %92 : vector<16x16xf32>
    %cst_35 = arith.constant 0xFF800000 : f32
    %94 = vector.broadcast %cst_35 : f32 to vector<16x16xf32>
    %95 = arith.select %36, %93, %94 : vector<16x16xi1>, vector<16x16xf32>
    %cst_36 = arith.constant dense<0xFF800000> : vector<16xf32>
    %96 = vector.multi_reduction <maximumf>, %95, %cst_36 [1] : vector<16x16xf32> to vector<16xf32>
    %97 = vector.shape_cast %96 : vector<16xf32> to vector<16x1xf32>
    %98 = vector.broadcast %97 : vector<16x1xf32> to vector<16x16xf32>
    %99 = arith.subf %95, %98 : vector<16x16xf32>
    %100 = math.exp %99 : vector<16x16xf32>
    %cst_37 = arith.constant dense<0.000000e+00> : vector<16xf32>
    %101 = vector.multi_reduction <add>, %100, %cst_37 [1] : vector<16x16xf32> to vector<16xf32>
    %102 = vector.shape_cast %101 : vector<16xf32> to vector<16x1xf32>
    %103 = tpu.reciprocal %102 {approx = true} : vector<16x1xf32> -> vector<16x1xf32>
    %104 = vector.broadcast %103 : vector<16x1xf32> to vector<16x16xf32>
    %105 = arith.mulf %100, %104 : vector<16x16xf32>
    %106 = arith.truncf %105 : vector<16x16xf32> to vector<16x16xbf16>
    %cst_38 = arith.constant dense<0.000000e+00> : vector<16x64xf32>
    %107 = tpu.matmul %106, %90, %cst_38 {dimension_numbers = #tpu.dot_dimension_numbers<[1], [0], [0], [1], [0, 0, 1, 1], [], []>} : vector<16x16xbf16>, vector<16x64xbf16>, vector<16x64xf32> -> vector<16x64xf32>
    %108 = arith.truncf %107 : vector<16x64xf32> to vector<16x64xbf16>
    %c2 = arith.constant 2 : index
    %c0_39 = arith.constant 0 : index
    %c0_40 = arith.constant 0 : index
    %109 = vector.load %arg6[%c2, %c0_39, %c0_40] : memref<6x64x384xbf16, #tpu.memory_space<vmem>>, vector<1x64x384xbf16>
    %110 = vector.shape_cast %109 : vector<1x64x384xbf16> to vector<64x384xbf16>
    %cst_41 = arith.constant dense<0.000000e+00> : vector<16x384xf32>
    %111 = tpu.matmul %108, %110, %cst_41 {dimension_numbers = #tpu.dot_dimension_numbers<[1], [0], [0], [1], [0, 0, 1, 1], [], []>} : vector<16x64xbf16>, vector<64x384xbf16>, vector<16x384xf32> -> vector<16x384xf32>
    %112 = arith.addf %87, %111 : vector<16x384xf32>
    %113 = vector.extract_strided_slice %33 {offsets = [0, 192], sizes = [16, 64], strides = [1, 1]} : vector<32x1152xbf16> to vector<16x64xbf16>
    %114 = vector.extract_strided_slice %33 {offsets = [0, 576], sizes = [16, 64], strides = [1, 1]} : vector<32x1152xbf16> to vector<16x64xbf16>
    %115 = vector.extract_strided_slice %33 {offsets = [0, 960], sizes = [16, 64], strides = [1, 1]} : vector<32x1152xbf16> to vector<16x64xbf16>
    "tpu.trace_start"() <{level = 10 : i32, message = "td,sd->ts"}> : () -> ()
    %cst_42 = arith.constant dense<0.000000e+00> : vector<16x16xf32>
    %116 = tpu.matmul %113, %114, %cst_42 {dimension_numbers = #tpu.dot_dimension_numbers<[1], [1], [0], [0], [0, 0, 1, 0], [], []>} : vector<16x64xbf16>, vector<16x64xbf16>, vector<16x16xf32> -> vector<16x16xf32>
    "tpu.trace_stop"() : () -> ()
    %cst_43 = arith.constant 1.250000e-01 : f32
    %117 = vector.broadcast %cst_43 : f32 to vector<16x16xf32>
    %118 = arith.mulf %116, %117 : vector<16x16xf32>
    %cst_44 = arith.constant 0xFF800000 : f32
    %119 = vector.broadcast %cst_44 : f32 to vector<16x16xf32>
    %120 = arith.select %36, %118, %119 : vector<16x16xi1>, vector<16x16xf32>
    %cst_45 = arith.constant dense<0xFF800000> : vector<16xf32>
    %121 = vector.multi_reduction <maximumf>, %120, %cst_45 [1] : vector<16x16xf32> to vector<16xf32>
    %122 = vector.shape_cast %121 : vector<16xf32> to vector<16x1xf32>
    %123 = vector.broadcast %122 : vector<16x1xf32> to vector<16x16xf32>
    %124 = arith.subf %120, %123 : vector<16x16xf32>
    %125 = math.exp %124 : vector<16x16xf32>
    %cst_46 = arith.constant dense<0.000000e+00> : vector<16xf32>
    %126 = vector.multi_reduction <add>, %125, %cst_46 [1] : vector<16x16xf32> to vector<16xf32>
    %127 = vector.shape_cast %126 : vector<16xf32> to vector<16x1xf32>
    %128 = tpu.reciprocal %127 {approx = true} : vector<16x1xf32> -> vector<16x1xf32>
    %129 = vector.broadcast %128 : vector<16x1xf32> to vector<16x16xf32>
    %130 = arith.mulf %125, %129 : vector<16x16xf32>
    %131 = arith.truncf %130 : vector<16x16xf32> to vector<16x16xbf16>
    %cst_47 = arith.constant dense<0.000000e+00> : vector<16x64xf32>
    %132 = tpu.matmul %131, %115, %cst_47 {dimension_numbers = #tpu.dot_dimension_numbers<[1], [0], [0], [1], [0, 0, 1, 1], [], []>} : vector<16x16xbf16>, vector<16x64xbf16>, vector<16x64xf32> -> vector<16x64xf32>
    %133 = arith.truncf %132 : vector<16x64xf32> to vector<16x64xbf16>
    %c3 = arith.constant 3 : index
    %c0_48 = arith.constant 0 : index
    %c0_49 = arith.constant 0 : index
    %134 = vector.load %arg6[%c3, %c0_48, %c0_49] : memref<6x64x384xbf16, #tpu.memory_space<vmem>>, vector<1x64x384xbf16>
    %135 = vector.shape_cast %134 : vector<1x64x384xbf16> to vector<64x384xbf16>
    %cst_50 = arith.constant dense<0.000000e+00> : vector<16x384xf32>
    %136 = tpu.matmul %133, %135, %cst_50 {dimension_numbers = #tpu.dot_dimension_numbers<[1], [0], [0], [1], [0, 0, 1, 1], [], []>} : vector<16x64xbf16>, vector<64x384xbf16>, vector<16x384xf32> -> vector<16x384xf32>
    %137 = arith.addf %112, %136 : vector<16x384xf32>
    %138 = vector.extract_strided_slice %33 {offsets = [0, 256], sizes = [16, 64], strides = [1, 1]} : vector<32x1152xbf16> to vector<16x64xbf16>
    %139 = vector.extract_strided_slice %33 {offsets = [0, 640], sizes = [16, 64], strides = [1, 1]} : vector<32x1152xbf16> to vector<16x64xbf16>
    %140 = vector.extract_strided_slice %33 {offsets = [0, 1024], sizes = [16, 64], strides = [1, 1]} : vector<32x1152xbf16> to vector<16x64xbf16>
    "tpu.trace_start"() <{level = 10 : i32, message = "td,sd->ts"}> : () -> ()
    %cst_51 = arith.constant dense<0.000000e+00> : vector<16x16xf32>
    %141 = tpu.matmul %138, %139, %cst_51 {dimension_numbers = #tpu.dot_dimension_numbers<[1], [1], [0], [0], [0, 0, 1, 0], [], []>} : vector<16x64xbf16>, vector<16x64xbf16>, vector<16x16xf32> -> vector<16x16xf32>
    "tpu.trace_stop"() : () -> ()
    %cst_52 = arith.constant 1.250000e-01 : f32
    %142 = vector.broadcast %cst_52 : f32 to vector<16x16xf32>
    %143 = arith.mulf %141, %142 : vector<16x16xf32>
    %cst_53 = arith.constant 0xFF800000 : f32
    %144 = vector.broadcast %cst_53 : f32 to vector<16x16xf32>
    %145 = arith.select %36, %143, %144 : vector<16x16xi1>, vector<16x16xf32>
    %cst_54 = arith.constant dense<0xFF800000> : vector<16xf32>
    %146 = vector.multi_reduction <maximumf>, %145, %cst_54 [1] : vector<16x16xf32> to vector<16xf32>
    %147 = vector.shape_cast %146 : vector<16xf32> to vector<16x1xf32>
    %148 = vector.broadcast %147 : vector<16x1xf32> to vector<16x16xf32>
    %149 = arith.subf %145, %148 : vector<16x16xf32>
    %150 = math.exp %149 : vector<16x16xf32>
    %cst_55 = arith.constant dense<0.000000e+00> : vector<16xf32>
    %151 = vector.multi_reduction <add>, %150, %cst_55 [1] : vector<16x16xf32> to vector<16xf32>
    %152 = vector.shape_cast %151 : vector<16xf32> to vector<16x1xf32>
    %153 = tpu.reciprocal %152 {approx = true} : vector<16x1xf32> -> vector<16x1xf32>
    %154 = vector.broadcast %153 : vector<16x1xf32> to vector<16x16xf32>
    %155 = arith.mulf %150, %154 : vector<16x16xf32>
    %156 = arith.truncf %155 : vector<16x16xf32> to vector<16x16xbf16>
    %cst_56 = arith.constant dense<0.000000e+00> : vector<16x64xf32>
    %157 = tpu.matmul %156, %140, %cst_56 {dimension_numbers = #tpu.dot_dimension_numbers<[1], [0], [0], [1], [0, 0, 1, 1], [], []>} : vector<16x16xbf16>, vector<16x64xbf16>, vector<16x64xf32> -> vector<16x64xf32>
    %158 = arith.truncf %157 : vector<16x64xf32> to vector<16x64xbf16>
    %c4 = arith.constant 4 : index
    %c0_57 = arith.constant 0 : index
    %c0_58 = arith.constant 0 : index
    %159 = vector.load %arg6[%c4, %c0_57, %c0_58] : memref<6x64x384xbf16, #tpu.memory_space<vmem>>, vector<1x64x384xbf16>
    %160 = vector.shape_cast %159 : vector<1x64x384xbf16> to vector<64x384xbf16>
    %cst_59 = arith.constant dense<0.000000e+00> : vector<16x384xf32>
    %161 = tpu.matmul %158, %160, %cst_59 {dimension_numbers = #tpu.dot_dimension_numbers<[1], [0], [0], [1], [0, 0, 1, 1], [], []>} : vector<16x64xbf16>, vector<64x384xbf16>, vector<16x384xf32> -> vector<16x384xf32>
    %162 = arith.addf %137, %161 : vector<16x384xf32>
    %163 = vector.extract_strided_slice %33 {offsets = [0, 320], sizes = [16, 64], strides = [1, 1]} : vector<32x1152xbf16> to vector<16x64xbf16>
    %164 = vector.extract_strided_slice %33 {offsets = [0, 704], sizes = [16, 64], strides = [1, 1]} : vector<32x1152xbf16> to vector<16x64xbf16>
    %165 = vector.extract_strided_slice %33 {offsets = [0, 1088], sizes = [16, 64], strides = [1, 1]} : vector<32x1152xbf16> to vector<16x64xbf16>
    "tpu.trace_start"() <{level = 10 : i32, message = "td,sd->ts"}> : () -> ()
    %cst_60 = arith.constant dense<0.000000e+00> : vector<16x16xf32>
    %166 = tpu.matmul %163, %164, %cst_60 {dimension_numbers = #tpu.dot_dimension_numbers<[1], [1], [0], [0], [0, 0, 1, 0], [], []>} : vector<16x64xbf16>, vector<16x64xbf16>, vector<16x16xf32> -> vector<16x16xf32>
    "tpu.trace_stop"() : () -> ()
    %cst_61 = arith.constant 1.250000e-01 : f32
    %167 = vector.broadcast %cst_61 : f32 to vector<16x16xf32>
    %168 = arith.mulf %166, %167 : vector<16x16xf32>
    %cst_62 = arith.constant 0xFF800000 : f32
    %169 = vector.broadcast %cst_62 : f32 to vector<16x16xf32>
    %170 = arith.select %36, %168, %169 : vector<16x16xi1>, vector<16x16xf32>
    %cst_63 = arith.constant dense<0xFF800000> : vector<16xf32>
    %171 = vector.multi_reduction <maximumf>, %170, %cst_63 [1] : vector<16x16xf32> to vector<16xf32>
    %172 = vector.shape_cast %171 : vector<16xf32> to vector<16x1xf32>
    %173 = vector.broadcast %172 : vector<16x1xf32> to vector<16x16xf32>
    %174 = arith.subf %170, %173 : vector<16x16xf32>
    %175 = math.exp %174 : vector<16x16xf32>
    %cst_64 = arith.constant dense<0.000000e+00> : vector<16xf32>
    %176 = vector.multi_reduction <add>, %175, %cst_64 [1] : vector<16x16xf32> to vector<16xf32>
    %177 = vector.shape_cast %176 : vector<16xf32> to vector<16x1xf32>
    %178 = tpu.reciprocal %177 {approx = true} : vector<16x1xf32> -> vector<16x1xf32>
    %179 = vector.broadcast %178 : vector<16x1xf32> to vector<16x16xf32>
    %180 = arith.mulf %175, %179 : vector<16x16xf32>
    %181 = arith.truncf %180 : vector<16x16xf32> to vector<16x16xbf16>
    %cst_65 = arith.constant dense<0.000000e+00> : vector<16x64xf32>
    %182 = tpu.matmul %181, %165, %cst_65 {dimension_numbers = #tpu.dot_dimension_numbers<[1], [0], [0], [1], [0, 0, 1, 1], [], []>} : vector<16x16xbf16>, vector<16x64xbf16>, vector<16x64xf32> -> vector<16x64xf32>
    %183 = arith.truncf %182 : vector<16x64xf32> to vector<16x64xbf16>
    %c5 = arith.constant 5 : index
    %c0_66 = arith.constant 0 : index
    %c0_67 = arith.constant 0 : index
    %184 = vector.load %arg6[%c5, %c0_66, %c0_67] : memref<6x64x384xbf16, #tpu.memory_space<vmem>>, vector<1x64x384xbf16>
    %185 = vector.shape_cast %184 : vector<1x64x384xbf16> to vector<64x384xbf16>
    %cst_68 = arith.constant dense<0.000000e+00> : vector<16x384xf32>
    %186 = tpu.matmul %183, %185, %cst_68 {dimension_numbers = #tpu.dot_dimension_numbers<[1], [0], [0], [1], [0, 0, 1, 1], [], []>} : vector<16x64xbf16>, vector<64x384xbf16>, vector<16x384xf32> -> vector<16x384xf32>
    %187 = arith.addf %162, %186 : vector<16x384xf32>
    %cst_69 = arith.constant 0.000000e+00 : f32
    %188 = vector.broadcast %cst_69 : f32 to vector<16x384xf32>
    %189 = vector.extract_strided_slice %33 {offsets = [16, 0], sizes = [16, 64], strides = [1, 1]} : vector<32x1152xbf16> to vector<16x64xbf16>
    %190 = vector.extract_strided_slice %33 {offsets = [16, 384], sizes = [16, 64], strides = [1, 1]} : vector<32x1152xbf16> to vector<16x64xbf16>
    %191 = vector.extract_strided_slice %33 {offsets = [16, 768], sizes = [16, 64], strides = [1, 1]} : vector<32x1152xbf16> to vector<16x64xbf16>
    "tpu.trace_start"() <{level = 10 : i32, message = "td,sd->ts"}> : () -> ()
    %cst_70 = arith.constant dense<0.000000e+00> : vector<16x16xf32>
    %192 = tpu.matmul %189, %190, %cst_70 {dimension_numbers = #tpu.dot_dimension_numbers<[1], [1], [0], [0], [0, 0, 1, 0], [], []>} : vector<16x64xbf16>, vector<16x64xbf16>, vector<16x16xf32> -> vector<16x16xf32>
    "tpu.trace_stop"() : () -> ()
    %cst_71 = arith.constant 1.250000e-01 : f32
    %193 = vector.broadcast %cst_71 : f32 to vector<16x16xf32>
    %194 = arith.mulf %192, %193 : vector<16x16xf32>
    %cst_72 = arith.constant 0xFF800000 : f32
    %195 = vector.broadcast %cst_72 : f32 to vector<16x16xf32>
    %196 = arith.select %36, %194, %195 : vector<16x16xi1>, vector<16x16xf32>
    %cst_73 = arith.constant dense<0xFF800000> : vector<16xf32>
    %197 = vector.multi_reduction <maximumf>, %196, %cst_73 [1] : vector<16x16xf32> to vector<16xf32>
    %198 = vector.shape_cast %197 : vector<16xf32> to vector<16x1xf32>
    %199 = vector.broadcast %198 : vector<16x1xf32> to vector<16x16xf32>
    %200 = arith.subf %196, %199 : vector<16x16xf32>
    %201 = math.exp %200 : vector<16x16xf32>
    %cst_74 = arith.constant dense<0.000000e+00> : vector<16xf32>
    %202 = vector.multi_reduction <add>, %201, %cst_74 [1] : vector<16x16xf32> to vector<16xf32>
    %203 = vector.shape_cast %202 : vector<16xf32> to vector<16x1xf32>
    %204 = tpu.reciprocal %203 {approx = true} : vector<16x1xf32> -> vector<16x1xf32>
    %205 = vector.broadcast %204 : vector<16x1xf32> to vector<16x16xf32>
    %206 = arith.mulf %201, %205 : vector<16x16xf32>
    %207 = arith.truncf %206 : vector<16x16xf32> to vector<16x16xbf16>
    %cst_75 = arith.constant dense<0.000000e+00> : vector<16x64xf32>
    %208 = tpu.matmul %207, %191, %cst_75 {dimension_numbers = #tpu.dot_dimension_numbers<[1], [0], [0], [1], [0, 0, 1, 1], [], []>} : vector<16x16xbf16>, vector<16x64xbf16>, vector<16x64xf32> -> vector<16x64xf32>
    %209 = arith.truncf %208 : vector<16x64xf32> to vector<16x64xbf16>
    %c0_76 = arith.constant 0 : index
    %c0_77 = arith.constant 0 : index
    %c0_78 = arith.constant 0 : index
    %210 = vector.load %arg6[%c0_76, %c0_77, %c0_78] : memref<6x64x384xbf16, #tpu.memory_space<vmem>>, vector<1x64x384xbf16>
    %211 = vector.shape_cast %210 : vector<1x64x384xbf16> to vector<64x384xbf16>
    %cst_79 = arith.constant dense<0.000000e+00> : vector<16x384xf32>
    %212 = tpu.matmul %209, %211, %cst_79 {dimension_numbers = #tpu.dot_dimension_numbers<[1], [0], [0], [1], [0, 0, 1, 1], [], []>} : vector<16x64xbf16>, vector<64x384xbf16>, vector<16x384xf32> -> vector<16x384xf32>
    %213 = arith.addf %188, %212 : vector<16x384xf32>
    %214 = vector.extract_strided_slice %33 {offsets = [16, 64], sizes = [16, 64], strides = [1, 1]} : vector<32x1152xbf16> to vector<16x64xbf16>
    %215 = vector.extract_strided_slice %33 {offsets = [16, 448], sizes = [16, 64], strides = [1, 1]} : vector<32x1152xbf16> to vector<16x64xbf16>
    %216 = vector.extract_strided_slice %33 {offsets = [16, 832], sizes = [16, 64], strides = [1, 1]} : vector<32x1152xbf16> to vector<16x64xbf16>
    "tpu.trace_start"() <{level = 10 : i32, message = "td,sd->ts"}> : () -> ()
    %cst_80 = arith.constant dense<0.000000e+00> : vector<16x16xf32>
    %217 = tpu.matmul %214, %215, %cst_80 {dimension_numbers = #tpu.dot_dimension_numbers<[1], [1], [0], [0], [0, 0, 1, 0], [], []>} : vector<16x64xbf16>, vector<16x64xbf16>, vector<16x16xf32> -> vector<16x16xf32>
    "tpu.trace_stop"() : () -> ()
    %cst_81 = arith.constant 1.250000e-01 : f32
    %218 = vector.broadcast %cst_81 : f32 to vector<16x16xf32>
    %219 = arith.mulf %217, %218 : vector<16x16xf32>
    %cst_82 = arith.constant 0xFF800000 : f32
    %220 = vector.broadcast %cst_82 : f32 to vector<16x16xf32>
    %221 = arith.select %36, %219, %220 : vector<16x16xi1>, vector<16x16xf32>
    %cst_83 = arith.constant dense<0xFF800000> : vector<16xf32>
    %222 = vector.multi_reduction <maximumf>, %221, %cst_83 [1] : vector<16x16xf32> to vector<16xf32>
    %223 = vector.shape_cast %222 : vector<16xf32> to vector<16x1xf32>
    %224 = vector.broadcast %223 : vector<16x1xf32> to vector<16x16xf32>
    %225 = arith.subf %221, %224 : vector<16x16xf32>
    %226 = math.exp %225 : vector<16x16xf32>
    %cst_84 = arith.constant dense<0.000000e+00> : vector<16xf32>
    %227 = vector.multi_reduction <add>, %226, %cst_84 [1] : vector<16x16xf32> to vector<16xf32>
    %228 = vector.shape_cast %227 : vector<16xf32> to vector<16x1xf32>
    %229 = tpu.reciprocal %228 {approx = true} : vector<16x1xf32> -> vector<16x1xf32>
    %230 = vector.broadcast %229 : vector<16x1xf32> to vector<16x16xf32>
    %231 = arith.mulf %226, %230 : vector<16x16xf32>
    %232 = arith.truncf %231 : vector<16x16xf32> to vector<16x16xbf16>
    %cst_85 = arith.constant dense<0.000000e+00> : vector<16x64xf32>
    %233 = tpu.matmul %232, %216, %cst_85 {dimension_numbers = #tpu.dot_dimension_numbers<[1], [0], [0], [1], [0, 0, 1, 1], [], []>} : vector<16x16xbf16>, vector<16x64xbf16>, vector<16x64xf32> -> vector<16x64xf32>
    %234 = arith.truncf %233 : vector<16x64xf32> to vector<16x64xbf16>
    %c1_86 = arith.constant 1 : index
    %c0_87 = arith.constant 0 : index
    %c0_88 = arith.constant 0 : index
    %235 = vector.load %arg6[%c1_86, %c0_87, %c0_88] : memref<6x64x384xbf16, #tpu.memory_space<vmem>>, vector<1x64x384xbf16>
    %236 = vector.shape_cast %235 : vector<1x64x384xbf16> to vector<64x384xbf16>
    %cst_89 = arith.constant dense<0.000000e+00> : vector<16x384xf32>
    %237 = tpu.matmul %234, %236, %cst_89 {dimension_numbers = #tpu.dot_dimension_numbers<[1], [0], [0], [1], [0, 0, 1, 1], [], []>} : vector<16x64xbf16>, vector<64x384xbf16>, vector<16x384xf32> -> vector<16x384xf32>
    %238 = arith.addf %213, %237 : vector<16x384xf32>
    %239 = vector.extract_strided_slice %33 {offsets = [16, 128], sizes = [16, 64], strides = [1, 1]} : vector<32x1152xbf16> to vector<16x64xbf16>
    %240 = vector.extract_strided_slice %33 {offsets = [16, 512], sizes = [16, 64], strides = [1, 1]} : vector<32x1152xbf16> to vector<16x64xbf16>
    %241 = vector.extract_strided_slice %33 {offsets = [16, 896], sizes = [16, 64], strides = [1, 1]} : vector<32x1152xbf16> to vector<16x64xbf16>
    "tpu.trace_start"() <{level = 10 : i32, message = "td,sd->ts"}> : () -> ()
    %cst_90 = arith.constant dense<0.000000e+00> : vector<16x16xf32>
    %242 = tpu.matmul %239, %240, %cst_90 {dimension_numbers = #tpu.dot_dimension_numbers<[1], [1], [0], [0], [0, 0, 1, 0], [], []>} : vector<16x64xbf16>, vector<16x64xbf16>, vector<16x16xf32> -> vector<16x16xf32>
    "tpu.trace_stop"() : () -> ()
    %cst_91 = arith.constant 1.250000e-01 : f32
    %243 = vector.broadcast %cst_91 : f32 to vector<16x16xf32>
    %244 = arith.mulf %242, %243 : vector<16x16xf32>
    %cst_92 = arith.constant 0xFF800000 : f32
    %245 = vector.broadcast %cst_92 : f32 to vector<16x16xf32>
    %246 = arith.select %36, %244, %245 : vector<16x16xi1>, vector<16x16xf32>
    %cst_93 = arith.constant dense<0xFF800000> : vector<16xf32>
    %247 = vector.multi_reduction <maximumf>, %246, %cst_93 [1] : vector<16x16xf32> to vector<16xf32>
    %248 = vector.shape_cast %247 : vector<16xf32> to vector<16x1xf32>
    %249 = vector.broadcast %248 : vector<16x1xf32> to vector<16x16xf32>
    %250 = arith.subf %246, %249 : vector<16x16xf32>
    %251 = math.exp %250 : vector<16x16xf32>
    %cst_94 = arith.constant dense<0.000000e+00> : vector<16xf32>
    %252 = vector.multi_reduction <add>, %251, %cst_94 [1] : vector<16x16xf32> to vector<16xf32>
    %253 = vector.shape_cast %252 : vector<16xf32> to vector<16x1xf32>
    %254 = tpu.reciprocal %253 {approx = true} : vector<16x1xf32> -> vector<16x1xf32>
    %255 = vector.broadcast %254 : vector<16x1xf32> to vector<16x16xf32>
    %256 = arith.mulf %251, %255 : vector<16x16xf32>
    %257 = arith.truncf %256 : vector<16x16xf32> to vector<16x16xbf16>
    %cst_95 = arith.constant dense<0.000000e+00> : vector<16x64xf32>
    %258 = tpu.matmul %257, %241, %cst_95 {dimension_numbers = #tpu.dot_dimension_numbers<[1], [0], [0], [1], [0, 0, 1, 1], [], []>} : vector<16x16xbf16>, vector<16x64xbf16>, vector<16x64xf32> -> vector<16x64xf32>
    %259 = arith.truncf %258 : vector<16x64xf32> to vector<16x64xbf16>
    %c2_96 = arith.constant 2 : index
    %c0_97 = arith.constant 0 : index
    %c0_98 = arith.constant 0 : index
    %260 = vector.load %arg6[%c2_96, %c0_97, %c0_98] : memref<6x64x384xbf16, #tpu.memory_space<vmem>>, vector<1x64x384xbf16>
    %261 = vector.shape_cast %260 : vector<1x64x384xbf16> to vector<64x384xbf16>
    %cst_99 = arith.constant dense<0.000000e+00> : vector<16x384xf32>
    %262 = tpu.matmul %259, %261, %cst_99 {dimension_numbers = #tpu.dot_dimension_numbers<[1], [0], [0], [1], [0, 0, 1, 1], [], []>} : vector<16x64xbf16>, vector<64x384xbf16>, vector<16x384xf32> -> vector<16x384xf32>
    %263 = arith.addf %238, %262 : vector<16x384xf32>
    %264 = vector.extract_strided_slice %33 {offsets = [16, 192], sizes = [16, 64], strides = [1, 1]} : vector<32x1152xbf16> to vector<16x64xbf16>
    %265 = vector.extract_strided_slice %33 {offsets = [16, 576], sizes = [16, 64], strides = [1, 1]} : vector<32x1152xbf16> to vector<16x64xbf16>
    %266 = vector.extract_strided_slice %33 {offsets = [16, 960], sizes = [16, 64], strides = [1, 1]} : vector<32x1152xbf16> to vector<16x64xbf16>
    "tpu.trace_start"() <{level = 10 : i32, message = "td,sd->ts"}> : () -> ()
    %cst_100 = arith.constant dense<0.000000e+00> : vector<16x16xf32>
    %267 = tpu.matmul %264, %265, %cst_100 {dimension_numbers = #tpu.dot_dimension_numbers<[1], [1], [0], [0], [0, 0, 1, 0], [], []>} : vector<16x64xbf16>, vector<16x64xbf16>, vector<16x16xf32> -> vector<16x16xf32>
    "tpu.trace_stop"() : () -> ()
    %cst_101 = arith.constant 1.250000e-01 : f32
    %268 = vector.broadcast %cst_101 : f32 to vector<16x16xf32>
    %269 = arith.mulf %267, %268 : vector<16x16xf32>
    %cst_102 = arith.constant 0xFF800000 : f32
    %270 = vector.broadcast %cst_102 : f32 to vector<16x16xf32>
    %271 = arith.select %36, %269, %270 : vector<16x16xi1>, vector<16x16xf32>
    %cst_103 = arith.constant dense<0xFF800000> : vector<16xf32>
    %272 = vector.multi_reduction <maximumf>, %271, %cst_103 [1] : vector<16x16xf32> to vector<16xf32>
    %273 = vector.shape_cast %272 : vector<16xf32> to vector<16x1xf32>
    %274 = vector.broadcast %273 : vector<16x1xf32> to vector<16x16xf32>
    %275 = arith.subf %271, %274 : vector<16x16xf32>
    %276 = math.exp %275 : vector<16x16xf32>
    %cst_104 = arith.constant dense<0.000000e+00> : vector<16xf32>
    %277 = vector.multi_reduction <add>, %276, %cst_104 [1] : vector<16x16xf32> to vector<16xf32>
    %278 = vector.shape_cast %277 : vector<16xf32> to vector<16x1xf32>
    %279 = tpu.reciprocal %278 {approx = true} : vector<16x1xf32> -> vector<16x1xf32>
    %280 = vector.broadcast %279 : vector<16x1xf32> to vector<16x16xf32>
    %281 = arith.mulf %276, %280 : vector<16x16xf32>
    %282 = arith.truncf %281 : vector<16x16xf32> to vector<16x16xbf16>
    %cst_105 = arith.constant dense<0.000000e+00> : vector<16x64xf32>
    %283 = tpu.matmul %282, %266, %cst_105 {dimension_numbers = #tpu.dot_dimension_numbers<[1], [0], [0], [1], [0, 0, 1, 1], [], []>} : vector<16x16xbf16>, vector<16x64xbf16>, vector<16x64xf32> -> vector<16x64xf32>
    %284 = arith.truncf %283 : vector<16x64xf32> to vector<16x64xbf16>
    %c3_106 = arith.constant 3 : index
    %c0_107 = arith.constant 0 : index
    %c0_108 = arith.constant 0 : index
    %285 = vector.load %arg6[%c3_106, %c0_107, %c0_108] : memref<6x64x384xbf16, #tpu.memory_space<vmem>>, vector<1x64x384xbf16>
    %286 = vector.shape_cast %285 : vector<1x64x384xbf16> to vector<64x384xbf16>
    %cst_109 = arith.constant dense<0.000000e+00> : vector<16x384xf32>
    %287 = tpu.matmul %284, %286, %cst_109 {dimension_numbers = #tpu.dot_dimension_numbers<[1], [0], [0], [1], [0, 0, 1, 1], [], []>} : vector<16x64xbf16>, vector<64x384xbf16>, vector<16x384xf32> -> vector<16x384xf32>
    %288 = arith.addf %263, %287 : vector<16x384xf32>
    %289 = vector.extract_strided_slice %33 {offsets = [16, 256], sizes = [16, 64], strides = [1, 1]} : vector<32x1152xbf16> to vector<16x64xbf16>
    %290 = vector.extract_strided_slice %33 {offsets = [16, 640], sizes = [16, 64], strides = [1, 1]} : vector<32x1152xbf16> to vector<16x64xbf16>
    %291 = vector.extract_strided_slice %33 {offsets = [16, 1024], sizes = [16, 64], strides = [1, 1]} : vector<32x1152xbf16> to vector<16x64xbf16>
    "tpu.trace_start"() <{level = 10 : i32, message = "td,sd->ts"}> : () -> ()
    %cst_110 = arith.constant dense<0.000000e+00> : vector<16x16xf32>
    %292 = tpu.matmul %289, %290, %cst_110 {dimension_numbers = #tpu.dot_dimension_numbers<[1], [1], [0], [0], [0, 0, 1, 0], [], []>} : vector<16x64xbf16>, vector<16x64xbf16>, vector<16x16xf32> -> vector<16x16xf32>
    "tpu.trace_stop"() : () -> ()
    %cst_111 = arith.constant 1.250000e-01 : f32
    %293 = vector.broadcast %cst_111 : f32 to vector<16x16xf32>
    %294 = arith.mulf %292, %293 : vector<16x16xf32>
    %cst_112 = arith.constant 0xFF800000 : f32
    %295 = vector.broadcast %cst_112 : f32 to vector<16x16xf32>
    %296 = arith.select %36, %294, %295 : vector<16x16xi1>, vector<16x16xf32>
    %cst_113 = arith.constant dense<0xFF800000> : vector<16xf32>
    %297 = vector.multi_reduction <maximumf>, %296, %cst_113 [1] : vector<16x16xf32> to vector<16xf32>
    %298 = vector.shape_cast %297 : vector<16xf32> to vector<16x1xf32>
    %299 = vector.broadcast %298 : vector<16x1xf32> to vector<16x16xf32>
    %300 = arith.subf %296, %299 : vector<16x16xf32>
    %301 = math.exp %300 : vector<16x16xf32>
    %cst_114 = arith.constant dense<0.000000e+00> : vector<16xf32>
    %302 = vector.multi_reduction <add>, %301, %cst_114 [1] : vector<16x16xf32> to vector<16xf32>
    %303 = vector.shape_cast %302 : vector<16xf32> to vector<16x1xf32>
    %304 = tpu.reciprocal %303 {approx = true} : vector<16x1xf32> -> vector<16x1xf32>
    %305 = vector.broadcast %304 : vector<16x1xf32> to vector<16x16xf32>
    %306 = arith.mulf %301, %305 : vector<16x16xf32>
    %307 = arith.truncf %306 : vector<16x16xf32> to vector<16x16xbf16>
    %cst_115 = arith.constant dense<0.000000e+00> : vector<16x64xf32>
    %308 = tpu.matmul %307, %291, %cst_115 {dimension_numbers = #tpu.dot_dimension_numbers<[1], [0], [0], [1], [0, 0, 1, 1], [], []>} : vector<16x16xbf16>, vector<16x64xbf16>, vector<16x64xf32> -> vector<16x64xf32>
    %309 = arith.truncf %308 : vector<16x64xf32> to vector<16x64xbf16>
    %c4_116 = arith.constant 4 : index
    %c0_117 = arith.constant 0 : index
    %c0_118 = arith.constant 0 : index
    %310 = vector.load %arg6[%c4_116, %c0_117, %c0_118] : memref<6x64x384xbf16, #tpu.memory_space<vmem>>, vector<1x64x384xbf16>
    %311 = vector.shape_cast %310 : vector<1x64x384xbf16> to vector<64x384xbf16>
    %cst_119 = arith.constant dense<0.000000e+00> : vector<16x384xf32>
    %312 = tpu.matmul %309, %311, %cst_119 {dimension_numbers = #tpu.dot_dimension_numbers<[1], [0], [0], [1], [0, 0, 1, 1], [], []>} : vector<16x64xbf16>, vector<64x384xbf16>, vector<16x384xf32> -> vector<16x384xf32>
    %313 = arith.addf %288, %312 : vector<16x384xf32>
    %314 = vector.extract_strided_slice %33 {offsets = [16, 320], sizes = [16, 64], strides = [1, 1]} : vector<32x1152xbf16> to vector<16x64xbf16>
    %315 = vector.extract_strided_slice %33 {offsets = [16, 704], sizes = [16, 64], strides = [1, 1]} : vector<32x1152xbf16> to vector<16x64xbf16>
    %316 = vector.extract_strided_slice %33 {offsets = [16, 1088], sizes = [16, 64], strides = [1, 1]} : vector<32x1152xbf16> to vector<16x64xbf16>
    "tpu.trace_start"() <{level = 10 : i32, message = "td,sd->ts"}> : () -> ()
    %cst_120 = arith.constant dense<0.000000e+00> : vector<16x16xf32>
    %317 = tpu.matmul %314, %315, %cst_120 {dimension_numbers = #tpu.dot_dimension_numbers<[1], [1], [0], [0], [0, 0, 1, 0], [], []>} : vector<16x64xbf16>, vector<16x64xbf16>, vector<16x16xf32> -> vector<16x16xf32>
    "tpu.trace_stop"() : () -> ()
    %cst_121 = arith.constant 1.250000e-01 : f32
    %318 = vector.broadcast %cst_121 : f32 to vector<16x16xf32>
    %319 = arith.mulf %317, %318 : vector<16x16xf32>
    %cst_122 = arith.constant 0xFF800000 : f32
    %320 = vector.broadcast %cst_122 : f32 to vector<16x16xf32>
    %321 = arith.select %36, %319, %320 : vector<16x16xi1>, vector<16x16xf32>
    %cst_123 = arith.constant dense<0xFF800000> : vector<16xf32>
    %322 = vector.multi_reduction <maximumf>, %321, %cst_123 [1] : vector<16x16xf32> to vector<16xf32>
    %323 = vector.shape_cast %322 : vector<16xf32> to vector<16x1xf32>
    %324 = vector.broadcast %323 : vector<16x1xf32> to vector<16x16xf32>
    %325 = arith.subf %321, %324 : vector<16x16xf32>
    %326 = math.exp %325 : vector<16x16xf32>
    %cst_124 = arith.constant dense<0.000000e+00> : vector<16xf32>
    %327 = vector.multi_reduction <add>, %326, %cst_124 [1] : vector<16x16xf32> to vector<16xf32>
    %328 = vector.shape_cast %327 : vector<16xf32> to vector<16x1xf32>
    %329 = tpu.reciprocal %328 {approx = true} : vector<16x1xf32> -> vector<16x1xf32>
    %330 = vector.broadcast %329 : vector<16x1xf32> to vector<16x16xf32>
    %331 = arith.mulf %326, %330 : vector<16x16xf32>
    %332 = arith.truncf %331 : vector<16x16xf32> to vector<16x16xbf16>
    %cst_125 = arith.constant dense<0.000000e+00> : vector<16x64xf32>
    %333 = tpu.matmul %332, %316, %cst_125 {dimension_numbers = #tpu.dot_dimension_numbers<[1], [0], [0], [1], [0, 0, 1, 1], [], []>} : vector<16x16xbf16>, vector<16x64xbf16>, vector<16x64xf32> -> vector<16x64xf32>
    %334 = arith.truncf %333 : vector<16x64xf32> to vector<16x64xbf16>
    %c5_126 = arith.constant 5 : index
    %c0_127 = arith.constant 0 : index
    %c0_128 = arith.constant 0 : index
    %335 = vector.load %arg6[%c5_126, %c0_127, %c0_128] : memref<6x64x384xbf16, #tpu.memory_space<vmem>>, vector<1x64x384xbf16>
    %336 = vector.shape_cast %335 : vector<1x64x384xbf16> to vector<64x384xbf16>
    %cst_129 = arith.constant dense<0.000000e+00> : vector<16x384xf32>
    %337 = tpu.matmul %334, %336, %cst_129 {dimension_numbers = #tpu.dot_dimension_numbers<[1], [0], [0], [1], [0, 0, 1, 1], [], []>} : vector<16x64xbf16>, vector<64x384xbf16>, vector<16x384xf32> -> vector<16x384xf32>
    %338 = arith.addf %313, %337 : vector<16x384xf32>
    %339 = tpu.concatenate %187, %338 in 0 : vector<16x384xf32>, vector<16x384xf32> -> vector<32x384xf32>
    %340 = arith.addf %1, %339 : vector<32x384xf32>
    %c0_130 = arith.constant 0 : index
    %c0_131 = arith.constant 0 : index
    %341 = vector.load %arg5[%c0_130, %c0_131] : memref<1x384xf32, #tpu.memory_space<vmem>>, vector<1x384xf32>
    %342 = vector.shape_cast %341 : vector<1x384xf32> to vector<384xf32>
    %343 = vector.shape_cast %342 : vector<384xf32> to vector<1x384xf32>
    %344 = vector.broadcast %343 : vector<1x384xf32> to vector<32x384xf32>
    %345 = arith.addf %340, %344 : vector<32x384xf32>
    %c0_132 = arith.constant 0 : index
    %c0_133 = arith.constant 0 : index
    %346 = vector.load %arg7[%c0_132, %c0_133] : memref<1x384xf32, #tpu.memory_space<vmem>>, vector<1x384xf32>
    %347 = vector.shape_cast %346 : vector<1x384xf32> to vector<384xf32>
    %c0_134 = arith.constant 0 : index
    %c0_135 = arith.constant 0 : index
    %348 = vector.load %arg8[%c0_134, %c0_135] : memref<1x384xf32, #tpu.memory_space<vmem>>, vector<1x384xf32>
    %349 = vector.shape_cast %348 : vector<1x384xf32> to vector<384xf32>
    %cst_136 = arith.constant dense<0.000000e+00> : vector<32xf32>
    %350 = vector.multi_reduction <add>, %345, %cst_136 [1] : vector<32x384xf32> to vector<32xf32>
    %351 = vector.shape_cast %350 : vector<32xf32> to vector<32x1xf32>
    %cst_137 = arith.constant 3.840000e+02 : f32
    %352 = vector.broadcast %cst_137 : f32 to vector<32x1xf32>
    %353 = arith.divf %351, %352 : vector<32x1xf32>
    %354 = vector.broadcast %353 : vector<32x1xf32> to vector<32x384xf32>
    %355 = arith.subf %345, %354 : vector<32x384xf32>
    %356 = arith.mulf %355, %355 : vector<32x384xf32>
    %cst_138 = arith.constant dense<0.000000e+00> : vector<32xf32>
    %357 = vector.multi_reduction <add>, %356, %cst_138 [1] : vector<32x384xf32> to vector<32xf32>
    %358 = vector.shape_cast %357 : vector<32xf32> to vector<32x1xf32>
    %cst_139 = arith.constant 3.840000e+02 : f32
    %359 = vector.broadcast %cst_139 : f32 to vector<32x1xf32>
    %360 = arith.divf %358, %359 : vector<32x1xf32>
    %361 = vector.broadcast %353 : vector<32x1xf32> to vector<32x384xf32>
    %362 = arith.subf %345, %361 : vector<32x384xf32>
    %cst_140 = arith.constant 9.99999974E-6 : f32
    %363 = vector.broadcast %cst_140 : f32 to vector<32x1xf32>
    %364 = arith.addf %360, %363 : vector<32x1xf32>
    %365 = math.rsqrt %364 : vector<32x1xf32>
    %366 = vector.broadcast %365 : vector<32x1xf32> to vector<32x384xf32>
    %367 = arith.mulf %362, %366 : vector<32x384xf32>
    %368 = vector.shape_cast %347 : vector<384xf32> to vector<1x384xf32>
    %369 = vector.broadcast %368 : vector<1x384xf32> to vector<32x384xf32>
    %370 = arith.mulf %367, %369 : vector<32x384xf32>
    %371 = vector.shape_cast %349 : vector<384xf32> to vector<1x384xf32>
    %372 = vector.broadcast %371 : vector<1x384xf32> to vector<32x384xf32>
    %373 = arith.addf %370, %372 : vector<32x384xf32>
    %374 = arith.truncf %373 : vector<32x384xf32> to vector<32x384xbf16>
    %c0_141 = arith.constant 0 : index
    %c0_142 = arith.constant 0 : index
    %375 = vector.load %arg9[%c0_141, %c0_142] : memref<384x1536xbf16, #tpu.memory_space<vmem>>, vector<384x1536xbf16>
    %cst_143 = arith.constant dense<0.000000e+00> : vector<32x1536xf32>
    %376 = tpu.matmul %374, %375, %cst_143 {dimension_numbers = #tpu.dot_dimension_numbers<[1], [0], [0], [1], [0, 0, 1, 1], [], []>} : vector<32x384xbf16>, vector<384x1536xbf16>, vector<32x1536xf32> -> vector<32x1536xf32>
    %c0_144 = arith.constant 0 : index
    %c0_145 = arith.constant 0 : index
    %377 = vector.load %arg10[%c0_144, %c0_145] : memref<1x1536xf32, #tpu.memory_space<vmem>>, vector<1x1536xf32>
    %378 = vector.shape_cast %377 : vector<1x1536xf32> to vector<1536xf32>
    %379 = vector.shape_cast %378 : vector<1536xf32> to vector<1x1536xf32>
    %380 = vector.broadcast %379 : vector<1x1536xf32> to vector<32x1536xf32>
    %381 = arith.addf %376, %380 : vector<32x1536xf32>
    %cst_146 = arith.constant 0.000000e+00 : f32
    %382 = vector.broadcast %cst_146 : f32 to vector<32x1536xf32>
    %383 = arith.maximumf %381, %382 : vector<32x1536xf32>
    %384 = arith.truncf %383 : vector<32x1536xf32> to vector<32x1536xbf16>
    %c0_147 = arith.constant 0 : index
    %c0_148 = arith.constant 0 : index
    %385 = vector.load %arg11[%c0_147, %c0_148] : memref<1536x384xbf16, #tpu.memory_space<vmem>>, vector<1536x384xbf16>
    %cst_149 = arith.constant dense<0.000000e+00> : vector<32x384xf32>
    %386 = tpu.matmul %384, %385, %cst_149 {dimension_numbers = #tpu.dot_dimension_numbers<[1], [0], [0], [1], [0, 0, 1, 1], [], []>} : vector<32x1536xbf16>, vector<1536x384xbf16>, vector<32x384xf32> -> vector<32x384xf32>
    %c0_150 = arith.constant 0 : index
    %c0_151 = arith.constant 0 : index
    %387 = vector.load %arg12[%c0_150, %c0_151] : memref<1x384xf32, #tpu.memory_space<vmem>>, vector<1x384xf32>
    %388 = vector.shape_cast %387 : vector<1x384xf32> to vector<384xf32>
    %389 = vector.shape_cast %388 : vector<384xf32> to vector<1x384xf32>
    %390 = vector.broadcast %389 : vector<1x384xf32> to vector<32x384xf32>
    %391 = arith.addf %386, %390 : vector<32x384xf32>
    %392 = arith.addf %345, %391 : vector<32x384xf32>
    %393 = vector.shape_cast %392 : vector<32x384xf32> to vector<2x16x384xf32>
    %c0_152 = arith.constant 0 : index
    %c0_153 = arith.constant 0 : index
    %c0_154 = arith.constant 0 : index
    %394 = vector.load %arg13[%c0_152, %c0_153, %c0_154] : memref<2x16x384xf32, #tpu.memory_space<vmem>>, vector<2x16x384xf32>
    tpu.vector_store %arg13[%c0_152, %c0_153, %c0_154], %393 {strides = array<i32>} : memref<2x16x384xf32, #tpu.memory_space<vmem>>, vector<2x16x384xf32>,
    return
  }
  func.func @transform_0(%arg0: i32) -> (i32, i32, i32) {
    %c0_i32 = arith.constant 0 : i32
    %c0_i32_0 = arith.constant 0 : i32
    %c0_i32_1 = arith.constant 0 : i32
    return %arg0, %c0_i32, %c0_i32_0 : i32, i32, i32
  }
  func.func @transform_1(%arg0: i32) -> (i32, i32) {
    %c0_i32 = arith.constant 0 : i32
    %c0_i32_0 = arith.constant 0 : i32
    %c0_i32_1 = arith.constant 0 : i32
    return %c0_i32, %c0_i32_0 : i32, i32
  }
  func.func @transform_2(%arg0: i32) -> (i32, i32) {
    %c0_i32 = arith.constant 0 : i32
    %c0_i32_0 = arith.constant 0 : i32
    %c0_i32_1 = arith.constant 0 : i32
    return %c0_i32, %c0_i32_0 : i32, i32
  }
  func.func @transform_3(%arg0: i32) -> (i32, i32) {
    %c0_i32 = arith.constant 0 : i32
    %c0_i32_0 = arith.constant 0 : i32
    %c0_i32_1 = arith.constant 0 : i32
    return %c0_i32, %c0_i32_0 : i32, i32
  }
  func.func @transform_4(%arg0: i32) -> (i32, i32) {
    %c0_i32 = arith.constant 0 : i32
    %c0_i32_0 = arith.constant 0 : i32
    %c0_i32_1 = arith.constant 0 : i32
    return %c0_i32, %c0_i32_0 : i32, i32
  }
  func.func @transform_5(%arg0: i32) -> (i32, i32, i32) {
    %c0_i32 = arith.constant 0 : i32
    %c0_i32_0 = arith.constant 0 : i32
    %c0_i32_1 = arith.constant 0 : i32
    %c0_i32_2 = arith.constant 0 : i32
    return %c0_i32, %c0_i32_0, %c0_i32_1 : i32, i32, i32
  }
  func.func @transform_6(%arg0: i32) -> (i32, i32) {
    %c0_i32 = arith.constant 0 : i32
    %c0_i32_0 = arith.constant 0 : i32
    %c0_i32_1 = arith.constant 0 : i32
    return %c0_i32, %c0_i32_0 : i32, i32
  }
  func.func @transform_7(%arg0: i32) -> (i32, i32) {
    %c0_i32 = arith.constant 0 : i32
    %c0_i32_0 = arith.constant 0 : i32
    %c0_i32_1 = arith.constant 0 : i32
    return %c0_i32, %c0_i32_0 : i32, i32
  }
  func.func @transform_8(%arg0: i32) -> (i32, i32) {
    %c0_i32 = arith.constant 0 : i32
    %c0_i32_0 = arith.constant 0 : i32
    %c0_i32_1 = arith.constant 0 : i32
    return %c0_i32, %c0_i32_0 : i32, i32
  }
  func.func @transform_9(%arg0: i32) -> (i32, i32) {
    %c0_i32 = arith.constant 0 : i32
    %c0_i32_0 = arith.constant 0 : i32
    %c0_i32_1 = arith.constant 0 : i32
    return %c0_i32, %c0_i32_0 : i32, i32
  }
  func.func @transform_10(%arg0: i32) -> (i32, i32) {
    %c0_i32 = arith.constant 0 : i32
    %c0_i32_0 = arith.constant 0 : i32
    %c0_i32_1 = arith.constant 0 : i32
    return %c0_i32, %c0_i32_0 : i32, i32
  }
  func.func @transform_11(%arg0: i32) -> (i32, i32) {
    %c0_i32 = arith.constant 0 : i32
    %c0_i32_0 = arith.constant 0 : i32
    %c0_i32_1 = arith.constant 0 : i32
    return %c0_i32, %c0_i32_0 : i32, i32
  }
  func.func @transform_12(%arg0: i32) -> (i32, i32, i32) {
    %c0_i32 = arith.constant 0 : i32
    %c0_i32_0 = arith.constant 0 : i32
    %c0_i32_1 = arith.constant 0 : i32
    return %arg0, %c0_i32, %c0_i32_0 : i32, i32, i32
  }
}

</mosaic_0001>

<llo_original>
// kernel: tpu_custom_call.1
$region0: #{tpu_custom_call.1}
  #allocation0 [shape = 'u32[]', space=smem, size = 0x4, offset = 0x4, fixed_abs, tag = 'smem constant byte address 0x4 - core index']
  #allocation1 [shape = 'u32[144,128]{1,0:T(1,128)}', space=vmem, size = 0x12000, scoped, tag = 'internal scratch']
  %s0 = inlined_call_operand.hbm [shape: f32[2,16,384], index: 0, kind: input, shape index: {}]
  %s1 = inlined_call_operand.hbm [shape: f32[1,384], index: 1, kind: input, shape index: {}]
  %s2 = inlined_call_operand.hbm [shape: f32[1,384], index: 2, kind: input, shape index: {}]
  %s3 = inlined_call_operand.hbm [shape: bf16[384,1152], index: 3, kind: input, shape index: {}]
  %s4 = inlined_call_operand.hbm [shape: f32[1,384], index: 4, kind: input, shape index: {}]
  %s5 = inlined_call_operand.hbm [shape: bf16[6,64,384], index: 5, kind: input, shape index: {}]
  %s6 = inlined_call_operand.hbm [shape: f32[1,384], index: 6, kind: input, shape index: {}]
  %s7 = inlined_call_operand.hbm [shape: f32[1,384], index: 7, kind: input, shape index: {}]
  %s8 = inlined_call_operand.hbm [shape: bf16[384,1536], index: 8, kind: input, shape index: {}]
  %s9 = inlined_call_operand.hbm [shape: f32[1,1536], index: 9, kind: input, shape index: {}]
  %s10 = inlined_call_operand.hbm [shape: bf16[1536,384], index: 10, kind: input, shape index: {}]
  %s11 = inlined_call_operand.hbm [shape: f32[1,384], index: 11, kind: input, shape index: {}]
  %s12 = inlined_call_operand.hbm [shape: f32[2,16,384], index: 12, kind: output, shape index: {}]
  %s13 = sld [smem:[#allocation0]]
  $region106: #{tpu_custom_call.1} parent=0
    _
  %s15 = ssub.s32 1, %s13
  %s16 = scalar_select 0, %s15, %s13
  $region1: #{tpu_custom_call.1} parent=0
    #allocation2 [shape = 'u8[49152]{0}', space=vmem, size = 0xc000, scoped, tag = 'input window, operand 0, single buffered']
    #allocation3 [shape = 's32[1]{0}', space=sflag, size = 0x4, scoped, tag = 'scoped memory for tpu_custom_call.1']
    #allocation4 [shape = 's32[1]{0}', space=sflag, size = 0x4, scoped, tag = 'scoped memory for tpu_custom_call.1']
    #allocation5 [shape = 'u8[1536]{0}', space=vmem, size = 0x800, scoped, tag = 'input window, operand 1, single buffered']
    #allocation6 [shape = 's32[1]{0}', space=sflag, size = 0x4, scoped, tag = 'scoped memory for tpu_custom_call.1']
    #allocation7 [shape = 'u8[1536]{0}', space=vmem, size = 0x800, scoped, tag = 'input window, operand 2, single buffered']
    #allocation8 [shape = 'u8[884736]{0}', space=vmem, size = 0xd8000, scoped, tag = 'input window, operand 3, single buffered']
    #allocation9 [shape = 's32[1]{0}', space=sflag, size = 0x4, scoped, tag = 'scoped memory for tpu_custom_call.1']
    #allocation10 [shape = 'u8[1536]{0}', space=vmem, size = 0x800, scoped, tag = 'input window, operand 4, single buffered']
    #allocation11 [shape = 'u8[294912]{0}', space=vmem, size = 0x48000, scoped, tag = 'input window, operand 5, single buffered']
    #allocation12 [shape = 's32[1]{0}', space=sflag, size = 0x4, scoped, tag = 'scoped memory for tpu_custom_call.1']
    #allocation13 [shape = 'u8[1536]{0}', space=vmem, size = 0x800, scoped, tag = 'input window, operand 6, single buffered']
    #allocation14 [shape = 'u8[1536]{0}', space=vmem, size = 0x800, scoped, tag = 'input window, operand 7, single buffered']
    #allocation15 [shape = 's32[1]{0}', space=sflag, size = 0x4, scoped, tag = 'scoped memory for tpu_custom_call.1']
    #allocation16 [shape = 'u8[1179648]{0}', space=vmem, size = 0x120000, scoped, tag = 'input window, operand 8, single buffered']
    #allocation17 [shape = 'u8[6144]{0}', space=vmem, size = 0x1800, scoped, tag = 'input window, operand 9, single buffered']
    #allocation18 [shape = 's32[1]{0}', space=sflag, size = 0x4, scoped, tag = 'scoped memory for tpu_custom_call.1']
    #allocation19 [shape = 'u8[1179648]{0}', space=vmem, size = 0x120000, scoped, tag = 'input window, operand 10, single buffered']
    #allocation20 [shape = 'u8[1536]{0}', space=vmem, size = 0x800, scoped, tag = 'input window, operand 11, single buffered']
    #allocation21 [shape = 's32[1]{0}', space=sflag, size = 0x4, scoped, tag = 'scoped memory for tpu_custom_call.1']
    #allocation22 [shape = 'u8[49152]{0}', space=vmem, size = 0xc000, scoped, tag = 'output window, operand 0, single buffered']
    %17 = vsyncpa [#allocation3], 0
    %18 = vsyncpa [#allocation6], 0
    %19 = vsyncpa [#allocation9], 0
    %20 = vsyncpa [#allocation12], 0
    %21 = vsyncpa [#allocation15], 0
    %22 = vsyncpa [#allocation18], 0
    %23 = vsyncpa [#allocation21], 0
    %24 = vsyncpa [#allocation4], 0
    // Predicated region
    $region2: #{tpu_custom_call.1} parent=1 // pred_check
      _
    $region3: #{tpu_custom_call.1} parent=1 // pred_check_branch
      %26 = sbr.rel (0) target = $region5
    $region4: #{tpu_custom_call.1} parent=1 // pred_region
      %s28 = ssub.s32 1536, 1536
      %29 = vsyncadd [#allocation3], %s28
      %s30 = sshll.u32 [#allocation2], 4
      %s31 = int_to_ptr.vmem [resolvable:$true] %s30
      %36 = dma.hbm_to_vmem [thread:$0]  %s0, 1536, %s31, [#allocation3], 384, 384, 24
    $region5: #{tpu_custom_call.1} parent=1 // pred_fallthru
      _
    // Predicated region
    $region6: #{tpu_custom_call.1} parent=1 // pred_check
      _
    $region7: #{tpu_custom_call.1} parent=1 // pred_check_branch
      %38 = sbr.rel (0) target = $region9
    $region8: #{tpu_custom_call.1} parent=1 // pred_region
      %s40 = ssub.s32 48, 48
      %41 = vsyncadd [#allocation6], %s40
      %s43 = sshll.u32 [#allocation5], 4
      %s44 = int_to_ptr.vmem [resolvable:$true] %s43
      %46 = dma.hbm_to_vmem [thread:$0]  %s1, 48, %s44, [#allocation6]
    $region9: #{tpu_custom_call.1} parent=1 // pred_fallthru
      _
    // Predicated region
    $region10: #{tpu_custom_call.1} parent=1 // pred_check
      _
    $region11: #{tpu_custom_call.1} parent=1 // pred_check_branch
      %48 = sbr.rel (0) target = $region13
    $region12: #{tpu_custom_call.1} parent=1 // pred_region
      %s50 = ssub.s32 48, 48
      %51 = vsyncadd [#allocation6], %s50
      %s53 = sshll.u32 [#allocation7], 4
      %s54 = int_to_ptr.vmem [resolvable:$true] %s53
      %56 = dma.hbm_to_vmem [thread:$0]  %s2, 48, %s54, [#allocation6]
    $region13: #{tpu_custom_call.1} parent=1 // pred_fallthru
      _
    // Predicated region
    $region14: #{tpu_custom_call.1} parent=1 // pred_check
      _
    $region15: #{tpu_custom_call.1} parent=1 // pred_check_branch
      %58 = sbr.rel (0) target = $region17
    $region16: #{tpu_custom_call.1} parent=1 // pred_region
      %s60 = ssub.s32 27648, 27648
      %61 = vsyncadd [#allocation9], %s60
      %s62 = sshll.u32 [#allocation8], 4
      %s63 = int_to_ptr.vmem [resolvable:$true] %s62
      %68 = dma.hbm_to_vmem [thread:$0]  %s3, 27648, %s63, [#allocation9], 576, 576, 36
    $region17: #{tpu_custom_call.1} parent=1 // pred_fallthru
      _
    // Predicated region
    $region18: #{tpu_custom_call.1} parent=1 // pred_check
      _
    $region19: #{tpu_custom_call.1} parent=1 // pred_check_branch
      %70 = sbr.rel (0) target = $region21
    $region20: #{tpu_custom_call.1} parent=1 // pred_region
      %s72 = ssub.s32 48, 48
      %73 = vsyncadd [#allocation9], %s72
      %s75 = sshll.u32 [#allocation10], 4
      %s76 = int_to_ptr.vmem [resolvable:$true] %s75
      %78 = dma.hbm_to_vmem [thread:$0]  %s4, 48, %s76, [#allocation9]
    $region21: #{tpu_custom_call.1} parent=1 // pred_fallthru
      _
    // Predicated region
    $region22: #{tpu_custom_call.1} parent=1 // pred_check
      _
    $region23: #{tpu_custom_call.1} parent=1 // pred_check_branch
      %80 = sbr.rel (0) target = $region25
    $region24: #{tpu_custom_call.1} parent=1 // pred_region
      %s82 = ssub.s32 9216, 9216
      %83 = vsyncadd [#allocation12], %s82
      %s84 = sshll.u32 [#allocation11], 4
      %s85 = int_to_ptr.vmem [resolvable:$true] %s84
      %90 = dma.hbm_to_vmem [thread:$0]  %s5, 9216, %s85, [#allocation12], 192, 192, 12
    $region25: #{tpu_custom_call.1} parent=1 // pred_fallthru
      _
    // Predicated region
    $region26: #{tpu_custom_call.1} parent=1 // pred_check
      _
    $region27: #{tpu_custom_call.1} parent=1 // pred_check_branch
      %92 = sbr.rel (0) target = $region29
    $region28: #{tpu_custom_call.1} parent=1 // pred_region
      %s94 = ssub.s32 48, 48
      %95 = vsyncadd [#allocation12], %s94
      %s97 = sshll.u32 [#allocation13], 4
      %s98 = int_to_ptr.vmem [resolvable:$true] %s97
      %100 = dma.hbm_to_vmem [thread:$0]  %s6, 48, %s98, [#allocation12]
    $region29: #{tpu_custom_call.1} parent=1 // pred_fallthru
      _
    // Predicated region
    $region30: #{tpu_custom_call.1} parent=1 // pred_check
      _
    $region31: #{tpu_custom_call.1} parent=1 // pred_check_branch
      %102 = sbr.rel (0) target = $region33
    $region32: #{tpu_custom_call.1} parent=1 // pred_region
      %s104 = ssub.s32 48, 48
      %105 = vsyncadd [#allocation15], %s104
      %s107 = sshll.u32 [#allocation14], 4
      %s108 = int_to_ptr.vmem [resolvable:$true] %s107
      %110 = dma.hbm_to_vmem [thread:$0]  %s7, 48, %s108, [#allocation15]
    $region33: #{tpu_custom_call.1} parent=1 // pred_fallthru
      _
    // Predicated region
    $region34: #{tpu_custom_call.1} parent=1 // pred_check
      _
    $region35: #{tpu_custom_call.1} parent=1 // pred_check_branch
      %112 = sbr.rel (0) target = $region37
    $region36: #{tpu_custom_call.1} parent=1 // pred_region
      %s114 = ssub.s32 36864, 36864
      %115 = vsyncadd [#allocation15], %s114
      %s116 = sshll.u32 [#allocation16], 4
      %s117 = int_to_ptr.vmem [resolvable:$true] %s116
      %122 = dma.hbm_to_vmem [thread:$0]  %s8, 36864, %s117, [#allocation15], 768, 768, 48
    $region37: #{tpu_custom_call.1} parent=1 // pred_fallthru
      _
    // Predicated region
    $region38: #{tpu_custom_call.1} parent=1 // pred_check
      _
    $region39: #{tpu_custom_call.1} parent=1 // pred_check_branch
      %124 = sbr.rel (0) target = $region41
    $region40: #{tpu_custom_call.1} parent=1 // pred_region
      %s126 = ssub.s32 192, 192
      %127 = vsyncadd [#allocation18], %s126
      %s129 = sshll.u32 [#allocation17], 4
      %s130 = int_to_ptr.vmem [resolvable:$true] %s129
      %132 = dma.hbm_to_vmem [thread:$0]  %s9, 192, %s130, [#allocation18]
    $region41: #{tpu_custom_call.1} parent=1 // pred_fallthru
      _
    // Predicated region
    $region42: #{tpu_custom_call.1} parent=1 // pred_check
      _
    $region43: #{tpu_custom_call.1} parent=1 // pred_check_branch
      %134 = sbr.rel (0) target = $region45
    $region44: #{tpu_custom_call.1} parent=1 // pred_region
      %s136 = ssub.s32 36864, 36864
      %137 = vsyncadd [#allocation18], %s136
      %s138 = sshll.u32 [#allocation19], 4
      %s139 = int_to_ptr.vmem [resolvable:$true] %s138
      %144 = dma.hbm_to_vmem [thread:$0]  %s10, 36864, %s139, [#allocation18], 192, 192, 12
    $region45: #{tpu_custom_call.1} parent=1 // pred_fallthru
      _
    // Predicated region
    $region46: #{tpu_custom_call.1} parent=1 // pred_check
      _
    $region47: #{tpu_custom_call.1} parent=1 // pred_check_branch
      %146 = sbr.rel (0) target = $region49
    $region48: #{tpu_custom_call.1} parent=1 // pred_region
      %s148 = ssub.s32 48, 48
      %149 = vsyncadd [#allocation21], %s148
      %s151 = sshll.u32 [#allocation20], 4
      %s152 = int_to_ptr.vmem [resolvable:$true] %s151
      %154 = dma.hbm_to_vmem [thread:$0]  %s11, 48, %s152, [#allocation21]
    $region49: #{tpu_custom_call.1} parent=1 // pred_fallthru
      _
    // Predicated region
    $region50: #{tpu_custom_call.1} parent=1 // pred_check
      _
    $region51: #{tpu_custom_call.1} parent=1 // pred_check_branch
      %156 = sbr.rel (0) target = $region53
    $region52: #{tpu_custom_call.1} parent=1 // pred_region
      %157 = dma.done [#allocation3], 1536
    $region53: #{tpu_custom_call.1} parent=1 // pred_fallthru
      _
    // Predicated region
    $region54: #{tpu_custom_call.1} parent=1 // pred_check
      _
    $region55: #{tpu_custom_call.1} parent=1 // pred_check_branch
      %159 = sbr.rel (0) target = $region57
    $region56: #{tpu_custom_call.1} parent=1 // pred_region
      %160 = dma.done [#allocation6], 48
    $region57: #{tpu_custom_call.1} parent=1 // pred_fallthru
      _
    // Predicated region
    $region58: #{tpu_custom_call.1} parent=1 // pred_check
      _
    $region59: #{tpu_custom_call.1} parent=1 // pred_check_branch
      %162 = sbr.rel (0) target = $region61
    $region60: #{tpu_custom_call.1} parent=1 // pred_region
      %163 = dma.done [#allocation6], 48
    $region61: #{tpu_custom_call.1} parent=1 // pred_fallthru
      _
    // Predicated region
    $region62: #{tpu_custom_call.1} parent=1 // pred_check
      _
    $region63: #{tpu_custom_call.1} parent=1 // pred_check_branch
      %165 = sbr.rel (0) target = $region65
    $region64: #{tpu_custom_call.1} parent=1 // pred_region
      %166 = dma.done [#allocation9], 27648
    $region65: #{tpu_custom_call.1} parent=1 // pred_fallthru
      _
    // Predicated region
    $region66: #{tpu_custom_call.1} parent=1 // pred_check
      _
    $region67: #{tpu_custom_call.1} parent=1 // pred_check_branch
      %168 = sbr.rel (0) target = $region69
    $region68: #{tpu_custom_call.1} parent=1 // pred_region
      %169 = dma.done [#allocation9], 48
    $region69: #{tpu_custom_call.1} parent=1 // pred_fallthru
      _
    // Predicated region
    $region70: #{tpu_custom_call.1} parent=1 // pred_check
      _
    $region71: #{tpu_custom_call.1} parent=1 // pred_check_branch
      %171 = sbr.rel (0) target = $region73
    $region72: #{tpu_custom_call.1} parent=1 // pred_region
      %172 = dma.done [#allocation12], 9216
    $region73: #{tpu_custom_call.1} parent=1 // pred_fallthru
      _
    // Predicated region
    $region74: #{tpu_custom_call.1} parent=1 // pred_check
      _
    $region75: #{tpu_custom_call.1} parent=1 // pred_check_branch
      %174 = sbr.rel (0) target = $region77
    $region76: #{tpu_custom_call.1} parent=1 // pred_region
      %175 = dma.done [#allocation12], 48
    $region77: #{tpu_custom_call.1} parent=1 // pred_fallthru
      _
    // Predicated region
    $region78: #{tpu_custom_call.1} parent=1 // pred_check
      _
    $region79: #{tpu_custom_call.1} parent=1 // pred_check_branch
      %177 = sbr.rel (0) target = $region81
    $region80: #{tpu_custom_call.1} parent=1 // pred_region
      %178 = dma.done [#allocation15], 48
    $region81: #{tpu_custom_call.1} parent=1 // pred_fallthru
      _
    // Predicated region
    $region82: #{tpu_custom_call.1} parent=1 // pred_check
      _
    $region83: #{tpu_custom_call.1} parent=1 // pred_check_branch
      %180 = sbr.rel (0) target = $region85
    $region84: #{tpu_custom_call.1} parent=1 // pred_region
      %181 = dma.done [#allocation15], 36864
    $region85: #{tpu_custom_call.1} parent=1 // pred_fallthru
      _
    // Predicated region
    $region86: #{tpu_custom_call.1} parent=1 // pred_check
      _
    $region87: #{tpu_custom_call.1} parent=1 // pred_check_branch
      %183 = sbr.rel (0) target = $region89
    $region88: #{tpu_custom_call.1} parent=1 // pred_region
      %184 = dma.done [#allocation18], 192
    $region89: #{tpu_custom_call.1} parent=1 // pred_fallthru
      _
    // Predicated region
    $region90: #{tpu_custom_call.1} parent=1 // pred_check
      _
    $region91: #{tpu_custom_call.1} parent=1 // pred_check_branch
      %186 = sbr.rel (0) target = $region93
    $region92: #{tpu_custom_call.1} parent=1 // pred_region
      %187 = dma.done [#allocation18], 36864
    $region93: #{tpu_custom_call.1} parent=1 // pred_fallthru
      _
    // Predicated region
    $region94: #{tpu_custom_call.1} parent=1 // pred_check
      _
    $region95: #{tpu_custom_call.1} parent=1 // pred_check_branch
      %189 = sbr.rel (0) target = $region97
    $region96: #{tpu_custom_call.1} parent=1 // pred_region
      %190 = dma.done [#allocation21], 48
    $region97: #{tpu_custom_call.1} parent=1 // pred_fallthru
      _
    %v192 = vld [vmem:[#allocation2] sm:$0xff]
    %v193 = vld [vmem:[#allocation2 + $0x8] sm:$0xff]
    %v194 = vld [vmem:[#allocation2 + $0x10] sm:$0xff]
    %v195 = vld [vmem:[#allocation2 + $0x18] sm:$0xff]
    %v196 = vld [vmem:[#allocation2 + $0x20] sm:$0xff]
    %v197 = vld [vmem:[#allocation2 + $0x28] sm:$0xff]
    %v198 = vld [vmem:[#allocation2 + $0x30] sm:$0xff]
    %v199 = vld [vmem:[#allocation2 + $0x38] sm:$0xff]
    %v200 = vld [vmem:[#allocation2 + $0x40] sm:$0xff]
    %v201 = vld [vmem:[#allocation2 + $0x48] sm:$0xff]
    %v202 = vld [vmem:[#allocation2 + $0x50] sm:$0xff]
    %v203 = vld [vmem:[#allocation2 + $0x58] sm:$0xff]
    %v204 = vld [vmem:[#allocation5] sm:$0x7]
    %v205 = vld [vmem:[#allocation7] sm:$0x7]
    %v206 = vadd.f32 %v192, %v193
    %v207 = vadd.f32 %v206, %v194
    %208 = vadd.xlane.f32.xlu0 %v207
    %v209 = vpop.xlane.xlu0 %208
    %v210 = vadd.f32 %v195, %v196
    %v211 = vadd.f32 %v210, %v197
    %212 = vadd.xlane.f32.xlu0 %v211
    %v213 = vpop.xlane.xlu0 %212
    %v214 = vadd.f32 %v198, %v199
    %v215 = vadd.f32 %v214, %v200
    %216 = vadd.xlane.f32.xlu0 %v215
    %v217 = vpop.xlane.xlu0 %216
    %v218 = vadd.f32 %v201, %v202
    %v219 = vadd.f32 %v218, %v203
    %220 = vadd.xlane.f32.xlu0 %v219
    %v221 = vpop.xlane.xlu0 %220
    %v222 = vrcp.pop 384.0
    %v223 = vmul.f32 %v209, %v222
    %v224 = vmul.f32 %v213, %v222
    %v225 = vmul.f32 %v217, %v222
    %v226 = vmul.f32 %v221, %v222
    %v227 = vsub.f32 %v192, %v223
    %v228 = vsub.f32 %v193, %v223
    %v229 = vsub.f32 %v194, %v223
    %v230 = vsub.f32 %v195, %v224
    %v231 = vsub.f32 %v196, %v224
    %v232 = vsub.f32 %v197, %v224
    %v233 = vsub.f32 %v198, %v225
    %v234 = vsub.f32 %v199, %v225
    %v235 = vsub.f32 %v200, %v225
    %v236 = vsub.f32 %v201, %v226
    %v237 = vsub.f32 %v202, %v226
    %v238 = vsub.f32 %v203, %v226
    %v239 = vmul.f32 %v227, %v227
    %v240 = vmul.f32 %v228, %v228
    %v241 = vmul.f32 %v229, %v229
    %v242 = vmul.f32 %v230, %v230
    %v243 = vmul.f32 %v231, %v231
    %v244 = vmul.f32 %v232, %v232
    %v245 = vmul.f32 %v233, %v233
    %v246 = vmul.f32 %v234, %v234
    %v247 = vmul.f32 %v235, %v235
    %v248 = vmul.f32 %v236, %v236
    %v249 = vmul.f32 %v237, %v237
    %v250 = vmul.f32 %v238, %v238
    %v251 = vadd.f32 %v239, %v240
    %v252 = vadd.f32 %v251, %v241
    %253 = vadd.xlane.f32.xlu0 %v252
    %v254 = vpop.xlane.xlu0 %253
    %v255 = vadd.f32 %v242, %v243
    %v256 = vadd.f32 %v255, %v244
    %257 = vadd.xlane.f32.xlu0 %v256
    %v258 = vpop.xlane.xlu0 %257
    %v259 = vadd.f32 %v245, %v246
    %v260 = vadd.f32 %v259, %v247
    %261 = vadd.xlane.f32.xlu0 %v260
    %v262 = vpop.xlane.xlu0 %261
    %v263 = vadd.f32 %v248, %v249
    %v264 = vadd.f32 %v263, %v250
    %265 = vadd.xlane.f32.xlu0 %v264
    %v266 = vpop.xlane.xlu0 %265
    %v267 = vmul.f32 %v254, %v222
    %v268 = vmul.f32 %v258, %v222
    %v269 = vmul.f32 %v262, %v222
    %v270 = vmul.f32 %v266, %v222
    %v271 = vadd.f32 %v267, 1e-05
    %v272 = vadd.f32 %v268, 1e-05
    %v273 = vadd.f32 %v269, 1e-05
    %v274 = vadd.f32 %v270, 1e-05
    %v275 = vrsqrt.pop %v271
    %v276 = vrsqrt.pop %v272
    %v277 = vrsqrt.pop %v273
    %v278 = vrsqrt.pop %v274
    %v279 = vmul.f32 %v227, %v275
    %v280 = vmul.f32 %v228, %v275
    %v281 = vmul.f32 %v229, %v275
    %v282 = vmul.f32 %v230, %v276
    %v283 = vmul.f32 %v231, %v276
    %v284 = vmul.f32 %v232, %v276
    %v285 = vmul.f32 %v233, %v277
    %v286 = vmul.f32 %v234, %v277
    %v287 = vmul.f32 %v235, %v277
    %v288 = vmul.f32 %v236, %v278
    %v289 = vmul.f32 %v237, %v278
    %v290 = vmul.f32 %v238, %v278
    %v292 = vlaneseq
    %v293 = vshrl.u32 %v292, 7
    %v294 = vsub.s32 0, %v293
    %v295 = vrot.slane %v204, %v294
    %v296 = vlaneseq
    %v297 = vshrl.u32 %v296, 7
    %v298 = vsub.s32 1, %v297
    %v299 = vrot.slane %v204, %v298
    %v300 = vlaneseq
    %v301 = vshrl.u32 %v300, 7
    %v302 = vsub.s32 2, %v301
    %v303 = vrot.slane %v204, %v302
    %v307 = vmul.f32 %v279, %v295
    %v308 = vmul.f32 %v280, %v299
    %v309 = vmul.f32 %v281, %v303
    %v310 = vmul.f32 %v282, %v295
    %v311 = vmul.f32 %v283, %v299
    %v312 = vmul.f32 %v284, %v303
    %v313 = vmul.f32 %v285, %v295
    %v314 = vmul.f32 %v286, %v299
    %v315 = vmul.f32 %v287, %v303
    %v316 = vmul.f32 %v288, %v295
    %v317 = vmul.f32 %v289, %v299
    %v318 = vmul.f32 %v290, %v303
    %v320 = vlaneseq
    %v321 = vshrl.u32 %v320, 7
    %v322 = vsub.s32 0, %v321
    %v323 = vrot.slane %v205, %v322
    %v324 = vlaneseq
    %v325 = vshrl.u32 %v324, 7
    %v326 = vsub.s32 1, %v325
    %v327 = vrot.slane %v205, %v326
    %v328 = vlaneseq
    %v329 = vshrl.u32 %v328, 7
    %v330 = vsub.s32 2, %v329
    %v331 = vrot.slane %v205, %v330
    %v335 = vadd.f32 %v307, %v323
    %v336 = vadd.f32 %v308, %v327
    %v337 = vadd.f32 %v309, %v331
    %v338 = vadd.f32 %v310, %v323
    %v339 = vadd.f32 %v311, %v327
    %v340 = vadd.f32 %v312, %v331
    %v341 = vadd.f32 %v313, %v323
    %v342 = vadd.f32 %v314, %v327
    %v343 = vadd.f32 %v315, %v331
    %v344 = vadd.f32 %v316, %v323
    %v345 = vadd.f32 %v317, %v327
    %v346 = vadd.f32 %v318, %v331
    %v347 = vpack.c.bf16 %v338, %v335
    %v348 = vpack.c.bf16 %v339, %v336
    %v349 = vpack.c.bf16 %v340, %v337
    %v350 = vpack.c.bf16 %v344, %v341
    %v351 = vpack.c.bf16 %v345, %v342
    %v352 = vpack.c.bf16 %v346, %v343
    %v353 = vld [vmem:[#allocation8] sm:$0xff]
    %v354 = vld [vmem:[#allocation8 + $0x8] sm:$0xff]
    %v355 = vld [vmem:[#allocation8 + $0x10] sm:$0xff]
    %v356 = vld [vmem:[#allocation8 + $0x18] sm:$0xff]
    %v357 = vld [vmem:[#allocation8 + $0x20] sm:$0xf]
    %v358 = vld [vmem:[#allocation8 + $0x24] sm:$0xff]
    %v359 = vld [vmem:[#allocation8 + $0x2c] sm:$0xff]
    %v360 = vld [vmem:[#allocation8 + $0x34] sm:$0xff]
    %v361 = vld [vmem:[#allocation8 + $0x3c] sm:$0xff]
    %v362 = vld [vmem:[#allocation8 + $0x44] sm:$0xf]
    %v363 = vld [vmem:[#allocation8 + $0x48] sm:$0xff]
    %v364 = vld [vmem:[#allocation8 + $0x50] sm:$0xff]
    %v365 = vld [vmem:[#allocation8 + $0x58] sm:$0xff]
    %v366 = vld [vmem:[#allocation8 + $0x60] sm:$0xff]
    %v367 = vld [vmem:[#allocation8 + $0x68] sm:$0xf]
    %v368 = vld [vmem:[#allocation8 + $0x6c] sm:$0xff]
    %v369 = vld [vmem:[#allocation8 + $0x74] sm:$0xff]
    %v370 = vld [vmem:[#allocation8 + $0x7c] sm:$0xff]
    %v371 = vld [vmem:[#allocation8 + $0x84] sm:$0xff]
    %v372 = vld [vmem:[#allocation8 + $0x8c] sm:$0xf]
    %v373 = vld [vmem:[#allocation8 + $0x90] sm:$0xff]
    %v374 = vld [vmem:[#allocation8 + $0x98] sm:$0xff]
    %v375 = vld [vmem:[#allocation8 + $0xa0] sm:$0xff]
    %v376 = vld [vmem:[#allocation8 + $0xa8] sm:$0xff]
    %v377 = vld [vmem:[#allocation8 + $0xb0] sm:$0xf]
    %v378 = vld [vmem:[#allocation8 + $0xb4] sm:$0xff]
    %v379 = vld [vmem:[#allocation8 + $0xbc] sm:$0xff]
    %v380 = vld [vmem:[#allocation8 + $0xc4] sm:$0xff]
    %v381 = vld [vmem:[#allocation8 + $0xcc] sm:$0xff]
    %v382 = vld [vmem:[#allocation8 + $0xd4] sm:$0xf]
    %v383 = vld [vmem:[#allocation8 + $0xd8] sm:$0xff]
    %v384 = vld [vmem:[#allocation8 + $0xe0] sm:$0xff]
    %v385 = vld [vmem:[#allocation8 + $0xe8] sm:$0xff]
    %v386 = vld [vmem:[#allocation8 + $0xf0] sm:$0xff]
    %v387 = vld [vmem:[#allocation8 + $0xf8] sm:$0xf]
    %v388 = vld [vmem:[#allocation8 + $0xfc] sm:$0xff]
    %v389 = vld [vmem:[#allocation8 + $0x104] sm:$0xff]
    %v390 = vld [vmem:[#allocation8 + $0x10c] sm:$0xff]
    %v391 = vld [vmem:[#allocation8 + $0x114] sm:$0xff]
    %v392 = vld [vmem:[#allocation8 + $0x11c] sm:$0xf]
    %v393 = vld [vmem:[#allocation8 + $0x120] sm:$0xff]
    %v394 = vld [vmem:[#allocation8 + $0x128] sm:$0xff]
    %v395 = vld [vmem:[#allocation8 + $0x130] sm:$0xff]
    %v396 = vld [vmem:[#allocation8 + $0x138] sm:$0xff]
    %v397 = vld [vmem:[#allocation8 + $0x140] sm:$0xf]
    %v398 = vld [vmem:[#allocation8 + $0x144] sm:$0xff]
    %v399 = vld [vmem:[#allocation8 + $0x14c] sm:$0xff]
    %v400 = vld [vmem:[#allocation8 + $0x154] sm:$0xff]
    %v401 = vld [vmem:[#allocation8 + $0x15c] sm:$0xff]
    %v402 = vld [vmem:[#allocation8 + $0x164] sm:$0xf]
    %v403 = vld [vmem:[#allocation8 + $0x168] sm:$0xff]
    %v404 = vld [vmem:[#allocation8 + $0x170] sm:$0xff]
    %v405 = vld [vmem:[#allocation8 + $0x178] sm:$0xff]
    %v406 = vld [vmem:[#allocation8 + $0x180] sm:$0xff]
    %v407 = vld [vmem:[#allocation8 + $0x188] sm:$0xf]
    %v408 = vld [vmem:[#allocation8 + $0x18c] sm:$0xff]
    %v409 = vld [vmem:[#allocation8 + $0x194] sm:$0xff]
    %v410 = vld [vmem:[#allocation8 + $0x19c] sm:$0xff]
    %v411 = vld [vmem:[#allocation8 + $0x1a4] sm:$0xff]
    %v412 = vld [vmem:[#allocation8 + $0x1ac] sm:$0xf]
    %v413 = vld [vmem:[#allocation8 + $0x1b0] sm:$0xff]
    %v414 = vld [vmem:[#allocation8 + $0x1b8] sm:$0xff]
    %v415 = vld [vmem:[#allocation8 + $0x1c0] sm:$0xff]
    %v416 = vld [vmem:[#allocation8 + $0x1c8] sm:$0xff]
    %v417 = vld [vmem:[#allocation8 + $0x1d0] sm:$0xf]
    %v418 = vld [vmem:[#allocation8 + $0x1d4] sm:$0xff]
    %v419 = vld [vmem:[#allocation8 + $0x1dc] sm:$0xff]
    %v420 = vld [vmem:[#allocation8 + $0x1e4] sm:$0xff]
    %v421 = vld [vmem:[#allocation8 + $0x1ec] sm:$0xff]
    %v422 = vld [vmem:[#allocation8 + $0x1f4] sm:$0xf]
    %v423 = vld [vmem:[#allocation8 + $0x1f8] sm:$0xff]
    %v424 = vld [vmem:[#allocation8 + $0x200] sm:$0xff]
    %v425 = vld [vmem:[#allocation8 + $0x208] sm:$0xff]
    %v426 = vld [vmem:[#allocation8 + $0x210] sm:$0xff]
    %v427 = vld [vmem:[#allocation8 + $0x218] sm:$0xf]
    %v428 = vld [vmem:[#allocation8 + $0x21c] sm:$0xff]
    %v429 = vld [vmem:[#allocation8 + $0x224] sm:$0xff]
    %v430 = vld [vmem:[#allocation8 + $0x22c] sm:$0xff]
    %v431 = vld [vmem:[#allocation8 + $0x234] sm:$0xff]
    %v432 = vld [vmem:[#allocation8 + $0x23c] sm:$0xf]
    %v433 = vld [vmem:[#allocation8 + $0x240] sm:$0xff]
    %v434 = vld [vmem:[#allocation8 + $0x248] sm:$0xff]
    %v435 = vld [vmem:[#allocation8 + $0x250] sm:$0xff]
    %v436 = vld [vmem:[#allocation8 + $0x258] sm:$0xff]
    %v437 = vld [vmem:[#allocation8 + $0x260] sm:$0xf]
    %v438 = vld [vmem:[#allocation8 + $0x264] sm:$0xff]
    %v439 = vld [vmem:[#allocation8 + $0x26c] sm:$0xff]
    %v440 = vld [vmem:[#allocation8 + $0x274] sm:$0xff]
    %v441 = vld [vmem:[#allocation8 + $0x27c] sm:$0xff]
    %v442 = vld [vmem:[#allocation8 + $0x284] sm:$0xf]
    %v443 = vld [vmem:[#allocation8 + $0x288] sm:$0xff]
    %v444 = vld [vmem:[#allocation8 + $0x290] sm:$0xff]
    %v445 = vld [vmem:[#allocation8 + $0x298] sm:$0xff]
    %v446 = vld [vmem:[#allocation8 + $0x2a0] sm:$0xff]
    %v447 = vld [vmem:[#allocation8 + $0x2a8] sm:$0xf]
    %v448 = vld [vmem:[#allocation8 + $0x2ac] sm:$0xff]
    %v449 = vld [vmem:[#allocation8 + $0x2b4] sm:$0xff]
    %v450 = vld [vmem:[#allocation8 + $0x2bc] sm:$0xff]
    %v451 = vld [vmem:[#allocation8 + $0x2c4] sm:$0xff]
    %v452 = vld [vmem:[#allocation8 + $0x2cc] sm:$0xf]
    %v453 = vld [vmem:[#allocation8 + $0x2d0] sm:$0xff]
    %v454 = vld [vmem:[#allocation8 + $0x2d8] sm:$0xff]
    %v455 = vld [vmem:[#allocation8 + $0x2e0] sm:$0xff]
    %v456 = vld [vmem:[#allocation8 + $0x2e8] sm:$0xff]
    %v457 = vld [vmem:[#allocation8 + $0x2f0] sm:$0xf]
    %v458 = vld [vmem:[#allocation8 + $0x2f4] sm:$0xff]
    %v459 = vld [vmem:[#allocation8 + $0x2fc] sm:$0xff]
    %v460 = vld [vmem:[#allocation8 + $0x304] sm:$0xff]
    %v461 = vld [vmem:[#allocation8 + $0x30c] sm:$0xff]
    %v462 = vld [vmem:[#allocation8 + $0x314] sm:$0xf]
    %v463 = vld [vmem:[#allocation8 + $0x318] sm:$0xff]
    %v464 = vld [vmem:[#allocation8 + $0x320] sm:$0xff]
    %v465 = vld [vmem:[#allocation8 + $0x328] sm:$0xff]
    %v466 = vld [vmem:[#allocation8 + $0x330] sm:$0xff]
    %v467 = vld [vmem:[#allocation8 + $0x338] sm:$0xf]
    %v468 = vld [vmem:[#allocation8 + $0x33c] sm:$0xff]
    %v469 = vld [vmem:[#allocation8 + $0x344] sm:$0xff]
    %v470 = vld [vmem:[#allocation8 + $0x34c] sm:$0xff]
    %v471 = vld [vmem:[#allocation8 + $0x354] sm:$0xff]
    %v472 = vld [vmem:[#allocation8 + $0x35c] sm:$0xf]
    %v473 = vld [vmem:[#allocation8 + $0x360] sm:$0xff]
    %v474 = vld [vmem:[#allocation8 + $0x368] sm:$0xff]
    %v475 = vld [vmem:[#allocation8 + $0x370] sm:$0xff]
    %v476 = vld [vmem:[#allocation8 + $0x378] sm:$0xff]
    %v477 = vld [vmem:[#allocation8 + $0x380] sm:$0xf]
    %v478 = vld [vmem:[#allocation8 + $0x384] sm:$0xff]
    %v479 = vld [vmem:[#allocation8 + $0x38c] sm:$0xff]
    %v480 = vld [vmem:[#allocation8 + $0x394] sm:$0xff]
    %v481 = vld [vmem:[#allocation8 + $0x39c] sm:$0xff]
    %v482 = vld [vmem:[#allocation8 + $0x3a4] sm:$0xf]
    %v483 = vld [vmem:[#allocation8 + $0x3a8] sm:$0xff]
    %v484 = vld [vmem:[#allocation8 + $0x3b0] sm:$0xff]
    %v485 = vld [vmem:[#allocation8 + $0x3b8] sm:$0xff]
    %v486 = vld [vmem:[#allocation8 + $0x3c0] sm:$0xff]
    %v487 = vld [vmem:[#allocation8 + $0x3c8] sm:$0xf]
    %v488 = vld [vmem:[#allocation8 + $0x3cc] sm:$0xff]
    %v489 = vld [vmem:[#allocation8 + $0x3d4] sm:$0xff]
    %v490 = vld [vmem:[#allocation8 + $0x3dc] sm:$0xff]
    %v491 = vld [vmem:[#allocation8 + $0x3e4] sm:$0xff]
    %v492 = vld [vmem:[#allocation8 + $0x3ec] sm:$0xf]
    %v493 = vld [vmem:[#allocation8 + $0x3f0] sm:$0xff]
    %v494 = vld [vmem:[#allocation8 + $0x3f8] sm:$0xff]
    %v495 = vld [vmem:[#allocation8 + $0x400] sm:$0xff]
    %v496 = vld [vmem:[#allocation8 + $0x408] sm:$0xff]
    %v497 = vld [vmem:[#allocation8 + $0x410] sm:$0xf]
    %v498 = vld [vmem:[#allocation8 + $0x414] sm:$0xff]
    %v499 = vld [vmem:[#allocation8 + $0x41c] sm:$0xff]
    %v500 = vld [vmem:[#allocation8 + $0x424] sm:$0xff]
    %v501 = vld [vmem:[#allocation8 + $0x42c] sm:$0xff]
    %v502 = vld [vmem:[#allocation8 + $0x434] sm:$0xf]
    %v503 = vld [vmem:[#allocation8 + $0x438] sm:$0xff]
    %v504 = vld [vmem:[#allocation8 + $0x440] sm:$0xff]
    %v505 = vld [vmem:[#allocation8 + $0x448] sm:$0xff]
    %v506 = vld [vmem:[#allocation8 + $0x450] sm:$0xff]
    %v507 = vld [vmem:[#allocation8 + $0x458] sm:$0xf]
    %v508 = vld [vmem:[#allocation8 + $0x45c] sm:$0xff]
    %v509 = vld [vmem:[#allocation8 + $0x464] sm:$0xff]
    %v510 = vld [vmem:[#allocation8 + $0x46c] sm:$0xff]
    %v511 = vld [vmem:[#allocation8 + $0x474] sm:$0xff]
    %v512 = vld [vmem:[#allocation8 + $0x47c] sm:$0xf]
    %v513 = vld [vmem:[#allocation8 + $0x480] sm:$0xff]
    %v514 = vld [vmem:[#allocation8 + $0x488] sm:$0xff]
    %v515 = vld [vmem:[#allocation8 + $0x490] sm:$0xff]
    %v516 = vld [vmem:[#allocation8 + $0x498] sm:$0xff]
    %v517 = vld [vmem:[#allocation8 + $0x4a0] sm:$0xf]
    %v518 = vld [vmem:[#allocation8 + $0x4a4] sm:$0xff]
    %v519 = vld [vmem:[#allocation8 + $0x4ac] sm:$0xff]
    %v520 = vld [vmem:[#allocation8 + $0x4b4] sm:$0xff]
    %v521 = vld [vmem:[#allocation8 + $0x4bc] sm:$0xff]
    %v522 = vld [vmem:[#allocation8 + $0x4c4] sm:$0xf]
    %v523 = vld [vmem:[#allocation8 + $0x4c8] sm:$0xff]
    %v524 = vld [vmem:[#allocation8 + $0x4d0] sm:$0xff]
    %v525 = vld [vmem:[#allocation8 + $0x4d8] sm:$0xff]
    %v526 = vld [vmem:[#allocation8 + $0x4e0] sm:$0xff]
    %v527 = vld [vmem:[#allocation8 + $0x4e8] sm:$0xf]
    %v528 = vld [vmem:[#allocation8 + $0x4ec] sm:$0xff]
    %v529 = vld [vmem:[#allocation8 + $0x4f4] sm:$0xff]
    %v530 = vld [vmem:[#allocation8 + $0x4fc] sm:$0xff]
    %v531 = vld [vmem:[#allocation8 + $0x504] sm:$0xff]
    %v532 = vld [vmem:[#allocation8 + $0x50c] sm:$0xf]
    %v533 = vld [vmem:[#allocation8 + $0x510] sm:$0xff]
    %v534 = vld [vmem:[#allocation8 + $0x518] sm:$0xff]
    %v535 = vld [vmem:[#allocation8 + $0x520] sm:$0xff]
    %v536 = vld [vmem:[#allocation8 + $0x528] sm:$0xff]
    %v537 = vld [vmem:[#allocation8 + $0x530] sm:$0xf]
    %v538 = vld [vmem:[#allocation8 + $0x534] sm:$0xff]
    %v539 = vld [vmem:[#allocation8 + $0x53c] sm:$0xff]
    %v540 = vld [vmem:[#allocation8 + $0x544] sm:$0xff]
    %v541 = vld [vmem:[#allocation8 + $0x54c] sm:$0xff]
    %v542 = vld [vmem:[#allocation8 + $0x554] sm:$0xf]
    %v543 = vld [vmem:[#allocation8 + $0x558] sm:$0xff]
    %v544 = vld [vmem:[#allocation8 + $0x560] sm:$0xff]
    %v545 = vld [vmem:[#allocation8 + $0x568] sm:$0xff]
    %v546 = vld [vmem:[#allocation8 + $0x570] sm:$0xff]
    %v547 = vld [vmem:[#allocation8 + $0x578] sm:$0xf]
    %v548 = vld [vmem:[#allocation8 + $0x57c] sm:$0xff]
    %v549 = vld [vmem:[#allocation8 + $0x584] sm:$0xff]
    %v550 = vld [vmem:[#allocation8 + $0x58c] sm:$0xff]
    %v551 = vld [vmem:[#allocation8 + $0x594] sm:$0xff]
    %v552 = vld [vmem:[#allocation8 + $0x59c] sm:$0xf]
    %v553 = vld [vmem:[#allocation8 + $0x5a0] sm:$0xff]
    %v554 = vld [vmem:[#allocation8 + $0x5a8] sm:$0xff]
    %v555 = vld [vmem:[#allocation8 + $0x5b0] sm:$0xff]
    %v556 = vld [vmem:[#allocation8 + $0x5b8] sm:$0xff]
    %v557 = vld [vmem:[#allocation8 + $0x5c0] sm:$0xf]
    %v558 = vld [vmem:[#allocation8 + $0x5c4] sm:$0xff]
    %v559 = vld [vmem:[#allocation8 + $0x5cc] sm:$0xff]
    %v560 = vld [vmem:[#allocation8 + $0x5d4] sm:$0xff]
    %v561 = vld [vmem:[#allocation8 + $0x5dc] sm:$0xff]
    %v562 = vld [vmem:[#allocation8 + $0x5e4] sm:$0xf]
    %v563 = vld [vmem:[#allocation8 + $0x5e8] sm:$0xff]
    %v564 = vld [vmem:[#allocation8 + $0x5f0] sm:$0xff]
    %v565 = vld [vmem:[#allocation8 + $0x5f8] sm:$0xff]
    %v566 = vld [vmem:[#allocation8 + $0x600] sm:$0xff]
    %v567 = vld [vmem:[#allocation8 + $0x608] sm:$0xf]
    %v568 = vld [vmem:[#allocation8 + $0x60c] sm:$0xff]
    %v569 = vld [vmem:[#allocation8 + $0x614] sm:$0xff]
    %v570 = vld [vmem:[#allocation8 + $0x61c] sm:$0xff]
    %v571 = vld [vmem:[#allocation8 + $0x624] sm:$0xff]
    %v572 = vld [vmem:[#allocation8 + $0x62c] sm:$0xf]
    %v573 = vld [vmem:[#allocation8 + $0x630] sm:$0xff]
    %v574 = vld [vmem:[#allocation8 + $0x638] sm:$0xff]
    %v575 = vld [vmem:[#allocation8 + $0x640] sm:$0xff]
    %v576 = vld [vmem:[#allocation8 + $0x648] sm:$0xff]
    %v577 = vld [vmem:[#allocation8 + $0x650] sm:$0xf]
    %v578 = vld [vmem:[#allocation8 + $0x654] sm:$0xff]
    %v579 = vld [vmem:[#allocation8 + $0x65c] sm:$0xff]
    %v580 = vld [vmem:[#allocation8 + $0x664] sm:$0xff]
    %v581 = vld [vmem:[#allocation8 + $0x66c] sm:$0xff]
    %v582 = vld [vmem:[#allocation8 + $0x674] sm:$0xf]
    %v583 = vld [vmem:[#allocation8 + $0x678] sm:$0xff]
    %v584 = vld [vmem:[#allocation8 + $0x680] sm:$0xff]
    %v585 = vld [vmem:[#allocation8 + $0x688] sm:$0xff]
    %v586 = vld [vmem:[#allocation8 + $0x690] sm:$0xff]
    %v587 = vld [vmem:[#allocation8 + $0x698] sm:$0xf]
    %v588 = vld [vmem:[#allocation8 + $0x69c] sm:$0xff]
    %v589 = vld [vmem:[#allocation8 + $0x6a4] sm:$0xff]
    %v590 = vld [vmem:[#allocation8 + $0x6ac] sm:$0xff]
    %v591 = vld [vmem:[#allocation8 + $0x6b4] sm:$0xff]
    %v592 = vld [vmem:[#allocation8 + $0x6bc] sm:$0xf]
    %v833 = vunpack.c.l.b16 %v353
    %v834 = vunpack.c.h.b16 %v353
    %v835 = vunpack.c.l.b16 %v354
    %v836 = vunpack.c.h.b16 %v354
    %v837 = vunpack.c.l.b16 %v355
    %v838 = vunpack.c.h.b16 %v355
    %v839 = vunpack.c.l.b16 %v356
    %v840 = vunpack.c.h.b16 %v356
    %v841 = vunpack.c.l.b16 %v357
    %v842 = vunpack.c.l.b16 %v358
    %v843 = vunpack.c.h.b16 %v358
    %v844 = vunpack.c.l.b16 %v359
    %v845 = vunpack.c.h.b16 %v359
    %v846 = vunpack.c.l.b16 %v360
    %v847 = vunpack.c.h.b16 %v360
    %v848 = vunpack.c.l.b16 %v361
    %v849 = vunpack.c.h.b16 %v361
    %v850 = vunpack.c.l.b16 %v362
    %v851 = vunpack.c.l.b16 %v363
    %v852 = vunpack.c.h.b16 %v363
    %v853 = vunpack.c.l.b16 %v364
    %v854 = vunpack.c.h.b16 %v364
    %v855 = vunpack.c.l.b16 %v365
    %v856 = vunpack.c.h.b16 %v365
    %v857 = vunpack.c.l.b16 %v366
    %v858 = vunpack.c.h.b16 %v366
    %v859 = vunpack.c.l.b16 %v367
    %v860 = vunpack.c.l.b16 %v368
    %v861 = vunpack.c.h.b16 %v368
    %v862 = vunpack.c.l.b16 %v369
    %v863 = vunpack.c.h.b16 %v369
    %v864 = vunpack.c.l.b16 %v370
    %v865 = vunpack.c.h.b16 %v370
    %v866 = vunpack.c.l.b16 %v371
    %v867 = vunpack.c.h.b16 %v371
    %v868 = vunpack.c.l.b16 %v372
    %v869 = vunpack.c.l.b16 %v373
    %v870 = vunpack.c.h.b16 %v373
    %v871 = vunpack.c.l.b16 %v374
    %v872 = vunpack.c.h.b16 %v374
    %v873 = vunpack.c.l.b16 %v375
    %v874 = vunpack.c.h.b16 %v375
    %v875 = vunpack.c.l.b16 %v376
    %v876 = vunpack.c.h.b16 %v376
    %v877 = vunpack.c.l.b16 %v377
    %v878 = vunpack.c.l.b16 %v378
    %v879 = vunpack.c.h.b16 %v378
    %v880 = vunpack.c.l.b16 %v379
    %v881 = vunpack.c.h.b16 %v379
    %v882 = vunpack.c.l.b16 %v380
    %v883 = vunpack.c.h.b16 %v380
    %v884 = vunpack.c.l.b16 %v381
    %v885 = vunpack.c.h.b16 %v381
    %v886 = vunpack.c.l.b16 %v382
    %v887 = vunpack.c.l.b16 %v383
    %v888 = vunpack.c.h.b16 %v383
    %v889 = vunpack.c.l.b16 %v384
    %v890 = vunpack.c.h.b16 %v384
    %v891 = vunpack.c.l.b16 %v385
    %v892 = vunpack.c.h.b16 %v385
    %v893 = vunpack.c.l.b16 %v386
    %v894 = vunpack.c.h.b16 %v386
    %v895 = vunpack.c.l.b16 %v387
    %v896 = vunpack.c.l.b16 %v388
    %v897 = vunpack.c.h.b16 %v388
    %v898 = vunpack.c.l.b16 %v389
    %v899 = vunpack.c.h.b16 %v389
    %v900 = vunpack.c.l.b16 %v390
    %v901 = vunpack.c.h.b16 %v390
    %v902 = vunpack.c.l.b16 %v391
    %v903 = vunpack.c.h.b16 %v391
    %v904 = vunpack.c.l.b16 %v392
    %v905 = vunpack.c.l.b16 %v393
    %v906 = vunpack.c.h.b16 %v393
    %v907 = vunpack.c.l.b16 %v394
    %v908 = vunpack.c.h.b16 %v394
    %v909 = vunpack.c.l.b16 %v395
    %v910 = vunpack.c.h.b16 %v395
    %v911 = vunpack.c.l.b16 %v396
    %v912 = vunpack.c.h.b16 %v396
    %v913 = vunpack.c.l.b16 %v397
    %v914 = vunpack.c.l.b16 %v398
    %v915 = vunpack.c.h.b16 %v398
    %v916 = vunpack.c.l.b16 %v399
    %v917 = vunpack.c.h.b16 %v399
    %v918 = vunpack.c.l.b16 %v400
    %v919 = vunpack.c.h.b16 %v400
    %v920 = vunpack.c.l.b16 %v401
    %v921 = vunpack.c.h.b16 %v401
    %v922 = vunpack.c.l.b16 %v402
    %v923 = vunpack.c.l.b16 %v403
    %v924 = vunpack.c.h.b16 %v403
    %v925 = vunpack.c.l.b16 %v404
    %v926 = vunpack.c.h.b16 %v404
    %v927 = vunpack.c.l.b16 %v405
    %v928 = vunpack.c.h.b16 %v405
    %v929 = vunpack.c.l.b16 %v406
    %v930 = vunpack.c.h.b16 %v406
    %v931 = vunpack.c.l.b16 %v407
    %v932 = vunpack.c.l.b16 %v408
    %v933 = vunpack.c.h.b16 %v408
    %v934 = vunpack.c.l.b16 %v409
    %v935 = vunpack.c.h.b16 %v409
    %v936 = vunpack.c.l.b16 %v410
    %v937 = vunpack.c.h.b16 %v410
    %v938 = vunpack.c.l.b16 %v411
    %v939 = vunpack.c.h.b16 %v411
    %v940 = vunpack.c.l.b16 %v412
    %v941 = vunpack.c.l.b16 %v413
    %v942 = vunpack.c.h.b16 %v413
    %v943 = vunpack.c.l.b16 %v414
    %v944 = vunpack.c.h.b16 %v414
    %v945 = vunpack.c.l.b16 %v415
    %v946 = vunpack.c.h.b16 %v415
    %v947 = vunpack.c.l.b16 %v416
    %v948 = vunpack.c.h.b16 %v416
    %v949 = vunpack.c.l.b16 %v417
    %v950 = vunpack.c.l.b16 %v418
    %v951 = vunpack.c.h.b16 %v418
    %v952 = vunpack.c.l.b16 %v419
    %v953 = vunpack.c.h.b16 %v419
    %v954 = vunpack.c.l.b16 %v420
    %v955 = vunpack.c.h.b16 %v420
    %v956 = vunpack.c.l.b16 %v421
    %v957 = vunpack.c.h.b16 %v421
    %v958 = vunpack.c.l.b16 %v422
    %v959 = vunpack.c.l.b16 %v423
    %v960 = vunpack.c.h.b16 %v423
    %v961 = vunpack.c.l.b16 %v424
    %v962 = vunpack.c.h.b16 %v424
    %v963 = vunpack.c.l.b16 %v425
    %v964 = vunpack.c.h.b16 %v425
    %v965 = vunpack.c.l.b16 %v426
    %v966 = vunpack.c.h.b16 %v426
    %v967 = vunpack.c.l.b16 %v427
    %v968 = vunpack.c.l.b16 %v428
    %v969 = vunpack.c.h.b16 %v428
    %v970 = vunpack.c.l.b16 %v429
    %v971 = vunpack.c.h.b16 %v429
    %v972 = vunpack.c.l.b16 %v430
    %v973 = vunpack.c.h.b16 %v430
    %v974 = vunpack.c.l.b16 %v431
    %v975 = vunpack.c.h.b16 %v431
    %v976 = vunpack.c.l.b16 %v432
    %v977 = vunpack.c.l.b16 %v433
    %v978 = vunpack.c.h.b16 %v433
    %v979 = vunpack.c.l.b16 %v434
    %v980 = vunpack.c.h.b16 %v434
    %v981 = vunpack.c.l.b16 %v435
    %v982 = vunpack.c.h.b16 %v435
    %v983 = vunpack.c.l.b16 %v436
    %v984 = vunpack.c.h.b16 %v436
    %v985 = vunpack.c.l.b16 %v437
    %v986 = vunpack.c.l.b16 %v438
    %v987 = vunpack.c.h.b16 %v438
    %v988 = vunpack.c.l.b16 %v439
    %v989 = vunpack.c.h.b16 %v439
    %v990 = vunpack.c.l.b16 %v440
    %v991 = vunpack.c.h.b16 %v440
    %v992 = vunpack.c.l.b16 %v441
    %v993 = vunpack.c.h.b16 %v441
    %v994 = vunpack.c.l.b16 %v442
    %v995 = vunpack.c.l.b16 %v443
    %v996 = vunpack.c.h.b16 %v443
    %v997 = vunpack.c.l.b16 %v444
    %v998 = vunpack.c.h.b16 %v444
    %v999 = vunpack.c.l.b16 %v445
    %v1000 = vunpack.c.h.b16 %v445
    %v1001 = vunpack.c.l.b16 %v446
    %v1002 = vunpack.c.h.b16 %v446
    %v1003 = vunpack.c.l.b16 %v447
    %v1004 = vunpack.c.l.b16 %v448
    %v1005 = vunpack.c.h.b16 %v448
    %v1006 = vunpack.c.l.b16 %v449
    %v1007 = vunpack.c.h.b16 %v449
    %v1008 = vunpack.c.l.b16 %v450
    %v1009 = vunpack.c.h.b16 %v450
    %v1010 = vunpack.c.l.b16 %v451
    %v1011 = vunpack.c.h.b16 %v451
    %v1012 = vunpack.c.l.b16 %v452
    %v1013 = vunpack.c.l.b16 %v453
    %v1014 = vunpack.c.h.b16 %v453
    %v1015 = vunpack.c.l.b16 %v454
    %v1016 = vunpack.c.h.b16 %v454
    %v1017 = vunpack.c.l.b16 %v455
    %v1018 = vunpack.c.h.b16 %v455
    %v1019 = vunpack.c.l.b16 %v456
    %v1020 = vunpack.c.h.b16 %v456
    %v1021 = vunpack.c.l.b16 %v457
    %v1022 = vunpack.c.l.b16 %v458
    %v1023 = vunpack.c.h.b16 %v458
    %v1024 = vunpack.c.l.b16 %v459
    %v1025 = vunpack.c.h.b16 %v459
    %v1026 = vunpack.c.l.b16 %v460
    %v1027 = vunpack.c.h.b16 %v460
    %v1028 = vunpack.c.l.b16 %v461
    %v1029 = vunpack.c.h.b16 %v461
    %v1030 = vunpack.c.l.b16 %v462
    %v1031 = vunpack.c.l.b16 %v463
    %v1032 = vunpack.c.h.b16 %v463
    %v1033 = vunpack.c.l.b16 %v464
    %v1034 = vunpack.c.h.b16 %v464
    %v1035 = vunpack.c.l.b16 %v465
    %v1036 = vunpack.c.h.b16 %v465
    %v1037 = vunpack.c.l.b16 %v466
    %v1038 = vunpack.c.h.b16 %v466
    %v1039 = vunpack.c.l.b16 %v467
    %v1040 = vunpack.c.l.b16 %v468
    %v1041 = vunpack.c.h.b16 %v468
    %v1042 = vunpack.c.l.b16 %v469
    %v1043 = vunpack.c.h.b16 %v469
    %v1044 = vunpack.c.l.b16 %v470
    %v1045 = vunpack.c.h.b16 %v470
    %v1046 = vunpack.c.l.b16 %v471
    %v1047 = vunpack.c.h.b16 %v471
    %v1048 = vunpack.c.l.b16 %v472
    %v1049 = vunpack.c.l.b16 %v473
    %v1050 = vunpack.c.h.b16 %v473
    %v1051 = vunpack.c.l.b16 %v474
    %v1052 = vunpack.c.h.b16 %v474
    %v1053 = vunpack.c.l.b16 %v475
    %v1054 = vunpack.c.h.b16 %v475
    %v1055 = vunpack.c.l.b16 %v476
    %v1056 = vunpack.c.h.b16 %v476
    %v1057 = vunpack.c.l.b16 %v477
    %v1058 = vunpack.c.l.b16 %v478
    %v1059 = vunpack.c.h.b16 %v478
    %v1060 = vunpack.c.l.b16 %v479
    %v1061 = vunpack.c.h.b16 %v479
    %v1062 = vunpack.c.l.b16 %v480
    %v1063 = vunpack.c.h.b16 %v480
    %v1064 = vunpack.c.l.b16 %v481
    %v1065 = vunpack.c.h.b16 %v481
    %v1066 = vunpack.c.l.b16 %v482
    %v1067 = vunpack.c.l.b16 %v483
    %v1068 = vunpack.c.h.b16 %v483
    %v1069 = vunpack.c.l.b16 %v484
    %v1070 = vunpack.c.h.b16 %v484
    %v1071 = vunpack.c.l.b16 %v485
    %v1072 = vunpack.c.h.b16 %v485
    %v1073 = vunpack.c.l.b16 %v486
    %v1074 = vunpack.c.h.b16 %v486
    %v1075 = vunpack.c.l.b16 %v487
    %v1076 = vunpack.c.l.b16 %v488
    %v1077 = vunpack.c.h.b16 %v488
    %v1078 = vunpack.c.l.b16 %v489
    %v1079 = vunpack.c.h.b16 %v489
    %v1080 = vunpack.c.l.b16 %v490
    %v1081 = vunpack.c.h.b16 %v490
    %v1082 = vunpack.c.l.b16 %v491
    %v1083 = vunpack.c.h.b16 %v491
    %v1084 = vunpack.c.l.b16 %v492
    %v1085 = vunpack.c.l.b16 %v493
    %v1086 = vunpack.c.h.b16 %v493
    %v1087 = vunpack.c.l.b16 %v494
    %v1088 = vunpack.c.h.b16 %v494
    %v1089 = vunpack.c.l.b16 %v495
    %v1090 = vunpack.c.h.b16 %v495
    %v1091 = vunpack.c.l.b16 %v496
    %v1092 = vunpack.c.h.b16 %v496
    %v1093 = vunpack.c.l.b16 %v497
    %v1094 = vunpack.c.l.b16 %v498
    %v1095 = vunpack.c.h.b16 %v498
    %v1096 = vunpack.c.l.b16 %v499
    %v1097 = vunpack.c.h.b16 %v499
    %v1098 = vunpack.c.l.b16 %v500
    %v1099 = vunpack.c.h.b16 %v500
    %v1100 = vunpack.c.l.b16 %v501
    %v1101 = vunpack.c.h.b16 %v501
    %v1102 = vunpack.c.l.b16 %v502
    %v1103 = vunpack.c.l.b16 %v503
    %v1104 = vunpack.c.h.b16 %v503
    %v1105 = vunpack.c.l.b16 %v504
    %v1106 = vunpack.c.h.b16 %v504
    %v1107 = vunpack.c.l.b16 %v505
    %v1108 = vunpack.c.h.b16 %v505
    %v1109 = vunpack.c.l.b16 %v506
    %v1110 = vunpack.c.h.b16 %v506
    %v1111 = vunpack.c.l.b16 %v507
    %v1112 = vunpack.c.l.b16 %v508
    %v1113 = vunpack.c.h.b16 %v508
    %v1114 = vunpack.c.l.b16 %v509
    %v1115 = vunpack.c.h.b16 %v509
    %v1116 = vunpack.c.l.b16 %v510
    %v1117 = vunpack.c.h.b16 %v510
    %v1118 = vunpack.c.l.b16 %v511
    %v1119 = vunpack.c.h.b16 %v511
    %v1120 = vunpack.c.l.b16 %v512
    %v1121 = vunpack.c.l.b16 %v513
    %v1122 = vunpack.c.h.b16 %v513
    %v1123 = vunpack.c.l.b16 %v514
    %v1124 = vunpack.c.h.b16 %v514
    %v1125 = vunpack.c.l.b16 %v515
    %v1126 = vunpack.c.h.b16 %v515
    %v1127 = vunpack.c.l.b16 %v516
    %v1128 = vunpack.c.h.b16 %v516
    %v1129 = vunpack.c.l.b16 %v517
    %v1130 = vunpack.c.l.b16 %v518
    %v1131 = vunpack.c.h.b16 %v518
    %v1132 = vunpack.c.l.b16 %v519
    %v1133 = vunpack.c.h.b16 %v519
    %v1134 = vunpack.c.l.b16 %v520
    %v1135 = vunpack.c.h.b16 %v520
    %v1136 = vunpack.c.l.b16 %v521
    %v1137 = vunpack.c.h.b16 %v521
    %v1138 = vunpack.c.l.b16 %v522
    %v1139 = vunpack.c.l.b16 %v523
    %v1140 = vunpack.c.h.b16 %v523
    %v1141 = vunpack.c.l.b16 %v524
    %v1142 = vunpack.c.h.b16 %v524
    %v1143 = vunpack.c.l.b16 %v525
    %v1144 = vunpack.c.h.b16 %v525
    %v1145 = vunpack.c.l.b16 %v526
    %v1146 = vunpack.c.h.b16 %v526
    %v1147 = vunpack.c.l.b16 %v527
    %v1148 = vunpack.c.l.b16 %v528
    %v1149 = vunpack.c.h.b16 %v528
    %v1150 = vunpack.c.l.b16 %v529
    %v1151 = vunpack.c.h.b16 %v529
    %v1152 = vunpack.c.l.b16 %v530
    %v1153 = vunpack.c.h.b16 %v530
    %v1154 = vunpack.c.l.b16 %v531
    %v1155 = vunpack.c.h.b16 %v531
    %v1156 = vunpack.c.l.b16 %v532
    %v1157 = vunpack.c.l.b16 %v533
    %v1158 = vunpack.c.h.b16 %v533
    %v1159 = vunpack.c.l.b16 %v534
    %v1160 = vunpack.c.h.b16 %v534
    %v1161 = vunpack.c.l.b16 %v535
    %v1162 = vunpack.c.h.b16 %v535
    %v1163 = vunpack.c.l.b16 %v536
    %v1164 = vunpack.c.h.b16 %v536
    %v1165 = vunpack.c.l.b16 %v537
    %v1166 = vunpack.c.l.b16 %v538
    %v1167 = vunpack.c.h.b16 %v538
    %v1168 = vunpack.c.l.b16 %v539
    %v1169 = vunpack.c.h.b16 %v539
    %v1170 = vunpack.c.l.b16 %v540
    %v1171 = vunpack.c.h.b16 %v540
    %v1172 = vunpack.c.l.b16 %v541
    %v1173 = vunpack.c.h.b16 %v541
    %v1174 = vunpack.c.l.b16 %v542
    %v1175 = vunpack.c.l.b16 %v543
    %v1176 = vunpack.c.h.b16 %v543
    %v1177 = vunpack.c.l.b16 %v544
    %v1178 = vunpack.c.h.b16 %v544
    %v1179 = vunpack.c.l.b16 %v545
    %v1180 = vunpack.c.h.b16 %v545
    %v1181 = vunpack.c.l.b16 %v546
    %v1182 = vunpack.c.h.b16 %v546
    %v1183 = vunpack.c.l.b16 %v547
    %v1184 = vunpack.c.l.b16 %v548
    %v1185 = vunpack.c.h.b16 %v548
    %v1186 = vunpack.c.l.b16 %v549
    %v1187 = vunpack.c.h.b16 %v549
    %v1188 = vunpack.c.l.b16 %v550
    %v1189 = vunpack.c.h.b16 %v550
    %v1190 = vunpack.c.l.b16 %v551
    %v1191 = vunpack.c.h.b16 %v551
    %v1192 = vunpack.c.l.b16 %v552
    %v1193 = vunpack.c.l.b16 %v553
    %v1194 = vunpack.c.h.b16 %v553
    %v1195 = vunpack.c.l.b16 %v554
    %v1196 = vunpack.c.h.b16 %v554
    %v1197 = vunpack.c.l.b16 %v555
    %v1198 = vunpack.c.h.b16 %v555
    %v1199 = vunpack.c.l.b16 %v556
    %v1200 = vunpack.c.h.b16 %v556
    %v1201 = vunpack.c.l.b16 %v557
    %v1202 = vunpack.c.l.b16 %v558
    %v1203 = vunpack.c.h.b16 %v558
    %v1204 = vunpack.c.l.b16 %v559
    %v1205 = vunpack.c.h.b16 %v559
    %v1206 = vunpack.c.l.b16 %v560
    %v1207 = vunpack.c.h.b16 %v560
    %v1208 = vunpack.c.l.b16 %v561
    %v1209 = vunpack.c.h.b16 %v561
    %v1210 = vunpack.c.l.b16 %v562
    %v1211 = vunpack.c.l.b16 %v563
    %v1212 = vunpack.c.h.b16 %v563
    %v1213 = vunpack.c.l.b16 %v564
    %v1214 = vunpack.c.h.b16 %v564
    %v1215 = vunpack.c.l.b16 %v565
    %v1216 = vunpack.c.h.b16 %v565
    %v1217 = vunpack.c.l.b16 %v566
    %v1218 = vunpack.c.h.b16 %v566
    %v1219 = vunpack.c.l.b16 %v567
    %v1220 = vunpack.c.l.b16 %v568
    %v1221 = vunpack.c.h.b16 %v568
    %v1222 = vunpack.c.l.b16 %v569
    %v1223 = vunpack.c.h.b16 %v569
    %v1224 = vunpack.c.l.b16 %v570
    %v1225 = vunpack.c.h.b16 %v570
    %v1226 = vunpack.c.l.b16 %v571
    %v1227 = vunpack.c.h.b16 %v571
    %v1228 = vunpack.c.l.b16 %v572
    %v1229 = vunpack.c.l.b16 %v573
    %v1230 = vunpack.c.h.b16 %v573
    %v1231 = vunpack.c.l.b16 %v574
    %v1232 = vunpack.c.h.b16 %v574
    %v1233 = vunpack.c.l.b16 %v575
    %v1234 = vunpack.c.h.b16 %v575
    %v1235 = vunpack.c.l.b16 %v576
    %v1236 = vunpack.c.h.b16 %v576
    %v1237 = vunpack.c.l.b16 %v577
    %v1238 = vunpack.c.l.b16 %v578
    %v1239 = vunpack.c.h.b16 %v578
    %v1240 = vunpack.c.l.b16 %v579
    %v1241 = vunpack.c.h.b16 %v579
    %v1242 = vunpack.c.l.b16 %v580
    %v1243 = vunpack.c.h.b16 %v580
    %v1244 = vunpack.c.l.b16 %v581
    %v1245 = vunpack.c.h.b16 %v581
    %v1246 = vunpack.c.l.b16 %v582
    %v1247 = vunpack.c.l.b16 %v583
    %v1248 = vunpack.c.h.b16 %v583
    %v1249 = vunpack.c.l.b16 %v584
    %v1250 = vunpack.c.h.b16 %v584
    %v1251 = vunpack.c.l.b16 %v585
    %v1252 = vunpack.c.h.b16 %v585
    %v1253 = vunpack.c.l.b16 %v586
    %v1254 = vunpack.c.h.b16 %v586
    %v1255 = vunpack.c.l.b16 %v587
    %v1256 = vunpack.c.l.b16 %v588
    %v1257 = vunpack.c.h.b16 %v588
    %v1258 = vunpack.c.l.b16 %v589
    %v1259 = vunpack.c.h.b16 %v589
    %v1260 = vunpack.c.l.b16 %v590
    %v1261 = vunpack.c.h.b16 %v590
    %v1262 = vunpack.c.l.b16 %v591
    %v1263 = vunpack.c.h.b16 %v591
    %v1264 = vunpack.c.l.b16 %v592
    %v1265 = vpack.c.b16 %v842, %v833
    %v1266 = vpack.c.b16 %v843, %v834
    %v1267 = vpack.c.b16 %v844, %v835
    %v1268 = vpack.c.b16 %v845, %v836
    %v1269 = vpack.c.b16 %v846, %v837
    %v1270 = vpack.c.b16 %v847, %v838
    %v1271 = vpack.c.b16 %v848, %v839
    %v1272 = vpack.c.b16 %v849, %v840
    %v1273 = vpack.c.b16 %v850, %v841
    %v1274 = vpack.c.b16 %v860, %v851
    %v1275 = vpack.c.b16 %v861, %v852
    %v1276 = vpack.c.b16 %v862, %v853
    %v1277 = vpack.c.b16 %v863, %v854
    %v1278 = vpack.c.b16 %v864, %v855
    %v1279 = vpack.c.b16 %v865, %v856
    %v1280 = vpack.c.b16 %v866, %v857
    %v1281 = vpack.c.b16 %v867, %v858
    %v1282 = vpack.c.b16 %v868, %v859
    %v1283 = vpack.c.b16 %v878, %v869
    %v1284 = vpack.c.b16 %v879, %v870
    %v1285 = vpack.c.b16 %v880, %v871
    %v1286 = vpack.c.b16 %v881, %v872
    %v1287 = vpack.c.b16 %v882, %v873
    %v1288 = vpack.c.b16 %v883, %v874
    %v1289 = vpack.c.b16 %v884, %v875
    %v1290 = vpack.c.b16 %v885, %v876
    %v1291 = vpack.c.b16 %v886, %v877
    %v1292 = vpack.c.b16 %v896, %v887
    %v1293 = vpack.c.b16 %v897, %v888
    %v1294 = vpack.c.b16 %v898, %v889
    %v1295 = vpack.c.b16 %v899, %v890
    %v1296 = vpack.c.b16 %v900, %v891
    %v1297 = vpack.c.b16 %v901, %v892
    %v1298 = vpack.c.b16 %v902, %v893
    %v1299 = vpack.c.b16 %v903, %v894
    %v1300 = vpack.c.b16 %v904, %v895
    %v1301 = vpack.c.b16 %v914, %v905
    %v1302 = vpack.c.b16 %v915, %v906
    %v1303 = vpack.c.b16 %v916, %v907
    %v1304 = vpack.c.b16 %v917, %v908
    %v1305 = vpack.c.b16 %v918, %v909
    %v1306 = vpack.c.b16 %v919, %v910
    %v1307 = vpack.c.b16 %v920, %v911
    %v1308 = vpack.c.b16 %v921, %v912
    %v1309 = vpack.c.b16 %v922, %v913
    %v1310 = vpack.c.b16 %v932, %v923
    %v1311 = vpack.c.b16 %v933, %v924
    %v1312 = vpack.c.b16 %v934, %v925
    %v1313 = vpack.c.b16 %v935, %v926
    %v1314 = vpack.c.b16 %v936, %v927
    %v1315 = vpack.c.b16 %v937, %v928
    %v1316 = vpack.c.b16 %v938, %v929
    %v1317 = vpack.c.b16 %v939, %v930
    %v1318 = vpack.c.b16 %v940, %v931
    %v1319 = vpack.c.b16 %v950, %v941
    %v1320 = vpack.c.b16 %v951, %v942
    %v1321 = vpack.c.b16 %v952, %v943
    %v1322 = vpack.c.b16 %v953, %v944
    %v1323 = vpack.c.b16 %v954, %v945
    %v1324 = vpack.c.b16 %v955, %v946
    %v1325 = vpack.c.b16 %v956, %v947
    %v1326 = vpack.c.b16 %v957, %v948
    %v1327 = vpack.c.b16 %v958, %v949
    %v1328 = vpack.c.b16 %v968, %v959
    %v1329 = vpack.c.b16 %v969, %v960
    %v1330 = vpack.c.b16 %v970, %v961
    %v1331 = vpack.c.b16 %v971, %v962
    %v1332 = vpack.c.b16 %v972, %v963
    %v1333 = vpack.c.b16 %v973, %v964
    %v1334 = vpack.c.b16 %v974, %v965
    %v1335 = vpack.c.b16 %v975, %v966
    %v1336 = vpack.c.b16 %v976, %v967
    %v1337 = vpack.c.b16 %v986, %v977
    %v1338 = vpack.c.b16 %v987, %v978
    %v1339 = vpack.c.b16 %v988, %v979
    %v1340 = vpack.c.b16 %v989, %v980
    %v1341 = vpack.c.b16 %v990, %v981
    %v1342 = vpack.c.b16 %v991, %v982
    %v1343 = vpack.c.b16 %v992, %v983
    %v1344 = vpack.c.b16 %v993, %v984
    %v1345 = vpack.c.b16 %v994, %v985
    %v1346 = vpack.c.b16 %v1004, %v995
    %v1347 = vpack.c.b16 %v1005, %v996
    %v1348 = vpack.c.b16 %v1006, %v997
    %v1349 = vpack.c.b16 %v1007, %v998
    %v1350 = vpack.c.b16 %v1008, %v999
    %v1351 = vpack.c.b16 %v1009, %v1000
    %v1352 = vpack.c.b16 %v1010, %v1001
    %v1353 = vpack.c.b16 %v1011, %v1002
    %v1354 = vpack.c.b16 %v1012, %v1003
    %v1355 = vpack.c.b16 %v1022, %v1013
    %v1356 = vpack.c.b16 %v1023, %v1014
    %v1357 = vpack.c.b16 %v1024, %v1015
    %v1358 = vpack.c.b16 %v1025, %v1016
    %v1359 = vpack.c.b16 %v1026, %v1017
    %v1360 = vpack.c.b16 %v1027, %v1018
    %v1361 = vpack.c.b16 %v1028, %v1019
    %v1362 = vpack.c.b16 %v1029, %v1020
    %v1363 = vpack.c.b16 %v1030, %v1021
    %v1364 = vpack.c.b16 %v1040, %v1031
    %v1365 = vpack.c.b16 %v1041, %v1032
    %v1366 = vpack.c.b16 %v1042, %v1033
    %v1367 = vpack.c.b16 %v1043, %v1034
    %v1368 = vpack.c.b16 %v1044, %v1035
    %v1369 = vpack.c.b16 %v1045, %v1036
    %v1370 = vpack.c.b16 %v1046, %v1037
    %v1371 = vpack.c.b16 %v1047, %v1038
    %v1372 = vpack.c.b16 %v1048, %v1039
    %v1373 = vpack.c.b16 %v1058, %v1049
    %v1374 = vpack.c.b16 %v1059, %v1050
    %v1375 = vpack.c.b16 %v1060, %v1051
    %v1376 = vpack.c.b16 %v1061, %v1052
    %v1377 = vpack.c.b16 %v1062, %v1053
    %v1378 = vpack.c.b16 %v1063, %v1054
    %v1379 = vpack.c.b16 %v1064, %v1055
    %v1380 = vpack.c.b16 %v1065, %v1056
    %v1381 = vpack.c.b16 %v1066, %v1057
    %v1382 = vpack.c.b16 %v1076, %v1067
    %v1383 = vpack.c.b16 %v1077, %v1068
    %v1384 = vpack.c.b16 %v1078, %v1069
    %v1385 = vpack.c.b16 %v1079, %v1070
    %v1386 = vpack.c.b16 %v1080, %v1071
    %v1387 = vpack.c.b16 %v1081, %v1072
    %v1388 = vpack.c.b16 %v1082, %v1073
    %v1389 = vpack.c.b16 %v1083, %v1074
    %v1390 = vpack.c.b16 %v1084, %v1075
    %v1391 = vpack.c.b16 %v1094, %v1085
    %v1392 = vpack.c.b16 %v1095, %v1086
    %v1393 = vpack.c.b16 %v1096, %v1087
    %v1394 = vpack.c.b16 %v1097, %v1088
    %v1395 = vpack.c.b16 %v1098, %v1089
    %v1396 = vpack.c.b16 %v1099, %v1090
    %v1397 = vpack.c.b16 %v1100, %v1091
    %v1398 = vpack.c.b16 %v1101, %v1092
    %v1399 = vpack.c.b16 %v1102, %v1093
    %v1400 = vpack.c.b16 %v1112, %v1103
    %v1401 = vpack.c.b16 %v1113, %v1104
    %v1402 = vpack.c.b16 %v1114, %v1105
    %v1403 = vpack.c.b16 %v1115, %v1106
    %v1404 = vpack.c.b16 %v1116, %v1107
    %v1405 = vpack.c.b16 %v1117, %v1108
    %v1406 = vpack.c.b16 %v1118, %v1109
    %v1407 = vpack.c.b16 %v1119, %v1110
    %v1408 = vpack.c.b16 %v1120, %v1111
    %v1409 = vpack.c.b16 %v1130, %v1121
    %v1410 = vpack.c.b16 %v1131, %v1122
    %v1411 = vpack.c.b16 %v1132, %v1123
    %v1412 = vpack.c.b16 %v1133, %v1124
    %v1413 = vpack.c.b16 %v1134, %v1125
    %v1414 = vpack.c.b16 %v1135, %v1126
    %v1415 = vpack.c.b16 %v1136, %v1127
    %v1416 = vpack.c.b16 %v1137, %v1128
    %v1417 = vpack.c.b16 %v1138, %v1129
    %v1418 = vpack.c.b16 %v1148, %v1139
    %v1419 = vpack.c.b16 %v1149, %v1140
    %v1420 = vpack.c.b16 %v1150, %v1141
    %v1421 = vpack.c.b16 %v1151, %v1142
    %v1422 = vpack.c.b16 %v1152, %v1143
    %v1423 = vpack.c.b16 %v1153, %v1144
    %v1424 = vpack.c.b16 %v1154, %v1145
    %v1425 = vpack.c.b16 %v1155, %v1146
    %v1426 = vpack.c.b16 %v1156, %v1147
    %v1427 = vpack.c.b16 %v1166, %v1157
    %v1428 = vpack.c.b16 %v1167, %v1158
    %v1429 = vpack.c.b16 %v1168, %v1159
    %v1430 = vpack.c.b16 %v1169, %v1160
    %v1431 = vpack.c.b16 %v1170, %v1161
    %v1432 = vpack.c.b16 %v1171, %v1162
    %v1433 = vpack.c.b16 %v1172, %v1163
    %v1434 = vpack.c.b16 %v1173, %v1164
    %v1435 = vpack.c.b16 %v1174, %v1165
    %v1436 = vpack.c.b16 %v1184, %v1175
    %v1437 = vpack.c.b16 %v1185, %v1176
    %v1438 = vpack.c.b16 %v1186, %v1177
    %v1439 = vpack.c.b16 %v1187, %v1178
    %v1440 = vpack.c.b16 %v1188, %v1179
    %v1441 = vpack.c.b16 %v1189, %v1180
    %v1442 = vpack.c.b16 %v1190, %v1181
    %v1443 = vpack.c.b16 %v1191, %v1182
    %v1444 = vpack.c.b16 %v1192, %v1183
    %v1445 = vpack.c.b16 %v1202, %v1193
    %v1446 = vpack.c.b16 %v1203, %v1194
    %v1447 = vpack.c.b16 %v1204, %v1195
    %v1448 = vpack.c.b16 %v1205, %v1196
    %v1449 = vpack.c.b16 %v1206, %v1197
    %v1450 = vpack.c.b16 %v1207, %v1198
    %v1451 = vpack.c.b16 %v1208, %v1199
    %v1452 = vpack.c.b16 %v1209, %v1200
    %v1453 = vpack.c.b16 %v1210, %v1201
    %v1454 = vpack.c.b16 %v1220, %v1211
    %v1455 = vpack.c.b16 %v1221, %v1212
    %v1456 = vpack.c.b16 %v1222, %v1213
    %v1457 = vpack.c.b16 %v1223, %v1214
    %v1458 = vpack.c.b16 %v1224, %v1215
    %v1459 = vpack.c.b16 %v1225, %v1216
    %v1460 = vpack.c.b16 %v1226, %v1217
    %v1461 = vpack.c.b16 %v1227, %v1218
    %v1462 = vpack.c.b16 %v1228, %v1219
    %v1463 = vpack.c.b16 %v1238, %v1229
    %v1464 = vpack.c.b16 %v1239, %v1230
    %v1465 = vpack.c.b16 %v1240, %v1231
    %v1466 = vpack.c.b16 %v1241, %v1232
    %v1467 = vpack.c.b16 %v1242, %v1233
    %v1468 = vpack.c.b16 %v1243, %v1234
    %v1469 = vpack.c.b16 %v1244, %v1235
    %v1470 = vpack.c.b16 %v1245, %v1236
    %v1471 = vpack.c.b16 %v1246, %v1237
    %v1472 = vpack.c.b16 %v1256, %v1247
    %v1473 = vpack.c.b16 %v1257, %v1248
    %v1474 = vpack.c.b16 %v1258, %v1249
    %v1475 = vpack.c.b16 %v1259, %v1250
    %v1476 = vpack.c.b16 %v1260, %v1251
    %v1477 = vpack.c.b16 %v1261, %v1252
    %v1478 = vpack.c.b16 %v1262, %v1253
    %v1479 = vpack.c.b16 %v1263, %v1254
    %v1480 = vpack.c.b16 %v1264, %v1255
    %1697 = vmatprep.subr.bf16.mxu0 %v1329
    %1698 = vmatpush1.bf16.msra.mxu0 %v1328
    %1699 = vmatprep.subr.bf16.mxu0 %v1320
    %1700 = vmatpush1.bf16.msra.mxu0 %v1319
    %1701 = vmatprep.subr.bf16.mxu0 %v1311
    %1702 = vmatpush1.bf16.msra.mxu0 %v1310
    %1703 = vmatprep.subr.bf16.mxu0 %v1302
    %1704 = vmatpush1.bf16.msra.mxu0 %v1301
    %1705 = vmatprep.subr.bf16.mxu0 %v1293
    %1706 = vmatpush1.bf16.msra.mxu0 %v1292
    %1707 = vmatprep.subr.bf16.mxu0 %v1284
    %1708 = vmatpush1.bf16.msra.mxu0 %v1283
    %1709 = vmatprep.subr.bf16.mxu0 %v1275
    %1710 = vmatpush1.bf16.msra.mxu0 %v1274
    %1711 = vmatprep.subr.bf16.mxu0 %v1266
    %1712 = vmatpush1.bf16.msra.mxu0 %v1265
    %1713 = vmatprep.subr.bf16.mxu0 %v1401
    %1714 = vmatpush2.bf16.msra.mxu0 %v1400
    %1715 = vmatprep.subr.bf16.mxu0 %v1392
    %1716 = vmatpush2.bf16.msra.mxu0 %v1391
    %1717 = vmatprep.subr.bf16.mxu0 %v1383
    %1718 = vmatpush2.bf16.msra.mxu0 %v1382
    %1719 = vmatprep.subr.bf16.mxu0 %v1374
    %1720 = vmatpush2.bf16.msra.mxu0 %v1373
    %1721 = vmatprep.subr.bf16.mxu0 %v1365
    %1722 = vmatpush2.bf16.msra.mxu0 %v1364
    %1723 = vmatprep.subr.bf16.mxu0 %v1356
    %1724 = vmatpush2.bf16.msra.mxu0 %v1355
    %1725 = vmatprep.subr.bf16.mxu0 %v1347
    %1726 = vmatpush2.bf16.msra.mxu0 %v1346
    %1727 = vmatprep.subr.bf16.mxu0 %v1338
    %1728 = vmatpush2.bf16.msra.mxu0 %v1337
    %1729 = vmatprep.mubr.bf16.mxu0 %v348
    %1730 = vmatmul.mubr.bf16.gmra.mxu0 %v347
    %v1731 = vpop.f32.mrf.mxu0
    %v1732 = vadd.f32 0.0, %v1731
    %v1733 = vpop.f32.mrf.mxu0
    %v1734 = vadd.f32 0.0, %v1733
    %v1735 = vpop.f32.mrf.mxu0
    %v1736 = vadd.f32 0.0, %v1735
    %v1737 = vpop.f32.mrf.mxu0
    %v1738 = vadd.f32 0.0, %v1737
    %1739 = vmatprep.mubr.bf16.mxu0 %v351
    %1740 = vmatmul.mubr.bf16.gmra.mxu0 %v350
    %v1741 = vpop.f32.mrf.mxu0
    %v1742 = vadd.f32 0.0, %v1741
    %v1743 = vpop.f32.mrf.mxu0
    %v1744 = vadd.f32 0.0, %v1743
    %v1745 = vpop.f32.mrf.mxu0
    %v1746 = vadd.f32 0.0, %v1745
    %v1747 = vpop.f32.mrf.mxu0
    %v1748 = vadd.f32 0.0, %v1747
    %1749 = vdwg.mxu0
    %1750 = vmatprep.subr.bf16.mxu0 %v1473
    %1751 = vmatpush1.bf16.msra.mxu0 %v1472
    %1752 = vmatprep.subr.bf16.mxu0 %v1464
    %1753 = vmatpush1.bf16.msra.mxu0 %v1463
    %1754 = vmatprep.subr.bf16.mxu0 %v1455
    %1755 = vmatpush1.bf16.msra.mxu0 %v1454
    %1756 = vmatprep.subr.bf16.mxu0 %v1446
    %1757 = vmatpush1.bf16.msra.mxu0 %v1445
    %1758 = vmatprep.subr.bf16.mxu0 %v1437
    %1759 = vmatpush1.bf16.msra.mxu0 %v1436
    %1760 = vmatprep.subr.bf16.mxu0 %v1428
    %1761 = vmatpush1.bf16.msra.mxu0 %v1427
    %1762 = vmatprep.subr.bf16.mxu0 %v1419
    %1763 = vmatpush1.bf16.msra.mxu0 %v1418
    %1764 = vmatprep.subr.bf16.mxu0 %v1410
    %1765 = vmatpush1.bf16.msra.mxu0 %v1409
    %1766 = vmatprep.subr.bf16.mxu0 0
    %1767 = vmatpush2.bf16.msra.mxu0 0
    %1768 = vmatprep.subr.bf16.mxu0 0
    %1769 = vmatpush2.bf16.msra.mxu0 0
    %1770 = vmatprep.subr.bf16.mxu0 0
    %1771 = vmatpush2.bf16.msra.mxu0 0
    %1772 = vmatprep.subr.bf16.mxu0 0
    %1773 = vmatpush2.bf16.msra.mxu0 0
    %1774 = vmatprep.subr.bf16.mxu0 0
    %1775 = vmatpush2.bf16.msra.mxu0 0
    %1776 = vmatprep.subr.bf16.mxu0 0
    %1777 = vmatpush2.bf16.msra.mxu0 0
    %1778 = vmatprep.subr.bf16.mxu0 0
    %1779 = vmatpush2.bf16.msra.mxu0 0
    %1780 = vmatprep.subr.bf16.mxu0 0
    %1781 = vmatpush2.bf16.msra.mxu0 0
    %1782 = vmatprep.mubr.bf16.mxu0 0
    %1783 = vmatmul.mubr.bf16.gmra.mxu0 %v349
    %v1784 = vpop.f32.mrf.mxu0
    %v1785 = vadd.f32 %v1732, %v1784
    %v1786 = vpop.f32.mrf.mxu0
    %v1787 = vadd.f32 %v1734, %v1786
    %v1788 = vpop.f32.mrf.mxu0
    %v1789 = vadd.f32 %v1736, %v1788
    %v1790 = vpop.f32.mrf.mxu0
    %v1791 = vadd.f32 %v1738, %v1790
    %1792 = vmatprep.mubr.bf16.mxu0 0
    %1793 = vmatmul.mubr.bf16.gmra.mxu0 %v352
    %v1794 = vpop.f32.mrf.mxu0
    %v1795 = vadd.f32 %v1742, %v1794
    %v1796 = vpop.f32.mrf.mxu0
    %v1797 = vadd.f32 %v1744, %v1796
    %v1798 = vpop.f32.mrf.mxu0
    %v1799 = vadd.f32 %v1746, %v1798
    %v1800 = vpop.f32.mrf.mxu0
    %v1801 = vadd.f32 %v1748, %v1800
    %1802 = vdwg.mxu0
    %1803 = vmatprep.subr.bf16.mxu0 %v1331
    %1804 = vmatpush1.bf16.msra.mxu0 %v1330
    %1805 = vmatprep.subr.bf16.mxu0 %v1322
    %1806 = vmatpush1.bf16.msra.mxu0 %v1321
    %1807 = vmatprep.subr.bf16.mxu0 %v1313
    %1808 = vmatpush1.bf16.msra.mxu0 %v1312
    %1809 = vmatprep.subr.bf16.mxu0 %v1304
    %1810 = vmatpush1.bf16.msra.mxu0 %v1303
    %1811 = vmatprep.subr.bf16.mxu0 %v1295
    %1812 = vmatpush1.bf16.msra.mxu0 %v1294
    %1813 = vmatprep.subr.bf16.mxu0 %v1286
    %1814 = vmatpush1.bf16.msra.mxu0 %v1285
    %1815 = vmatprep.subr.bf16.mxu0 %v1277
    %1816 = vmatpush1.bf16.msra.mxu0 %v1276
    %1817 = vmatprep.subr.bf16.mxu0 %v1268
    %1818 = vmatpush1.bf16.msra.mxu0 %v1267
    %1819 = vmatprep.subr.bf16.mxu0 %v1403
    %1820 = vmatpush2.bf16.msra.mxu0 %v1402
    %1821 = vmatprep.subr.bf16.mxu0 %v1394
    %1822 = vmatpush2.bf16.msra.mxu0 %v1393
    %1823 = vmatprep.subr.bf16.mxu0 %v1385
    %1824 = vmatpush2.bf16.msra.mxu0 %v1384
    %1825 = vmatprep.subr.bf16.mxu0 %v1376
    %1826 = vmatpush2.bf16.msra.mxu0 %v1375
    %1827 = vmatprep.subr.bf16.mxu0 %v1367
    %1828 = vmatpush2.bf16.msra.mxu0 %v1366
    %1829 = vmatprep.subr.bf16.mxu0 %v1358
    %1830 = vmatpush2.bf16.msra.mxu0 %v1357
    %1831 = vmatprep.subr.bf16.mxu0 %v1349
    %1832 = vmatpush2.bf16.msra.mxu0 %v1348
    %1833 = vmatprep.subr.bf16.mxu0 %v1340
    %1834 = vmatpush2.bf16.msra.mxu0 %v1339
    %1835 = vmatprep.mubr.bf16.mxu0 %v348
    %1836 = vmatmul.mubr.bf16.gmra.mxu0 %v347
    %v1837 = vpop.f32.mrf.mxu0
    %v1838 = vadd.f32 0.0, %v1837
    %v1839 = vpop.f32.mrf.mxu0
    %v1840 = vadd.f32 0.0, %v1839
    %v1841 = vpop.f32.mrf.mxu0
    %v1842 = vadd.f32 0.0, %v1841
    %v1843 = vpop.f32.mrf.mxu0
    %v1844 = vadd.f32 0.0, %v1843
    %1845 = vmatprep.mubr.bf16.mxu0 %v351
    %1846 = vmatmul.mubr.bf16.gmra.mxu0 %v350
    %v1847 = vpop.f32.mrf.mxu0
    %v1848 = vadd.f32 0.0, %v1847
    %v1849 = vpop.f32.mrf.mxu0
    %v1850 = vadd.f32 0.0, %v1849
    %v1851 = vpop.f32.mrf.mxu0
    %v1852 = vadd.f32 0.0, %v1851
    %v1853 = vpop.f32.mrf.mxu0
    %v1854 = vadd.f32 0.0, %v1853
    %1855 = vdwg.mxu0
    %1856 = vmatprep.subr.bf16.mxu0 %v1475
    %1857 = vmatpush1.bf16.msra.mxu0 %v1474
    %1858 = vmatprep.subr.bf16.mxu0 %v1466
    %1859 = vmatpush1.bf16.msra.mxu0 %v1465
    %1860 = vmatprep.subr.bf16.mxu0 %v1457
    %1861 = vmatpush1.bf16.msra.mxu0 %v1456
    %1862 = vmatprep.subr.bf16.mxu0 %v1448
    %1863 = vmatpush1.bf16.msra.mxu0 %v1447
    %1864 = vmatprep.subr.bf16.mxu0 %v1439
    %1865 = vmatpush1.bf16.msra.mxu0 %v1438
    %1866 = vmatprep.subr.bf16.mxu0 %v1430
    %1867 = vmatpush1.bf16.msra.mxu0 %v1429
    %1868 = vmatprep.subr.bf16.mxu0 %v1421
    %1869 = vmatpush1.bf16.msra.mxu0 %v1420
    %1870 = vmatprep.subr.bf16.mxu0 %v1412
    %1871 = vmatpush1.bf16.msra.mxu0 %v1411
    %1872 = vmatprep.subr.bf16.mxu0 0
    %1873 = vmatpush2.bf16.msra.mxu0 0
    %1874 = vmatprep.subr.bf16.mxu0 0
    %1875 = vmatpush2.bf16.msra.mxu0 0
    %1876 = vmatprep.subr.bf16.mxu0 0
    %1877 = vmatpush2.bf16.msra.mxu0 0
    %1878 = vmatprep.subr.bf16.mxu0 0
    %1879 = vmatpush2.bf16.msra.mxu0 0
    %1880 = vmatprep.subr.bf16.mxu0 0
    %1881 = vmatpush2.bf16.msra.mxu0 0
    %1882 = vmatprep.subr.bf16.mxu0 0
    %1883 = vmatpush2.bf16.msra.mxu0 0
    %1884 = vmatprep.subr.bf16.mxu0 0
    %1885 = vmatpush2.bf16.msra.mxu0 0
    %1886 = vmatprep.subr.bf16.mxu0 0
    %1887 = vmatpush2.bf16.msra.mxu0 0
    %1888 = vmatprep.mubr.bf16.mxu0 0
    %1889 = vmatmul.mubr.bf16.gmra.mxu0 %v349
    %v1890 = vpop.f32.mrf.mxu0
    %v1891 = vadd.f32 %v1838, %v1890
    %v1892 = vpop.f32.mrf.mxu0
    %v1893 = vadd.f32 %v1840, %v1892
    %v1894 = vpop.f32.mrf.mxu0
    %v1895 = vadd.f32 %v1842, %v1894
    %v1896 = vpop.f32.mrf.mxu0
    %v1897 = vadd.f32 %v1844, %v1896
    %1898 = vmatprep.mubr.bf16.mxu0 0
    %1899 = vmatmul.mubr.bf16.gmra.mxu0 %v352
    %v1900 = vpop.f32.mrf.mxu0
    %v1901 = vadd.f32 %v1848, %v1900
    %v1902 = vpop.f32.mrf.mxu0
    %v1903 = vadd.f32 %v1850, %v1902
    %v1904 = vpop.f32.mrf.mxu0
    %v1905 = vadd.f32 %v1852, %v1904
    %v1906 = vpop.f32.mrf.mxu0
    %v1907 = vadd.f32 %v1854, %v1906
    %1908 = vdwg.mxu0
    %1909 = vmatprep.subr.bf16.mxu0 %v1333
    %1910 = vmatpush1.bf16.msra.mxu0 %v1332
    %1911 = vmatprep.subr.bf16.mxu0 %v1324
    %1912 = vmatpush1.bf16.msra.mxu0 %v1323
    %1913 = vmatprep.subr.bf16.mxu0 %v1315
    %1914 = vmatpush1.bf16.msra.mxu0 %v1314
    %1915 = vmatprep.subr.bf16.mxu0 %v1306
    %1916 = vmatpush1.bf16.msra.mxu0 %v1305
    %1917 = vmatprep.subr.bf16.mxu0 %v1297
    %1918 = vmatpush1.bf16.msra.mxu0 %v1296
    %1919 = vmatprep.subr.bf16.mxu0 %v1288
    %1920 = vmatpush1.bf16.msra.mxu0 %v1287
    %1921 = vmatprep.subr.bf16.mxu0 %v1279
    %1922 = vmatpush1.bf16.msra.mxu0 %v1278
    %1923 = vmatprep.subr.bf16.mxu0 %v1270
    %1924 = vmatpush1.bf16.msra.mxu0 %v1269
    %1925 = vmatprep.subr.bf16.mxu0 %v1405
    %1926 = vmatpush2.bf16.msra.mxu0 %v1404
    %1927 = vmatprep.subr.bf16.mxu0 %v1396
    %1928 = vmatpush2.bf16.msra.mxu0 %v1395
    %1929 = vmatprep.subr.bf16.mxu0 %v1387
    %1930 = vmatpush2.bf16.msra.mxu0 %v1386
    %1931 = vmatprep.subr.bf16.mxu0 %v1378
    %1932 = vmatpush2.bf16.msra.mxu0 %v1377
    %1933 = vmatprep.subr.bf16.mxu0 %v1369
    %1934 = vmatpush2.bf16.msra.mxu0 %v1368
    %1935 = vmatprep.subr.bf16.mxu0 %v1360
    %1936 = vmatpush2.bf16.msra.mxu0 %v1359
    %1937 = vmatprep.subr.bf16.mxu0 %v1351
    %1938 = vmatpush2.bf16.msra.mxu0 %v1350
    %1939 = vmatprep.subr.bf16.mxu0 %v1342
    %1940 = vmatpush2.bf16.msra.mxu0 %v1341
    %1941 = vmatprep.mubr.bf16.mxu0 %v348
    %1942 = vmatmul.mubr.bf16.gmra.mxu0 %v347
    %v1943 = vpop.f32.mrf.mxu0
    %v1944 = vadd.f32 0.0, %v1943
    %v1945 = vpop.f32.mrf.mxu0
    %v1946 = vadd.f32 0.0, %v1945
    %v1947 = vpop.f32.mrf.mxu0
    %v1948 = vadd.f32 0.0, %v1947
    %v1949 = vpop.f32.mrf.mxu0
    %v1950 = vadd.f32 0.0, %v1949
    %1951 = vmatprep.mubr.bf16.mxu0 %v351
    %1952 = vmatmul.mubr.bf16.gmra.mxu0 %v350
    %v1953 = vpop.f32.mrf.mxu0
    %v1954 = vadd.f32 0.0, %v1953
    %v1955 = vpop.f32.mrf.mxu0
    %v1956 = vadd.f32 0.0, %v1955
    %v1957 = vpop.f32.mrf.mxu0
    %v1958 = vadd.f32 0.0, %v1957
    %v1959 = vpop.f32.mrf.mxu0
    %v1960 = vadd.f32 0.0, %v1959
    %1961 = vdwg.mxu0
    %1962 = vmatprep.subr.bf16.mxu0 %v1477
    %1963 = vmatpush1.bf16.msra.mxu0 %v1476
    %1964 = vmatprep.subr.bf16.mxu0 %v1468
    %1965 = vmatpush1.bf16.msra.mxu0 %v1467
    %1966 = vmatprep.subr.bf16.mxu0 %v1459
    %1967 = vmatpush1.bf16.msra.mxu0 %v1458
    %1968 = vmatprep.subr.bf16.mxu0 %v1450
    %1969 = vmatpush1.bf16.msra.mxu0 %v1449
    %1970 = vmatprep.subr.bf16.mxu0 %v1441
    %1971 = vmatpush1.bf16.msra.mxu0 %v1440
    %1972 = vmatprep.subr.bf16.mxu0 %v1432
    %1973 = vmatpush1.bf16.msra.mxu0 %v1431
    %1974 = vmatprep.subr.bf16.mxu0 %v1423
    %1975 = vmatpush1.bf16.msra.mxu0 %v1422
    %1976 = vmatprep.subr.bf16.mxu0 %v1414
    %1977 = vmatpush1.bf16.msra.mxu0 %v1413
    %1978 = vmatprep.subr.bf16.mxu0 0
    %1979 = vmatpush2.bf16.msra.mxu0 0
    %1980 = vmatprep.subr.bf16.mxu0 0
    %1981 = vmatpush2.bf16.msra.mxu0 0
    %1982 = vmatprep.subr.bf16.mxu0 0
    %1983 = vmatpush2.bf16.msra.mxu0 0
    %1984 = vmatprep.subr.bf16.mxu0 0
    %1985 = vmatpush2.bf16.msra.mxu0 0
    %1986 = vmatprep.subr.bf16.mxu0 0
    %1987 = vmatpush2.bf16.msra.mxu0 0
    %1988 = vmatprep.subr.bf16.mxu0 0
    %1989 = vmatpush2.bf16.msra.mxu0 0
    %1990 = vmatprep.subr.bf16.mxu0 0
    %1991 = vmatpush2.bf16.msra.mxu0 0
    %1992 = vmatprep.subr.bf16.mxu0 0
    %1993 = vmatpush2.bf16.msra.mxu0 0
    %1994 = vmatprep.mubr.bf16.mxu0 0
    %1995 = vmatmul.mubr.bf16.gmra.mxu0 %v349
    %v1996 = vpop.f32.mrf.mxu0
    %v1997 = vadd.f32 %v1944, %v1996
    %v1998 = vpop.f32.mrf.mxu0
    %v1999 = vadd.f32 %v1946, %v1998
    %v2000 = vpop.f32.mrf.mxu0
    %v2001 = vadd.f32 %v1948, %v2000
    %v2002 = vpop.f32.mrf.mxu0
    %v2003 = vadd.f32 %v1950, %v2002
    %2004 = vmatprep.mubr.bf16.mxu0 0
    %2005 = vmatmul.mubr.bf16.gmra.mxu0 %v352
    %v2006 = vpop.f32.mrf.mxu0
    %v2007 = vadd.f32 %v1954, %v2006
    %v2008 = vpop.f32.mrf.mxu0
    %v2009 = vadd.f32 %v1956, %v2008
    %v2010 = vpop.f32.mrf.mxu0
    %v2011 = vadd.f32 %v1958, %v2010
    %v2012 = vpop.f32.mrf.mxu0
    %v2013 = vadd.f32 %v1960, %v2012
    %2014 = vdwg.mxu0
    %2015 = vmatprep.subr.bf16.mxu0 %v1335
    %2016 = vmatpush1.bf16.msra.mxu0 %v1334
    %2017 = vmatprep.subr.bf16.mxu0 %v1326
    %2018 = vmatpush1.bf16.msra.mxu0 %v1325
    %2019 = vmatprep.subr.bf16.mxu0 %v1317
    %2020 = vmatpush1.bf16.msra.mxu0 %v1316
    %2021 = vmatprep.subr.bf16.mxu0 %v1308
    %2022 = vmatpush1.bf16.msra.mxu0 %v1307
    %2023 = vmatprep.subr.bf16.mxu0 %v1299
    %2024 = vmatpush1.bf16.msra.mxu0 %v1298
    %2025 = vmatprep.subr.bf16.mxu0 %v1290
    %2026 = vmatpush1.bf16.msra.mxu0 %v1289
    %2027 = vmatprep.subr.bf16.mxu0 %v1281
    %2028 = vmatpush1.bf16.msra.mxu0 %v1280
    %2029 = vmatprep.subr.bf16.mxu0 %v1272
    %2030 = vmatpush1.bf16.msra.mxu0 %v1271
    %2031 = vmatprep.subr.bf16.mxu0 %v1407
    %2032 = vmatpush2.bf16.msra.mxu0 %v1406
    %2033 = vmatprep.subr.bf16.mxu0 %v1398
    %2034 = vmatpush2.bf16.msra.mxu0 %v1397
    %2035 = vmatprep.subr.bf16.mxu0 %v1389
    %2036 = vmatpush2.bf16.msra.mxu0 %v1388
    %2037 = vmatprep.subr.bf16.mxu0 %v1380
    %2038 = vmatpush2.bf16.msra.mxu0 %v1379
    %2039 = vmatprep.subr.bf16.mxu0 %v1371
    %2040 = vmatpush2.bf16.msra.mxu0 %v1370
    %2041 = vmatprep.subr.bf16.mxu0 %v1362
    %2042 = vmatpush2.bf16.msra.mxu0 %v1361
    %2043 = vmatprep.subr.bf16.mxu0 %v1353
    %2044 = vmatpush2.bf16.msra.mxu0 %v1352
    %2045 = vmatprep.subr.bf16.mxu0 %v1344
    %2046 = vmatpush2.bf16.msra.mxu0 %v1343
    %2047 = vmatprep.mubr.bf16.mxu0 %v348
    %2048 = vmatmul.mubr.bf16.gmra.mxu0 %v347
    %v2049 = vpop.f32.mrf.mxu0
    %v2050 = vadd.f32 0.0, %v2049
    %v2051 = vpop.f32.mrf.mxu0
    %v2052 = vadd.f32 0.0, %v2051
    %v2053 = vpop.f32.mrf.mxu0
    %v2054 = vadd.f32 0.0, %v2053
    %v2055 = vpop.f32.mrf.mxu0
    %v2056 = vadd.f32 0.0, %v2055
    %2057 = vmatprep.mubr.bf16.mxu0 %v351
    %2058 = vmatmul.mubr.bf16.gmra.mxu0 %v350
    %v2059 = vpop.f32.mrf.mxu0
    %v2060 = vadd.f32 0.0, %v2059
    %v2061 = vpop.f32.mrf.mxu0
    %v2062 = vadd.f32 0.0, %v2061
    %v2063 = vpop.f32.mrf.mxu0
    %v2064 = vadd.f32 0.0, %v2063
    %v2065 = vpop.f32.mrf.mxu0
    %v2066 = vadd.f32 0.0, %v2065
    %2067 = vdwg.mxu0
    %2068 = vmatprep.subr.bf16.mxu0 %v1479
    %2069 = vmatpush1.bf16.msra.mxu0 %v1478
    %2070 = vmatprep.subr.bf16.mxu0 %v1470
    %2071 = vmatpush1.bf16.msra.mxu0 %v1469
    %2072 = vmatprep.subr.bf16.mxu0 %v1461
    %2073 = vmatpush1.bf16.msra.mxu0 %v1460
    %2074 = vmatprep.subr.bf16.mxu0 %v1452
    %2075 = vmatpush1.bf16.msra.mxu0 %v1451
    %2076 = vmatprep.subr.bf16.mxu0 %v1443
    %2077 = vmatpush1.bf16.msra.mxu0 %v1442
    %2078 = vmatprep.subr.bf16.mxu0 %v1434
    %2079 = vmatpush1.bf16.msra.mxu0 %v1433
    %2080 = vmatprep.subr.bf16.mxu0 %v1425
    %2081 = vmatpush1.bf16.msra.mxu0 %v1424
    %2082 = vmatprep.subr.bf16.mxu0 %v1416
    %2083 = vmatpush1.bf16.msra.mxu0 %v1415
    %2084 = vmatprep.subr.bf16.mxu0 0
    %2085 = vmatpush2.bf16.msra.mxu0 0
    %2086 = vmatprep.subr.bf16.mxu0 0
    %2087 = vmatpush2.bf16.msra.mxu0 0
    %2088 = vmatprep.subr.bf16.mxu0 0
    %2089 = vmatpush2.bf16.msra.mxu0 0
    %2090 = vmatprep.subr.bf16.mxu0 0
    %2091 = vmatpush2.bf16.msra.mxu0 0
    %2092 = vmatprep.subr.bf16.mxu0 0
    %2093 = vmatpush2.bf16.msra.mxu0 0
    %2094 = vmatprep.subr.bf16.mxu0 0
    %2095 = vmatpush2.bf16.msra.mxu0 0
    %2096 = vmatprep.subr.bf16.mxu0 0
    %2097 = vmatpush2.bf16.msra.mxu0 0
    %2098 = vmatprep.subr.bf16.mxu0 0
    %2099 = vmatpush2.bf16.msra.mxu0 0
    %2100 = vmatprep.mubr.bf16.mxu0 0
    %2101 = vmatmul.mubr.bf16.gmra.mxu0 %v349
    %v2102 = vpop.f32.mrf.mxu0
    %v2103 = vadd.f32 %v2050, %v2102
    %v2104 = vpop.f32.mrf.mxu0
    %v2105 = vadd.f32 %v2052, %v2104
    %v2106 = vpop.f32.mrf.mxu0
    %v2107 = vadd.f32 %v2054, %v2106
    %v2108 = vpop.f32.mrf.mxu0
    %v2109 = vadd.f32 %v2056, %v2108
    %2110 = vmatprep.mubr.bf16.mxu0 0
    %2111 = vmatmul.mubr.bf16.gmra.mxu0 %v352
    %v2112 = vpop.f32.mrf.mxu0
    %v2113 = vadd.f32 %v2060, %v2112
    %v2114 = vpop.f32.mrf.mxu0
    %v2115 = vadd.f32 %v2062, %v2114
    %v2116 = vpop.f32.mrf.mxu0
    %v2117 = vadd.f32 %v2064, %v2116
    %v2118 = vpop.f32.mrf.mxu0
    %v2119 = vadd.f32 %v2066, %v2118
    %2120 = vdwg.mxu0
    %2121 = vmatprep.subr.bf16.mxu0 0
    %2122 = vmatpush1.bf16.msra.mxu0 %v1336
    %2123 = vmatprep.subr.bf16.mxu0 0
    %2124 = vmatpush1.bf16.msra.mxu0 %v1327
    %2125 = vmatprep.subr.bf16.mxu0 0
    %2126 = vmatpush1.bf16.msra.mxu0 %v1318
    %2127 = vmatprep.subr.bf16.mxu0 0
    %2128 = vmatpush1.bf16.msra.mxu0 %v1309
    %2129 = vmatprep.subr.bf16.mxu0 0
    %2130 = vmatpush1.bf16.msra.mxu0 %v1300
    %2131 = vmatprep.subr.bf16.mxu0 0
    %2132 = vmatpush1.bf16.msra.mxu0 %v1291
    %2133 = vmatprep.subr.bf16.mxu0 0
    %2134 = vmatpush1.bf16.msra.mxu0 %v1282
    %2135 = vmatprep.subr.bf16.mxu0 0
    %2136 = vmatpush1.bf16.msra.mxu0 %v1273
    %2137 = vmatprep.subr.bf16.mxu0 0
    %2138 = vmatpush2.bf16.msra.mxu0 %v1408
    %2139 = vmatprep.subr.bf16.mxu0 0
    %2140 = vmatpush2.bf16.msra.mxu0 %v1399
    %2141 = vmatprep.subr.bf16.mxu0 0
    %2142 = vmatpush2.bf16.msra.mxu0 %v1390
    %2143 = vmatprep.subr.bf16.mxu0 0
    %2144 = vmatpush2.bf16.msra.mxu0 %v1381
    %2145 = vmatprep.subr.bf16.mxu0 0
    %2146 = vmatpush2.bf16.msra.mxu0 %v1372
    %2147 = vmatprep.subr.bf16.mxu0 0
    %2148 = vmatpush2.bf16.msra.mxu0 %v1363
    %2149 = vmatprep.subr.bf16.mxu0 0
    %2150 = vmatpush2.bf16.msra.mxu0 %v1354
    %2151 = vmatprep.subr.bf16.mxu0 0
    %2152 = vmatpush2.bf16.msra.mxu0 %v1345
    %2153 = vmatprep.mubr.bf16.mxu0 %v348
    %2154 = vmatmul.mubr.bf16.gmra.mxu0 %v347
    %v2155 = vpop.f32.mrf.mxu0
    %v2156 = vadd.f32 0.0, %v2155
    %v2157 = vpop.f32.mrf.mxu0
    %v2158 = vpop.f32.mrf.mxu0
    %v2159 = vadd.f32 0.0, %v2158
    %v2160 = vpop.f32.mrf.mxu0
    %2161 = vmatprep.mubr.bf16.mxu0 %v351
    %2162 = vmatmul.mubr.bf16.gmra.mxu0 %v350
    %v2163 = vpop.f32.mrf.mxu0
    %v2164 = vadd.f32 0.0, %v2163
    %v2165 = vpop.f32.mrf.mxu0
    %v2166 = vpop.f32.mrf.mxu0
    %v2167 = vadd.f32 0.0, %v2166
    %v2168 = vpop.f32.mrf.mxu0
    %2169 = vdwg.mxu0
    %2170 = vmatprep.subr.bf16.mxu0 0
    %2171 = vmatpush1.bf16.msra.mxu0 %v1480
    %2172 = vmatprep.subr.bf16.mxu0 0
    %2173 = vmatpush1.bf16.msra.mxu0 %v1471
    %2174 = vmatprep.subr.bf16.mxu0 0
    %2175 = vmatpush1.bf16.msra.mxu0 %v1462
    %2176 = vmatprep.subr.bf16.mxu0 0
    %2177 = vmatpush1.bf16.msra.mxu0 %v1453
    %2178 = vmatprep.subr.bf16.mxu0 0
    %2179 = vmatpush1.bf16.msra.mxu0 %v1444
    %2180 = vmatprep.subr.bf16.mxu0 0
    %2181 = vmatpush1.bf16.msra.mxu0 %v1435
    %2182 = vmatprep.subr.bf16.mxu0 0
    %2183 = vmatpush1.bf16.msra.mxu0 %v1426
    %2184 = vmatprep.subr.bf16.mxu0 0
    %2185 = vmatpush1.bf16.msra.mxu0 %v1417
    %2186 = vmatprep.subr.bf16.mxu0 0
    %2187 = vmatpush2.bf16.msra.mxu0 0
    %2188 = vmatprep.subr.bf16.mxu0 0
    %2189 = vmatpush2.bf16.msra.mxu0 0
    %2190 = vmatprep.subr.bf16.mxu0 0
    %2191 = vmatpush2.bf16.msra.mxu0 0
    %2192 = vmatprep.subr.bf16.mxu0 0
    %2193 = vmatpush2.bf16.msra.mxu0 0
    %2194 = vmatprep.subr.bf16.mxu0 0
    %2195 = vmatpush2.bf16.msra.mxu0 0
    %2196 = vmatprep.subr.bf16.mxu0 0
    %2197 = vmatpush2.bf16.msra.mxu0 0
    %2198 = vmatprep.subr.bf16.mxu0 0
    %2199 = vmatpush2.bf16.msra.mxu0 0
    %2200 = vmatprep.subr.bf16.mxu0 0
    %2201 = vmatpush2.bf16.msra.mxu0 0
    %2202 = vmatprep.mubr.bf16.mxu0 0
    %2203 = vmatmul.mubr.bf16.gmra.mxu0 %v349
    %v2204 = vpop.f32.mrf.mxu0
    %v2205 = vadd.f32 %v2156, %v2204
    %v2206 = vpop.f32.mrf.mxu0
    %v2207 = vpop.f32.mrf.mxu0
    %v2208 = vadd.f32 %v2159, %v2207
    %v2209 = vpop.f32.mrf.mxu0
    %2210 = vmatprep.mubr.bf16.mxu0 0
    %2211 = vmatmul.mubr.bf16.gmra.mxu0 %v352
    %v2212 = vpop.f32.mrf.mxu0
    %v2213 = vadd.f32 %v2164, %v2212
    %v2214 = vpop.f32.mrf.mxu0
    %v2215 = vpop.f32.mrf.mxu0
    %v2216 = vadd.f32 %v2167, %v2215
    %v2217 = vpop.f32.mrf.mxu0
    %2218 = vdwg.mxu0
    %v2219 = vpack.c.bf16 %v1789, %v1785
    %v2220 = vpack.c.bf16 %v1791, %v1787
    %v2221 = vpack.c.bf16 %v1895, %v1891
    %v2222 = vpack.c.bf16 %v1897, %v1893
    %v2223 = vpack.c.bf16 %v2001, %v1997
    %v2224 = vpack.c.bf16 %v2003, %v1999
    %v2225 = vpack.c.bf16 %v2107, %v2103
    %v2226 = vpack.c.bf16 %v2109, %v2105
    %v2227 = vpack.c.bf16 %v2208, %v2205
    %v2228 = vpack.c.bf16 %v1799, %v1795
    %v2229 = vpack.c.bf16 %v1801, %v1797
    %v2230 = vpack.c.bf16 %v1905, %v1901
    %v2231 = vpack.c.bf16 %v1907, %v1903
    %v2232 = vpack.c.bf16 %v2011, %v2007
    %v2233 = vpack.c.bf16 %v2013, %v2009
    %v2234 = vpack.c.bf16 %v2117, %v2113
    %v2235 = vpack.c.bf16 %v2119, %v2115
    %v2236 = vpack.c.bf16 %v2216, %v2213
    %v2237 = vlaneseq
    %v2238 = vshrl.u32 %v2237, 7
    %v2239 = vadd.s32 %v2238, 8
    %v2240 = vlaneseq
    %v2241 = vand.u32 %v2240, 127
    %vm2242 = vcmp.ge.s32.totalorder %v2238, %v2241
    %vm2243 = vcmp.ge.s32.totalorder %v2239, %v2241
    %vm2244 = vcmask 523264
    %v2246 = vsel %vm2244, %v2219, 0
    %v2249 = vsel %vm2244, %v2222, 0
    %2251 = vmatprep.subr.bf16.mxu0 0
    %2252 = vmatpush1.bf16.xpose.msra.mxu0 0
    %2253 = vmatprep.subr.bf16.mxu0 0
    %2254 = vmatpush1.bf16.xpose.msra.mxu0 0
    %2255 = vmatprep.subr.bf16.mxu0 0
    %2256 = vmatpush1.bf16.xpose.msra.mxu0 0
    %2257 = vmatprep.subr.bf16.mxu0 0
    %2258 = vmatpush1.bf16.xpose.msra.mxu0 0
    %2259 = vmatprep.subr.bf16.mxu0 0
    %2260 = vmatpush1.bf16.xpose.msra.mxu0 0
    %2261 = vmatprep.subr.bf16.mxu0 0
    %2262 = vmatpush1.bf16.xpose.msra.mxu0 0
    %2263 = vmatprep.subr.bf16.mxu0 0
    %2264 = vmatpush1.bf16.xpose.msra.mxu0 0
    %2265 = vmatprep.subr.bf16.mxu0 0
    %2266 = vmatpush1.bf16.xpose.msra.mxu0 %v2249
    %2267 = vmatprep.subr.bf16.mxu0 0
    %2268 = vmatpush2.bf16.xpose.msra.mxu0 0
    %2269 = vmatprep.subr.bf16.mxu0 0
    %2270 = vmatpush2.bf16.xpose.msra.mxu0 0
    %2271 = vmatprep.subr.bf16.mxu0 0
    %2272 = vmatpush2.bf16.xpose.msra.mxu0 0
    %2273 = vmatprep.subr.bf16.mxu0 0
    %2274 = vmatpush2.bf16.xpose.msra.mxu0 0
    %2275 = vmatprep.subr.bf16.mxu0 0
    %2276 = vmatpush2.bf16.xpose.msra.mxu0 0
    %2277 = vmatprep.subr.bf16.mxu0 0
    %2278 = vmatpush2.bf16.xpose.msra.mxu0 0
    %2279 = vmatprep.subr.bf16.mxu0 0
    %2280 = vmatpush2.bf16.xpose.msra.mxu0 0
    %2281 = vmatprep.subr.bf16.mxu0 0
    %2282 = vmatpush2.bf16.xpose.msra.mxu0 0
    %2283 = vmatprep.mubr.bf16.mxu0 0
    %2284 = vmatmul.mubr.bf16.gmra.mxu0 %v2246
    %v2285 = vpop.f32.mrf.mxu0
    %v2286 = vadd.f32 0.0, %v2285
    %v2287 = vpop.f32.mrf.mxu0
    %v2288 = vpop.f32.mrf.mxu0
    %v2289 = vadd.f32 0.0, %v2288
    %v2290 = vpop.f32.mrf.mxu0
    %2291 = vdwg.mxu0
    %v2292 = vmul.f32 %v2286, 0.125
    %v2293 = vmul.f32 %v2289, 0.125
    %v2294 = vsel %vm2242, %v2292, -inf
    %v2295 = vsel %vm2243, %v2293, -inf
    %vm2296 = vcmask 130048
    %v2297 = vsel %vm2296, %v2294, -inf
    %2298 = vmax.xlane.f32.xlu0 %v2297
    %v2299 = vpop.xlane.xlu0 %2298
    %v2300 = vsel %vm2296, %v2295, -inf
    %2301 = vmax.xlane.f32.xlu0 %v2300
    %v2302 = vpop.xlane.xlu0 %2301
    %v2303 = vsub.f32 %v2294, %v2299
    %v2304 = vsub.f32 %v2295, %v2302
    %v2305 = vmul.f32 %v2303, 1.442695
    %v2306 = vpow.pop %v2305
    %v2307 = vmul.f32 %v2304, 1.442695
    %v2308 = vpow.pop %v2307
    %v2309 = vsel %vm2296, %v2306, 0.0
    %2310 = vadd.xlane.f32.xlu0 %v2309
    %v2311 = vpop.xlane.xlu0 %2310
    %v2312 = vsel %vm2296, %v2308, 0.0
    %2313 = vadd.xlane.f32.xlu0 %v2312
    %v2314 = vpop.xlane.xlu0 %2313
    %v2315 = vrcp.pop %v2311
    %v2316 = vrcp.pop %v2314
    %v2317 = vmul.f32 %v2306, %v2315
    %v2318 = vmul.f32 %v2308, %v2316
    %v2319 = vpack.c.bf16 %v2318, %v2317
    %v2321 = vsel %vm2296, %v2319, 0
    %2323 = vmatprep.subr.bf16.mxu0 0
    %2324 = vmatpush1.bf16.msra.mxu0 0
    %2325 = vmatprep.subr.bf16.mxu0 0
    %2326 = vmatpush1.bf16.msra.mxu0 0
    %2327 = vmatprep.subr.bf16.mxu0 0
    %2328 = vmatpush1.bf16.msra.mxu0 0
    %2329 = vmatprep.subr.bf16.mxu0 0
    %2330 = vmatpush1.bf16.msra.mxu0 0
    %2331 = vmatprep.subr.bf16.mxu0 0
    %2332 = vmatpush1.bf16.msra.mxu0 0
    %2333 = vmatprep.subr.bf16.mxu0 0
    %2334 = vmatpush1.bf16.msra.mxu0 0
    %2335 = vmatprep.subr.bf16.mxu0 0
    %2336 = vmatpush1.bf16.msra.mxu0 0
    %2337 = vmatprep.subr.bf16.mxu0 0
    %2338 = vmatpush1.bf16.msra.mxu0 %v2225
    %2339 = vmatprep.subr.bf16.mxu0 0
    %2340 = vmatpush2.bf16.msra.mxu0 0
    %2341 = vmatprep.subr.bf16.mxu0 0
    %2342 = vmatpush2.bf16.msra.mxu0 0
    %2343 = vmatprep.subr.bf16.mxu0 0
    %2344 = vmatpush2.bf16.msra.mxu0 0
    %2345 = vmatprep.subr.bf16.mxu0 0
    %2346 = vmatpush2.bf16.msra.mxu0 0
    %2347 = vmatprep.subr.bf16.mxu0 0
    %2348 = vmatpush2.bf16.msra.mxu0 0
    %2349 = vmatprep.subr.bf16.mxu0 0
    %2350 = vmatpush2.bf16.msra.mxu0 0
    %2351 = vmatprep.subr.bf16.mxu0 0
    %2352 = vmatpush2.bf16.msra.mxu0 0
    %2353 = vmatprep.subr.bf16.mxu0 0
    %2354 = vmatpush2.bf16.msra.mxu0 0
    %2355 = vmatprep.mubr.bf16.mxu0 0
    %2356 = vmatmul.mubr.bf16.gmra.mxu0 %v2321
    %v2357 = vpop.f32.mrf.mxu0
    %v2358 = vadd.f32 0.0, %v2357
    %v2359 = vpop.f32.mrf.mxu0
    %v2360 = vpop.f32.mrf.mxu0
    %v2361 = vadd.f32 0.0, %v2360
    %v2362 = vpop.f32.mrf.mxu0
    %2363 = vdwg.mxu0
    %v2364 = vpack.c.bf16 %v2361, %v2358
    %v2365 = vld [vmem:[#allocation11] sm:$0xff]
    %v2366 = vld [vmem:[#allocation11 + $0x8] sm:$0xf]
    %v2367 = vld [vmem:[#allocation11 + $0xc] sm:$0xff]
    %v2368 = vld [vmem:[#allocation11 + $0x14] sm:$0xf]
    %v2369 = vld [vmem:[#allocation11 + $0x18] sm:$0xff]
    %v2370 = vld [vmem:[#allocation11 + $0x20] sm:$0xf]
    %v2371 = vld [vmem:[#allocation11 + $0x24] sm:$0xff]
    %v2372 = vld [vmem:[#allocation11 + $0x2c] sm:$0xf]
    %v2373 = vld [vmem:[#allocation11 + $0x30] sm:$0xff]
    %v2374 = vld [vmem:[#allocation11 + $0x38] sm:$0xf]
    %v2375 = vld [vmem:[#allocation11 + $0x3c] sm:$0xff]
    %v2376 = vld [vmem:[#allocation11 + $0x44] sm:$0xf]
    %v2377 = vld [vmem:[#allocation11 + $0x48] sm:$0xff]
    %v2378 = vld [vmem:[#allocation11 + $0x50] sm:$0xf]
    %v2379 = vld [vmem:[#allocation11 + $0x54] sm:$0xff]
    %v2380 = vld [vmem:[#allocation11 + $0x5c] sm:$0xf]
    %2382 = vrot.lane.b32.xlu0 %v2219, 64
    %v2383 = vpop.permute.xlu0 %2382
    %2385 = vrot.lane.b32.xlu0 %v2222, 64
    %v2386 = vpop.permute.xlu0 %2385
    %v2388 = vsel %vm2244, %v2383, 0
    %v2391 = vsel %vm2244, %v2386, 0
    %2393 = vmatprep.subr.bf16.mxu0 0
    %2394 = vmatpush1.bf16.xpose.msra.mxu0 0
    %2395 = vmatprep.subr.bf16.mxu0 0
    %2396 = vmatpush1.bf16.xpose.msra.mxu0 0
    %2397 = vmatprep.subr.bf16.mxu0 0
    %2398 = vmatpush1.bf16.xpose.msra.mxu0 0
    %2399 = vmatprep.subr.bf16.mxu0 0
    %2400 = vmatpush1.bf16.xpose.msra.mxu0 0
    %2401 = vmatprep.subr.bf16.mxu0 0
    %2402 = vmatpush1.bf16.xpose.msra.mxu0 0
    %2403 = vmatprep.subr.bf16.mxu0 0
    %2404 = vmatpush1.bf16.xpose.msra.mxu0 0
    %2405 = vmatprep.subr.bf16.mxu0 0
    %2406 = vmatpush1.bf16.xpose.msra.mxu0 0
    %2407 = vmatprep.subr.bf16.mxu0 0
    %2408 = vmatpush1.bf16.xpose.msra.mxu0 %v2391
    %2409 = vmatprep.subr.bf16.mxu0 0
    %2410 = vmatpush2.bf16.xpose.msra.mxu0 0
    %2411 = vmatprep.subr.bf16.mxu0 0
    %2412 = vmatpush2.bf16.xpose.msra.mxu0 0
    %2413 = vmatprep.subr.bf16.mxu0 0
    %2414 = vmatpush2.bf16.xpose.msra.mxu0 0
    %2415 = vmatprep.subr.bf16.mxu0 0
    %2416 = vmatpush2.bf16.xpose.msra.mxu0 0
    %2417 = vmatprep.subr.bf16.mxu0 0
    %2418 = vmatpush2.bf16.xpose.msra.mxu0 0
    %2419 = vmatprep.subr.bf16.mxu0 0
    %2420 = vmatpush2.bf16.xpose.msra.mxu0 0
    %2421 = vmatprep.subr.bf16.mxu0 0
    %2422 = vmatpush2.bf16.xpose.msra.mxu0 0
    %2423 = vmatprep.subr.bf16.mxu0 0
    %2424 = vmatpush2.bf16.xpose.msra.mxu0 0
    %2425 = vmatprep.mubr.bf16.mxu0 0
    %2426 = vmatmul.mubr.bf16.gmra.mxu0 %v2388
    %v2427 = vpop.f32.mrf.mxu0
    %v2428 = vadd.f32 0.0, %v2427
    %v2429 = vpop.f32.mrf.mxu0
    %v2430 = vpop.f32.mrf.mxu0
    %v2431 = vadd.f32 0.0, %v2430
    %v2432 = vpop.f32.mrf.mxu0
    %2433 = vdwg.mxu0
    %v2434 = vmul.f32 %v2428, 0.125
    %v2435 = vmul.f32 %v2431, 0.125
    %v2436 = vsel %vm2242, %v2434, -inf
    %v2437 = vsel %vm2243, %v2435, -inf
    %v2438 = vsel %vm2296, %v2436, -inf
    %2439 = vmax.xlane.f32.xlu0 %v2438
    %v2440 = vpop.xlane.xlu0 %2439
    %v2441 = vsel %vm2296, %v2437, -inf
    %2442 = vmax.xlane.f32.xlu0 %v2441
    %v2443 = vpop.xlane.xlu0 %2442
    %v2444 = vsub.f32 %v2436, %v2440
    %v2445 = vsub.f32 %v2437, %v2443
    %v2446 = vmul.f32 %v2444, 1.442695
    %v2447 = vpow.pop %v2446
    %v2448 = vmul.f32 %v2445, 1.442695
    %v2449 = vpow.pop %v2448
    %v2450 = vsel %vm2296, %v2447, 0.0
    %2451 = vadd.xlane.f32.xlu0 %v2450
    %v2452 = vpop.xlane.xlu0 %2451
    %v2453 = vsel %vm2296, %v2449, 0.0
    %2454 = vadd.xlane.f32.xlu0 %v2453
    %v2455 = vpop.xlane.xlu0 %2454
    %v2456 = vrcp.pop %v2452
    %v2457 = vrcp.pop %v2455
    %v2458 = vmul.f32 %v2447, %v2456
    %v2459 = vmul.f32 %v2449, %v2457
    %v2460 = vpack.c.bf16 %v2459, %v2458
    %2462 = vrot.lane.b32.xlu0 %v2225, 64
    %v2463 = vpop.permute.xlu0 %2462
    %v2466 = vsel %vm2296, %v2460, 0
    %2468 = vmatprep.subr.bf16.mxu0 0
    %2469 = vmatpush1.bf16.msra.mxu0 0
    %2470 = vmatprep.subr.bf16.mxu0 0
    %2471 = vmatpush1.bf16.msra.mxu0 0
    %2472 = vmatprep.subr.bf16.mxu0 0
    %2473 = vmatpush1.bf16.msra.mxu0 0
    %2474 = vmatprep.subr.bf16.mxu0 0
    %2475 = vmatpush1.bf16.msra.mxu0 0
    %2476 = vmatprep.subr.bf16.mxu0 0
    %2477 = vmatpush1.bf16.msra.mxu0 0
    %2478 = vmatprep.subr.bf16.mxu0 0
    %2479 = vmatpush1.bf16.msra.mxu0 0
    %2480 = vmatprep.subr.bf16.mxu0 0
    %2481 = vmatpush1.bf16.msra.mxu0 0
    %2482 = vmatprep.subr.bf16.mxu0 0
    %2483 = vmatpush1.bf16.msra.mxu0 %v2463
    %2484 = vmatprep.subr.bf16.mxu0 0
    %2485 = vmatpush2.bf16.msra.mxu0 0
    %2486 = vmatprep.subr.bf16.mxu0 0
    %2487 = vmatpush2.bf16.msra.mxu0 0
    %2488 = vmatprep.subr.bf16.mxu0 0
    %2489 = vmatpush2.bf16.msra.mxu0 0
    %2490 = vmatprep.subr.bf16.mxu0 0
    %2491 = vmatpush2.bf16.msra.mxu0 0
    %2492 = vmatprep.subr.bf16.mxu0 0
    %2493 = vmatpush2.bf16.msra.mxu0 0
    %2494 = vmatprep.subr.bf16.mxu0 0
    %2495 = vmatpush2.bf16.msra.mxu0 0
    %2496 = vmatprep.subr.bf16.mxu0 0
    %2497 = vmatpush2.bf16.msra.mxu0 0
    %2498 = vmatprep.subr.bf16.mxu0 0
    %2499 = vmatpush2.bf16.msra.mxu0 0
    %2500 = vmatprep.mubr.bf16.mxu0 0
    %2501 = vmatmul.mubr.bf16.gmra.mxu0 %v2466
    %v2502 = vpop.f32.mrf.mxu0
    %v2503 = vadd.f32 0.0, %v2502
    %v2504 = vpop.f32.mrf.mxu0
    %v2505 = vpop.f32.mrf.mxu0
    %v2506 = vadd.f32 0.0, %v2505
    %v2507 = vpop.f32.mrf.mxu0
    %2508 = vdwg.mxu0
    %v2509 = vpack.c.bf16 %v2506, %v2503
    %s2510 = scalar_lea.vmem [#allocation11], 96
    %v2511 = vld [vmem:[%s2510] sm:$0xff]
    %v2512 = vld [vmem:[%s2510 + $0x8] sm:$0xf]
    %v2513 = vld [vmem:[%s2510 + $0xc] sm:$0xff]
    %v2514 = vld [vmem:[%s2510 + $0x14] sm:$0xf]
    %v2515 = vld [vmem:[%s2510 + $0x18] sm:$0xff]
    %v2516 = vld [vmem:[%s2510 + $0x20] sm:$0xf]
    %v2517 = vld [vmem:[%s2510 + $0x24] sm:$0xff]
    %v2518 = vld [vmem:[%s2510 + $0x2c] sm:$0xf]
    %v2519 = vld [vmem:[%s2510 + $0x30] sm:$0xff]
    %v2520 = vld [vmem:[%s2510 + $0x38] sm:$0xf]
    %v2521 = vld [vmem:[%s2510 + $0x3c] sm:$0xff]
    %v2522 = vld [vmem:[%s2510 + $0x44] sm:$0xf]
    %v2523 = vld [vmem:[%s2510 + $0x48] sm:$0xff]
    %v2524 = vld [vmem:[%s2510 + $0x50] sm:$0xf]
    %v2525 = vld [vmem:[%s2510 + $0x54] sm:$0xff]
    %v2526 = vld [vmem:[%s2510 + $0x5c] sm:$0xf]
    %v2543 = vunpack.c.l.b16 %v2511
    %v2544 = vunpack.c.h.b16 %v2511
    %v2545 = vunpack.c.l.b16 %v2512
    %v2546 = vunpack.c.l.b16 %v2513
    %v2547 = vunpack.c.h.b16 %v2513
    %v2548 = vunpack.c.l.b16 %v2514
    %v2549 = vunpack.c.l.b16 %v2515
    %v2550 = vunpack.c.h.b16 %v2515
    %v2551 = vunpack.c.l.b16 %v2516
    %v2552 = vunpack.c.l.b16 %v2517
    %v2553 = vunpack.c.h.b16 %v2517
    %v2554 = vunpack.c.l.b16 %v2518
    %v2555 = vunpack.c.l.b16 %v2519
    %v2556 = vunpack.c.h.b16 %v2519
    %v2557 = vunpack.c.l.b16 %v2520
    %v2558 = vunpack.c.l.b16 %v2521
    %v2559 = vunpack.c.h.b16 %v2521
    %v2560 = vunpack.c.l.b16 %v2522
    %v2561 = vunpack.c.l.b16 %v2523
    %v2562 = vunpack.c.h.b16 %v2523
    %v2563 = vunpack.c.l.b16 %v2524
    %v2564 = vunpack.c.l.b16 %v2525
    %v2565 = vunpack.c.h.b16 %v2525
    %v2566 = vunpack.c.l.b16 %v2526
    %v2567 = vpack.c.b16 %v2546, %v2543
    %v2568 = vpack.c.b16 %v2547, %v2544
    %v2569 = vpack.c.b16 %v2548, %v2545
    %v2570 = vpack.c.b16 %v2552, %v2549
    %v2571 = vpack.c.b16 %v2553, %v2550
    %v2572 = vpack.c.b16 %v2554, %v2551
    %v2573 = vpack.c.b16 %v2558, %v2555
    %v2574 = vpack.c.b16 %v2559, %v2556
    %v2575 = vpack.c.b16 %v2560, %v2557
    %v2576 = vpack.c.b16 %v2564, %v2561
    %v2577 = vpack.c.b16 %v2565, %v2562
    %v2578 = vpack.c.b16 %v2566, %v2563
    %v2592 = vsel %vm2244, %v2509, 0
    %2594 = vmatprep.subr.bf16.mxu0 0
    %2595 = vmatpush1.bf16.msra.mxu0 0
    %2596 = vmatprep.subr.bf16.mxu0 0
    %2597 = vmatpush1.bf16.msra.mxu0 0
    %2598 = vmatprep.subr.bf16.mxu0 0
    %2599 = vmatpush1.bf16.msra.mxu0 0
    %2600 = vmatprep.subr.bf16.mxu0 0
    %2601 = vmatpush1.bf16.msra.mxu0 0
    %2602 = vmatprep.subr.bf16.mxu0 %v2577
    %2603 = vmatpush1.bf16.msra.mxu0 %v2576
    %2604 = vmatprep.subr.bf16.mxu0 %v2574
    %2605 = vmatpush1.bf16.msra.mxu0 %v2573
    %2606 = vmatprep.subr.bf16.mxu0 %v2571
    %2607 = vmatpush1.bf16.msra.mxu0 %v2570
    %2608 = vmatprep.subr.bf16.mxu0 %v2568
    %2609 = vmatpush1.bf16.msra.mxu0 %v2567
    %2610 = vmatprep.subr.bf16.mxu0 0
    %2611 = vmatpush2.bf16.msra.mxu0 0
    %2612 = vmatprep.subr.bf16.mxu0 0
    %2613 = vmatpush2.bf16.msra.mxu0 0
    %2614 = vmatprep.subr.bf16.mxu0 0
    %2615 = vmatpush2.bf16.msra.mxu0 0
    %2616 = vmatprep.subr.bf16.mxu0 0
    %2617 = vmatpush2.bf16.msra.mxu0 0
    %2618 = vmatprep.subr.bf16.mxu0 0
    %2619 = vmatpush2.bf16.msra.mxu0 0
    %2620 = vmatprep.subr.bf16.mxu0 0
    %2621 = vmatpush2.bf16.msra.mxu0 0
    %2622 = vmatprep.subr.bf16.mxu0 0
    %2623 = vmatpush2.bf16.msra.mxu0 0
    %2624 = vmatprep.subr.bf16.mxu0 0
    %2625 = vmatpush2.bf16.msra.mxu0 0
    %2626 = vmatprep.mubr.bf16.mxu0 0
    %2627 = vmatmul.mubr.bf16.gmra.mxu0 %v2592
    %v2628 = vpop.f32.mrf.mxu0
    %v2629 = vadd.f32 0.0, %v2628
    %v2630 = vpop.f32.mrf.mxu0
    %v2631 = vadd.f32 0.0, %v2630
    %v2632 = vpop.f32.mrf.mxu0
    %v2633 = vadd.f32 0.0, %v2632
    %v2634 = vpop.f32.mrf.mxu0
    %v2635 = vadd.f32 0.0, %v2634
    %2636 = vdwg.mxu0
    %2637 = vmatprep.subr.bf16.mxu0 0
    %2638 = vmatpush1.bf16.msra.mxu0 0
    %2639 = vmatprep.subr.bf16.mxu0 0
    %2640 = vmatpush1.bf16.msra.mxu0 0
    %2641 = vmatprep.subr.bf16.mxu0 0
    %2642 = vmatpush1.bf16.msra.mxu0 0
    %2643 = vmatprep.subr.bf16.mxu0 0
    %2644 = vmatpush1.bf16.msra.mxu0 0
    %2645 = vmatprep.subr.bf16.mxu0 0
    %2646 = vmatpush1.bf16.msra.mxu0 %v2578
    %2647 = vmatprep.subr.bf16.mxu0 0
    %2648 = vmatpush1.bf16.msra.mxu0 %v2575
    %2649 = vmatprep.subr.bf16.mxu0 0
    %2650 = vmatpush1.bf16.msra.mxu0 %v2572
    %2651 = vmatprep.subr.bf16.mxu0 0
    %2652 = vmatpush1.bf16.msra.mxu0 %v2569
    %2653 = vmatprep.subr.bf16.mxu0 0
    %2654 = vmatpush2.bf16.msra.mxu0 0
    %2655 = vmatprep.subr.bf16.mxu0 0
    %2656 = vmatpush2.bf16.msra.mxu0 0
    %2657 = vmatprep.subr.bf16.mxu0 0
    %2658 = vmatpush2.bf16.msra.mxu0 0
    %2659 = vmatprep.subr.bf16.mxu0 0
    %2660 = vmatpush2.bf16.msra.mxu0 0
    %2661 = vmatprep.subr.bf16.mxu0 0
    %2662 = vmatpush2.bf16.msra.mxu0 0
    %2663 = vmatprep.subr.bf16.mxu0 0
    %2664 = vmatpush2.bf16.msra.mxu0 0
    %2665 = vmatprep.subr.bf16.mxu0 0
    %2666 = vmatpush2.bf16.msra.mxu0 0
    %2667 = vmatprep.subr.bf16.mxu0 0
    %2668 = vmatpush2.bf16.msra.mxu0 0
    %2669 = vmatprep.mubr.bf16.mxu0 0
    %2670 = vmatmul.mubr.bf16.gmra.mxu0 %v2592
    %v2671 = vpop.f32.mrf.mxu0
    %v2672 = vadd.f32 0.0, %v2671
    %v2673 = vpop.f32.mrf.mxu0
    %v2674 = vpop.f32.mrf.mxu0
    %v2675 = vadd.f32 0.0, %v2674
    %v2676 = vpop.f32.mrf.mxu0
    %2677 = vdwg.mxu0
    %v2694 = vunpack.c.l.b16 %v2365
    %v2695 = vunpack.c.h.b16 %v2365
    %v2696 = vunpack.c.l.b16 %v2366
    %v2697 = vunpack.c.l.b16 %v2367
    %v2698 = vunpack.c.h.b16 %v2367
    %v2699 = vunpack.c.l.b16 %v2368
    %v2700 = vunpack.c.l.b16 %v2369
    %v2701 = vunpack.c.h.b16 %v2369
    %v2702 = vunpack.c.l.b16 %v2370
    %v2703 = vunpack.c.l.b16 %v2371
    %v2704 = vunpack.c.h.b16 %v2371
    %v2705 = vunpack.c.l.b16 %v2372
    %v2706 = vunpack.c.l.b16 %v2373
    %v2707 = vunpack.c.h.b16 %v2373
    %v2708 = vunpack.c.l.b16 %v2374
    %v2709 = vunpack.c.l.b16 %v2375
    %v2710 = vunpack.c.h.b16 %v2375
    %v2711 = vunpack.c.l.b16 %v2376
    %v2712 = vunpack.c.l.b16 %v2377
    %v2713 = vunpack.c.h.b16 %v2377
    %v2714 = vunpack.c.l.b16 %v2378
    %v2715 = vunpack.c.l.b16 %v2379
    %v2716 = vunpack.c.h.b16 %v2379
    %v2717 = vunpack.c.l.b16 %v2380
    %v2718 = vpack.c.b16 %v2697, %v2694
    %v2719 = vpack.c.b16 %v2698, %v2695
    %v2720 = vpack.c.b16 %v2699, %v2696
    %v2721 = vpack.c.b16 %v2703, %v2700
    %v2722 = vpack.c.b16 %v2704, %v2701
    %v2723 = vpack.c.b16 %v2705, %v2702
    %v2724 = vpack.c.b16 %v2709, %v2706
    %v2725 = vpack.c.b16 %v2710, %v2707
    %v2726 = vpack.c.b16 %v2711, %v2708
    %v2727 = vpack.c.b16 %v2715, %v2712
    %v2728 = vpack.c.b16 %v2716, %v2713
    %v2729 = vpack.c.b16 %v2717, %v2714
    %v2743 = vsel %vm2244, %v2364, 0
    %2745 = vmatprep.subr.bf16.mxu0 0
    %2746 = vmatpush1.bf16.msra.mxu0 0
    %2747 = vmatprep.subr.bf16.mxu0 0
    %2748 = vmatpush1.bf16.msra.mxu0 0
    %2749 = vmatprep.subr.bf16.mxu0 0
    %2750 = vmatpush1.bf16.msra.mxu0 0
    %2751 = vmatprep.subr.bf16.mxu0 0
    %2752 = vmatpush1.bf16.msra.mxu0 0
    %2753 = vmatprep.subr.bf16.mxu0 %v2728
    %2754 = vmatpush1.bf16.msra.mxu0 %v2727
    %2755 = vmatprep.subr.bf16.mxu0 %v2725
    %2756 = vmatpush1.bf16.msra.mxu0 %v2724
    %2757 = vmatprep.subr.bf16.mxu0 %v2722
    %2758 = vmatpush1.bf16.msra.mxu0 %v2721
    %2759 = vmatprep.subr.bf16.mxu0 %v2719
    %2760 = vmatpush1.bf16.msra.mxu0 %v2718
    %2761 = vmatprep.subr.bf16.mxu0 0
    %2762 = vmatpush2.bf16.msra.mxu0 0
    %2763 = vmatprep.subr.bf16.mxu0 0
    %2764 = vmatpush2.bf16.msra.mxu0 0
    %2765 = vmatprep.subr.bf16.mxu0 0
    %2766 = vmatpush2.bf16.msra.mxu0 0
    %2767 = vmatprep.subr.bf16.mxu0 0
    %2768 = vmatpush2.bf16.msra.mxu0 0
    %2769 = vmatprep.subr.bf16.mxu0 0
    %2770 = vmatpush2.bf16.msra.mxu0 0
    %2771 = vmatprep.subr.bf16.mxu0 0
    %2772 = vmatpush2.bf16.msra.mxu0 0
    %2773 = vmatprep.subr.bf16.mxu0 0
    %2774 = vmatpush2.bf16.msra.mxu0 0
    %2775 = vmatprep.subr.bf16.mxu0 0
    %2776 = vmatpush2.bf16.msra.mxu0 0
    %2777 = vmatprep.mubr.bf16.mxu0 0
    %2778 = vmatmul.mubr.bf16.gmra.mxu0 %v2743
    %v2779 = vpop.f32.mrf.mxu0
    %v2780 = vadd.f32 %v2629, %v2779
    %v2781 = vpop.f32.mrf.mxu0
    %v2782 = vadd.f32 %v2631, %v2781
    %v2783 = vpop.f32.mrf.mxu0
    %v2784 = vadd.f32 %v2633, %v2783
    %v2785 = vpop.f32.mrf.mxu0
    %v2786 = vadd.f32 %v2635, %v2785
    %2787 = vdwg.mxu0
    %2788 = vmatprep.subr.bf16.mxu0 0
    %2789 = vmatpush1.bf16.msra.mxu0 0
    %2790 = vmatprep.subr.bf16.mxu0 0
    %2791 = vmatpush1.bf16.msra.mxu0 0
    %2792 = vmatprep.subr.bf16.mxu0 0
    %2793 = vmatpush1.bf16.msra.mxu0 0
    %2794 = vmatprep.subr.bf16.mxu0 0
    %2795 = vmatpush1.bf16.msra.mxu0 0
    %2796 = vmatprep.subr.bf16.mxu0 0
    %2797 = vmatpush1.bf16.msra.mxu0 %v2729
    %2798 = vmatprep.subr.bf16.mxu0 0
    %2799 = vmatpush1.bf16.msra.mxu0 %v2726
    %2800 = vmatprep.subr.bf16.mxu0 0
    %2801 = vmatpush1.bf16.msra.mxu0 %v2723
    %2802 = vmatprep.subr.bf16.mxu0 0
    %2803 = vmatpush1.bf16.msra.mxu0 %v2720
    %2804 = vmatprep.subr.bf16.mxu0 0
    %2805 = vmatpush2.bf16.msra.mxu0 0
    %2806 = vmatprep.subr.bf16.mxu0 0
    %2807 = vmatpush2.bf16.msra.mxu0 0
    %2808 = vmatprep.subr.bf16.mxu0 0
    %2809 = vmatpush2.bf16.msra.mxu0 0
    %2810 = vmatprep.subr.bf16.mxu0 0
    %2811 = vmatpush2.bf16.msra.mxu0 0
    %2812 = vmatprep.subr.bf16.mxu0 0
    %2813 = vmatpush2.bf16.msra.mxu0 0
    %2814 = vmatprep.subr.bf16.mxu0 0
    %2815 = vmatpush2.bf16.msra.mxu0 0
    %2816 = vmatprep.subr.bf16.mxu0 0
    %2817 = vmatpush2.bf16.msra.mxu0 0
    %2818 = vmatprep.subr.bf16.mxu0 0
    %2819 = vmatpush2.bf16.msra.mxu0 0
    %2820 = vmatprep.mubr.bf16.mxu0 0
    %2821 = vmatmul.mubr.bf16.gmra.mxu0 %v2743
    %v2822 = vpop.f32.mrf.mxu0
    %v2823 = vadd.f32 %v2672, %v2822
    %v2824 = vpop.f32.mrf.mxu0
    %v2825 = vpop.f32.mrf.mxu0
    %v2826 = vadd.f32 %v2675, %v2825
    %v2827 = vpop.f32.mrf.mxu0
    %2828 = vdwg.mxu0
    %v2830 = vsel %vm2244, %v2220, 0
    %v2833 = vsel %vm2244, %v2223, 0
    %2835 = vmatprep.subr.bf16.mxu0 0
    %2836 = vmatpush1.bf16.xpose.msra.mxu0 0
    %2837 = vmatprep.subr.bf16.mxu0 0
    %2838 = vmatpush1.bf16.xpose.msra.mxu0 0
    %2839 = vmatprep.subr.bf16.mxu0 0
    %2840 = vmatpush1.bf16.xpose.msra.mxu0 0
    %2841 = vmatprep.subr.bf16.mxu0 0
    %2842 = vmatpush1.bf16.xpose.msra.mxu0 0
    %2843 = vmatprep.subr.bf16.mxu0 0
    %2844 = vmatpush1.bf16.xpose.msra.mxu0 0
    %2845 = vmatprep.subr.bf16.mxu0 0
    %2846 = vmatpush1.bf16.xpose.msra.mxu0 0
    %2847 = vmatprep.subr.bf16.mxu0 0
    %2848 = vmatpush1.bf16.xpose.msra.mxu0 0
    %2849 = vmatprep.subr.bf16.mxu0 0
    %2850 = vmatpush1.bf16.xpose.msra.mxu0 %v2833
    %2851 = vmatprep.subr.bf16.mxu0 0
    %2852 = vmatpush2.bf16.xpose.msra.mxu0 0
    %2853 = vmatprep.subr.bf16.mxu0 0
    %2854 = vmatpush2.bf16.xpose.msra.mxu0 0
    %2855 = vmatprep.subr.bf16.mxu0 0
    %2856 = vmatpush2.bf16.xpose.msra.mxu0 0
    %2857 = vmatprep.subr.bf16.mxu0 0
    %2858 = vmatpush2.bf16.xpose.msra.mxu0 0
    %2859 = vmatprep.subr.bf16.mxu0 0
    %2860 = vmatpush2.bf16.xpose.msra.mxu0 0
    %2861 = vmatprep.subr.bf16.mxu0 0
    %2862 = vmatpush2.bf16.xpose.msra.mxu0 0
    %2863 = vmatprep.subr.bf16.mxu0 0
    %2864 = vmatpush2.bf16.xpose.msra.mxu0 0
    %2865 = vmatprep.subr.bf16.mxu0 0
    %2866 = vmatpush2.bf16.xpose.msra.mxu0 0
    %2867 = vmatprep.mubr.bf16.mxu0 0
    %2868 = vmatmul.mubr.bf16.gmra.mxu0 %v2830
    %v2869 = vpop.f32.mrf.mxu0
    %v2870 = vadd.f32 0.0, %v2869
    %v2871 = vpop.f32.mrf.mxu0
    %v2872 = vpop.f32.mrf.mxu0
    %v2873 = vadd.f32 0.0, %v2872
    %v2874 = vpop.f32.mrf.mxu0
    %2875 = vdwg.mxu0
    %v2876 = vmul.f32 %v2870, 0.125
    %v2877 = vmul.f32 %v2873, 0.125
    %v2878 = vsel %vm2242, %v2876, -inf
    %v2879 = vsel %vm2243, %v2877, -inf
    %v2880 = vsel %vm2296, %v2878, -inf
    %2881 = vmax.xlane.f32.xlu0 %v2880
    %v2882 = vpop.xlane.xlu0 %2881
    %v2883 = vsel %vm2296, %v2879, -inf
    %2884 = vmax.xlane.f32.xlu0 %v2883
    %v2885 = vpop.xlane.xlu0 %2884
    %v2886 = vsub.f32 %v2878, %v2882
    %v2887 = vsub.f32 %v2879, %v2885
    %v2888 = vmul.f32 %v2886, 1.442695
    %v2889 = vpow.pop %v2888
    %v2890 = vmul.f32 %v2887, 1.442695
    %v2891 = vpow.pop %v2890
    %v2892 = vsel %vm2296, %v2889, 0.0
    %2893 = vadd.xlane.f32.xlu0 %v2892
    %v2894 = vpop.xlane.xlu0 %2893
    %v2895 = vsel %vm2296, %v2891, 0.0
    %2896 = vadd.xlane.f32.xlu0 %v2895
    %v2897 = vpop.xlane.xlu0 %2896
    %v2898 = vrcp.pop %v2894
    %v2899 = vrcp.pop %v2897
    %v2900 = vmul.f32 %v2889, %v2898
    %v2901 = vmul.f32 %v2891, %v2899
    %v2902 = vpack.c.bf16 %v2901, %v2900
    %v2904 = vsel %vm2296, %v2902, 0
    %2906 = vmatprep.subr.bf16.mxu0 0
    %2907 = vmatpush1.bf16.msra.mxu0 0
    %2908 = vmatprep.subr.bf16.mxu0 0
    %2909 = vmatpush1.bf16.msra.mxu0 0
    %2910 = vmatprep.subr.bf16.mxu0 0
    %2911 = vmatpush1.bf16.msra.mxu0 0
    %2912 = vmatprep.subr.bf16.mxu0 0
    %2913 = vmatpush1.bf16.msra.mxu0 0
    %2914 = vmatprep.subr.bf16.mxu0 0
    %2915 = vmatpush1.bf16.msra.mxu0 0
    %2916 = vmatprep.subr.bf16.mxu0 0
    %2917 = vmatpush1.bf16.msra.mxu0 0
    %2918 = vmatprep.subr.bf16.mxu0 0
    %2919 = vmatpush1.bf16.msra.mxu0 0
    %2920 = vmatprep.subr.bf16.mxu0 0
    %2921 = vmatpush1.bf16.msra.mxu0 %v2226
    %2922 = vmatprep.subr.bf16.mxu0 0
    %2923 = vmatpush2.bf16.msra.mxu0 0
    %2924 = vmatprep.subr.bf16.mxu0 0
    %2925 = vmatpush2.bf16.msra.mxu0 0
    %2926 = vmatprep.subr.bf16.mxu0 0
    %2927 = vmatpush2.bf16.msra.mxu0 0
    %2928 = vmatprep.subr.bf16.mxu0 0
    %2929 = vmatpush2.bf16.msra.mxu0 0
    %2930 = vmatprep.subr.bf16.mxu0 0
    %2931 = vmatpush2.bf16.msra.mxu0 0
    %2932 = vmatprep.subr.bf16.mxu0 0
    %2933 = vmatpush2.bf16.msra.mxu0 0
    %2934 = vmatprep.subr.bf16.mxu0 0
    %2935 = vmatpush2.bf16.msra.mxu0 0
    %2936 = vmatprep.subr.bf16.mxu0 0
    %2937 = vmatpush2.bf16.msra.mxu0 0
    %2938 = vmatprep.mubr.bf16.mxu0 0
    %2939 = vmatmul.mubr.bf16.gmra.mxu0 %v2904
    %v2940 = vpop.f32.mrf.mxu0
    %v2941 = vadd.f32 0.0, %v2940
    %v2942 = vpop.f32.mrf.mxu0
    %v2943 = vpop.f32.mrf.mxu0
    %v2944 = vadd.f32 0.0, %v2943
    %v2945 = vpop.f32.mrf.mxu0
    %2946 = vdwg.mxu0
    %v2947 = vpack.c.bf16 %v2944, %v2941
    %s2948 = scalar_lea.vmem [#allocation11], 192
    %v2949 = vld [vmem:[%s2948] sm:$0xff]
    %v2950 = vld [vmem:[%s2948 + $0x8] sm:$0xf]
    %v2951 = vld [vmem:[%s2948 + $0xc] sm:$0xff]
    %v2952 = vld [vmem:[%s2948 + $0x14] sm:$0xf]
    %v2953 = vld [vmem:[%s2948 + $0x18] sm:$0xff]
    %v2954 = vld [vmem:[%s2948 + $0x20] sm:$0xf]
    %v2955 = vld [vmem:[%s2948 + $0x24] sm:$0xff]
    %v2956 = vld [vmem:[%s2948 + $0x2c] sm:$0xf]
    %v2957 = vld [vmem:[%s2948 + $0x30] sm:$0xff]
    %v2958 = vld [vmem:[%s2948 + $0x38] sm:$0xf]
    %v2959 = vld [vmem:[%s2948 + $0x3c] sm:$0xff]
    %v2960 = vld [vmem:[%s2948 + $0x44] sm:$0xf]
    %v2961 = vld [vmem:[%s2948 + $0x48] sm:$0xff]
    %v2962 = vld [vmem:[%s2948 + $0x50] sm:$0xf]
    %v2963 = vld [vmem:[%s2948 + $0x54] sm:$0xff]
    %v2964 = vld [vmem:[%s2948 + $0x5c] sm:$0xf]
    %v2981 = vunpack.c.l.b16 %v2949
    %v2982 = vunpack.c.h.b16 %v2949
    %v2983 = vunpack.c.l.b16 %v2950
    %v2984 = vunpack.c.l.b16 %v2951
    %v2985 = vunpack.c.h.b16 %v2951
    %v2986 = vunpack.c.l.b16 %v2952
    %v2987 = vunpack.c.l.b16 %v2953
    %v2988 = vunpack.c.h.b16 %v2953
    %v2989 = vunpack.c.l.b16 %v2954
    %v2990 = vunpack.c.l.b16 %v2955
    %v2991 = vunpack.c.h.b16 %v2955
    %v2992 = vunpack.c.l.b16 %v2956
    %v2993 = vunpack.c.l.b16 %v2957
    %v2994 = vunpack.c.h.b16 %v2957
    %v2995 = vunpack.c.l.b16 %v2958
    %v2996 = vunpack.c.l.b16 %v2959
    %v2997 = vunpack.c.h.b16 %v2959
    %v2998 = vunpack.c.l.b16 %v2960
    %v2999 = vunpack.c.l.b16 %v2961
    %v3000 = vunpack.c.h.b16 %v2961
    %v3001 = vunpack.c.l.b16 %v2962
    %v3002 = vunpack.c.l.b16 %v2963
    %v3003 = vunpack.c.h.b16 %v2963
    %v3004 = vunpack.c.l.b16 %v2964
    %v3005 = vpack.c.b16 %v2984, %v2981
    %v3006 = vpack.c.b16 %v2985, %v2982
    %v3007 = vpack.c.b16 %v2986, %v2983
    %v3008 = vpack.c.b16 %v2990, %v2987
    %v3009 = vpack.c.b16 %v2991, %v2988
    %v3010 = vpack.c.b16 %v2992, %v2989
    %v3011 = vpack.c.b16 %v2996, %v2993
    %v3012 = vpack.c.b16 %v2997, %v2994
    %v3013 = vpack.c.b16 %v2998, %v2995
    %v3014 = vpack.c.b16 %v3002, %v2999
    %v3015 = vpack.c.b16 %v3003, %v3000
    %v3016 = vpack.c.b16 %v3004, %v3001
    %v3030 = vsel %vm2244, %v2947, 0
    %3032 = vmatprep.subr.bf16.mxu0 0
    %3033 = vmatpush1.bf16.msra.mxu0 0
    %3034 = vmatprep.subr.bf16.mxu0 0
    %3035 = vmatpush1.bf16.msra.mxu0 0
    %3036 = vmatprep.subr.bf16.mxu0 0
    %3037 = vmatpush1.bf16.msra.mxu0 0
    %3038 = vmatprep.subr.bf16.mxu0 0
    %3039 = vmatpush1.bf16.msra.mxu0 0
    %3040 = vmatprep.subr.bf16.mxu0 %v3015
    %3041 = vmatpush1.bf16.msra.mxu0 %v3014
    %3042 = vmatprep.subr.bf16.mxu0 %v3012
    %3043 = vmatpush1.bf16.msra.mxu0 %v3011
    %3044 = vmatprep.subr.bf16.mxu0 %v3009
    %3045 = vmatpush1.bf16.msra.mxu0 %v3008
    %3046 = vmatprep.subr.bf16.mxu0 %v3006
    %3047 = vmatpush1.bf16.msra.mxu0 %v3005
    %3048 = vmatprep.subr.bf16.mxu0 0
    %3049 = vmatpush2.bf16.msra.mxu0 0
    %3050 = vmatprep.subr.bf16.mxu0 0
    %3051 = vmatpush2.bf16.msra.mxu0 0
    %3052 = vmatprep.subr.bf16.mxu0 0
    %3053 = vmatpush2.bf16.msra.mxu0 0
    %3054 = vmatprep.subr.bf16.mxu0 0
    %3055 = vmatpush2.bf16.msra.mxu0 0
    %3056 = vmatprep.subr.bf16.mxu0 0
    %3057 = vmatpush2.bf16.msra.mxu0 0
    %3058 = vmatprep.subr.bf16.mxu0 0
    %3059 = vmatpush2.bf16.msra.mxu0 0
    %3060 = vmatprep.subr.bf16.mxu0 0
    %3061 = vmatpush2.bf16.msra.mxu0 0
    %3062 = vmatprep.subr.bf16.mxu0 0
    %3063 = vmatpush2.bf16.msra.mxu0 0
    %3064 = vmatprep.mubr.bf16.mxu0 0
    %3065 = vmatmul.mubr.bf16.gmra.mxu0 %v3030
    %v3066 = vpop.f32.mrf.mxu0
    %v3067 = vadd.f32 0.0, %v3066
    %v3068 = vpop.f32.mrf.mxu0
    %v3069 = vadd.f32 0.0, %v3068
    %v3070 = vpop.f32.mrf.mxu0
    %v3071 = vadd.f32 0.0, %v3070
    %v3072 = vpop.f32.mrf.mxu0
    %v3073 = vadd.f32 0.0, %v3072
    %3074 = vdwg.mxu0
    %3075 = vmatprep.subr.bf16.mxu0 0
    %3076 = vmatpush1.bf16.msra.mxu0 0
    %3077 = vmatprep.subr.bf16.mxu0 0
    %3078 = vmatpush1.bf16.msra.mxu0 0
    %3079 = vmatprep.subr.bf16.mxu0 0
    %3080 = vmatpush1.bf16.msra.mxu0 0
    %3081 = vmatprep.subr.bf16.mxu0 0
    %3082 = vmatpush1.bf16.msra.mxu0 0
    %3083 = vmatprep.subr.bf16.mxu0 0
    %3084 = vmatpush1.bf16.msra.mxu0 %v3016
    %3085 = vmatprep.subr.bf16.mxu0 0
    %3086 = vmatpush1.bf16.msra.mxu0 %v3013
    %3087 = vmatprep.subr.bf16.mxu0 0
    %3088 = vmatpush1.bf16.msra.mxu0 %v3010
    %3089 = vmatprep.subr.bf16.mxu0 0
    %3090 = vmatpush1.bf16.msra.mxu0 %v3007
    %3091 = vmatprep.subr.bf16.mxu0 0
    %3092 = vmatpush2.bf16.msra.mxu0 0
    %3093 = vmatprep.subr.bf16.mxu0 0
    %3094 = vmatpush2.bf16.msra.mxu0 0
    %3095 = vmatprep.subr.bf16.mxu0 0
    %3096 = vmatpush2.bf16.msra.mxu0 0
    %3097 = vmatprep.subr.bf16.mxu0 0
    %3098 = vmatpush2.bf16.msra.mxu0 0
    %3099 = vmatprep.subr.bf16.mxu0 0
    %3100 = vmatpush2.bf16.msra.mxu0 0
    %3101 = vmatprep.subr.bf16.mxu0 0
    %3102 = vmatpush2.bf16.msra.mxu0 0
    %3103 = vmatprep.subr.bf16.mxu0 0
    %3104 = vmatpush2.bf16.msra.mxu0 0
    %3105 = vmatprep.subr.bf16.mxu0 0
    %3106 = vmatpush2.bf16.msra.mxu0 0
    %3107 = vmatprep.mubr.bf16.mxu0 0
    %3108 = vmatmul.mubr.bf16.gmra.mxu0 %v3030
    %v3109 = vpop.f32.mrf.mxu0
    %v3110 = vadd.f32 0.0, %v3109
    %v3111 = vpop.f32.mrf.mxu0
    %v3112 = vpop.f32.mrf.mxu0
    %v3113 = vadd.f32 0.0, %v3112
    %v3114 = vpop.f32.mrf.mxu0
    %3115 = vdwg.mxu0
    %v3116 = vadd.f32 %v2780, %v3067
    %v3117 = vadd.f32 %v2782, %v3069
    %v3118 = vadd.f32 %v2823, %v3110
    %v3119 = vadd.f32 %v2784, %v3071
    %v3120 = vadd.f32 %v2786, %v3073
    %v3121 = vadd.f32 %v2826, %v3113
    %3123 = vrot.lane.b32.xlu0 %v2220, 64
    %v3124 = vpop.permute.xlu0 %3123
    %3126 = vrot.lane.b32.xlu0 %v2223, 64
    %v3127 = vpop.permute.xlu0 %3126
    %v3129 = vsel %vm2244, %v3124, 0
    %v3132 = vsel %vm2244, %v3127, 0
    %3134 = vmatprep.subr.bf16.mxu0 0
    %3135 = vmatpush1.bf16.xpose.msra.mxu0 0
    %3136 = vmatprep.subr.bf16.mxu0 0
    %3137 = vmatpush1.bf16.xpose.msra.mxu0 0
    %3138 = vmatprep.subr.bf16.mxu0 0
    %3139 = vmatpush1.bf16.xpose.msra.mxu0 0
    %3140 = vmatprep.subr.bf16.mxu0 0
    %3141 = vmatpush1.bf16.xpose.msra.mxu0 0
    %3142 = vmatprep.subr.bf16.mxu0 0
    %3143 = vmatpush1.bf16.xpose.msra.mxu0 0
    %3144 = vmatprep.subr.bf16.mxu0 0
    %3145 = vmatpush1.bf16.xpose.msra.mxu0 0
    %3146 = vmatprep.subr.bf16.mxu0 0
    %3147 = vmatpush1.bf16.xpose.msra.mxu0 0
    %3148 = vmatprep.subr.bf16.mxu0 0
    %3149 = vmatpush1.bf16.xpose.msra.mxu0 %v3132
    %3150 = vmatprep.subr.bf16.mxu0 0
    %3151 = vmatpush2.bf16.xpose.msra.mxu0 0
    %3152 = vmatprep.subr.bf16.mxu0 0
    %3153 = vmatpush2.bf16.xpose.msra.mxu0 0
    %3154 = vmatprep.subr.bf16.mxu0 0
    %3155 = vmatpush2.bf16.xpose.msra.mxu0 0
    %3156 = vmatprep.subr.bf16.mxu0 0
    %3157 = vmatpush2.bf16.xpose.msra.mxu0 0
    %3158 = vmatprep.subr.bf16.mxu0 0
    %3159 = vmatpush2.bf16.xpose.msra.mxu0 0
    %3160 = vmatprep.subr.bf16.mxu0 0
    %3161 = vmatpush2.bf16.xpose.msra.mxu0 0
    %3162 = vmatprep.subr.bf16.mxu0 0
    %3163 = vmatpush2.bf16.xpose.msra.mxu0 0
    %3164 = vmatprep.subr.bf16.mxu0 0
    %3165 = vmatpush2.bf16.xpose.msra.mxu0 0
    %3166 = vmatprep.mubr.bf16.mxu0 0
    %3167 = vmatmul.mubr.bf16.gmra.mxu0 %v3129
    %v3168 = vpop.f32.mrf.mxu0
    %v3169 = vadd.f32 0.0, %v3168
    %v3170 = vpop.f32.mrf.mxu0
    %v3171 = vpop.f32.mrf.mxu0
    %v3172 = vadd.f32 0.0, %v3171
    %v3173 = vpop.f32.mrf.mxu0
    %3174 = vdwg.mxu0
    %v3175 = vmul.f32 %v3169, 0.125
    %v3176 = vmul.f32 %v3172, 0.125
    %v3177 = vsel %vm2242, %v3175, -inf
    %v3178 = vsel %vm2243, %v3176, -inf
    %v3179 = vsel %vm2296, %v3177, -inf
    %3180 = vmax.xlane.f32.xlu0 %v3179
    %v3181 = vpop.xlane.xlu0 %3180
    %v3182 = vsel %vm2296, %v3178, -inf
    %3183 = vmax.xlane.f32.xlu0 %v3182
    %v3184 = vpop.xlane.xlu0 %3183
    %v3185 = vsub.f32 %v3177, %v3181
    %v3186 = vsub.f32 %v3178, %v3184
    %v3187 = vmul.f32 %v3185, 1.442695
    %v3188 = vpow.pop %v3187
    %v3189 = vmul.f32 %v3186, 1.442695
    %v3190 = vpow.pop %v3189
    %v3191 = vsel %vm2296, %v3188, 0.0
    %3192 = vadd.xlane.f32.xlu0 %v3191
    %v3193 = vpop.xlane.xlu0 %3192
    %v3194 = vsel %vm2296, %v3190, 0.0
    %3195 = vadd.xlane.f32.xlu0 %v3194
    %v3196 = vpop.xlane.xlu0 %3195
    %v3197 = vrcp.pop %v3193
    %v3198 = vrcp.pop %v3196
    %v3199 = vmul.f32 %v3188, %v3197
    %v3200 = vmul.f32 %v3190, %v3198
    %v3201 = vpack.c.bf16 %v3200, %v3199
    %3203 = vrot.lane.b32.xlu0 %v2226, 64
    %v3204 = vpop.permute.xlu0 %3203
    %v3207 = vsel %vm2296, %v3201, 0
    %3209 = vmatprep.subr.bf16.mxu0 0
    %3210 = vmatpush1.bf16.msra.mxu0 0
    %3211 = vmatprep.subr.bf16.mxu0 0
    %3212 = vmatpush1.bf16.msra.mxu0 0
    %3213 = vmatprep.subr.bf16.mxu0 0
    %3214 = vmatpush1.bf16.msra.mxu0 0
    %3215 = vmatprep.subr.bf16.mxu0 0
    %3216 = vmatpush1.bf16.msra.mxu0 0
    %3217 = vmatprep.subr.bf16.mxu0 0
    %3218 = vmatpush1.bf16.msra.mxu0 0
    %3219 = vmatprep.subr.bf16.mxu0 0
    %3220 = vmatpush1.bf16.msra.mxu0 0
    %3221 = vmatprep.subr.bf16.mxu0 0
    %3222 = vmatpush1.bf16.msra.mxu0 0
    %3223 = vmatprep.subr.bf16.mxu0 0
    %3224 = vmatpush1.bf16.msra.mxu0 %v3204
    %3225 = vmatprep.subr.bf16.mxu0 0
    %3226 = vmatpush2.bf16.msra.mxu0 0
    %3227 = vmatprep.subr.bf16.mxu0 0
    %3228 = vmatpush2.bf16.msra.mxu0 0
    %3229 = vmatprep.subr.bf16.mxu0 0
    %3230 = vmatpush2.bf16.msra.mxu0 0
    %3231 = vmatprep.subr.bf16.mxu0 0
    %3232 = vmatpush2.bf16.msra.mxu0 0
    %3233 = vmatprep.subr.bf16.mxu0 0
    %3234 = vmatpush2.bf16.msra.mxu0 0
    %3235 = vmatprep.subr.bf16.mxu0 0
    %3236 = vmatpush2.bf16.msra.mxu0 0
    %3237 = vmatprep.subr.bf16.mxu0 0
    %3238 = vmatpush2.bf16.msra.mxu0 0
    %3239 = vmatprep.subr.bf16.mxu0 0
    %3240 = vmatpush2.bf16.msra.mxu0 0
    %3241 = vmatprep.mubr.bf16.mxu0 0
    %3242 = vmatmul.mubr.bf16.gmra.mxu0 %v3207
    %v3243 = vpop.f32.mrf.mxu0
    %v3244 = vadd.f32 0.0, %v3243
    %v3245 = vpop.f32.mrf.mxu0
    %v3246 = vpop.f32.mrf.mxu0
    %v3247 = vadd.f32 0.0, %v3246
    %v3248 = vpop.f32.mrf.mxu0
    %3249 = vdwg.mxu0
    %v3250 = vpack.c.bf16 %v3247, %v3244
    %s3251 = scalar_lea.vmem [#allocation11], 288
    %v3252 = vld [vmem:[%s3251] sm:$0xff]
    %v3253 = vld [vmem:[%s3251 + $0x8] sm:$0xf]
    %v3254 = vld [vmem:[%s3251 + $0xc] sm:$0xff]
    %v3255 = vld [vmem:[%s3251 + $0x14] sm:$0xf]
    %v3256 = vld [vmem:[%s3251 + $0x18] sm:$0xff]
    %v3257 = vld [vmem:[%s3251 + $0x20] sm:$0xf]
    %v3258 = vld [vmem:[%s3251 + $0x24] sm:$0xff]
    %v3259 = vld [vmem:[%s3251 + $0x2c] sm:$0xf]
    %v3260 = vld [vmem:[%s3251 + $0x30] sm:$0xff]
    %v3261 = vld [vmem:[%s3251 + $0x38] sm:$0xf]
    %v3262 = vld [vmem:[%s3251 + $0x3c] sm:$0xff]
    %v3263 = vld [vmem:[%s3251 + $0x44] sm:$0xf]
    %v3264 = vld [vmem:[%s3251 + $0x48] sm:$0xff]
    %v3265 = vld [vmem:[%s3251 + $0x50] sm:$0xf]
    %v3266 = vld [vmem:[%s3251 + $0x54] sm:$0xff]
    %v3267 = vld [vmem:[%s3251 + $0x5c] sm:$0xf]
    %v3284 = vunpack.c.l.b16 %v3252
    %v3285 = vunpack.c.h.b16 %v3252
    %v3286 = vunpack.c.l.b16 %v3253
    %v3287 = vunpack.c.l.b16 %v3254
    %v3288 = vunpack.c.h.b16 %v3254
    %v3289 = vunpack.c.l.b16 %v3255
    %v3290 = vunpack.c.l.b16 %v3256
    %v3291 = vunpack.c.h.b16 %v3256
    %v3292 = vunpack.c.l.b16 %v3257
    %v3293 = vunpack.c.l.b16 %v3258
    %v3294 = vunpack.c.h.b16 %v3258
    %v3295 = vunpack.c.l.b16 %v3259
    %v3296 = vunpack.c.l.b16 %v3260
    %v3297 = vunpack.c.h.b16 %v3260
    %v3298 = vunpack.c.l.b16 %v3261
    %v3299 = vunpack.c.l.b16 %v3262
    %v3300 = vunpack.c.h.b16 %v3262
    %v3301 = vunpack.c.l.b16 %v3263
    %v3302 = vunpack.c.l.b16 %v3264
    %v3303 = vunpack.c.h.b16 %v3264
    %v3304 = vunpack.c.l.b16 %v3265
    %v3305 = vunpack.c.l.b16 %v3266
    %v3306 = vunpack.c.h.b16 %v3266
    %v3307 = vunpack.c.l.b16 %v3267
    %v3308 = vpack.c.b16 %v3287, %v3284
    %v3309 = vpack.c.b16 %v3288, %v3285
    %v3310 = vpack.c.b16 %v3289, %v3286
    %v3311 = vpack.c.b16 %v3293, %v3290
    %v3312 = vpack.c.b16 %v3294, %v3291
    %v3313 = vpack.c.b16 %v3295, %v3292
    %v3314 = vpack.c.b16 %v3299, %v3296
    %v3315 = vpack.c.b16 %v3300, %v3297
    %v3316 = vpack.c.b16 %v3301, %v3298
    %v3317 = vpack.c.b16 %v3305, %v3302
    %v3318 = vpack.c.b16 %v3306, %v3303
    %v3319 = vpack.c.b16 %v3307, %v3304
    %v3333 = vsel %vm2244, %v3250, 0
    %3335 = vmatprep.subr.bf16.mxu0 0
    %3336 = vmatpush1.bf16.msra.mxu0 0
    %3337 = vmatprep.subr.bf16.mxu0 0
    %3338 = vmatpush1.bf16.msra.mxu0 0
    %3339 = vmatprep.subr.bf16.mxu0 0
    %3340 = vmatpush1.bf16.msra.mxu0 0
    %3341 = vmatprep.subr.bf16.mxu0 0
    %3342 = vmatpush1.bf16.msra.mxu0 0
    %3343 = vmatprep.subr.bf16.mxu0 %v3318
    %3344 = vmatpush1.bf16.msra.mxu0 %v3317
    %3345 = vmatprep.subr.bf16.mxu0 %v3315
    %3346 = vmatpush1.bf16.msra.mxu0 %v3314
    %3347 = vmatprep.subr.bf16.mxu0 %v3312
    %3348 = vmatpush1.bf16.msra.mxu0 %v3311
    %3349 = vmatprep.subr.bf16.mxu0 %v3309
    %3350 = vmatpush1.bf16.msra.mxu0 %v3308
    %3351 = vmatprep.subr.bf16.mxu0 0
    %3352 = vmatpush2.bf16.msra.mxu0 0
    %3353 = vmatprep.subr.bf16.mxu0 0
    %3354 = vmatpush2.bf16.msra.mxu0 0
    %3355 = vmatprep.subr.bf16.mxu0 0
    %3356 = vmatpush2.bf16.msra.mxu0 0
    %3357 = vmatprep.subr.bf16.mxu0 0
    %3358 = vmatpush2.bf16.msra.mxu0 0
    %3359 = vmatprep.subr.bf16.mxu0 0
    %3360 = vmatpush2.bf16.msra.mxu0 0
    %3361 = vmatprep.subr.bf16.mxu0 0
    %3362 = vmatpush2.bf16.msra.mxu0 0
    %3363 = vmatprep.subr.bf16.mxu0 0
    %3364 = vmatpush2.bf16.msra.mxu0 0
    %3365 = vmatprep.subr.bf16.mxu0 0
    %3366 = vmatpush2.bf16.msra.mxu0 0
    %3367 = vmatprep.mubr.bf16.mxu0 0
    %3368 = vmatmul.mubr.bf16.gmra.mxu0 %v3333
    %v3369 = vpop.f32.mrf.mxu0
    %v3370 = vadd.f32 0.0, %v3369
    %v3371 = vpop.f32.mrf.mxu0
    %v3372 = vadd.f32 0.0, %v3371
    %v3373 = vpop.f32.mrf.mxu0
    %v3374 = vadd.f32 0.0, %v3373
    %v3375 = vpop.f32.mrf.mxu0
    %v3376 = vadd.f32 0.0, %v3375
    %3377 = vdwg.mxu0
    %3378 = vmatprep.subr.bf16.mxu0 0
    %3379 = vmatpush1.bf16.msra.mxu0 0
    %3380 = vmatprep.subr.bf16.mxu0 0
    %3381 = vmatpush1.bf16.msra.mxu0 0
    %3382 = vmatprep.subr.bf16.mxu0 0
    %3383 = vmatpush1.bf16.msra.mxu0 0
    %3384 = vmatprep.subr.bf16.mxu0 0
    %3385 = vmatpush1.bf16.msra.mxu0 0
    %3386 = vmatprep.subr.bf16.mxu0 0
    %3387 = vmatpush1.bf16.msra.mxu0 %v3319
    %3388 = vmatprep.subr.bf16.mxu0 0
    %3389 = vmatpush1.bf16.msra.mxu0 %v3316
    %3390 = vmatprep.subr.bf16.mxu0 0
    %3391 = vmatpush1.bf16.msra.mxu0 %v3313
    %3392 = vmatprep.subr.bf16.mxu0 0
    %3393 = vmatpush1.bf16.msra.mxu0 %v3310
    %3394 = vmatprep.subr.bf16.mxu0 0
    %3395 = vmatpush2.bf16.msra.mxu0 0
    %3396 = vmatprep.subr.bf16.mxu0 0
    %3397 = vmatpush2.bf16.msra.mxu0 0
    %3398 = vmatprep.subr.bf16.mxu0 0
    %3399 = vmatpush2.bf16.msra.mxu0 0
    %3400 = vmatprep.subr.bf16.mxu0 0
    %3401 = vmatpush2.bf16.msra.mxu0 0
    %3402 = vmatprep.subr.bf16.mxu0 0
    %3403 = vmatpush2.bf16.msra.mxu0 0
    %3404 = vmatprep.subr.bf16.mxu0 0
    %3405 = vmatpush2.bf16.msra.mxu0 0
    %3406 = vmatprep.subr.bf16.mxu0 0
    %3407 = vmatpush2.bf16.msra.mxu0 0
    %3408 = vmatprep.subr.bf16.mxu0 0
    %3409 = vmatpush2.bf16.msra.mxu0 0
    %3410 = vmatprep.mubr.bf16.mxu0 0
    %3411 = vmatmul.mubr.bf16.gmra.mxu0 %v3333
    %v3412 = vpop.f32.mrf.mxu0
    %v3413 = vadd.f32 0.0, %v3412
    %v3414 = vpop.f32.mrf.mxu0
    %v3415 = vpop.f32.mrf.mxu0
    %v3416 = vadd.f32 0.0, %v3415
    %v3417 = vpop.f32.mrf.mxu0
    %3418 = vdwg.mxu0
    %v3419 = vadd.f32 %v3116, %v3370
    %v3420 = vadd.f32 %v3117, %v3372
    %v3421 = vadd.f32 %v3118, %v3413
    %v3422 = vadd.f32 %v3119, %v3374
    %v3423 = vadd.f32 %v3120, %v3376
    %v3424 = vadd.f32 %v3121, %v3416
    %v3426 = vsel %vm2244, %v2221, 0
    %v3429 = vsel %vm2244, %v2224, 0
    %3431 = vmatprep.subr.bf16.mxu0 0
    %3432 = vmatpush1.bf16.xpose.msra.mxu0 0
    %3433 = vmatprep.subr.bf16.mxu0 0
    %3434 = vmatpush1.bf16.xpose.msra.mxu0 0
    %3435 = vmatprep.subr.bf16.mxu0 0
    %3436 = vmatpush1.bf16.xpose.msra.mxu0 0
    %3437 = vmatprep.subr.bf16.mxu0 0
    %3438 = vmatpush1.bf16.xpose.msra.mxu0 0
    %3439 = vmatprep.subr.bf16.mxu0 0
    %3440 = vmatpush1.bf16.xpose.msra.mxu0 0
    %3441 = vmatprep.subr.bf16.mxu0 0
    %3442 = vmatpush1.bf16.xpose.msra.mxu0 0
    %3443 = vmatprep.subr.bf16.mxu0 0
    %3444 = vmatpush1.bf16.xpose.msra.mxu0 0
    %3445 = vmatprep.subr.bf16.mxu0 0
    %3446 = vmatpush1.bf16.xpose.msra.mxu0 %v3429
    %3447 = vmatprep.subr.bf16.mxu0 0
    %3448 = vmatpush2.bf16.xpose.msra.mxu0 0
    %3449 = vmatprep.subr.bf16.mxu0 0
    %3450 = vmatpush2.bf16.xpose.msra.mxu0 0
    %3451 = vmatprep.subr.bf16.mxu0 0
    %3452 = vmatpush2.bf16.xpose.msra.mxu0 0
    %3453 = vmatprep.subr.bf16.mxu0 0
    %3454 = vmatpush2.bf16.xpose.msra.mxu0 0
    %3455 = vmatprep.subr.bf16.mxu0 0
    %3456 = vmatpush2.bf16.xpose.msra.mxu0 0
    %3457 = vmatprep.subr.bf16.mxu0 0
    %3458 = vmatpush2.bf16.xpose.msra.mxu0 0
    %3459 = vmatprep.subr.bf16.mxu0 0
    %3460 = vmatpush2.bf16.xpose.msra.mxu0 0
    %3461 = vmatprep.subr.bf16.mxu0 0
    %3462 = vmatpush2.bf16.xpose.msra.mxu0 0
    %3463 = vmatprep.mubr.bf16.mxu0 0
    %3464 = vmatmul.mubr.bf16.gmra.mxu0 %v3426
    %v3465 = vpop.f32.mrf.mxu0
    %v3466 = vadd.f32 0.0, %v3465
    %v3467 = vpop.f32.mrf.mxu0
    %v3468 = vpop.f32.mrf.mxu0
    %v3469 = vadd.f32 0.0, %v3468
    %v3470 = vpop.f32.mrf.mxu0
    %3471 = vdwg.mxu0
    %v3472 = vmul.f32 %v3466, 0.125
    %v3473 = vmul.f32 %v3469, 0.125
    %v3474 = vsel %vm2242, %v3472, -inf
    %v3475 = vsel %vm2243, %v3473, -inf
    %v3476 = vsel %vm2296, %v3474, -inf
    %3477 = vmax.xlane.f32.xlu0 %v3476
    %v3478 = vpop.xlane.xlu0 %3477
    %v3479 = vsel %vm2296, %v3475, -inf
    %3480 = vmax.xlane.f32.xlu0 %v3479
    %v3481 = vpop.xlane.xlu0 %3480
    %v3482 = vsub.f32 %v3474, %v3478
    %v3483 = vsub.f32 %v3475, %v3481
    %v3484 = vmul.f32 %v3482, 1.442695
    %v3485 = vpow.pop %v3484
    %v3486 = vmul.f32 %v3483, 1.442695
    %v3487 = vpow.pop %v3486
    %v3488 = vsel %vm2296, %v3485, 0.0
    %3489 = vadd.xlane.f32.xlu0 %v3488
    %v3490 = vpop.xlane.xlu0 %3489
    %v3491 = vsel %vm2296, %v3487, 0.0
    %3492 = vadd.xlane.f32.xlu0 %v3491
    %v3493 = vpop.xlane.xlu0 %3492
    %v3494 = vrcp.pop %v3490
    %v3495 = vrcp.pop %v3493
    %v3496 = vmul.f32 %v3485, %v3494
    %v3497 = vmul.f32 %v3487, %v3495
    %v3498 = vpack.c.bf16 %v3497, %v3496
    %v3500 = vsel %vm2296, %v3498, 0
    %3502 = vmatprep.subr.bf16.mxu0 0
    %3503 = vmatpush1.bf16.msra.mxu0 0
    %3504 = vmatprep.subr.bf16.mxu0 0
    %3505 = vmatpush1.bf16.msra.mxu0 0
    %3506 = vmatprep.subr.bf16.mxu0 0
    %3507 = vmatpush1.bf16.msra.mxu0 0
    %3508 = vmatprep.subr.bf16.mxu0 0
    %3509 = vmatpush1.bf16.msra.mxu0 0
    %3510 = vmatprep.subr.bf16.mxu0 0
    %3511 = vmatpush1.bf16.msra.mxu0 0
    %3512 = vmatprep.subr.bf16.mxu0 0
    %3513 = vmatpush1.bf16.msra.mxu0 0
    %3514 = vmatprep.subr.bf16.mxu0 0
    %3515 = vmatpush1.bf16.msra.mxu0 0
    %3516 = vmatprep.subr.bf16.mxu0 0
    %3517 = vmatpush1.bf16.msra.mxu0 %v2227
    %3518 = vmatprep.subr.bf16.mxu0 0
    %3519 = vmatpush2.bf16.msra.mxu0 0
    %3520 = vmatprep.subr.bf16.mxu0 0
    %3521 = vmatpush2.bf16.msra.mxu0 0
    %3522 = vmatprep.subr.bf16.mxu0 0
    %3523 = vmatpush2.bf16.msra.mxu0 0
    %3524 = vmatprep.subr.bf16.mxu0 0
    %3525 = vmatpush2.bf16.msra.mxu0 0
    %3526 = vmatprep.subr.bf16.mxu0 0
    %3527 = vmatpush2.bf16.msra.mxu0 0
    %3528 = vmatprep.subr.bf16.mxu0 0
    %3529 = vmatpush2.bf16.msra.mxu0 0
    %3530 = vmatprep.subr.bf16.mxu0 0
    %3531 = vmatpush2.bf16.msra.mxu0 0
    %3532 = vmatprep.subr.bf16.mxu0 0
    %3533 = vmatpush2.bf16.msra.mxu0 0
    %3534 = vmatprep.mubr.bf16.mxu0 0
    %3535 = vmatmul.mubr.bf16.gmra.mxu0 %v3500
    %v3536 = vpop.f32.mrf.mxu0
    %v3537 = vadd.f32 0.0, %v3536
    %v3538 = vpop.f32.mrf.mxu0
    %v3539 = vpop.f32.mrf.mxu0
    %v3540 = vadd.f32 0.0, %v3539
    %v3541 = vpop.f32.mrf.mxu0
    %3542 = vdwg.mxu0
    %v3543 = vpack.c.bf16 %v3540, %v3537
    %s3544 = scalar_lea.vmem [#allocation11], 384
    %v3545 = vld [vmem:[%s3544] sm:$0xff]
    %v3546 = vld [vmem:[%s3544 + $0x8] sm:$0xf]
    %v3547 = vld [vmem:[%s3544 + $0xc] sm:$0xff]
    %v3548 = vld [vmem:[%s3544 + $0x14] sm:$0xf]
    %v3549 = vld [vmem:[%s3544 + $0x18] sm:$0xff]
    %v3550 = vld [vmem:[%s3544 + $0x20] sm:$0xf]
    %v3551 = vld [vmem:[%s3544 + $0x24] sm:$0xff]
    %v3552 = vld [vmem:[%s3544 + $0x2c] sm:$0xf]
    %v3553 = vld [vmem:[%s3544 + $0x30] sm:$0xff]
    %v3554 = vld [vmem:[%s3544 + $0x38] sm:$0xf]
    %v3555 = vld [vmem:[%s3544 + $0x3c] sm:$0xff]
    %v3556 = vld [vmem:[%s3544 + $0x44] sm:$0xf]
    %v3557 = vld [vmem:[%s3544 + $0x48] sm:$0xff]
    %v3558 = vld [vmem:[%s3544 + $0x50] sm:$0xf]
    %v3559 = vld [vmem:[%s3544 + $0x54] sm:$0xff]
    %v3560 = vld [vmem:[%s3544 + $0x5c] sm:$0xf]
    %v3577 = vunpack.c.l.b16 %v3545
    %v3578 = vunpack.c.h.b16 %v3545
    %v3579 = vunpack.c.l.b16 %v3546
    %v3580 = vunpack.c.l.b16 %v3547
    %v3581 = vunpack.c.h.b16 %v3547
    %v3582 = vunpack.c.l.b16 %v3548
    %v3583 = vunpack.c.l.b16 %v3549
    %v3584 = vunpack.c.h.b16 %v3549
    %v3585 = vunpack.c.l.b16 %v3550
    %v3586 = vunpack.c.l.b16 %v3551
    %v3587 = vunpack.c.h.b16 %v3551
    %v3588 = vunpack.c.l.b16 %v3552
    %v3589 = vunpack.c.l.b16 %v3553
    %v3590 = vunpack.c.h.b16 %v3553
    %v3591 = vunpack.c.l.b16 %v3554
    %v3592 = vunpack.c.l.b16 %v3555
    %v3593 = vunpack.c.h.b16 %v3555
    %v3594 = vunpack.c.l.b16 %v3556
    %v3595 = vunpack.c.l.b16 %v3557
    %v3596 = vunpack.c.h.b16 %v3557
    %v3597 = vunpack.c.l.b16 %v3558
    %v3598 = vunpack.c.l.b16 %v3559
    %v3599 = vunpack.c.h.b16 %v3559
    %v3600 = vunpack.c.l.b16 %v3560
    %v3601 = vpack.c.b16 %v3580, %v3577
    %v3602 = vpack.c.b16 %v3581, %v3578
    %v3603 = vpack.c.b16 %v3582, %v3579
    %v3604 = vpack.c.b16 %v3586, %v3583
    %v3605 = vpack.c.b16 %v3587, %v3584
    %v3606 = vpack.c.b16 %v3588, %v3585
    %v3607 = vpack.c.b16 %v3592, %v3589
    %v3608 = vpack.c.b16 %v3593, %v3590
    %v3609 = vpack.c.b16 %v3594, %v3591
    %v3610 = vpack.c.b16 %v3598, %v3595
    %v3611 = vpack.c.b16 %v3599, %v3596
    %v3612 = vpack.c.b16 %v3600, %v3597
    %v3626 = vsel %vm2244, %v3543, 0
    %3628 = vmatprep.subr.bf16.mxu0 0
    %3629 = vmatpush1.bf16.msra.mxu0 0
    %3630 = vmatprep.subr.bf16.mxu0 0
    %3631 = vmatpush1.bf16.msra.mxu0 0
    %3632 = vmatprep.subr.bf16.mxu0 0
    %3633 = vmatpush1.bf16.msra.mxu0 0
    %3634 = vmatprep.subr.bf16.mxu0 0
    %3635 = vmatpush1.bf16.msra.mxu0 0
    %3636 = vmatprep.subr.bf16.mxu0 %v3611
    %3637 = vmatpush1.bf16.msra.mxu0 %v3610
    %3638 = vmatprep.subr.bf16.mxu0 %v3608
    %3639 = vmatpush1.bf16.msra.mxu0 %v3607
    %3640 = vmatprep.subr.bf16.mxu0 %v3605
    %3641 = vmatpush1.bf16.msra.mxu0 %v3604
    %3642 = vmatprep.subr.bf16.mxu0 %v3602
    %3643 = vmatpush1.bf16.msra.mxu0 %v3601
    %3644 = vmatprep.subr.bf16.mxu0 0
    %3645 = vmatpush2.bf16.msra.mxu0 0
    %3646 = vmatprep.subr.bf16.mxu0 0
    %3647 = vmatpush2.bf16.msra.mxu0 0
    %3648 = vmatprep.subr.bf16.mxu0 0
    %3649 = vmatpush2.bf16.msra.mxu0 0
    %3650 = vmatprep.subr.bf16.mxu0 0
    %3651 = vmatpush2.bf16.msra.mxu0 0
    %3652 = vmatprep.subr.bf16.mxu0 0
    %3653 = vmatpush2.bf16.msra.mxu0 0
    %3654 = vmatprep.subr.bf16.mxu0 0
    %3655 = vmatpush2.bf16.msra.mxu0 0
    %3656 = vmatprep.subr.bf16.mxu0 0
    %3657 = vmatpush2.bf16.msra.mxu0 0
    %3658 = vmatprep.subr.bf16.mxu0 0
    %3659 = vmatpush2.bf16.msra.mxu0 0
    %3660 = vmatprep.mubr.bf16.mxu0 0
    %3661 = vmatmul.mubr.bf16.gmra.mxu0 %v3626
    %v3662 = vpop.f32.mrf.mxu0
    %v3663 = vadd.f32 0.0, %v3662
    %v3664 = vpop.f32.mrf.mxu0
    %v3665 = vadd.f32 0.0, %v3664
    %v3666 = vpop.f32.mrf.mxu0
    %v3667 = vadd.f32 0.0, %v3666
    %v3668 = vpop.f32.mrf.mxu0
    %v3669 = vadd.f32 0.0, %v3668
    %3670 = vdwg.mxu0
    %3671 = vmatprep.subr.bf16.mxu0 0
    %3672 = vmatpush1.bf16.msra.mxu0 0
    %3673 = vmatprep.subr.bf16.mxu0 0
    %3674 = vmatpush1.bf16.msra.mxu0 0
    %3675 = vmatprep.subr.bf16.mxu0 0
    %3676 = vmatpush1.bf16.msra.mxu0 0
    %3677 = vmatprep.subr.bf16.mxu0 0
    %3678 = vmatpush1.bf16.msra.mxu0 0
    %3679 = vmatprep.subr.bf16.mxu0 0
    %3680 = vmatpush1.bf16.msra.mxu0 %v3612
    %3681 = vmatprep.subr.bf16.mxu0 0
    %3682 = vmatpush1.bf16.msra.mxu0 %v3609
    %3683 = vmatprep.subr.bf16.mxu0 0
    %3684 = vmatpush1.bf16.msra.mxu0 %v3606
    %3685 = vmatprep.subr.bf16.mxu0 0
    %3686 = vmatpush1.bf16.msra.mxu0 %v3603
    %3687 = vmatprep.subr.bf16.mxu0 0
    %3688 = vmatpush2.bf16.msra.mxu0 0
    %3689 = vmatprep.subr.bf16.mxu0 0
    %3690 = vmatpush2.bf16.msra.mxu0 0
    %3691 = vmatprep.subr.bf16.mxu0 0
    %3692 = vmatpush2.bf16.msra.mxu0 0
    %3693 = vmatprep.subr.bf16.mxu0 0
    %3694 = vmatpush2.bf16.msra.mxu0 0
    %3695 = vmatprep.subr.bf16.mxu0 0
    %3696 = vmatpush2.bf16.msra.mxu0 0
    %3697 = vmatprep.subr.bf16.mxu0 0
    %3698 = vmatpush2.bf16.msra.mxu0 0
    %3699 = vmatprep.subr.bf16.mxu0 0
    %3700 = vmatpush2.bf16.msra.mxu0 0
    %3701 = vmatprep.subr.bf16.mxu0 0
    %3702 = vmatpush2.bf16.msra.mxu0 0
    %3703 = vmatprep.mubr.bf16.mxu0 0
    %3704 = vmatmul.mubr.bf16.gmra.mxu0 %v3626
    %v3705 = vpop.f32.mrf.mxu0
    %v3706 = vadd.f32 0.0, %v3705
    %v3707 = vpop.f32.mrf.mxu0
    %v3708 = vpop.f32.mrf.mxu0
    %v3709 = vadd.f32 0.0, %v3708
    %v3710 = vpop.f32.mrf.mxu0
    %3711 = vdwg.mxu0
    %v3712 = vadd.f32 %v3419, %v3663
    %v3713 = vadd.f32 %v3420, %v3665
    %v3714 = vadd.f32 %v3421, %v3706
    %v3715 = vadd.f32 %v3422, %v3667
    %v3716 = vadd.f32 %v3423, %v3669
    %v3717 = vadd.f32 %v3424, %v3709
    %3719 = vrot.lane.b32.xlu0 %v2221, 64
    %v3720 = vpop.permute.xlu0 %3719
    %3722 = vrot.lane.b32.xlu0 %v2224, 64
    %v3723 = vpop.permute.xlu0 %3722
    %v3725 = vsel %vm2244, %v3720, 0
    %v3728 = vsel %vm2244, %v3723, 0
    %3730 = vmatprep.subr.bf16.mxu0 0
    %3731 = vmatpush1.bf16.xpose.msra.mxu0 0
    %3732 = vmatprep.subr.bf16.mxu0 0
    %3733 = vmatpush1.bf16.xpose.msra.mxu0 0
    %3734 = vmatprep.subr.bf16.mxu0 0
    %3735 = vmatpush1.bf16.xpose.msra.mxu0 0
    %3736 = vmatprep.subr.bf16.mxu0 0
    %3737 = vmatpush1.bf16.xpose.msra.mxu0 0
    %3738 = vmatprep.subr.bf16.mxu0 0
    %3739 = vmatpush1.bf16.xpose.msra.mxu0 0
    %3740 = vmatprep.subr.bf16.mxu0 0
    %3741 = vmatpush1.bf16.xpose.msra.mxu0 0
    %3742 = vmatprep.subr.bf16.mxu0 0
    %3743 = vmatpush1.bf16.xpose.msra.mxu0 0
    %3744 = vmatprep.subr.bf16.mxu0 0
    %3745 = vmatpush1.bf16.xpose.msra.mxu0 %v3728
    %3746 = vmatprep.subr.bf16.mxu0 0
    %3747 = vmatpush2.bf16.xpose.msra.mxu0 0
    %3748 = vmatprep.subr.bf16.mxu0 0
    %3749 = vmatpush2.bf16.xpose.msra.mxu0 0
    %3750 = vmatprep.subr.bf16.mxu0 0
    %3751 = vmatpush2.bf16.xpose.msra.mxu0 0
    %3752 = vmatprep.subr.bf16.mxu0 0
    %3753 = vmatpush2.bf16.xpose.msra.mxu0 0
    %3754 = vmatprep.subr.bf16.mxu0 0
    %3755 = vmatpush2.bf16.xpose.msra.mxu0 0
    %3756 = vmatprep.subr.bf16.mxu0 0
    %3757 = vmatpush2.bf16.xpose.msra.mxu0 0
    %3758 = vmatprep.subr.bf16.mxu0 0
    %3759 = vmatpush2.bf16.xpose.msra.mxu0 0
    %3760 = vmatprep.subr.bf16.mxu0 0
    %3761 = vmatpush2.bf16.xpose.msra.mxu0 0
    %3762 = vmatprep.mubr.bf16.mxu0 0
    %3763 = vmatmul.mubr.bf16.gmra.mxu0 %v3725
    %v3764 = vpop.f32.mrf.mxu0
    %v3765 = vadd.f32 0.0, %v3764
    %v3766 = vpop.f32.mrf.mxu0
    %v3767 = vpop.f32.mrf.mxu0
    %v3768 = vadd.f32 0.0, %v3767
    %v3769 = vpop.f32.mrf.mxu0
    %3770 = vdwg.mxu0
    %v3771 = vmul.f32 %v3765, 0.125
    %v3772 = vmul.f32 %v3768, 0.125
    %v3773 = vsel %vm2242, %v3771, -inf
    %v3774 = vsel %vm2243, %v3772, -inf
    %v3775 = vsel %vm2296, %v3773, -inf
    %3776 = vmax.xlane.f32.xlu0 %v3775
    %v3777 = vpop.xlane.xlu0 %3776
    %v3778 = vsel %vm2296, %v3774, -inf
    %3779 = vmax.xlane.f32.xlu0 %v3778
    %v3780 = vpop.xlane.xlu0 %3779
    %v3781 = vsub.f32 %v3773, %v3777
    %v3782 = vsub.f32 %v3774, %v3780
    %v3783 = vmul.f32 %v3781, 1.442695
    %v3784 = vpow.pop %v3783
    %v3785 = vmul.f32 %v3782, 1.442695
    %v3786 = vpow.pop %v3785
    %v3787 = vsel %vm2296, %v3784, 0.0
    %3788 = vadd.xlane.f32.xlu0 %v3787
    %v3789 = vpop.xlane.xlu0 %3788
    %v3790 = vsel %vm2296, %v3786, 0.0
    %3791 = vadd.xlane.f32.xlu0 %v3790
    %v3792 = vpop.xlane.xlu0 %3791
    %v3793 = vrcp.pop %v3789
    %v3794 = vrcp.pop %v3792
    %v3795 = vmul.f32 %v3784, %v3793
    %v3796 = vmul.f32 %v3786, %v3794
    %v3797 = vpack.c.bf16 %v3796, %v3795
    %3799 = vrot.lane.b32.xlu0 %v2227, 64
    %v3800 = vpop.permute.xlu0 %3799
    %v3803 = vsel %vm2296, %v3797, 0
    %3805 = vmatprep.subr.bf16.mxu0 0
    %3806 = vmatpush1.bf16.msra.mxu0 0
    %3807 = vmatprep.subr.bf16.mxu0 0
    %3808 = vmatpush1.bf16.msra.mxu0 0
    %3809 = vmatprep.subr.bf16.mxu0 0
    %3810 = vmatpush1.bf16.msra.mxu0 0
    %3811 = vmatprep.subr.bf16.mxu0 0
    %3812 = vmatpush1.bf16.msra.mxu0 0
    %3813 = vmatprep.subr.bf16.mxu0 0
    %3814 = vmatpush1.bf16.msra.mxu0 0
    %3815 = vmatprep.subr.bf16.mxu0 0
    %3816 = vmatpush1.bf16.msra.mxu0 0
    %3817 = vmatprep.subr.bf16.mxu0 0
    %3818 = vmatpush1.bf16.msra.mxu0 0
    %3819 = vmatprep.subr.bf16.mxu0 0
    %3820 = vmatpush1.bf16.msra.mxu0 %v3800
    %3821 = vmatprep.subr.bf16.mxu0 0
    %3822 = vmatpush2.bf16.msra.mxu0 0
    %3823 = vmatprep.subr.bf16.mxu0 0
    %3824 = vmatpush2.bf16.msra.mxu0 0
    %3825 = vmatprep.subr.bf16.mxu0 0
    %3826 = vmatpush2.bf16.msra.mxu0 0
    %3827 = vmatprep.subr.bf16.mxu0 0
    %3828 = vmatpush2.bf16.msra.mxu0 0
    %3829 = vmatprep.subr.bf16.mxu0 0
    %3830 = vmatpush2.bf16.msra.mxu0 0
    %3831 = vmatprep.subr.bf16.mxu0 0
    %3832 = vmatpush2.bf16.msra.mxu0 0
    %3833 = vmatprep.subr.bf16.mxu0 0
    %3834 = vmatpush2.bf16.msra.mxu0 0
    %3835 = vmatprep.subr.bf16.mxu0 0
    %3836 = vmatpush2.bf16.msra.mxu0 0
    %3837 = vmatprep.mubr.bf16.mxu0 0
    %3838 = vmatmul.mubr.bf16.gmra.mxu0 %v3803
    %v3839 = vpop.f32.mrf.mxu0
    %v3840 = vadd.f32 0.0, %v3839
    %v3841 = vpop.f32.mrf.mxu0
    %v3842 = vpop.f32.mrf.mxu0
    %v3843 = vadd.f32 0.0, %v3842
    %v3844 = vpop.f32.mrf.mxu0
    %3845 = vdwg.mxu0
    %v3846 = vpack.c.bf16 %v3843, %v3840
    %s3847 = scalar_lea.vmem [#allocation11], 480
    %v3848 = vld [vmem:[%s3847] sm:$0xff]
    %v3849 = vld [vmem:[%s3847 + $0x8] sm:$0xf]
    %v3850 = vld [vmem:[%s3847 + $0xc] sm:$0xff]
    %v3851 = vld [vmem:[%s3847 + $0x14] sm:$0xf]
    %v3852 = vld [vmem:[%s3847 + $0x18] sm:$0xff]
    %v3853 = vld [vmem:[%s3847 + $0x20] sm:$0xf]
    %v3854 = vld [vmem:[%s3847 + $0x24] sm:$0xff]
    %v3855 = vld [vmem:[%s3847 + $0x2c] sm:$0xf]
    %v3856 = vld [vmem:[%s3847 + $0x30] sm:$0xff]
    %v3857 = vld [vmem:[%s3847 + $0x38] sm:$0xf]
    %v3858 = vld [vmem:[%s3847 + $0x3c] sm:$0xff]
    %v3859 = vld [vmem:[%s3847 + $0x44] sm:$0xf]
    %v3860 = vld [vmem:[%s3847 + $0x48] sm:$0xff]
    %v3861 = vld [vmem:[%s3847 + $0x50] sm:$0xf]
    %v3862 = vld [vmem:[%s3847 + $0x54] sm:$0xff]
    %v3863 = vld [vmem:[%s3847 + $0x5c] sm:$0xf]
    %v3880 = vunpack.c.l.b16 %v3848
    %v3881 = vunpack.c.h.b16 %v3848
    %v3882 = vunpack.c.l.b16 %v3849
    %v3883 = vunpack.c.l.b16 %v3850
    %v3884 = vunpack.c.h.b16 %v3850
    %v3885 = vunpack.c.l.b16 %v3851
    %v3886 = vunpack.c.l.b16 %v3852
    %v3887 = vunpack.c.h.b16 %v3852
    %v3888 = vunpack.c.l.b16 %v3853
    %v3889 = vunpack.c.l.b16 %v3854
    %v3890 = vunpack.c.h.b16 %v3854
    %v3891 = vunpack.c.l.b16 %v3855
    %v3892 = vunpack.c.l.b16 %v3856
    %v3893 = vunpack.c.h.b16 %v3856
    %v3894 = vunpack.c.l.b16 %v3857
    %v3895 = vunpack.c.l.b16 %v3858
    %v3896 = vunpack.c.h.b16 %v3858
    %v3897 = vunpack.c.l.b16 %v3859
    %v3898 = vunpack.c.l.b16 %v3860
    %v3899 = vunpack.c.h.b16 %v3860
    %v3900 = vunpack.c.l.b16 %v3861
    %v3901 = vunpack.c.l.b16 %v3862
    %v3902 = vunpack.c.h.b16 %v3862
    %v3903 = vunpack.c.l.b16 %v3863
    %v3904 = vpack.c.b16 %v3883, %v3880
    %v3905 = vpack.c.b16 %v3884, %v3881
    %v3906 = vpack.c.b16 %v3885, %v3882
    %v3907 = vpack.c.b16 %v3889, %v3886
    %v3908 = vpack.c.b16 %v3890, %v3887
    %v3909 = vpack.c.b16 %v3891, %v3888
    %v3910 = vpack.c.b16 %v3895, %v3892
    %v3911 = vpack.c.b16 %v3896, %v3893
    %v3912 = vpack.c.b16 %v3897, %v3894
    %v3913 = vpack.c.b16 %v3901, %v3898
    %v3914 = vpack.c.b16 %v3902, %v3899
    %v3915 = vpack.c.b16 %v3903, %v3900
    %v3929 = vsel %vm2244, %v3846, 0
    %3931 = vmatprep.subr.bf16.mxu0 0
    %3932 = vmatpush1.bf16.msra.mxu0 0
    %3933 = vmatprep.subr.bf16.mxu0 0
    %3934 = vmatpush1.bf16.msra.mxu0 0
    %3935 = vmatprep.subr.bf16.mxu0 0
    %3936 = vmatpush1.bf16.msra.mxu0 0
    %3937 = vmatprep.subr.bf16.mxu0 0
    %3938 = vmatpush1.bf16.msra.mxu0 0
    %3939 = vmatprep.subr.bf16.mxu0 %v3914
    %3940 = vmatpush1.bf16.msra.mxu0 %v3913
    %3941 = vmatprep.subr.bf16.mxu0 %v3911
    %3942 = vmatpush1.bf16.msra.mxu0 %v3910
    %3943 = vmatprep.subr.bf16.mxu0 %v3908
    %3944 = vmatpush1.bf16.msra.mxu0 %v3907
    %3945 = vmatprep.subr.bf16.mxu0 %v3905
    %3946 = vmatpush1.bf16.msra.mxu0 %v3904
    %3947 = vmatprep.subr.bf16.mxu0 0
    %3948 = vmatpush2.bf16.msra.mxu0 0
    %3949 = vmatprep.subr.bf16.mxu0 0
    %3950 = vmatpush2.bf16.msra.mxu0 0
    %3951 = vmatprep.subr.bf16.mxu0 0
    %3952 = vmatpush2.bf16.msra.mxu0 0
    %3953 = vmatprep.subr.bf16.mxu0 0
    %3954 = vmatpush2.bf16.msra.mxu0 0
    %3955 = vmatprep.subr.bf16.mxu0 0
    %3956 = vmatpush2.bf16.msra.mxu0 0
    %3957 = vmatprep.subr.bf16.mxu0 0
    %3958 = vmatpush2.bf16.msra.mxu0 0
    %3959 = vmatprep.subr.bf16.mxu0 0
    %3960 = vmatpush2.bf16.msra.mxu0 0
    %3961 = vmatprep.subr.bf16.mxu0 0
    %3962 = vmatpush2.bf16.msra.mxu0 0
    %3963 = vmatprep.mubr.bf16.mxu0 0
    %3964 = vmatmul.mubr.bf16.gmra.mxu0 %v3929
    %v3965 = vpop.f32.mrf.mxu0
    %v3966 = vadd.f32 0.0, %v3965
    %v3967 = vpop.f32.mrf.mxu0
    %v3968 = vadd.f32 0.0, %v3967
    %v3969 = vpop.f32.mrf.mxu0
    %v3970 = vadd.f32 0.0, %v3969
    %v3971 = vpop.f32.mrf.mxu0
    %v3972 = vadd.f32 0.0, %v3971
    %3973 = vdwg.mxu0
    %3974 = vmatprep.subr.bf16.mxu0 0
    %3975 = vmatpush1.bf16.msra.mxu0 0
    %3976 = vmatprep.subr.bf16.mxu0 0
    %3977 = vmatpush1.bf16.msra.mxu0 0
    %3978 = vmatprep.subr.bf16.mxu0 0
    %3979 = vmatpush1.bf16.msra.mxu0 0
    %3980 = vmatprep.subr.bf16.mxu0 0
    %3981 = vmatpush1.bf16.msra.mxu0 0
    %3982 = vmatprep.subr.bf16.mxu0 0
    %3983 = vmatpush1.bf16.msra.mxu0 %v3915
    %3984 = vmatprep.subr.bf16.mxu0 0
    %3985 = vmatpush1.bf16.msra.mxu0 %v3912
    %3986 = vmatprep.subr.bf16.mxu0 0
    %3987 = vmatpush1.bf16.msra.mxu0 %v3909
    %3988 = vmatprep.subr.bf16.mxu0 0
    %3989 = vmatpush1.bf16.msra.mxu0 %v3906
    %3990 = vmatprep.subr.bf16.mxu0 0
    %3991 = vmatpush2.bf16.msra.mxu0 0
    %3992 = vmatprep.subr.bf16.mxu0 0
    %3993 = vmatpush2.bf16.msra.mxu0 0
    %3994 = vmatprep.subr.bf16.mxu0 0
    %3995 = vmatpush2.bf16.msra.mxu0 0
    %3996 = vmatprep.subr.bf16.mxu0 0
    %3997 = vmatpush2.bf16.msra.mxu0 0
    %3998 = vmatprep.subr.bf16.mxu0 0
    %3999 = vmatpush2.bf16.msra.mxu0 0
    %4000 = vmatprep.subr.bf16.mxu0 0
    %4001 = vmatpush2.bf16.msra.mxu0 0
    %4002 = vmatprep.subr.bf16.mxu0 0
    %4003 = vmatpush2.bf16.msra.mxu0 0
    %4004 = vmatprep.subr.bf16.mxu0 0
    %4005 = vmatpush2.bf16.msra.mxu0 0
    %4006 = vmatprep.mubr.bf16.mxu0 0
    %4007 = vmatmul.mubr.bf16.gmra.mxu0 %v3929
    %v4008 = vpop.f32.mrf.mxu0
    %v4009 = vadd.f32 0.0, %v4008
    %v4010 = vpop.f32.mrf.mxu0
    %v4011 = vpop.f32.mrf.mxu0
    %v4012 = vadd.f32 0.0, %v4011
    %v4013 = vpop.f32.mrf.mxu0
    %4014 = vdwg.mxu0
    %v4015 = vadd.f32 %v3712, %v3966
    %v4016 = vadd.f32 %v3713, %v3968
    %v4017 = vadd.f32 %v3714, %v4009
    %v4018 = vadd.f32 %v3715, %v3970
    %v4019 = vadd.f32 %v3716, %v3972
    %v4020 = vadd.f32 %v3717, %v4012
    %v4022 = vsel %vm2244, %v2228, 0
    %v4025 = vsel %vm2244, %v2231, 0
    %4027 = vmatprep.subr.bf16.mxu0 0
    %4028 = vmatpush1.bf16.xpose.msra.mxu0 0
    %4029 = vmatprep.subr.bf16.mxu0 0
    %4030 = vmatpush1.bf16.xpose.msra.mxu0 0
    %4031 = vmatprep.subr.bf16.mxu0 0
    %4032 = vmatpush1.bf16.xpose.msra.mxu0 0
    %4033 = vmatprep.subr.bf16.mxu0 0
    %4034 = vmatpush1.bf16.xpose.msra.mxu0 0
    %4035 = vmatprep.subr.bf16.mxu0 0
    %4036 = vmatpush1.bf16.xpose.msra.mxu0 0
    %4037 = vmatprep.subr.bf16.mxu0 0
    %4038 = vmatpush1.bf16.xpose.msra.mxu0 0
    %4039 = vmatprep.subr.bf16.mxu0 0
    %4040 = vmatpush1.bf16.xpose.msra.mxu0 0
    %4041 = vmatprep.subr.bf16.mxu0 0
    %4042 = vmatpush1.bf16.xpose.msra.mxu0 %v4025
    %4043 = vmatprep.subr.bf16.mxu0 0
    %4044 = vmatpush2.bf16.xpose.msra.mxu0 0
    %4045 = vmatprep.subr.bf16.mxu0 0
    %4046 = vmatpush2.bf16.xpose.msra.mxu0 0
    %4047 = vmatprep.subr.bf16.mxu0 0
    %4048 = vmatpush2.bf16.xpose.msra.mxu0 0
    %4049 = vmatprep.subr.bf16.mxu0 0
    %4050 = vmatpush2.bf16.xpose.msra.mxu0 0
    %4051 = vmatprep.subr.bf16.mxu0 0
    %4052 = vmatpush2.bf16.xpose.msra.mxu0 0
    %4053 = vmatprep.subr.bf16.mxu0 0
    %4054 = vmatpush2.bf16.xpose.msra.mxu0 0
    %4055 = vmatprep.subr.bf16.mxu0 0
    %4056 = vmatpush2.bf16.xpose.msra.mxu0 0
    %4057 = vmatprep.subr.bf16.mxu0 0
    %4058 = vmatpush2.bf16.xpose.msra.mxu0 0
    %4059 = vmatprep.mubr.bf16.mxu0 0
    %4060 = vmatmul.mubr.bf16.gmra.mxu0 %v4022
    %v4061 = vpop.f32.mrf.mxu0
    %v4062 = vadd.f32 0.0, %v4061
    %v4063 = vpop.f32.mrf.mxu0
    %v4064 = vpop.f32.mrf.mxu0
    %v4065 = vadd.f32 0.0, %v4064
    %v4066 = vpop.f32.mrf.mxu0
    %4067 = vdwg.mxu0
    %v4068 = vmul.f32 %v4062, 0.125
    %v4069 = vmul.f32 %v4065, 0.125
    %v4070 = vsel %vm2242, %v4068, -inf
    %v4071 = vsel %vm2243, %v4069, -inf
    %v4072 = vsel %vm2296, %v4070, -inf
    %4073 = vmax.xlane.f32.xlu0 %v4072
    %v4074 = vpop.xlane.xlu0 %4073
    %v4075 = vsel %vm2296, %v4071, -inf
    %4076 = vmax.xlane.f32.xlu0 %v4075
    %v4077 = vpop.xlane.xlu0 %4076
    %v4078 = vsub.f32 %v4070, %v4074
    %v4079 = vsub.f32 %v4071, %v4077
    %v4080 = vmul.f32 %v4078, 1.442695
    %v4081 = vpow.pop %v4080
    %v4082 = vmul.f32 %v4079, 1.442695
    %v4083 = vpow.pop %v4082
    %v4084 = vsel %vm2296, %v4081, 0.0
    %4085 = vadd.xlane.f32.xlu0 %v4084
    %v4086 = vpop.xlane.xlu0 %4085
    %v4087 = vsel %vm2296, %v4083, 0.0
    %4088 = vadd.xlane.f32.xlu0 %v4087
    %v4089 = vpop.xlane.xlu0 %4088
    %v4090 = vrcp.pop %v4086
    %v4091 = vrcp.pop %v4089
    %v4092 = vmul.f32 %v4081, %v4090
    %v4093 = vmul.f32 %v4083, %v4091
    %v4094 = vpack.c.bf16 %v4093, %v4092
    %v4096 = vsel %vm2296, %v4094, 0
    %4098 = vmatprep.subr.bf16.mxu0 0
    %4099 = vmatpush1.bf16.msra.mxu0 0
    %4100 = vmatprep.subr.bf16.mxu0 0
    %4101 = vmatpush1.bf16.msra.mxu0 0
    %4102 = vmatprep.subr.bf16.mxu0 0
    %4103 = vmatpush1.bf16.msra.mxu0 0
    %4104 = vmatprep.subr.bf16.mxu0 0
    %4105 = vmatpush1.bf16.msra.mxu0 0
    %4106 = vmatprep.subr.bf16.mxu0 0
    %4107 = vmatpush1.bf16.msra.mxu0 0
    %4108 = vmatprep.subr.bf16.mxu0 0
    %4109 = vmatpush1.bf16.msra.mxu0 0
    %4110 = vmatprep.subr.bf16.mxu0 0
    %4111 = vmatpush1.bf16.msra.mxu0 0
    %4112 = vmatprep.subr.bf16.mxu0 0
    %4113 = vmatpush1.bf16.msra.mxu0 %v2234
    %4114 = vmatprep.subr.bf16.mxu0 0
    %4115 = vmatpush2.bf16.msra.mxu0 0
    %4116 = vmatprep.subr.bf16.mxu0 0
    %4117 = vmatpush2.bf16.msra.mxu0 0
    %4118 = vmatprep.subr.bf16.mxu0 0
    %4119 = vmatpush2.bf16.msra.mxu0 0
    %4120 = vmatprep.subr.bf16.mxu0 0
    %4121 = vmatpush2.bf16.msra.mxu0 0
    %4122 = vmatprep.subr.bf16.mxu0 0
    %4123 = vmatpush2.bf16.msra.mxu0 0
    %4124 = vmatprep.subr.bf16.mxu0 0
    %4125 = vmatpush2.bf16.msra.mxu0 0
    %4126 = vmatprep.subr.bf16.mxu0 0
    %4127 = vmatpush2.bf16.msra.mxu0 0
    %4128 = vmatprep.subr.bf16.mxu0 0
    %4129 = vmatpush2.bf16.msra.mxu0 0
    %4130 = vmatprep.mubr.bf16.mxu0 0
    %4131 = vmatmul.mubr.bf16.gmra.mxu0 %v4096
    %v4132 = vpop.f32.mrf.mxu0
    %v4133 = vadd.f32 0.0, %v4132
    %v4134 = vpop.f32.mrf.mxu0
    %v4135 = vpop.f32.mrf.mxu0
    %v4136 = vadd.f32 0.0, %v4135
    %v4137 = vpop.f32.mrf.mxu0
    %4138 = vdwg.mxu0
    %v4139 = vpack.c.bf16 %v4136, %v4133
    %v4140 = vld [vmem:[#allocation11] sm:$0xff]
    %v4141 = vld [vmem:[#allocation11 + $0x8] sm:$0xf]
    %v4142 = vld [vmem:[#allocation11 + $0xc] sm:$0xff]
    %v4143 = vld [vmem:[#allocation11 + $0x14] sm:$0xf]
    %v4144 = vld [vmem:[#allocation11 + $0x18] sm:$0xff]
    %v4145 = vld [vmem:[#allocation11 + $0x20] sm:$0xf]
    %v4146 = vld [vmem:[#allocation11 + $0x24] sm:$0xff]
    %v4147 = vld [vmem:[#allocation11 + $0x2c] sm:$0xf]
    %v4148 = vld [vmem:[#allocation11 + $0x30] sm:$0xff]
    %v4149 = vld [vmem:[#allocation11 + $0x38] sm:$0xf]
    %v4150 = vld [vmem:[#allocation11 + $0x3c] sm:$0xff]
    %v4151 = vld [vmem:[#allocation11 + $0x44] sm:$0xf]
    %v4152 = vld [vmem:[#allocation11 + $0x48] sm:$0xff]
    %v4153 = vld [vmem:[#allocation11 + $0x50] sm:$0xf]
    %v4154 = vld [vmem:[#allocation11 + $0x54] sm:$0xff]
    %v4155 = vld [vmem:[#allocation11 + $0x5c] sm:$0xf]
    %4157 = vrot.lane.b32.xlu0 %v2228, 64
    %v4158 = vpop.permute.xlu0 %4157
    %4160 = vrot.lane.b32.xlu0 %v2231, 64
    %v4161 = vpop.permute.xlu0 %4160
    %v4163 = vsel %vm2244, %v4158, 0
    %v4166 = vsel %vm2244, %v4161, 0
    %4168 = vmatprep.subr.bf16.mxu0 0
    %4169 = vmatpush1.bf16.xpose.msra.mxu0 0
    %4170 = vmatprep.subr.bf16.mxu0 0
    %4171 = vmatpush1.bf16.xpose.msra.mxu0 0
    %4172 = vmatprep.subr.bf16.mxu0 0
    %4173 = vmatpush1.bf16.xpose.msra.mxu0 0
    %4174 = vmatprep.subr.bf16.mxu0 0
    %4175 = vmatpush1.bf16.xpose.msra.mxu0 0
    %4176 = vmatprep.subr.bf16.mxu0 0
    %4177 = vmatpush1.bf16.xpose.msra.mxu0 0
    %4178 = vmatprep.subr.bf16.mxu0 0
    %4179 = vmatpush1.bf16.xpose.msra.mxu0 0
    %4180 = vmatprep.subr.bf16.mxu0 0
    %4181 = vmatpush1.bf16.xpose.msra.mxu0 0
    %4182 = vmatprep.subr.bf16.mxu0 0
    %4183 = vmatpush1.bf16.xpose.msra.mxu0 %v4166
    %4184 = vmatprep.subr.bf16.mxu0 0
    %4185 = vmatpush2.bf16.xpose.msra.mxu0 0
    %4186 = vmatprep.subr.bf16.mxu0 0
    %4187 = vmatpush2.bf16.xpose.msra.mxu0 0
    %4188 = vmatprep.subr.bf16.mxu0 0
    %4189 = vmatpush2.bf16.xpose.msra.mxu0 0
    %4190 = vmatprep.subr.bf16.mxu0 0
    %4191 = vmatpush2.bf16.xpose.msra.mxu0 0
    %4192 = vmatprep.subr.bf16.mxu0 0
    %4193 = vmatpush2.bf16.xpose.msra.mxu0 0
    %4194 = vmatprep.subr.bf16.mxu0 0
    %4195 = vmatpush2.bf16.xpose.msra.mxu0 0
    %4196 = vmatprep.subr.bf16.mxu0 0
    %4197 = vmatpush2.bf16.xpose.msra.mxu0 0
    %4198 = vmatprep.subr.bf16.mxu0 0
    %4199 = vmatpush2.bf16.xpose.msra.mxu0 0
    %4200 = vmatprep.mubr.bf16.mxu0 0
    %4201 = vmatmul.mubr.bf16.gmra.mxu0 %v4163
    %v4202 = vpop.f32.mrf.mxu0
    %v4203 = vadd.f32 0.0, %v4202
    %v4204 = vpop.f32.mrf.mxu0
    %v4205 = vpop.f32.mrf.mxu0
    %v4206 = vadd.f32 0.0, %v4205
    %v4207 = vpop.f32.mrf.mxu0
    %4208 = vdwg.mxu0
    %v4209 = vmul.f32 %v4203, 0.125
    %v4210 = vmul.f32 %v4206, 0.125
    %v4211 = vsel %vm2242, %v4209, -inf
    %v4212 = vsel %vm2243, %v4210, -inf
    %v4213 = vsel %vm2296, %v4211, -inf
    %4214 = vmax.xlane.f32.xlu0 %v4213
    %v4215 = vpop.xlane.xlu0 %4214
    %v4216 = vsel %vm2296, %v4212, -inf
    %4217 = vmax.xlane.f32.xlu0 %v4216
    %v4218 = vpop.xlane.xlu0 %4217
    %v4219 = vsub.f32 %v4211, %v4215
    %v4220 = vsub.f32 %v4212, %v4218
    %v4221 = vmul.f32 %v4219, 1.442695
    %v4222 = vpow.pop %v4221
    %v4223 = vmul.f32 %v4220, 1.442695
    %v4224 = vpow.pop %v4223
    %v4225 = vsel %vm2296, %v4222, 0.0
    %4226 = vadd.xlane.f32.xlu0 %v4225
    %v4227 = vpop.xlane.xlu0 %4226
    %v4228 = vsel %vm2296, %v4224, 0.0
    %4229 = vadd.xlane.f32.xlu0 %v4228
    %v4230 = vpop.xlane.xlu0 %4229
    %v4231 = vrcp.pop %v4227
    %v4232 = vrcp.pop %v4230
    %v4233 = vmul.f32 %v4222, %v4231
    %v4234 = vmul.f32 %v4224, %v4232
    %v4235 = vpack.c.bf16 %v4234, %v4233
    %4237 = vrot.lane.b32.xlu0 %v2234, 64
    %v4238 = vpop.permute.xlu0 %4237
    %v4241 = vsel %vm2296, %v4235, 0
    %4243 = vmatprep.subr.bf16.mxu0 0
    %4244 = vmatpush1.bf16.msra.mxu0 0
    %4245 = vmatprep.subr.bf16.mxu0 0
    %4246 = vmatpush1.bf16.msra.mxu0 0
    %4247 = vmatprep.subr.bf16.mxu0 0
    %4248 = vmatpush1.bf16.msra.mxu0 0
    %4249 = vmatprep.subr.bf16.mxu0 0
    %4250 = vmatpush1.bf16.msra.mxu0 0
    %4251 = vmatprep.subr.bf16.mxu0 0
    %4252 = vmatpush1.bf16.msra.mxu0 0
    %4253 = vmatprep.subr.bf16.mxu0 0
    %4254 = vmatpush1.bf16.msra.mxu0 0
    %4255 = vmatprep.subr.bf16.mxu0 0
    %4256 = vmatpush1.bf16.msra.mxu0 0
    %4257 = vmatprep.subr.bf16.mxu0 0
    %4258 = vmatpush1.bf16.msra.mxu0 %v4238
    %4259 = vmatprep.subr.bf16.mxu0 0
    %4260 = vmatpush2.bf16.msra.mxu0 0
    %4261 = vmatprep.subr.bf16.mxu0 0
    %4262 = vmatpush2.bf16.msra.mxu0 0
    %4263 = vmatprep.subr.bf16.mxu0 0
    %4264 = vmatpush2.bf16.msra.mxu0 0
    %4265 = vmatprep.subr.bf16.mxu0 0
    %4266 = vmatpush2.bf16.msra.mxu0 0
    %4267 = vmatprep.subr.bf16.mxu0 0
    %4268 = vmatpush2.bf16.msra.mxu0 0
    %4269 = vmatprep.subr.bf16.mxu0 0
    %4270 = vmatpush2.bf16.msra.mxu0 0
    %4271 = vmatprep.subr.bf16.mxu0 0
    %4272 = vmatpush2.bf16.msra.mxu0 0
    %4273 = vmatprep.subr.bf16.mxu0 0
    %4274 = vmatpush2.bf16.msra.mxu0 0
    %4275 = vmatprep.mubr.bf16.mxu0 0
    %4276 = vmatmul.mubr.bf16.gmra.mxu0 %v4241
    %v4277 = vpop.f32.mrf.mxu0
    %v4278 = vadd.f32 0.0, %v4277
    %v4279 = vpop.f32.mrf.mxu0
    %v4280 = vpop.f32.mrf.mxu0
    %v4281 = vadd.f32 0.0, %v4280
    %v4282 = vpop.f32.mrf.mxu0
    %4283 = vdwg.mxu0
    %v4284 = vpack.c.bf16 %v4281, %v4278
    %v4285 = vld [vmem:[%s2510] sm:$0xff]
    %v4286 = vld [vmem:[%s2510 + $0x8] sm:$0xf]
    %v4287 = vld [vmem:[%s2510 + $0xc] sm:$0xff]
    %v4288 = vld [vmem:[%s2510 + $0x14] sm:$0xf]
    %v4289 = vld [vmem:[%s2510 + $0x18] sm:$0xff]
    %v4290 = vld [vmem:[%s2510 + $0x20] sm:$0xf]
    %v4291 = vld [vmem:[%s2510 + $0x24] sm:$0xff]
    %v4292 = vld [vmem:[%s2510 + $0x2c] sm:$0xf]
    %v4293 = vld [vmem:[%s2510 + $0x30] sm:$0xff]
    %v4294 = vld [vmem:[%s2510 + $0x38] sm:$0xf]
    %v4295 = vld [vmem:[%s2510 + $0x3c] sm:$0xff]
    %v4296 = vld [vmem:[%s2510 + $0x44] sm:$0xf]
    %v4297 = vld [vmem:[%s2510 + $0x48] sm:$0xff]
    %v4298 = vld [vmem:[%s2510 + $0x50] sm:$0xf]
    %v4299 = vld [vmem:[%s2510 + $0x54] sm:$0xff]
    %v4300 = vld [vmem:[%s2510 + $0x5c] sm:$0xf]
    %v4317 = vunpack.c.l.b16 %v4285
    %v4318 = vunpack.c.h.b16 %v4285
    %v4319 = vunpack.c.l.b16 %v4286
    %v4320 = vunpack.c.l.b16 %v4287
    %v4321 = vunpack.c.h.b16 %v4287
    %v4322 = vunpack.c.l.b16 %v4288
    %v4323 = vunpack.c.l.b16 %v4289
    %v4324 = vunpack.c.h.b16 %v4289
    %v4325 = vunpack.c.l.b16 %v4290
    %v4326 = vunpack.c.l.b16 %v4291
    %v4327 = vunpack.c.h.b16 %v4291
    %v4328 = vunpack.c.l.b16 %v4292
    %v4329 = vunpack.c.l.b16 %v4293
    %v4330 = vunpack.c.h.b16 %v4293
    %v4331 = vunpack.c.l.b16 %v4294
    %v4332 = vunpack.c.l.b16 %v4295
    %v4333 = vunpack.c.h.b16 %v4295
    %v4334 = vunpack.c.l.b16 %v4296
    %v4335 = vunpack.c.l.b16 %v4297
    %v4336 = vunpack.c.h.b16 %v4297
    %v4337 = vunpack.c.l.b16 %v4298
    %v4338 = vunpack.c.l.b16 %v4299
    %v4339 = vunpack.c.h.b16 %v4299
    %v4340 = vunpack.c.l.b16 %v4300
    %v4341 = vpack.c.b16 %v4320, %v4317
    %v4342 = vpack.c.b16 %v4321, %v4318
    %v4343 = vpack.c.b16 %v4322, %v4319
    %v4344 = vpack.c.b16 %v4326, %v4323
    %v4345 = vpack.c.b16 %v4327, %v4324
    %v4346 = vpack.c.b16 %v4328, %v4325
    %v4347 = vpack.c.b16 %v4332, %v4329
    %v4348 = vpack.c.b16 %v4333, %v4330
    %v4349 = vpack.c.b16 %v4334, %v4331
    %v4350 = vpack.c.b16 %v4338, %v4335
    %v4351 = vpack.c.b16 %v4339, %v4336
    %v4352 = vpack.c.b16 %v4340, %v4337
    %v4366 = vsel %vm2244, %v4284, 0
    %4368 = vmatprep.subr.bf16.mxu0 0
    %4369 = vmatpush1.bf16.msra.mxu0 0
    %4370 = vmatprep.subr.bf16.mxu0 0
    %4371 = vmatpush1.bf16.msra.mxu0 0
    %4372 = vmatprep.subr.bf16.mxu0 0
    %4373 = vmatpush1.bf16.msra.mxu0 0
    %4374 = vmatprep.subr.bf16.mxu0 0
    %4375 = vmatpush1.bf16.msra.mxu0 0
    %4376 = vmatprep.subr.bf16.mxu0 %v4351
    %4377 = vmatpush1.bf16.msra.mxu0 %v4350
    %4378 = vmatprep.subr.bf16.mxu0 %v4348
    %4379 = vmatpush1.bf16.msra.mxu0 %v4347
    %4380 = vmatprep.subr.bf16.mxu0 %v4345
    %4381 = vmatpush1.bf16.msra.mxu0 %v4344
    %4382 = vmatprep.subr.bf16.mxu0 %v4342
    %4383 = vmatpush1.bf16.msra.mxu0 %v4341
    %4384 = vmatprep.subr.bf16.mxu0 0
    %4385 = vmatpush2.bf16.msra.mxu0 0
    %4386 = vmatprep.subr.bf16.mxu0 0
    %4387 = vmatpush2.bf16.msra.mxu0 0
    %4388 = vmatprep.subr.bf16.mxu0 0
    %4389 = vmatpush2.bf16.msra.mxu0 0
    %4390 = vmatprep.subr.bf16.mxu0 0
    %4391 = vmatpush2.bf16.msra.mxu0 0
    %4392 = vmatprep.subr.bf16.mxu0 0
    %4393 = vmatpush2.bf16.msra.mxu0 0
    %4394 = vmatprep.subr.bf16.mxu0 0
    %4395 = vmatpush2.bf16.msra.mxu0 0
    %4396 = vmatprep.subr.bf16.mxu0 0
    %4397 = vmatpush2.bf16.msra.mxu0 0
    %4398 = vmatprep.subr.bf16.mxu0 0
    %4399 = vmatpush2.bf16.msra.mxu0 0
    %4400 = vmatprep.mubr.bf16.mxu0 0
    %4401 = vmatmul.mubr.bf16.gmra.mxu0 %v4366
    %v4402 = vpop.f32.mrf.mxu0
    %v4403 = vadd.f32 0.0, %v4402
    %v4404 = vpop.f32.mrf.mxu0
    %v4405 = vadd.f32 0.0, %v4404
    %v4406 = vpop.f32.mrf.mxu0
    %v4407 = vadd.f32 0.0, %v4406
    %v4408 = vpop.f32.mrf.mxu0
    %v4409 = vadd.f32 0.0, %v4408
    %4410 = vdwg.mxu0
    %4411 = vmatprep.subr.bf16.mxu0 0
    %4412 = vmatpush1.bf16.msra.mxu0 0
    %4413 = vmatprep.subr.bf16.mxu0 0
    %4414 = vmatpush1.bf16.msra.mxu0 0
    %4415 = vmatprep.subr.bf16.mxu0 0
    %4416 = vmatpush1.bf16.msra.mxu0 0
    %4417 = vmatprep.subr.bf16.mxu0 0
    %4418 = vmatpush1.bf16.msra.mxu0 0
    %4419 = vmatprep.subr.bf16.mxu0 0
    %4420 = vmatpush1.bf16.msra.mxu0 %v4352
    %4421 = vmatprep.subr.bf16.mxu0 0
    %4422 = vmatpush1.bf16.msra.mxu0 %v4349
    %4423 = vmatprep.subr.bf16.mxu0 0
    %4424 = vmatpush1.bf16.msra.mxu0 %v4346
    %4425 = vmatprep.subr.bf16.mxu0 0
    %4426 = vmatpush1.bf16.msra.mxu0 %v4343
    %4427 = vmatprep.subr.bf16.mxu0 0
    %4428 = vmatpush2.bf16.msra.mxu0 0
    %4429 = vmatprep.subr.bf16.mxu0 0
    %4430 = vmatpush2.bf16.msra.mxu0 0
    %4431 = vmatprep.subr.bf16.mxu0 0
    %4432 = vmatpush2.bf16.msra.mxu0 0
    %4433 = vmatprep.subr.bf16.mxu0 0
    %4434 = vmatpush2.bf16.msra.mxu0 0
    %4435 = vmatprep.subr.bf16.mxu0 0
    %4436 = vmatpush2.bf16.msra.mxu0 0
    %4437 = vmatprep.subr.bf16.mxu0 0
    %4438 = vmatpush2.bf16.msra.mxu0 0
    %4439 = vmatprep.subr.bf16.mxu0 0
    %4440 = vmatpush2.bf16.msra.mxu0 0
    %4441 = vmatprep.subr.bf16.mxu0 0
    %4442 = vmatpush2.bf16.msra.mxu0 0
    %4443 = vmatprep.mubr.bf16.mxu0 0
    %4444 = vmatmul.mubr.bf16.gmra.mxu0 %v4366
    %v4445 = vpop.f32.mrf.mxu0
    %v4446 = vadd.f32 0.0, %v4445
    %v4447 = vpop.f32.mrf.mxu0
    %v4448 = vpop.f32.mrf.mxu0
    %v4449 = vadd.f32 0.0, %v4448
    %v4450 = vpop.f32.mrf.mxu0
    %4451 = vdwg.mxu0
    %v4468 = vunpack.c.l.b16 %v4140
    %v4469 = vunpack.c.h.b16 %v4140
    %v4470 = vunpack.c.l.b16 %v4141
    %v4471 = vunpack.c.l.b16 %v4142
    %v4472 = vunpack.c.h.b16 %v4142
    %v4473 = vunpack.c.l.b16 %v4143
    %v4474 = vunpack.c.l.b16 %v4144
    %v4475 = vunpack.c.h.b16 %v4144
    %v4476 = vunpack.c.l.b16 %v4145
    %v4477 = vunpack.c.l.b16 %v4146
    %v4478 = vunpack.c.h.b16 %v4146
    %v4479 = vunpack.c.l.b16 %v4147
    %v4480 = vunpack.c.l.b16 %v4148
    %v4481 = vunpack.c.h.b16 %v4148
    %v4482 = vunpack.c.l.b16 %v4149
    %v4483 = vunpack.c.l.b16 %v4150
    %v4484 = vunpack.c.h.b16 %v4150
    %v4485 = vunpack.c.l.b16 %v4151
    %v4486 = vunpack.c.l.b16 %v4152
    %v4487 = vunpack.c.h.b16 %v4152
    %v4488 = vunpack.c.l.b16 %v4153
    %v4489 = vunpack.c.l.b16 %v4154
    %v4490 = vunpack.c.h.b16 %v4154
    %v4491 = vunpack.c.l.b16 %v4155
    %v4492 = vpack.c.b16 %v4471, %v4468
    %v4493 = vpack.c.b16 %v4472, %v4469
    %v4494 = vpack.c.b16 %v4473, %v4470
    %v4495 = vpack.c.b16 %v4477, %v4474
    %v4496 = vpack.c.b16 %v4478, %v4475
    %v4497 = vpack.c.b16 %v4479, %v4476
    %v4498 = vpack.c.b16 %v4483, %v4480
    %v4499 = vpack.c.b16 %v4484, %v4481
    %v4500 = vpack.c.b16 %v4485, %v4482
    %v4501 = vpack.c.b16 %v4489, %v4486
    %v4502 = vpack.c.b16 %v4490, %v4487
    %v4503 = vpack.c.b16 %v4491, %v4488
    %v4517 = vsel %vm2244, %v4139, 0
    %4519 = vmatprep.subr.bf16.mxu0 0
    %4520 = vmatpush1.bf16.msra.mxu0 0
    %4521 = vmatprep.subr.bf16.mxu0 0
    %4522 = vmatpush1.bf16.msra.mxu0 0
    %4523 = vmatprep.subr.bf16.mxu0 0
    %4524 = vmatpush1.bf16.msra.mxu0 0
    %4525 = vmatprep.subr.bf16.mxu0 0
    %4526 = vmatpush1.bf16.msra.mxu0 0
    %4527 = vmatprep.subr.bf16.mxu0 %v4502
    %4528 = vmatpush1.bf16.msra.mxu0 %v4501
    %4529 = vmatprep.subr.bf16.mxu0 %v4499
    %4530 = vmatpush1.bf16.msra.mxu0 %v4498
    %4531 = vmatprep.subr.bf16.mxu0 %v4496
    %4532 = vmatpush1.bf16.msra.mxu0 %v4495
    %4533 = vmatprep.subr.bf16.mxu0 %v4493
    %4534 = vmatpush1.bf16.msra.mxu0 %v4492
    %4535 = vmatprep.subr.bf16.mxu0 0
    %4536 = vmatpush2.bf16.msra.mxu0 0
    %4537 = vmatprep.subr.bf16.mxu0 0
    %4538 = vmatpush2.bf16.msra.mxu0 0
    %4539 = vmatprep.subr.bf16.mxu0 0
    %4540 = vmatpush2.bf16.msra.mxu0 0
    %4541 = vmatprep.subr.bf16.mxu0 0
    %4542 = vmatpush2.bf16.msra.mxu0 0
    %4543 = vmatprep.subr.bf16.mxu0 0
    %4544 = vmatpush2.bf16.msra.mxu0 0
    %4545 = vmatprep.subr.bf16.mxu0 0
    %4546 = vmatpush2.bf16.msra.mxu0 0
    %4547 = vmatprep.subr.bf16.mxu0 0
    %4548 = vmatpush2.bf16.msra.mxu0 0
    %4549 = vmatprep.subr.bf16.mxu0 0
    %4550 = vmatpush2.bf16.msra.mxu0 0
    %4551 = vmatprep.mubr.bf16.mxu0 0
    %4552 = vmatmul.mubr.bf16.gmra.mxu0 %v4517
    %v4553 = vpop.f32.mrf.mxu0
    %v4554 = vadd.f32 %v4403, %v4553
    %v4555 = vpop.f32.mrf.mxu0
    %v4556 = vadd.f32 %v4405, %v4555
    %v4557 = vpop.f32.mrf.mxu0
    %v4558 = vadd.f32 %v4407, %v4557
    %v4559 = vpop.f32.mrf.mxu0
    %v4560 = vadd.f32 %v4409, %v4559
    %4561 = vdwg.mxu0
    %4562 = vmatprep.subr.bf16.mxu0 0
    %4563 = vmatpush1.bf16.msra.mxu0 0
    %4564 = vmatprep.subr.bf16.mxu0 0
    %4565 = vmatpush1.bf16.msra.mxu0 0
    %4566 = vmatprep.subr.bf16.mxu0 0
    %4567 = vmatpush1.bf16.msra.mxu0 0
    %4568 = vmatprep.subr.bf16.mxu0 0
    %4569 = vmatpush1.bf16.msra.mxu0 0
    %4570 = vmatprep.subr.bf16.mxu0 0
    %4571 = vmatpush1.bf16.msra.mxu0 %v4503
    %4572 = vmatprep.subr.bf16.mxu0 0
    %4573 = vmatpush1.bf16.msra.mxu0 %v4500
    %4574 = vmatprep.subr.bf16.mxu0 0
    %4575 = vmatpush1.bf16.msra.mxu0 %v4497
    %4576 = vmatprep.subr.bf16.mxu0 0
    %4577 = vmatpush1.bf16.msra.mxu0 %v4494
    %4578 = vmatprep.subr.bf16.mxu0 0
    %4579 = vmatpush2.bf16.msra.mxu0 0
    %4580 = vmatprep.subr.bf16.mxu0 0
    %4581 = vmatpush2.bf16.msra.mxu0 0
    %4582 = vmatprep.subr.bf16.mxu0 0
    %4583 = vmatpush2.bf16.msra.mxu0 0
    %4584 = vmatprep.subr.bf16.mxu0 0
    %4585 = vmatpush2.bf16.msra.mxu0 0
    %4586 = vmatprep.subr.bf16.mxu0 0
    %4587 = vmatpush2.bf16.msra.mxu0 0
    %4588 = vmatprep.subr.bf16.mxu0 0
    %4589 = vmatpush2.bf16.msra.mxu0 0
    %4590 = vmatprep.subr.bf16.mxu0 0
    %4591 = vmatpush2.bf16.msra.mxu0 0
    %4592 = vmatprep.subr.bf16.mxu0 0
    %4593 = vmatpush2.bf16.msra.mxu0 0
    %4594 = vmatprep.mubr.bf16.mxu0 0
    %4595 = vmatmul.mubr.bf16.gmra.mxu0 %v4517
    %v4596 = vpop.f32.mrf.mxu0
    %v4597 = vadd.f32 %v4446, %v4596
    %v4598 = vpop.f32.mrf.mxu0
    %v4599 = vpop.f32.mrf.mxu0
    %v4600 = vadd.f32 %v4449, %v4599
    %v4601 = vpop.f32.mrf.mxu0
    %4602 = vdwg.mxu0
    %v4604 = vsel %vm2244, %v2229, 0
    %v4607 = vsel %vm2244, %v2232, 0
    %4609 = vmatprep.subr.bf16.mxu0 0
    %4610 = vmatpush1.bf16.xpose.msra.mxu0 0
    %4611 = vmatprep.subr.bf16.mxu0 0
    %4612 = vmatpush1.bf16.xpose.msra.mxu0 0
    %4613 = vmatprep.subr.bf16.mxu0 0
    %4614 = vmatpush1.bf16.xpose.msra.mxu0 0
    %4615 = vmatprep.subr.bf16.mxu0 0
    %4616 = vmatpush1.bf16.xpose.msra.mxu0 0
    %4617 = vmatprep.subr.bf16.mxu0 0
    %4618 = vmatpush1.bf16.xpose.msra.mxu0 0
    %4619 = vmatprep.subr.bf16.mxu0 0
    %4620 = vmatpush1.bf16.xpose.msra.mxu0 0
    %4621 = vmatprep.subr.bf16.mxu0 0
    %4622 = vmatpush1.bf16.xpose.msra.mxu0 0
    %4623 = vmatprep.subr.bf16.mxu0 0
    %4624 = vmatpush1.bf16.xpose.msra.mxu0 %v4607
    %4625 = vmatprep.subr.bf16.mxu0 0
    %4626 = vmatpush2.bf16.xpose.msra.mxu0 0
    %4627 = vmatprep.subr.bf16.mxu0 0
    %4628 = vmatpush2.bf16.xpose.msra.mxu0 0
    %4629 = vmatprep.subr.bf16.mxu0 0
    %4630 = vmatpush2.bf16.xpose.msra.mxu0 0
    %4631 = vmatprep.subr.bf16.mxu0 0
    %4632 = vmatpush2.bf16.xpose.msra.mxu0 0
    %4633 = vmatprep.subr.bf16.mxu0 0
    %4634 = vmatpush2.bf16.xpose.msra.mxu0 0
    %4635 = vmatprep.subr.bf16.mxu0 0
    %4636 = vmatpush2.bf16.xpose.msra.mxu0 0
    %4637 = vmatprep.subr.bf16.mxu0 0
    %4638 = vmatpush2.bf16.xpose.msra.mxu0 0
    %4639 = vmatprep.subr.bf16.mxu0 0
    %4640 = vmatpush2.bf16.xpose.msra.mxu0 0
    %4641 = vmatprep.mubr.bf16.mxu0 0
    %4642 = vmatmul.mubr.bf16.gmra.mxu0 %v4604
    %v4643 = vpop.f32.mrf.mxu0
    %v4644 = vadd.f32 0.0, %v4643
    %v4645 = vpop.f32.mrf.mxu0
    %v4646 = vpop.f32.mrf.mxu0
    %v4647 = vadd.f32 0.0, %v4646
    %v4648 = vpop.f32.mrf.mxu0
    %4649 = vdwg.mxu0
    %v4650 = vmul.f32 %v4644, 0.125
    %v4651 = vmul.f32 %v4647, 0.125
    %v4652 = vsel %vm2242, %v4650, -inf
    %v4653 = vsel %vm2243, %v4651, -inf
    %v4654 = vsel %vm2296, %v4652, -inf
    %4655 = vmax.xlane.f32.xlu0 %v4654
    %v4656 = vpop.xlane.xlu0 %4655
    %v4657 = vsel %vm2296, %v4653, -inf
    %4658 = vmax.xlane.f32.xlu0 %v4657
    %v4659 = vpop.xlane.xlu0 %4658
    %v4660 = vsub.f32 %v4652, %v4656
    %v4661 = vsub.f32 %v4653, %v4659
    %v4662 = vmul.f32 %v4660, 1.442695
    %v4663 = vpow.pop %v4662
    %v4664 = vmul.f32 %v4661, 1.442695
    %v4665 = vpow.pop %v4664
    %v4666 = vsel %vm2296, %v4663, 0.0
    %4667 = vadd.xlane.f32.xlu0 %v4666
    %v4668 = vpop.xlane.xlu0 %4667
    %v4669 = vsel %vm2296, %v4665, 0.0
    %4670 = vadd.xlane.f32.xlu0 %v4669
    %v4671 = vpop.xlane.xlu0 %4670
    %v4672 = vrcp.pop %v4668
    %v4673 = vrcp.pop %v4671
    %v4674 = vmul.f32 %v4663, %v4672
    %v4675 = vmul.f32 %v4665, %v4673
    %v4676 = vpack.c.bf16 %v4675, %v4674
    %v4678 = vsel %vm2296, %v4676, 0
    %4680 = vmatprep.subr.bf16.mxu0 0
    %4681 = vmatpush1.bf16.msra.mxu0 0
    %4682 = vmatprep.subr.bf16.mxu0 0
    %4683 = vmatpush1.bf16.msra.mxu0 0
    %4684 = vmatprep.subr.bf16.mxu0 0
    %4685 = vmatpush1.bf16.msra.mxu0 0
    %4686 = vmatprep.subr.bf16.mxu0 0
    %4687 = vmatpush1.bf16.msra.mxu0 0
    %4688 = vmatprep.subr.bf16.mxu0 0
    %4689 = vmatpush1.bf16.msra.mxu0 0
    %4690 = vmatprep.subr.bf16.mxu0 0
    %4691 = vmatpush1.bf16.msra.mxu0 0
    %4692 = vmatprep.subr.bf16.mxu0 0
    %4693 = vmatpush1.bf16.msra.mxu0 0
    %4694 = vmatprep.subr.bf16.mxu0 0
    %4695 = vmatpush1.bf16.msra.mxu0 %v2235
    %4696 = vmatprep.subr.bf16.mxu0 0
    %4697 = vmatpush2.bf16.msra.mxu0 0
    %4698 = vmatprep.subr.bf16.mxu0 0
    %4699 = vmatpush2.bf16.msra.mxu0 0
    %4700 = vmatprep.subr.bf16.mxu0 0
    %4701 = vmatpush2.bf16.msra.mxu0 0
    %4702 = vmatprep.subr.bf16.mxu0 0
    %4703 = vmatpush2.bf16.msra.mxu0 0
    %4704 = vmatprep.subr.bf16.mxu0 0
    %4705 = vmatpush2.bf16.msra.mxu0 0
    %4706 = vmatprep.subr.bf16.mxu0 0
    %4707 = vmatpush2.bf16.msra.mxu0 0
    %4708 = vmatprep.subr.bf16.mxu0 0
    %4709 = vmatpush2.bf16.msra.mxu0 0
    %4710 = vmatprep.subr.bf16.mxu0 0
    %4711 = vmatpush2.bf16.msra.mxu0 0
    %4712 = vmatprep.mubr.bf16.mxu0 0
    %4713 = vmatmul.mubr.bf16.gmra.mxu0 %v4678
    %v4714 = vpop.f32.mrf.mxu0
    %v4715 = vadd.f32 0.0, %v4714
    %v4716 = vpop.f32.mrf.mxu0
    %v4717 = vpop.f32.mrf.mxu0
    %v4718 = vadd.f32 0.0, %v4717
    %v4719 = vpop.f32.mrf.mxu0
    %4720 = vdwg.mxu0
    %v4721 = vpack.c.bf16 %v4718, %v4715
    %v4722 = vld [vmem:[%s2948] sm:$0xff]
    %v4723 = vld [vmem:[%s2948 + $0x8] sm:$0xf]
    %v4724 = vld [vmem:[%s2948 + $0xc] sm:$0xff]
    %v4725 = vld [vmem:[%s2948 + $0x14] sm:$0xf]
    %v4726 = vld [vmem:[%s2948 + $0x18] sm:$0xff]
    %v4727 = vld [vmem:[%s2948 + $0x20] sm:$0xf]
    %v4728 = vld [vmem:[%s2948 + $0x24] sm:$0xff]
    %v4729 = vld [vmem:[%s2948 + $0x2c] sm:$0xf]
    %v4730 = vld [vmem:[%s2948 + $0x30] sm:$0xff]
    %v4731 = vld [vmem:[%s2948 + $0x38] sm:$0xf]
    %v4732 = vld [vmem:[%s2948 + $0x3c] sm:$0xff]
    %v4733 = vld [vmem:[%s2948 + $0x44] sm:$0xf]
    %v4734 = vld [vmem:[%s2948 + $0x48] sm:$0xff]
    %v4735 = vld [vmem:[%s2948 + $0x50] sm:$0xf]
    %v4736 = vld [vmem:[%s2948 + $0x54] sm:$0xff]
    %v4737 = vld [vmem:[%s2948 + $0x5c] sm:$0xf]
    %v4754 = vunpack.c.l.b16 %v4722
    %v4755 = vunpack.c.h.b16 %v4722
    %v4756 = vunpack.c.l.b16 %v4723
    %v4757 = vunpack.c.l.b16 %v4724
    %v4758 = vunpack.c.h.b16 %v4724
    %v4759 = vunpack.c.l.b16 %v4725
    %v4760 = vunpack.c.l.b16 %v4726
    %v4761 = vunpack.c.h.b16 %v4726
    %v4762 = vunpack.c.l.b16 %v4727
    %v4763 = vunpack.c.l.b16 %v4728
    %v4764 = vunpack.c.h.b16 %v4728
    %v4765 = vunpack.c.l.b16 %v4729
    %v4766 = vunpack.c.l.b16 %v4730
    %v4767 = vunpack.c.h.b16 %v4730
    %v4768 = vunpack.c.l.b16 %v4731
    %v4769 = vunpack.c.l.b16 %v4732
    %v4770 = vunpack.c.h.b16 %v4732
    %v4771 = vunpack.c.l.b16 %v4733
    %v4772 = vunpack.c.l.b16 %v4734
    %v4773 = vunpack.c.h.b16 %v4734
    %v4774 = vunpack.c.l.b16 %v4735
    %v4775 = vunpack.c.l.b16 %v4736
    %v4776 = vunpack.c.h.b16 %v4736
    %v4777 = vunpack.c.l.b16 %v4737
    %v4778 = vpack.c.b16 %v4757, %v4754
    %v4779 = vpack.c.b16 %v4758, %v4755
    %v4780 = vpack.c.b16 %v4759, %v4756
    %v4781 = vpack.c.b16 %v4763, %v4760
    %v4782 = vpack.c.b16 %v4764, %v4761
    %v4783 = vpack.c.b16 %v4765, %v4762
    %v4784 = vpack.c.b16 %v4769, %v4766
    %v4785 = vpack.c.b16 %v4770, %v4767
    %v4786 = vpack.c.b16 %v4771, %v4768
    %v4787 = vpack.c.b16 %v4775, %v4772
    %v4788 = vpack.c.b16 %v4776, %v4773
    %v4789 = vpack.c.b16 %v4777, %v4774
    %v4803 = vsel %vm2244, %v4721, 0
    %4805 = vmatprep.subr.bf16.mxu0 0
    %4806 = vmatpush1.bf16.msra.mxu0 0
    %4807 = vmatprep.subr.bf16.mxu0 0
    %4808 = vmatpush1.bf16.msra.mxu0 0
    %4809 = vmatprep.subr.bf16.mxu0 0
    %4810 = vmatpush1.bf16.msra.mxu0 0
    %4811 = vmatprep.subr.bf16.mxu0 0
    %4812 = vmatpush1.bf16.msra.mxu0 0
    %4813 = vmatprep.subr.bf16.mxu0 %v4788
    %4814 = vmatpush1.bf16.msra.mxu0 %v4787
    %4815 = vmatprep.subr.bf16.mxu0 %v4785
    %4816 = vmatpush1.bf16.msra.mxu0 %v4784
    %4817 = vmatprep.subr.bf16.mxu0 %v4782
    %4818 = vmatpush1.bf16.msra.mxu0 %v4781
    %4819 = vmatprep.subr.bf16.mxu0 %v4779
    %4820 = vmatpush1.bf16.msra.mxu0 %v4778
    %4821 = vmatprep.subr.bf16.mxu0 0
    %4822 = vmatpush2.bf16.msra.mxu0 0
    %4823 = vmatprep.subr.bf16.mxu0 0
    %4824 = vmatpush2.bf16.msra.mxu0 0
    %4825 = vmatprep.subr.bf16.mxu0 0
    %4826 = vmatpush2.bf16.msra.mxu0 0
    %4827 = vmatprep.subr.bf16.mxu0 0
    %4828 = vmatpush2.bf16.msra.mxu0 0
    %4829 = vmatprep.subr.bf16.mxu0 0
    %4830 = vmatpush2.bf16.msra.mxu0 0
    %4831 = vmatprep.subr.bf16.mxu0 0
    %4832 = vmatpush2.bf16.msra.mxu0 0
    %4833 = vmatprep.subr.bf16.mxu0 0
    %4834 = vmatpush2.bf16.msra.mxu0 0
    %4835 = vmatprep.subr.bf16.mxu0 0
    %4836 = vmatpush2.bf16.msra.mxu0 0
    %4837 = vmatprep.mubr.bf16.mxu0 0
    %4838 = vmatmul.mubr.bf16.gmra.mxu0 %v4803
    %v4839 = vpop.f32.mrf.mxu0
    %v4840 = vadd.f32 0.0, %v4839
    %v4841 = vpop.f32.mrf.mxu0
    %v4842 = vadd.f32 0.0, %v4841
    %v4843 = vpop.f32.mrf.mxu0
    %v4844 = vadd.f32 0.0, %v4843
    %v4845 = vpop.f32.mrf.mxu0
    %v4846 = vadd.f32 0.0, %v4845
    %4847 = vdwg.mxu0
    %4848 = vmatprep.subr.bf16.mxu0 0
    %4849 = vmatpush1.bf16.msra.mxu0 0
    %4850 = vmatprep.subr.bf16.mxu0 0
    %4851 = vmatpush1.bf16.msra.mxu0 0
    %4852 = vmatprep.subr.bf16.mxu0 0
    %4853 = vmatpush1.bf16.msra.mxu0 0
    %4854 = vmatprep.subr.bf16.mxu0 0
    %4855 = vmatpush1.bf16.msra.mxu0 0
    %4856 = vmatprep.subr.bf16.mxu0 0
    %4857 = vmatpush1.bf16.msra.mxu0 %v4789
    %4858 = vmatprep.subr.bf16.mxu0 0
    %4859 = vmatpush1.bf16.msra.mxu0 %v4786
    %4860 = vmatprep.subr.bf16.mxu0 0
    %4861 = vmatpush1.bf16.msra.mxu0 %v4783
    %4862 = vmatprep.subr.bf16.mxu0 0
    %4863 = vmatpush1.bf16.msra.mxu0 %v4780
    %4864 = vmatprep.subr.bf16.mxu0 0
    %4865 = vmatpush2.bf16.msra.mxu0 0
    %4866 = vmatprep.subr.bf16.mxu0 0
    %4867 = vmatpush2.bf16.msra.mxu0 0
    %4868 = vmatprep.subr.bf16.mxu0 0
    %4869 = vmatpush2.bf16.msra.mxu0 0
    %4870 = vmatprep.subr.bf16.mxu0 0
    %4871 = vmatpush2.bf16.msra.mxu0 0
    %4872 = vmatprep.subr.bf16.mxu0 0
    %4873 = vmatpush2.bf16.msra.mxu0 0
    %4874 = vmatprep.subr.bf16.mxu0 0
    %4875 = vmatpush2.bf16.msra.mxu0 0
    %4876 = vmatprep.subr.bf16.mxu0 0
    %4877 = vmatpush2.bf16.msra.mxu0 0
    %4878 = vmatprep.subr.bf16.mxu0 0
    %4879 = vmatpush2.bf16.msra.mxu0 0
    %4880 = vmatprep.mubr.bf16.mxu0 0
    %4881 = vmatmul.mubr.bf16.gmra.mxu0 %v4803
    %v4882 = vpop.f32.mrf.mxu0
    %v4883 = vadd.f32 0.0, %v4882
    %v4884 = vpop.f32.mrf.mxu0
    %v4885 = vpop.f32.mrf.mxu0
    %v4886 = vadd.f32 0.0, %v4885
    %v4887 = vpop.f32.mrf.mxu0
    %4888 = vdwg.mxu0
    %v4889 = vadd.f32 %v4554, %v4840
    %v4890 = vadd.f32 %v4556, %v4842
    %v4891 = vadd.f32 %v4597, %v4883
    %v4892 = vadd.f32 %v4558, %v4844
    %v4893 = vadd.f32 %v4560, %v4846
    %v4894 = vadd.f32 %v4600, %v4886
    %4896 = vrot.lane.b32.xlu0 %v2229, 64
    %v4897 = vpop.permute.xlu0 %4896
    %4899 = vrot.lane.b32.xlu0 %v2232, 64
    %v4900 = vpop.permute.xlu0 %4899
    %v4902 = vsel %vm2244, %v4897, 0
    %v4905 = vsel %vm2244, %v4900, 0
    %4907 = vmatprep.subr.bf16.mxu0 0
    %4908 = vmatpush1.bf16.xpose.msra.mxu0 0
    %4909 = vmatprep.subr.bf16.mxu0 0
    %4910 = vmatpush1.bf16.xpose.msra.mxu0 0
    %4911 = vmatprep.subr.bf16.mxu0 0
    %4912 = vmatpush1.bf16.xpose.msra.mxu0 0
    %4913 = vmatprep.subr.bf16.mxu0 0
    %4914 = vmatpush1.bf16.xpose.msra.mxu0 0
    %4915 = vmatprep.subr.bf16.mxu0 0
    %4916 = vmatpush1.bf16.xpose.msra.mxu0 0
    %4917 = vmatprep.subr.bf16.mxu0 0
    %4918 = vmatpush1.bf16.xpose.msra.mxu0 0
    %4919 = vmatprep.subr.bf16.mxu0 0
    %4920 = vmatpush1.bf16.xpose.msra.mxu0 0
    %4921 = vmatprep.subr.bf16.mxu0 0
    %4922 = vmatpush1.bf16.xpose.msra.mxu0 %v4905
    %4923 = vmatprep.subr.bf16.mxu0 0
    %4924 = vmatpush2.bf16.xpose.msra.mxu0 0
    %4925 = vmatprep.subr.bf16.mxu0 0
    %4926 = vmatpush2.bf16.xpose.msra.mxu0 0
    %4927 = vmatprep.subr.bf16.mxu0 0
    %4928 = vmatpush2.bf16.xpose.msra.mxu0 0
    %4929 = vmatprep.subr.bf16.mxu0 0
    %4930 = vmatpush2.bf16.xpose.msra.mxu0 0
    %4931 = vmatprep.subr.bf16.mxu0 0
    %4932 = vmatpush2.bf16.xpose.msra.mxu0 0
    %4933 = vmatprep.subr.bf16.mxu0 0
    %4934 = vmatpush2.bf16.xpose.msra.mxu0 0
    %4935 = vmatprep.subr.bf16.mxu0 0
    %4936 = vmatpush2.bf16.xpose.msra.mxu0 0
    %4937 = vmatprep.subr.bf16.mxu0 0
    %4938 = vmatpush2.bf16.xpose.msra.mxu0 0
    %4939 = vmatprep.mubr.bf16.mxu0 0
    %4940 = vmatmul.mubr.bf16.gmra.mxu0 %v4902
    %v4941 = vpop.f32.mrf.mxu0
    %v4942 = vadd.f32 0.0, %v4941
    %v4943 = vpop.f32.mrf.mxu0
    %v4944 = vpop.f32.mrf.mxu0
    %v4945 = vadd.f32 0.0, %v4944
    %v4946 = vpop.f32.mrf.mxu0
    %4947 = vdwg.mxu0
    %v4948 = vmul.f32 %v4942, 0.125
    %v4949 = vmul.f32 %v4945, 0.125
    %v4950 = vsel %vm2242, %v4948, -inf
    %v4951 = vsel %vm2243, %v4949, -inf
    %v4952 = vsel %vm2296, %v4950, -inf
    %4953 = vmax.xlane.f32.xlu0 %v4952
    %v4954 = vpop.xlane.xlu0 %4953
    %v4955 = vsel %vm2296, %v4951, -inf
    %4956 = vmax.xlane.f32.xlu0 %v4955
    %v4957 = vpop.xlane.xlu0 %4956
    %v4958 = vsub.f32 %v4950, %v4954
    %v4959 = vsub.f32 %v4951, %v4957
    %v4960 = vmul.f32 %v4958, 1.442695
    %v4961 = vpow.pop %v4960
    %v4962 = vmul.f32 %v4959, 1.442695
    %v4963 = vpow.pop %v4962
    %v4964 = vsel %vm2296, %v4961, 0.0
    %4965 = vadd.xlane.f32.xlu0 %v4964
    %v4966 = vpop.xlane.xlu0 %4965
    %v4967 = vsel %vm2296, %v4963, 0.0
    %4968 = vadd.xlane.f32.xlu0 %v4967
    %v4969 = vpop.xlane.xlu0 %4968
    %v4970 = vrcp.pop %v4966
    %v4971 = vrcp.pop %v4969
    %v4972 = vmul.f32 %v4961, %v4970
    %v4973 = vmul.f32 %v4963, %v4971
    %v4974 = vpack.c.bf16 %v4973, %v4972
    %4976 = vrot.lane.b32.xlu0 %v2235, 64
    %v4977 = vpop.permute.xlu0 %4976
    %v4980 = vsel %vm2296, %v4974, 0
    %4982 = vmatprep.subr.bf16.mxu0 0
    %4983 = vmatpush1.bf16.msra.mxu0 0
    %4984 = vmatprep.subr.bf16.mxu0 0
    %4985 = vmatpush1.bf16.msra.mxu0 0
    %4986 = vmatprep.subr.bf16.mxu0 0
    %4987 = vmatpush1.bf16.msra.mxu0 0
    %4988 = vmatprep.subr.bf16.mxu0 0
    %4989 = vmatpush1.bf16.msra.mxu0 0
    %4990 = vmatprep.subr.bf16.mxu0 0
    %4991 = vmatpush1.bf16.msra.mxu0 0
    %4992 = vmatprep.subr.bf16.mxu0 0
    %4993 = vmatpush1.bf16.msra.mxu0 0
    %4994 = vmatprep.subr.bf16.mxu0 0
    %4995 = vmatpush1.bf16.msra.mxu0 0
    %4996 = vmatprep.subr.bf16.mxu0 0
    %4997 = vmatpush1.bf16.msra.mxu0 %v4977
    %4998 = vmatprep.subr.bf16.mxu0 0
    %4999 = vmatpush2.bf16.msra.mxu0 0
    %5000 = vmatprep.subr.bf16.mxu0 0
    %5001 = vmatpush2.bf16.msra.mxu0 0
    %5002 = vmatprep.subr.bf16.mxu0 0
    %5003 = vmatpush2.bf16.msra.mxu0 0
    %5004 = vmatprep.subr.bf16.mxu0 0
    %5005 = vmatpush2.bf16.msra.mxu0 0
    %5006 = vmatprep.subr.bf16.mxu0 0
    %5007 = vmatpush2.bf16.msra.mxu0 0
    %5008 = vmatprep.subr.bf16.mxu0 0
    %5009 = vmatpush2.bf16.msra.mxu0 0
    %5010 = vmatprep.subr.bf16.mxu0 0
    %5011 = vmatpush2.bf16.msra.mxu0 0
    %5012 = vmatprep.subr.bf16.mxu0 0
    %5013 = vmatpush2.bf16.msra.mxu0 0
    %5014 = vmatprep.mubr.bf16.mxu0 0
    %5015 = vmatmul.mubr.bf16.gmra.mxu0 %v4980
    %v5016 = vpop.f32.mrf.mxu0
    %v5017 = vadd.f32 0.0, %v5016
    %v5018 = vpop.f32.mrf.mxu0
    %v5019 = vpop.f32.mrf.mxu0
    %v5020 = vadd.f32 0.0, %v5019
    %v5021 = vpop.f32.mrf.mxu0
    %5022 = vdwg.mxu0
    %v5023 = vpack.c.bf16 %v5020, %v5017
    %v5024 = vld [vmem:[%s3251] sm:$0xff]
    %v5025 = vld [vmem:[%s3251 + $0x8] sm:$0xf]
    %v5026 = vld [vmem:[%s3251 + $0xc] sm:$0xff]
    %v5027 = vld [vmem:[%s3251 + $0x14] sm:$0xf]
    %v5028 = vld [vmem:[%s3251 + $0x18] sm:$0xff]
    %v5029 = vld [vmem:[%s3251 + $0x20] sm:$0xf]
    %v5030 = vld [vmem:[%s3251 + $0x24] sm:$0xff]
    %v5031 = vld [vmem:[%s3251 + $0x2c] sm:$0xf]
    %v5032 = vld [vmem:[%s3251 + $0x30] sm:$0xff]
    %v5033 = vld [vmem:[%s3251 + $0x38] sm:$0xf]
    %v5034 = vld [vmem:[%s3251 + $0x3c] sm:$0xff]
    %v5035 = vld [vmem:[%s3251 + $0x44] sm:$0xf]
    %v5036 = vld [vmem:[%s3251 + $0x48] sm:$0xff]
    %v5037 = vld [vmem:[%s3251 + $0x50] sm:$0xf]
    %v5038 = vld [vmem:[%s3251 + $0x54] sm:$0xff]
    %v5039 = vld [vmem:[%s3251 + $0x5c] sm:$0xf]
    %v5056 = vunpack.c.l.b16 %v5024
    %v5057 = vunpack.c.h.b16 %v5024
    %v5058 = vunpack.c.l.b16 %v5025
    %v5059 = vunpack.c.l.b16 %v5026
    %v5060 = vunpack.c.h.b16 %v5026
    %v5061 = vunpack.c.l.b16 %v5027
    %v5062 = vunpack.c.l.b16 %v5028
    %v5063 = vunpack.c.h.b16 %v5028
    %v5064 = vunpack.c.l.b16 %v5029
    %v5065 = vunpack.c.l.b16 %v5030
    %v5066 = vunpack.c.h.b16 %v5030
    %v5067 = vunpack.c.l.b16 %v5031
    %v5068 = vunpack.c.l.b16 %v5032
    %v5069 = vunpack.c.h.b16 %v5032
    %v5070 = vunpack.c.l.b16 %v5033
    %v5071 = vunpack.c.l.b16 %v5034
    %v5072 = vunpack.c.h.b16 %v5034
    %v5073 = vunpack.c.l.b16 %v5035
    %v5074 = vunpack.c.l.b16 %v5036
    %v5075 = vunpack.c.h.b16 %v5036
    %v5076 = vunpack.c.l.b16 %v5037
    %v5077 = vunpack.c.l.b16 %v5038
    %v5078 = vunpack.c.h.b16 %v5038
    %v5079 = vunpack.c.l.b16 %v5039
    %v5080 = vpack.c.b16 %v5059, %v5056
    %v5081 = vpack.c.b16 %v5060, %v5057
    %v5082 = vpack.c.b16 %v5061, %v5058
    %v5083 = vpack.c.b16 %v5065, %v5062
    %v5084 = vpack.c.b16 %v5066, %v5063
    %v5085 = vpack.c.b16 %v5067, %v5064
    %v5086 = vpack.c.b16 %v5071, %v5068
    %v5087 = vpack.c.b16 %v5072, %v5069
    %v5088 = vpack.c.b16 %v5073, %v5070
    %v5089 = vpack.c.b16 %v5077, %v5074
    %v5090 = vpack.c.b16 %v5078, %v5075
    %v5091 = vpack.c.b16 %v5079, %v5076
    %v5105 = vsel %vm2244, %v5023, 0
    %5107 = vmatprep.subr.bf16.mxu0 0
    %5108 = vmatpush1.bf16.msra.mxu0 0
    %5109 = vmatprep.subr.bf16.mxu0 0
    %5110 = vmatpush1.bf16.msra.mxu0 0
    %5111 = vmatprep.subr.bf16.mxu0 0
    %5112 = vmatpush1.bf16.msra.mxu0 0
    %5113 = vmatprep.subr.bf16.mxu0 0
    %5114 = vmatpush1.bf16.msra.mxu0 0
    %5115 = vmatprep.subr.bf16.mxu0 %v5090
    %5116 = vmatpush1.bf16.msra.mxu0 %v5089
    %5117 = vmatprep.subr.bf16.mxu0 %v5087
    %5118 = vmatpush1.bf16.msra.mxu0 %v5086
    %5119 = vmatprep.subr.bf16.mxu0 %v5084
    %5120 = vmatpush1.bf16.msra.mxu0 %v5083
    %5121 = vmatprep.subr.bf16.mxu0 %v5081
    %5122 = vmatpush1.bf16.msra.mxu0 %v5080
    %5123 = vmatprep.subr.bf16.mxu0 0
    %5124 = vmatpush2.bf16.msra.mxu0 0
    %5125 = vmatprep.subr.bf16.mxu0 0
    %5126 = vmatpush2.bf16.msra.mxu0 0
    %5127 = vmatprep.subr.bf16.mxu0 0
    %5128 = vmatpush2.bf16.msra.mxu0 0
    %5129 = vmatprep.subr.bf16.mxu0 0
    %5130 = vmatpush2.bf16.msra.mxu0 0
    %5131 = vmatprep.subr.bf16.mxu0 0
    %5132 = vmatpush2.bf16.msra.mxu0 0
    %5133 = vmatprep.subr.bf16.mxu0 0
    %5134 = vmatpush2.bf16.msra.mxu0 0
    %5135 = vmatprep.subr.bf16.mxu0 0
    %5136 = vmatpush2.bf16.msra.mxu0 0
    %5137 = vmatprep.subr.bf16.mxu0 0
    %5138 = vmatpush2.bf16.msra.mxu0 0
    %5139 = vmatprep.mubr.bf16.mxu0 0
    %5140 = vmatmul.mubr.bf16.gmra.mxu0 %v5105
    %v5141 = vpop.f32.mrf.mxu0
    %v5142 = vadd.f32 0.0, %v5141
    %v5143 = vpop.f32.mrf.mxu0
    %v5144 = vadd.f32 0.0, %v5143
    %v5145 = vpop.f32.mrf.mxu0
    %v5146 = vadd.f32 0.0, %v5145
    %v5147 = vpop.f32.mrf.mxu0
    %v5148 = vadd.f32 0.0, %v5147
    %5149 = vdwg.mxu0
    %5150 = vmatprep.subr.bf16.mxu0 0
    %5151 = vmatpush1.bf16.msra.mxu0 0
    %5152 = vmatprep.subr.bf16.mxu0 0
    %5153 = vmatpush1.bf16.msra.mxu0 0
    %5154 = vmatprep.subr.bf16.mxu0 0
    %5155 = vmatpush1.bf16.msra.mxu0 0
    %5156 = vmatprep.subr.bf16.mxu0 0
    %5157 = vmatpush1.bf16.msra.mxu0 0
    %5158 = vmatprep.subr.bf16.mxu0 0
    %5159 = vmatpush1.bf16.msra.mxu0 %v5091
    %5160 = vmatprep.subr.bf16.mxu0 0
    %5161 = vmatpush1.bf16.msra.mxu0 %v5088
    %5162 = vmatprep.subr.bf16.mxu0 0
    %5163 = vmatpush1.bf16.msra.mxu0 %v5085
    %5164 = vmatprep.subr.bf16.mxu0 0
    %5165 = vmatpush1.bf16.msra.mxu0 %v5082
    %5166 = vmatprep.subr.bf16.mxu0 0
    %5167 = vmatpush2.bf16.msra.mxu0 0
    %5168 = vmatprep.subr.bf16.mxu0 0
    %5169 = vmatpush2.bf16.msra.mxu0 0
    %5170 = vmatprep.subr.bf16.mxu0 0
    %5171 = vmatpush2.bf16.msra.mxu0 0
    %5172 = vmatprep.subr.bf16.mxu0 0
    %5173 = vmatpush2.bf16.msra.mxu0 0
    %5174 = vmatprep.subr.bf16.mxu0 0
    %5175 = vmatpush2.bf16.msra.mxu0 0
    %5176 = vmatprep.subr.bf16.mxu0 0
    %5177 = vmatpush2.bf16.msra.mxu0 0
    %5178 = vmatprep.subr.bf16.mxu0 0
    %5179 = vmatpush2.bf16.msra.mxu0 0
    %5180 = vmatprep.subr.bf16.mxu0 0
    %5181 = vmatpush2.bf16.msra.mxu0 0
    %5182 = vmatprep.mubr.bf16.mxu0 0
    %5183 = vmatmul.mubr.bf16.gmra.mxu0 %v5105
    %v5184 = vpop.f32.mrf.mxu0
    %v5185 = vadd.f32 0.0, %v5184
    %v5186 = vpop.f32.mrf.mxu0
    %v5187 = vpop.f32.mrf.mxu0
    %v5188 = vadd.f32 0.0, %v5187
    %v5189 = vpop.f32.mrf.mxu0
    %5190 = vdwg.mxu0
    %v5191 = vadd.f32 %v4889, %v5142
    %v5192 = vadd.f32 %v4890, %v5144
    %v5193 = vadd.f32 %v4891, %v5185
    %v5194 = vadd.f32 %v4892, %v5146
    %v5195 = vadd.f32 %v4893, %v5148
    %v5196 = vadd.f32 %v4894, %v5188
    %v5198 = vsel %vm2244, %v2230, 0
    %v5201 = vsel %vm2244, %v2233, 0
    %5203 = vmatprep.subr.bf16.mxu0 0
    %5204 = vmatpush1.bf16.xpose.msra.mxu0 0
    %5205 = vmatprep.subr.bf16.mxu0 0
    %5206 = vmatpush1.bf16.xpose.msra.mxu0 0
    %5207 = vmatprep.subr.bf16.mxu0 0
    %5208 = vmatpush1.bf16.xpose.msra.mxu0 0
    %5209 = vmatprep.subr.bf16.mxu0 0
    %5210 = vmatpush1.bf16.xpose.msra.mxu0 0
    %5211 = vmatprep.subr.bf16.mxu0 0
    %5212 = vmatpush1.bf16.xpose.msra.mxu0 0
    %5213 = vmatprep.subr.bf16.mxu0 0
    %5214 = vmatpush1.bf16.xpose.msra.mxu0 0
    %5215 = vmatprep.subr.bf16.mxu0 0
    %5216 = vmatpush1.bf16.xpose.msra.mxu0 0
    %5217 = vmatprep.subr.bf16.mxu0 0
    %5218 = vmatpush1.bf16.xpose.msra.mxu0 %v5201
    %5219 = vmatprep.subr.bf16.mxu0 0
    %5220 = vmatpush2.bf16.xpose.msra.mxu0 0
    %5221 = vmatprep.subr.bf16.mxu0 0
    %5222 = vmatpush2.bf16.xpose.msra.mxu0 0
    %5223 = vmatprep.subr.bf16.mxu0 0
    %5224 = vmatpush2.bf16.xpose.msra.mxu0 0
    %5225 = vmatprep.subr.bf16.mxu0 0
    %5226 = vmatpush2.bf16.xpose.msra.mxu0 0
    %5227 = vmatprep.subr.bf16.mxu0 0
    %5228 = vmatpush2.bf16.xpose.msra.mxu0 0
    %5229 = vmatprep.subr.bf16.mxu0 0
    %5230 = vmatpush2.bf16.xpose.msra.mxu0 0
    %5231 = vmatprep.subr.bf16.mxu0 0
    %5232 = vmatpush2.bf16.xpose.msra.mxu0 0
    %5233 = vmatprep.subr.bf16.mxu0 0
    %5234 = vmatpush2.bf16.xpose.msra.mxu0 0
    %5235 = vmatprep.mubr.bf16.mxu0 0
    %5236 = vmatmul.mubr.bf16.gmra.mxu0 %v5198
    %v5237 = vpop.f32.mrf.mxu0
    %v5238 = vadd.f32 0.0, %v5237
    %v5239 = vpop.f32.mrf.mxu0
    %v5240 = vpop.f32.mrf.mxu0
    %v5241 = vadd.f32 0.0, %v5240
    %v5242 = vpop.f32.mrf.mxu0
    %5243 = vdwg.mxu0
    %v5244 = vmul.f32 %v5238, 0.125
    %v5245 = vmul.f32 %v5241, 0.125
    %v5246 = vsel %vm2242, %v5244, -inf
    %v5247 = vsel %vm2243, %v5245, -inf
    %v5248 = vsel %vm2296, %v5246, -inf
    %5249 = vmax.xlane.f32.xlu0 %v5248
    %v5250 = vpop.xlane.xlu0 %5249
    %v5251 = vsel %vm2296, %v5247, -inf
    %5252 = vmax.xlane.f32.xlu0 %v5251
    %v5253 = vpop.xlane.xlu0 %5252
    %v5254 = vsub.f32 %v5246, %v5250
    %v5255 = vsub.f32 %v5247, %v5253
    %v5256 = vmul.f32 %v5254, 1.442695
    %v5257 = vpow.pop %v5256
    %v5258 = vmul.f32 %v5255, 1.442695
    %v5259 = vpow.pop %v5258
    %v5260 = vsel %vm2296, %v5257, 0.0
    %5261 = vadd.xlane.f32.xlu0 %v5260
    %v5262 = vpop.xlane.xlu0 %5261
    %v5263 = vsel %vm2296, %v5259, 0.0
    %5264 = vadd.xlane.f32.xlu0 %v5263
    %v5265 = vpop.xlane.xlu0 %5264
    %v5266 = vrcp.pop %v5262
    %v5267 = vrcp.pop %v5265
    %v5268 = vmul.f32 %v5257, %v5266
    %v5269 = vmul.f32 %v5259, %v5267
    %v5270 = vpack.c.bf16 %v5269, %v5268
    %v5272 = vsel %vm2296, %v5270, 0
    %5274 = vmatprep.subr.bf16.mxu0 0
    %5275 = vmatpush1.bf16.msra.mxu0 0
    %5276 = vmatprep.subr.bf16.mxu0 0
    %5277 = vmatpush1.bf16.msra.mxu0 0
    %5278 = vmatprep.subr.bf16.mxu0 0
    %5279 = vmatpush1.bf16.msra.mxu0 0
    %5280 = vmatprep.subr.bf16.mxu0 0
    %5281 = vmatpush1.bf16.msra.mxu0 0
    %5282 = vmatprep.subr.bf16.mxu0 0
    %5283 = vmatpush1.bf16.msra.mxu0 0
    %5284 = vmatprep.subr.bf16.mxu0 0
    %5285 = vmatpush1.bf16.msra.mxu0 0
    %5286 = vmatprep.subr.bf16.mxu0 0
    %5287 = vmatpush1.bf16.msra.mxu0 0
    %5288 = vmatprep.subr.bf16.mxu0 0
    %5289 = vmatpush1.bf16.msra.mxu0 %v2236
    %5290 = vmatprep.subr.bf16.mxu0 0
    %5291 = vmatpush2.bf16.msra.mxu0 0
    %5292 = vmatprep.subr.bf16.mxu0 0
    %5293 = vmatpush2.bf16.msra.mxu0 0
    %5294 = vmatprep.subr.bf16.mxu0 0
    %5295 = vmatpush2.bf16.msra.mxu0 0
    %5296 = vmatprep.subr.bf16.mxu0 0
    %5297 = vmatpush2.bf16.msra.mxu0 0
    %5298 = vmatprep.subr.bf16.mxu0 0
    %5299 = vmatpush2.bf16.msra.mxu0 0
    %5300 = vmatprep.subr.bf16.mxu0 0
    %5301 = vmatpush2.bf16.msra.mxu0 0
    %5302 = vmatprep.subr.bf16.mxu0 0
    %5303 = vmatpush2.bf16.msra.mxu0 0
    %5304 = vmatprep.subr.bf16.mxu0 0
    %5305 = vmatpush2.bf16.msra.mxu0 0
    %5306 = vmatprep.mubr.bf16.mxu0 0
    %5307 = vmatmul.mubr.bf16.gmra.mxu0 %v5272
    %v5308 = vpop.f32.mrf.mxu0
    %v5309 = vadd.f32 0.0, %v5308
    %v5310 = vpop.f32.mrf.mxu0
    %v5311 = vpop.f32.mrf.mxu0
    %v5312 = vadd.f32 0.0, %v5311
    %v5313 = vpop.f32.mrf.mxu0
    %5314 = vdwg.mxu0
    %v5315 = vpack.c.bf16 %v5312, %v5309
    %v5316 = vld [vmem:[%s3544] sm:$0xff]
    %v5317 = vld [vmem:[%s3544 + $0x8] sm:$0xf]
    %v5318 = vld [vmem:[%s3544 + $0xc] sm:$0xff]
    %v5319 = vld [vmem:[%s3544 + $0x14] sm:$0xf]
    %v5320 = vld [vmem:[%s3544 + $0x18] sm:$0xff]
    %v5321 = vld [vmem:[%s3544 + $0x20] sm:$0xf]
    %v5322 = vld [vmem:[%s3544 + $0x24] sm:$0xff]
    %v5323 = vld [vmem:[%s3544 + $0x2c] sm:$0xf]
    %v5324 = vld [vmem:[%s3544 + $0x30] sm:$0xff]
    %v5325 = vld [vmem:[%s3544 + $0x38] sm:$0xf]
    %v5326 = vld [vmem:[%s3544 + $0x3c] sm:$0xff]
    %v5327 = vld [vmem:[%s3544 + $0x44] sm:$0xf]
    %v5328 = vld [vmem:[%s3544 + $0x48] sm:$0xff]
    %v5329 = vld [vmem:[%s3544 + $0x50] sm:$0xf]
    %v5330 = vld [vmem:[%s3544 + $0x54] sm:$0xff]
    %v5331 = vld [vmem:[%s3544 + $0x5c] sm:$0xf]
    %v5348 = vunpack.c.l.b16 %v5316
    %v5349 = vunpack.c.h.b16 %v5316
    %v5350 = vunpack.c.l.b16 %v5317
    %v5351 = vunpack.c.l.b16 %v5318
    %v5352 = vunpack.c.h.b16 %v5318
    %v5353 = vunpack.c.l.b16 %v5319
    %v5354 = vunpack.c.l.b16 %v5320
    %v5355 = vunpack.c.h.b16 %v5320
    %v5356 = vunpack.c.l.b16 %v5321
    %v5357 = vunpack.c.l.b16 %v5322
    %v5358 = vunpack.c.h.b16 %v5322
    %v5359 = vunpack.c.l.b16 %v5323
    %v5360 = vunpack.c.l.b16 %v5324
    %v5361 = vunpack.c.h.b16 %v5324
    %v5362 = vunpack.c.l.b16 %v5325
    %v5363 = vunpack.c.l.b16 %v5326
    %v5364 = vunpack.c.h.b16 %v5326
    %v5365 = vunpack.c.l.b16 %v5327
    %v5366 = vunpack.c.l.b16 %v5328
    %v5367 = vunpack.c.h.b16 %v5328
    %v5368 = vunpack.c.l.b16 %v5329
    %v5369 = vunpack.c.l.b16 %v5330
    %v5370 = vunpack.c.h.b16 %v5330
    %v5371 = vunpack.c.l.b16 %v5331
    %v5372 = vpack.c.b16 %v5351, %v5348
    %v5373 = vpack.c.b16 %v5352, %v5349
    %v5374 = vpack.c.b16 %v5353, %v5350
    %v5375 = vpack.c.b16 %v5357, %v5354
    %v5376 = vpack.c.b16 %v5358, %v5355
    %v5377 = vpack.c.b16 %v5359, %v5356
    %v5378 = vpack.c.b16 %v5363, %v5360
    %v5379 = vpack.c.b16 %v5364, %v5361
    %v5380 = vpack.c.b16 %v5365, %v5362
    %v5381 = vpack.c.b16 %v5369, %v5366
    %v5382 = vpack.c.b16 %v5370, %v5367
    %v5383 = vpack.c.b16 %v5371, %v5368
    %v5397 = vsel %vm2244, %v5315, 0
    %5399 = vmatprep.subr.bf16.mxu0 0
    %5400 = vmatpush1.bf16.msra.mxu0 0
    %5401 = vmatprep.subr.bf16.mxu0 0
    %5402 = vmatpush1.bf16.msra.mxu0 0
    %5403 = vmatprep.subr.bf16.mxu0 0
    %5404 = vmatpush1.bf16.msra.mxu0 0
    %5405 = vmatprep.subr.bf16.mxu0 0
    %5406 = vmatpush1.bf16.msra.mxu0 0
    %5407 = vmatprep.subr.bf16.mxu0 %v5382
    %5408 = vmatpush1.bf16.msra.mxu0 %v5381
    %5409 = vmatprep.subr.bf16.mxu0 %v5379
    %5410 = vmatpush1.bf16.msra.mxu0 %v5378
    %5411 = vmatprep.subr.bf16.mxu0 %v5376
    %5412 = vmatpush1.bf16.msra.mxu0 %v5375
    %5413 = vmatprep.subr.bf16.mxu0 %v5373
    %5414 = vmatpush1.bf16.msra.mxu0 %v5372
    %5415 = vmatprep.subr.bf16.mxu0 0
    %5416 = vmatpush2.bf16.msra.mxu0 0
    %5417 = vmatprep.subr.bf16.mxu0 0
    %5418 = vmatpush2.bf16.msra.mxu0 0
    %5419 = vmatprep.subr.bf16.mxu0 0
    %5420 = vmatpush2.bf16.msra.mxu0 0
    %5421 = vmatprep.subr.bf16.mxu0 0
    %5422 = vmatpush2.bf16.msra.mxu0 0
    %5423 = vmatprep.subr.bf16.mxu0 0
    %5424 = vmatpush2.bf16.msra.mxu0 0
    %5425 = vmatprep.subr.bf16.mxu0 0
    %5426 = vmatpush2.bf16.msra.mxu0 0
    %5427 = vmatprep.subr.bf16.mxu0 0
    %5428 = vmatpush2.bf16.msra.mxu0 0
    %5429 = vmatprep.subr.bf16.mxu0 0
    %5430 = vmatpush2.bf16.msra.mxu0 0
    %5431 = vmatprep.mubr.bf16.mxu0 0
    %5432 = vmatmul.mubr.bf16.gmra.mxu0 %v5397
    %v5433 = vpop.f32.mrf.mxu0
    %v5434 = vadd.f32 0.0, %v5433
    %v5435 = vpop.f32.mrf.mxu0
    %v5436 = vadd.f32 0.0, %v5435
    %v5437 = vpop.f32.mrf.mxu0
    %v5438 = vadd.f32 0.0, %v5437
    %v5439 = vpop.f32.mrf.mxu0
    %v5440 = vadd.f32 0.0, %v5439
    %5441 = vdwg.mxu0
    %5442 = vmatprep.subr.bf16.mxu0 0
    %5443 = vmatpush1.bf16.msra.mxu0 0
    %5444 = vmatprep.subr.bf16.mxu0 0
    %5445 = vmatpush1.bf16.msra.mxu0 0
    %5446 = vmatprep.subr.bf16.mxu0 0
    %5447 = vmatpush1.bf16.msra.mxu0 0
    %5448 = vmatprep.subr.bf16.mxu0 0
    %5449 = vmatpush1.bf16.msra.mxu0 0
    %5450 = vmatprep.subr.bf16.mxu0 0
    %5451 = vmatpush1.bf16.msra.mxu0 %v5383
    %5452 = vmatprep.subr.bf16.mxu0 0
    %5453 = vmatpush1.bf16.msra.mxu0 %v5380
    %5454 = vmatprep.subr.bf16.mxu0 0
    %5455 = vmatpush1.bf16.msra.mxu0 %v5377
    %5456 = vmatprep.subr.bf16.mxu0 0
    %5457 = vmatpush1.bf16.msra.mxu0 %v5374
    %5458 = vmatprep.subr.bf16.mxu0 0
    %5459 = vmatpush2.bf16.msra.mxu0 0
    %5460 = vmatprep.subr.bf16.mxu0 0
    %5461 = vmatpush2.bf16.msra.mxu0 0
    %5462 = vmatprep.subr.bf16.mxu0 0
    %5463 = vmatpush2.bf16.msra.mxu0 0
    %5464 = vmatprep.subr.bf16.mxu0 0
    %5465 = vmatpush2.bf16.msra.mxu0 0
    %5466 = vmatprep.subr.bf16.mxu0 0
    %5467 = vmatpush2.bf16.msra.mxu0 0
    %5468 = vmatprep.subr.bf16.mxu0 0
    %5469 = vmatpush2.bf16.msra.mxu0 0
    %5470 = vmatprep.subr.bf16.mxu0 0
    %5471 = vmatpush2.bf16.msra.mxu0 0
    %5472 = vmatprep.subr.bf16.mxu0 0
    %5473 = vmatpush2.bf16.msra.mxu0 0
    %5474 = vmatprep.mubr.bf16.mxu0 0
    %5475 = vmatmul.mubr.bf16.gmra.mxu0 %v5397
    %v5476 = vpop.f32.mrf.mxu0
    %v5477 = vadd.f32 0.0, %v5476
    %v5478 = vpop.f32.mrf.mxu0
    %v5479 = vpop.f32.mrf.mxu0
    %v5480 = vadd.f32 0.0, %v5479
    %v5481 = vpop.f32.mrf.mxu0
    %5482 = vdwg.mxu0
    %v5483 = vadd.f32 %v5191, %v5434
    %v5484 = vadd.f32 %v5192, %v5436
    %v5485 = vadd.f32 %v5193, %v5477
    %v5486 = vadd.f32 %v5194, %v5438
    %v5487 = vadd.f32 %v5195, %v5440
    %v5488 = vadd.f32 %v5196, %v5480
    %5490 = vrot.lane.b32.xlu0 %v2230, 64
    %v5491 = vpop.permute.xlu0 %5490
    %5493 = vrot.lane.b32.xlu0 %v2233, 64
    %v5494 = vpop.permute.xlu0 %5493
    %v5496 = vsel %vm2244, %v5491, 0
    %v5499 = vsel %vm2244, %v5494, 0
    %5501 = vmatprep.subr.bf16.mxu0 0
    %5502 = vmatpush1.bf16.xpose.msra.mxu0 0
    %5503 = vmatprep.subr.bf16.mxu0 0
    %5504 = vmatpush1.bf16.xpose.msra.mxu0 0
    %5505 = vmatprep.subr.bf16.mxu0 0
    %5506 = vmatpush1.bf16.xpose.msra.mxu0 0
    %5507 = vmatprep.subr.bf16.mxu0 0
    %5508 = vmatpush1.bf16.xpose.msra.mxu0 0
    %5509 = vmatprep.subr.bf16.mxu0 0
    %5510 = vmatpush1.bf16.xpose.msra.mxu0 0
    %5511 = vmatprep.subr.bf16.mxu0 0
    %5512 = vmatpush1.bf16.xpose.msra.mxu0 0
    %5513 = vmatprep.subr.bf16.mxu0 0
    %5514 = vmatpush1.bf16.xpose.msra.mxu0 0
    %5515 = vmatprep.subr.bf16.mxu0 0
    %5516 = vmatpush1.bf16.xpose.msra.mxu0 %v5499
    %5517 = vmatprep.subr.bf16.mxu0 0
    %5518 = vmatpush2.bf16.xpose.msra.mxu0 0
    %5519 = vmatprep.subr.bf16.mxu0 0
    %5520 = vmatpush2.bf16.xpose.msra.mxu0 0
    %5521 = vmatprep.subr.bf16.mxu0 0
    %5522 = vmatpush2.bf16.xpose.msra.mxu0 0
    %5523 = vmatprep.subr.bf16.mxu0 0
    %5524 = vmatpush2.bf16.xpose.msra.mxu0 0
    %5525 = vmatprep.subr.bf16.mxu0 0
    %5526 = vmatpush2.bf16.xpose.msra.mxu0 0
    %5527 = vmatprep.subr.bf16.mxu0 0
    %5528 = vmatpush2.bf16.xpose.msra.mxu0 0
    %5529 = vmatprep.subr.bf16.mxu0 0
    %5530 = vmatpush2.bf16.xpose.msra.mxu0 0
    %5531 = vmatprep.subr.bf16.mxu0 0
    %5532 = vmatpush2.bf16.xpose.msra.mxu0 0
    %5533 = vmatprep.mubr.bf16.mxu0 0
    %5534 = vmatmul.mubr.bf16.gmra.mxu0 %v5496
    %v5535 = vpop.f32.mrf.mxu0
    %v5536 = vadd.f32 0.0, %v5535
    %v5537 = vpop.f32.mrf.mxu0
    %v5538 = vpop.f32.mrf.mxu0
    %v5539 = vadd.f32 0.0, %v5538
    %v5540 = vpop.f32.mrf.mxu0
    %5541 = vdwg.mxu0
    %v5542 = vmul.f32 %v5536, 0.125
    %v5543 = vmul.f32 %v5539, 0.125
    %v5544 = vsel %vm2242, %v5542, -inf
    %v5545 = vsel %vm2243, %v5543, -inf
    %v5546 = vsel %vm2296, %v5544, -inf
    %5547 = vmax.xlane.f32.xlu0 %v5546
    %v5548 = vpop.xlane.xlu0 %5547
    %v5549 = vsel %vm2296, %v5545, -inf
    %5550 = vmax.xlane.f32.xlu0 %v5549
    %v5551 = vpop.xlane.xlu0 %5550
    %v5552 = vsub.f32 %v5544, %v5548
    %v5553 = vsub.f32 %v5545, %v5551
    %v5554 = vmul.f32 %v5552, 1.442695
    %v5555 = vpow.pop %v5554
    %v5556 = vmul.f32 %v5553, 1.442695
    %v5557 = vpow.pop %v5556
    %v5558 = vsel %vm2296, %v5555, 0.0
    %5559 = vadd.xlane.f32.xlu0 %v5558
    %v5560 = vpop.xlane.xlu0 %5559
    %v5561 = vsel %vm2296, %v5557, 0.0
    %5562 = vadd.xlane.f32.xlu0 %v5561
    %v5563 = vpop.xlane.xlu0 %5562
    %v5564 = vrcp.pop %v5560
    %v5565 = vrcp.pop %v5563
    %v5566 = vmul.f32 %v5555, %v5564
    %v5567 = vmul.f32 %v5557, %v5565
    %v5568 = vpack.c.bf16 %v5567, %v5566
    %5570 = vrot.lane.b32.xlu0 %v2236, 64
    %v5571 = vpop.permute.xlu0 %5570
    %v5574 = vsel %vm2296, %v5568, 0
    %5576 = vmatprep.subr.bf16.mxu0 0
    %5577 = vmatpush1.bf16.msra.mxu0 0
    %5578 = vmatprep.subr.bf16.mxu0 0
    %5579 = vmatpush1.bf16.msra.mxu0 0
    %5580 = vmatprep.subr.bf16.mxu0 0
    %5581 = vmatpush1.bf16.msra.mxu0 0
    %5582 = vmatprep.subr.bf16.mxu0 0
    %5583 = vmatpush1.bf16.msra.mxu0 0
    %5584 = vmatprep.subr.bf16.mxu0 0
    %5585 = vmatpush1.bf16.msra.mxu0 0
    %5586 = vmatprep.subr.bf16.mxu0 0
    %5587 = vmatpush1.bf16.msra.mxu0 0
    %5588 = vmatprep.subr.bf16.mxu0 0
    %5589 = vmatpush1.bf16.msra.mxu0 0
    %5590 = vmatprep.subr.bf16.mxu0 0
    %5591 = vmatpush1.bf16.msra.mxu0 %v5571
    %5592 = vmatprep.subr.bf16.mxu0 0
    %5593 = vmatpush2.bf16.msra.mxu0 0
    %5594 = vmatprep.subr.bf16.mxu0 0
    %5595 = vmatpush2.bf16.msra.mxu0 0
    %5596 = vmatprep.subr.bf16.mxu0 0
    %5597 = vmatpush2.bf16.msra.mxu0 0
    %5598 = vmatprep.subr.bf16.mxu0 0
    %5599 = vmatpush2.bf16.msra.mxu0 0
    %5600 = vmatprep.subr.bf16.mxu0 0
    %5601 = vmatpush2.bf16.msra.mxu0 0
    %5602 = vmatprep.subr.bf16.mxu0 0
    %5603 = vmatpush2.bf16.msra.mxu0 0
    %5604 = vmatprep.subr.bf16.mxu0 0
    %5605 = vmatpush2.bf16.msra.mxu0 0
    %5606 = vmatprep.subr.bf16.mxu0 0
    %5607 = vmatpush2.bf16.msra.mxu0 0
    %5608 = vmatprep.mubr.bf16.mxu0 0
    %5609 = vmatmul.mubr.bf16.gmra.mxu0 %v5574
    %v5610 = vpop.f32.mrf.mxu0
    %v5611 = vadd.f32 0.0, %v5610
    %v5612 = vpop.f32.mrf.mxu0
    %v5613 = vpop.f32.mrf.mxu0
    %v5614 = vadd.f32 0.0, %v5613
    %v5615 = vpop.f32.mrf.mxu0
    %5616 = vdwg.mxu0
    %v5617 = vpack.c.bf16 %v5614, %v5611
    %v5618 = vld [vmem:[%s3847] sm:$0xff]
    %v5619 = vld [vmem:[%s3847 + $0x8] sm:$0xf]
    %v5620 = vld [vmem:[%s3847 + $0xc] sm:$0xff]
    %v5621 = vld [vmem:[%s3847 + $0x14] sm:$0xf]
    %v5622 = vld [vmem:[%s3847 + $0x18] sm:$0xff]
    %v5623 = vld [vmem:[%s3847 + $0x20] sm:$0xf]
    %v5624 = vld [vmem:[%s3847 + $0x24] sm:$0xff]
    %v5625 = vld [vmem:[%s3847 + $0x2c] sm:$0xf]
    %v5626 = vld [vmem:[%s3847 + $0x30] sm:$0xff]
    %v5627 = vld [vmem:[%s3847 + $0x38] sm:$0xf]
    %v5628 = vld [vmem:[%s3847 + $0x3c] sm:$0xff]
    %v5629 = vld [vmem:[%s3847 + $0x44] sm:$0xf]
    %v5630 = vld [vmem:[%s3847 + $0x48] sm:$0xff]
    %v5631 = vld [vmem:[%s3847 + $0x50] sm:$0xf]
    %v5632 = vld [vmem:[%s3847 + $0x54] sm:$0xff]
    %v5633 = vld [vmem:[%s3847 + $0x5c] sm:$0xf]
    %v5650 = vunpack.c.l.b16 %v5618
    %v5651 = vunpack.c.h.b16 %v5618
    %v5652 = vunpack.c.l.b16 %v5619
    %v5653 = vunpack.c.l.b16 %v5620
    %v5654 = vunpack.c.h.b16 %v5620
    %v5655 = vunpack.c.l.b16 %v5621
    %v5656 = vunpack.c.l.b16 %v5622
    %v5657 = vunpack.c.h.b16 %v5622
    %v5658 = vunpack.c.l.b16 %v5623
    %v5659 = vunpack.c.l.b16 %v5624
    %v5660 = vunpack.c.h.b16 %v5624
    %v5661 = vunpack.c.l.b16 %v5625
    %v5662 = vunpack.c.l.b16 %v5626
    %v5663 = vunpack.c.h.b16 %v5626
    %v5664 = vunpack.c.l.b16 %v5627
    %v5665 = vunpack.c.l.b16 %v5628
    %v5666 = vunpack.c.h.b16 %v5628
    %v5667 = vunpack.c.l.b16 %v5629
    %v5668 = vunpack.c.l.b16 %v5630
    %v5669 = vunpack.c.h.b16 %v5630
    %v5670 = vunpack.c.l.b16 %v5631
    %v5671 = vunpack.c.l.b16 %v5632
    %v5672 = vunpack.c.h.b16 %v5632
    %v5673 = vunpack.c.l.b16 %v5633
    %v5674 = vpack.c.b16 %v5653, %v5650
    %v5675 = vpack.c.b16 %v5654, %v5651
    %v5676 = vpack.c.b16 %v5655, %v5652
    %v5677 = vpack.c.b16 %v5659, %v5656
    %v5678 = vpack.c.b16 %v5660, %v5657
    %v5679 = vpack.c.b16 %v5661, %v5658
    %v5680 = vpack.c.b16 %v5665, %v5662
    %v5681 = vpack.c.b16 %v5666, %v5663
    %v5682 = vpack.c.b16 %v5667, %v5664
    %v5683 = vpack.c.b16 %v5671, %v5668
    %v5684 = vpack.c.b16 %v5672, %v5669
    %v5685 = vpack.c.b16 %v5673, %v5670
    %v5699 = vsel %vm2244, %v5617, 0
    %5701 = vmatprep.subr.bf16.mxu0 0
    %5702 = vmatpush1.bf16.msra.mxu0 0
    %5703 = vmatprep.subr.bf16.mxu0 0
    %5704 = vmatpush1.bf16.msra.mxu0 0
    %5705 = vmatprep.subr.bf16.mxu0 0
    %5706 = vmatpush1.bf16.msra.mxu0 0
    %5707 = vmatprep.subr.bf16.mxu0 0
    %5708 = vmatpush1.bf16.msra.mxu0 0
    %5709 = vmatprep.subr.bf16.mxu0 %v5684
    %5710 = vmatpush1.bf16.msra.mxu0 %v5683
    %5711 = vmatprep.subr.bf16.mxu0 %v5681
    %5712 = vmatpush1.bf16.msra.mxu0 %v5680
    %5713 = vmatprep.subr.bf16.mxu0 %v5678
    %5714 = vmatpush1.bf16.msra.mxu0 %v5677
    %5715 = vmatprep.subr.bf16.mxu0 %v5675
    %5716 = vmatpush1.bf16.msra.mxu0 %v5674
    %5717 = vmatprep.subr.bf16.mxu0 0
    %5718 = vmatpush2.bf16.msra.mxu0 0
    %5719 = vmatprep.subr.bf16.mxu0 0
    %5720 = vmatpush2.bf16.msra.mxu0 0
    %5721 = vmatprep.subr.bf16.mxu0 0
    %5722 = vmatpush2.bf16.msra.mxu0 0
    %5723 = vmatprep.subr.bf16.mxu0 0
    %5724 = vmatpush2.bf16.msra.mxu0 0
    %5725 = vmatprep.subr.bf16.mxu0 0
    %5726 = vmatpush2.bf16.msra.mxu0 0
    %5727 = vmatprep.subr.bf16.mxu0 0
    %5728 = vmatpush2.bf16.msra.mxu0 0
    %5729 = vmatprep.subr.bf16.mxu0 0
    %5730 = vmatpush2.bf16.msra.mxu0 0
    %5731 = vmatprep.subr.bf16.mxu0 0
    %5732 = vmatpush2.bf16.msra.mxu0 0
    %5733 = vmatprep.mubr.bf16.mxu0 0
    %5734 = vmatmul.mubr.bf16.gmra.mxu0 %v5699
    %v5735 = vpop.f32.mrf.mxu0
    %v5736 = vadd.f32 0.0, %v5735
    %v5737 = vpop.f32.mrf.mxu0
    %v5738 = vadd.f32 0.0, %v5737
    %v5739 = vpop.f32.mrf.mxu0
    %v5740 = vadd.f32 0.0, %v5739
    %v5741 = vpop.f32.mrf.mxu0
    %v5742 = vadd.f32 0.0, %v5741
    %5743 = vdwg.mxu0
    %5744 = vmatprep.subr.bf16.mxu0 0
    %5745 = vmatpush1.bf16.msra.mxu0 0
    %5746 = vmatprep.subr.bf16.mxu0 0
    %5747 = vmatpush1.bf16.msra.mxu0 0
    %5748 = vmatprep.subr.bf16.mxu0 0
    %5749 = vmatpush1.bf16.msra.mxu0 0
    %5750 = vmatprep.subr.bf16.mxu0 0
    %5751 = vmatpush1.bf16.msra.mxu0 0
    %5752 = vmatprep.subr.bf16.mxu0 0
    %5753 = vmatpush1.bf16.msra.mxu0 %v5685
    %5754 = vmatprep.subr.bf16.mxu0 0
    %5755 = vmatpush1.bf16.msra.mxu0 %v5682
    %5756 = vmatprep.subr.bf16.mxu0 0
    %5757 = vmatpush1.bf16.msra.mxu0 %v5679
    %5758 = vmatprep.subr.bf16.mxu0 0
    %5759 = vmatpush1.bf16.msra.mxu0 %v5676
    %5760 = vmatprep.subr.bf16.mxu0 0
    %5761 = vmatpush2.bf16.msra.mxu0 0
    %5762 = vmatprep.subr.bf16.mxu0 0
    %5763 = vmatpush2.bf16.msra.mxu0 0
    %5764 = vmatprep.subr.bf16.mxu0 0
    %5765 = vmatpush2.bf16.msra.mxu0 0
    %5766 = vmatprep.subr.bf16.mxu0 0
    %5767 = vmatpush2.bf16.msra.mxu0 0
    %5768 = vmatprep.subr.bf16.mxu0 0
    %5769 = vmatpush2.bf16.msra.mxu0 0
    %5770 = vmatprep.subr.bf16.mxu0 0
    %5771 = vmatpush2.bf16.msra.mxu0 0
    %5772 = vmatprep.subr.bf16.mxu0 0
    %5773 = vmatpush2.bf16.msra.mxu0 0
    %5774 = vmatprep.subr.bf16.mxu0 0
    %5775 = vmatpush2.bf16.msra.mxu0 0
    %5776 = vmatprep.mubr.bf16.mxu0 0
    %5777 = vmatmul.mubr.bf16.gmra.mxu0 %v5699
    %v5778 = vpop.f32.mrf.mxu0
    %v5779 = vadd.f32 0.0, %v5778
    %v5780 = vpop.f32.mrf.mxu0
    %v5781 = vpop.f32.mrf.mxu0
    %v5782 = vadd.f32 0.0, %v5781
    %v5783 = vpop.f32.mrf.mxu0
    %5784 = vdwg.mxu0
    %v5785 = vadd.f32 %v5483, %v5736
    %v5786 = vadd.f32 %v5484, %v5738
    %v5787 = vadd.f32 %v5485, %v5779
    %v5788 = vadd.f32 %v5486, %v5740
    %v5789 = vadd.f32 %v5487, %v5742
    %v5790 = vadd.f32 %v5488, %v5782
    %v5791 = vadd.f32 %v192, %v4015
    %v5792 = vadd.f32 %v193, %v4016
    %v5793 = vadd.f32 %v194, %v4017
    %v5794 = vadd.f32 %v195, %v4018
    %v5795 = vadd.f32 %v196, %v4019
    %v5796 = vadd.f32 %v197, %v4020
    %v5797 = vadd.f32 %v198, %v5785
    %v5798 = vadd.f32 %v199, %v5786
    %v5799 = vadd.f32 %v200, %v5787
    %v5800 = vadd.f32 %v201, %v5788
    %v5801 = vadd.f32 %v202, %v5789
    %v5802 = vadd.f32 %v203, %v5790
    %v5803 = vld [vmem:[#allocation10] sm:$0x7]
    %v5805 = vlaneseq
    %v5806 = vshrl.u32 %v5805, 7
    %v5807 = vsub.s32 0, %v5806
    %v5808 = vrot.slane %v5803, %v5807
    %v5809 = vlaneseq
    %v5810 = vshrl.u32 %v5809, 7
    %v5811 = vsub.s32 1, %v5810
    %v5812 = vrot.slane %v5803, %v5811
    %v5813 = vlaneseq
    %v5814 = vshrl.u32 %v5813, 7
    %v5815 = vsub.s32 2, %v5814
    %v5816 = vrot.slane %v5803, %v5815
    %v5820 = vadd.f32 %v5791, %v5808
    %v5821 = vadd.f32 %v5792, %v5812
    %v5822 = vadd.f32 %v5793, %v5816
    %v5823 = vadd.f32 %v5794, %v5808
    %v5824 = vadd.f32 %v5795, %v5812
    %v5825 = vadd.f32 %v5796, %v5816
    %v5826 = vadd.f32 %v5797, %v5808
    %v5827 = vadd.f32 %v5798, %v5812
    %v5828 = vadd.f32 %v5799, %v5816
    %v5829 = vadd.f32 %v5800, %v5808
    %v5830 = vadd.f32 %v5801, %v5812
    %v5831 = vadd.f32 %v5802, %v5816
    %v5832 = vld [vmem:[#allocation13] sm:$0x7]
    %v5833 = vld [vmem:[#allocation14] sm:$0x7]
    %v5834 = vadd.f32 %v5820, %v5821
    %v5835 = vadd.f32 %v5834, %v5822
    %5836 = vadd.xlane.f32.xlu0 %v5835
    %v5837 = vpop.xlane.xlu0 %5836
    %v5838 = vadd.f32 %v5823, %v5824
    %v5839 = vadd.f32 %v5838, %v5825
    %5840 = vadd.xlane.f32.xlu0 %v5839
    %v5841 = vpop.xlane.xlu0 %5840
    %v5842 = vadd.f32 %v5826, %v5827
    %v5843 = vadd.f32 %v5842, %v5828
    %5844 = vadd.xlane.f32.xlu0 %v5843
    %v5845 = vpop.xlane.xlu0 %5844
    %v5846 = vadd.f32 %v5829, %v5830
    %v5847 = vadd.f32 %v5846, %v5831
    %5848 = vadd.xlane.f32.xlu0 %v5847
    %v5849 = vpop.xlane.xlu0 %5848
    %v5850 = vmul.f32 %v5837, %v222
    %v5851 = vmul.f32 %v5841, %v222
    %v5852 = vmul.f32 %v5845, %v222
    %v5853 = vmul.f32 %v5849, %v222
    %v5854 = vsub.f32 %v5820, %v5850
    %v5855 = vsub.f32 %v5821, %v5850
    %v5856 = vsub.f32 %v5822, %v5850
    %v5857 = vsub.f32 %v5823, %v5851
    %v5858 = vsub.f32 %v5824, %v5851
    %v5859 = vsub.f32 %v5825, %v5851
    %v5860 = vsub.f32 %v5826, %v5852
    %v5861 = vsub.f32 %v5827, %v5852
    %v5862 = vsub.f32 %v5828, %v5852
    %v5863 = vsub.f32 %v5829, %v5853
    %v5864 = vsub.f32 %v5830, %v5853
    %v5865 = vsub.f32 %v5831, %v5853
    %v5866 = vmul.f32 %v5854, %v5854
    %v5867 = vmul.f32 %v5855, %v5855
    %v5868 = vmul.f32 %v5856, %v5856
    %v5869 = vmul.f32 %v5857, %v5857
    %v5870 = vmul.f32 %v5858, %v5858
    %v5871 = vmul.f32 %v5859, %v5859
    %v5872 = vmul.f32 %v5860, %v5860
    %v5873 = vmul.f32 %v5861, %v5861
    %v5874 = vmul.f32 %v5862, %v5862
    %v5875 = vmul.f32 %v5863, %v5863
    %v5876 = vmul.f32 %v5864, %v5864
    %v5877 = vmul.f32 %v5865, %v5865
    %v5878 = vadd.f32 %v5866, %v5867
    %v5879 = vadd.f32 %v5878, %v5868
    %5880 = vadd.xlane.f32.xlu0 %v5879
    %v5881 = vpop.xlane.xlu0 %5880
    %v5882 = vadd.f32 %v5869, %v5870
    %v5883 = vadd.f32 %v5882, %v5871
    %5884 = vadd.xlane.f32.xlu0 %v5883
    %v5885 = vpop.xlane.xlu0 %5884
    %v5886 = vadd.f32 %v5872, %v5873
    %v5887 = vadd.f32 %v5886, %v5874
    %5888 = vadd.xlane.f32.xlu0 %v5887
    %v5889 = vpop.xlane.xlu0 %5888
    %v5890 = vadd.f32 %v5875, %v5876
    %v5891 = vadd.f32 %v5890, %v5877
    %5892 = vadd.xlane.f32.xlu0 %v5891
    %v5893 = vpop.xlane.xlu0 %5892
    %v5894 = vmul.f32 %v5881, %v222
    %v5895 = vmul.f32 %v5885, %v222
    %v5896 = vmul.f32 %v5889, %v222
    %v5897 = vmul.f32 %v5893, %v222
    %v5898 = vadd.f32 %v5894, 1e-05
    %v5899 = vadd.f32 %v5895, 1e-05
    %v5900 = vadd.f32 %v5896, 1e-05
    %v5901 = vadd.f32 %v5897, 1e-05
    %v5902 = vrsqrt.pop %v5898
    %v5903 = vrsqrt.pop %v5899
    %v5904 = vrsqrt.pop %v5900
    %v5905 = vrsqrt.pop %v5901
    %v5906 = vmul.f32 %v5854, %v5902
    %v5907 = vmul.f32 %v5855, %v5902
    %v5908 = vmul.f32 %v5856, %v5902
    %v5909 = vmul.f32 %v5857, %v5903
    %v5910 = vmul.f32 %v5858, %v5903
    %v5911 = vmul.f32 %v5859, %v5903
    %v5912 = vmul.f32 %v5860, %v5904
    %v5913 = vmul.f32 %v5861, %v5904
    %v5914 = vmul.f32 %v5862, %v5904
    %v5915 = vmul.f32 %v5863, %v5905
    %v5916 = vmul.f32 %v5864, %v5905
    %v5917 = vmul.f32 %v5865, %v5905
    %v5919 = vlaneseq
    %v5920 = vshrl.u32 %v5919, 7
    %v5921 = vsub.s32 0, %v5920
    %v5922 = vrot.slane %v5832, %v5921
    %v5923 = vlaneseq
    %v5924 = vshrl.u32 %v5923, 7
    %v5925 = vsub.s32 1, %v5924
    %v5926 = vrot.slane %v5832, %v5925
    %v5927 = vlaneseq
    %v5928 = vshrl.u32 %v5927, 7
    %v5929 = vsub.s32 2, %v5928
    %v5930 = vrot.slane %v5832, %v5929
    %v5934 = vmul.f32 %v5906, %v5922
    %v5935 = vmul.f32 %v5907, %v5926
    %v5936 = vmul.f32 %v5908, %v5930
    %v5937 = vmul.f32 %v5909, %v5922
    %v5938 = vmul.f32 %v5910, %v5926
    %v5939 = vmul.f32 %v5911, %v5930
    %v5940 = vmul.f32 %v5912, %v5922
    %v5941 = vmul.f32 %v5913, %v5926
    %v5942 = vmul.f32 %v5914, %v5930
    %v5943 = vmul.f32 %v5915, %v5922
    %v5944 = vmul.f32 %v5916, %v5926
    %v5945 = vmul.f32 %v5917, %v5930
    %v5947 = vlaneseq
    %v5948 = vshrl.u32 %v5947, 7
    %v5949 = vsub.s32 0, %v5948
    %v5950 = vrot.slane %v5833, %v5949
    %v5951 = vlaneseq
    %v5952 = vshrl.u32 %v5951, 7
    %v5953 = vsub.s32 1, %v5952
    %v5954 = vrot.slane %v5833, %v5953
    %v5955 = vlaneseq
    %v5956 = vshrl.u32 %v5955, 7
    %v5957 = vsub.s32 2, %v5956
    %v5958 = vrot.slane %v5833, %v5957
    %v5962 = vadd.f32 %v5934, %v5950
    %v5963 = vadd.f32 %v5935, %v5954
    %v5964 = vadd.f32 %v5936, %v5958
    %v5965 = vadd.f32 %v5937, %v5950
    %v5966 = vadd.f32 %v5938, %v5954
    %v5967 = vadd.f32 %v5939, %v5958
    %v5968 = vadd.f32 %v5940, %v5950
    %v5969 = vadd.f32 %v5941, %v5954
    %v5970 = vadd.f32 %v5942, %v5958
    %v5971 = vadd.f32 %v5943, %v5950
    %v5972 = vadd.f32 %v5944, %v5954
    %v5973 = vadd.f32 %v5945, %v5958
    %v5974 = vpack.c.bf16 %v5965, %v5962
    %v5975 = vpack.c.bf16 %v5966, %v5963
    %v5976 = vpack.c.bf16 %v5967, %v5964
    %v5977 = vpack.c.bf16 %v5971, %v5968
    %v5978 = vpack.c.bf16 %v5972, %v5969
    %v5979 = vpack.c.bf16 %v5973, %v5970
    %v5980 = vld [vmem:[#allocation16] sm:$0xff]
    %v5981 = vld [vmem:[#allocation16 + $0x8] sm:$0xff]
    %v5982 = vld [vmem:[#allocation16 + $0x10] sm:$0xff]
    %v5983 = vld [vmem:[#allocation16 + $0x18] sm:$0xff]
    %v5984 = vld [vmem:[#allocation16 + $0x20] sm:$0xff]
    %v5985 = vld [vmem:[#allocation16 + $0x28] sm:$0xff]
    %v5986 = vld [vmem:[#allocation16 + $0x30] sm:$0xff]
    %v5987 = vld [vmem:[#allocation16 + $0x38] sm:$0xff]
    %v5988 = vld [vmem:[#allocation16 + $0x40] sm:$0xff]
    %v5989 = vld [vmem:[#allocation16 + $0x48] sm:$0xff]
    %v5990 = vld [vmem:[#allocation16 + $0x50] sm:$0xff]
    %v5991 = vld [vmem:[#allocation16 + $0x58] sm:$0xff]
    %v5992 = vld [vmem:[#allocation16 + $0x60] sm:$0xff]
    %v5993 = vld [vmem:[#allocation16 + $0x68] sm:$0xff]
    %v5994 = vld [vmem:[#allocation16 + $0x70] sm:$0xff]
    %v5995 = vld [vmem:[#allocation16 + $0x78] sm:$0xff]
    %v5996 = vld [vmem:[#allocation16 + $0x80] sm:$0xff]
    %v5997 = vld [vmem:[#allocation16 + $0x88] sm:$0xff]
    %v5998 = vld [vmem:[#allocation16 + $0x90] sm:$0xff]
    %v5999 = vld [vmem:[#allocation16 + $0x98] sm:$0xff]
    %v6000 = vld [vmem:[#allocation16 + $0xa0] sm:$0xff]
    %v6001 = vld [vmem:[#allocation16 + $0xa8] sm:$0xff]
    %v6002 = vld [vmem:[#allocation16 + $0xb0] sm:$0xff]
    %v6003 = vld [vmem:[#allocation16 + $0xb8] sm:$0xff]
    %v6004 = vld [vmem:[#allocation16 + $0xc0] sm:$0xff]
    %v6005 = vld [vmem:[#allocation16 + $0xc8] sm:$0xff]
    %v6006 = vld [vmem:[#allocation16 + $0xd0] sm:$0xff]
    %v6007 = vld [vmem:[#allocation16 + $0xd8] sm:$0xff]
    %v6008 = vld [vmem:[#allocation16 + $0xe0] sm:$0xff]
    %v6009 = vld [vmem:[#allocation16 + $0xe8] sm:$0xff]
    %v6010 = vld [vmem:[#allocation16 + $0xf0] sm:$0xff]
    %v6011 = vld [vmem:[#allocation16 + $0xf8] sm:$0xff]
    %v6012 = vld [vmem:[#allocation16 + $0x100] sm:$0xff]
    %v6013 = vld [vmem:[#allocation16 + $0x108] sm:$0xff]
    %v6014 = vld [vmem:[#allocation16 + $0x110] sm:$0xff]
    %v6015 = vld [vmem:[#allocation16 + $0x118] sm:$0xff]
    %v6016 = vld [vmem:[#allocation16 + $0x120] sm:$0xff]
    %v6017 = vld [vmem:[#allocation16 + $0x128] sm:$0xff]
    %v6018 = vld [vmem:[#allocation16 + $0x130] sm:$0xff]
    %v6019 = vld [vmem:[#allocation16 + $0x138] sm:$0xff]
    %v6020 = vld [vmem:[#allocation16 + $0x140] sm:$0xff]
    %v6021 = vld [vmem:[#allocation16 + $0x148] sm:$0xff]
    %v6022 = vld [vmem:[#allocation16 + $0x150] sm:$0xff]
    %v6023 = vld [vmem:[#allocation16 + $0x158] sm:$0xff]
    %v6024 = vld [vmem:[#allocation16 + $0x160] sm:$0xff]
    %v6025 = vld [vmem:[#allocation16 + $0x168] sm:$0xff]
    %v6026 = vld [vmem:[#allocation16 + $0x170] sm:$0xff]
    %v6027 = vld [vmem:[#allocation16 + $0x178] sm:$0xff]
    %v6028 = vld [vmem:[#allocation16 + $0x180] sm:$0xff]
    %v6029 = vld [vmem:[#allocation16 + $0x188] sm:$0xff]
    %v6030 = vld [vmem:[#allocation16 + $0x190] sm:$0xff]
    %v6031 = vld [vmem:[#allocation16 + $0x198] sm:$0xff]
    %v6032 = vld [vmem:[#allocation16 + $0x1a0] sm:$0xff]
    %v6033 = vld [vmem:[#allocation16 + $0x1a8] sm:$0xff]
    %v6034 = vld [vmem:[#allocation16 + $0x1b0] sm:$0xff]
    %v6035 = vld [vmem:[#allocation16 + $0x1b8] sm:$0xff]
    %v6036 = vld [vmem:[#allocation16 + $0x1c0] sm:$0xff]
    %v6037 = vld [vmem:[#allocation16 + $0x1c8] sm:$0xff]
    %v6038 = vld [vmem:[#allocation16 + $0x1d0] sm:$0xff]
    %v6039 = vld [vmem:[#allocation16 + $0x1d8] sm:$0xff]
    %v6040 = vld [vmem:[#allocation16 + $0x1e0] sm:$0xff]
    %v6041 = vld [vmem:[#allocation16 + $0x1e8] sm:$0xff]
    %v6042 = vld [vmem:[#allocation16 + $0x1f0] sm:$0xff]
    %v6043 = vld [vmem:[#allocation16 + $0x1f8] sm:$0xff]
    %v6044 = vld [vmem:[#allocation16 + $0x200] sm:$0xff]
    %v6045 = vld [vmem:[#allocation16 + $0x208] sm:$0xff]
    %v6046 = vld [vmem:[#allocation16 + $0x210] sm:$0xff]
    %v6047 = vld [vmem:[#allocation16 + $0x218] sm:$0xff]
    %v6048 = vld [vmem:[#allocation16 + $0x220] sm:$0xff]
    %v6049 = vld [vmem:[#allocation16 + $0x228] sm:$0xff]
    %v6050 = vld [vmem:[#allocation16 + $0x230] sm:$0xff]
    %v6051 = vld [vmem:[#allocation16 + $0x238] sm:$0xff]
    %v6052 = vld [vmem:[#allocation16 + $0x240] sm:$0xff]
    %v6053 = vld [vmem:[#allocation16 + $0x248] sm:$0xff]
    %v6054 = vld [vmem:[#allocation16 + $0x250] sm:$0xff]
    %v6055 = vld [vmem:[#allocation16 + $0x258] sm:$0xff]
    %v6056 = vld [vmem:[#allocation16 + $0x260] sm:$0xff]
    %v6057 = vld [vmem:[#allocation16 + $0x268] sm:$0xff]
    %v6058 = vld [vmem:[#allocation16 + $0x270] sm:$0xff]
    %v6059 = vld [vmem:[#allocation16 + $0x278] sm:$0xff]
    %v6060 = vld [vmem:[#allocation16 + $0x280] sm:$0xff]
    %v6061 = vld [vmem:[#allocation16 + $0x288] sm:$0xff]
    %v6062 = vld [vmem:[#allocation16 + $0x290] sm:$0xff]
    %v6063 = vld [vmem:[#allocation16 + $0x298] sm:$0xff]
    %v6064 = vld [vmem:[#allocation16 + $0x2a0] sm:$0xff]
    %v6065 = vld [vmem:[#allocation16 + $0x2a8] sm:$0xff]
    %v6066 = vld [vmem:[#allocation16 + $0x2b0] sm:$0xff]
    %v6067 = vld [vmem:[#allocation16 + $0x2b8] sm:$0xff]
    %v6068 = vld [vmem:[#allocation16 + $0x2c0] sm:$0xff]
    %v6069 = vld [vmem:[#allocation16 + $0x2c8] sm:$0xff]
    %v6070 = vld [vmem:[#allocation16 + $0x2d0] sm:$0xff]
    %v6071 = vld [vmem:[#allocation16 + $0x2d8] sm:$0xff]
    %v6072 = vld [vmem:[#allocation16 + $0x2e0] sm:$0xff]
    %v6073 = vld [vmem:[#allocation16 + $0x2e8] sm:$0xff]
    %v6074 = vld [vmem:[#allocation16 + $0x2f0] sm:$0xff]
    %v6075 = vld [vmem:[#allocation16 + $0x2f8] sm:$0xff]
    %v6076 = vld [vmem:[#allocation16 + $0x300] sm:$0xff]
    %v6077 = vld [vmem:[#allocation16 + $0x308] sm:$0xff]
    %v6078 = vld [vmem:[#allocation16 + $0x310] sm:$0xff]
    %v6079 = vld [vmem:[#allocation16 + $0x318] sm:$0xff]
    %v6080 = vld [vmem:[#allocation16 + $0x320] sm:$0xff]
    %v6081 = vld [vmem:[#allocation16 + $0x328] sm:$0xff]
    %v6082 = vld [vmem:[#allocation16 + $0x330] sm:$0xff]
    %v6083 = vld [vmem:[#allocation16 + $0x338] sm:$0xff]
    %v6084 = vld [vmem:[#allocation16 + $0x340] sm:$0xff]
    %v6085 = vld [vmem:[#allocation16 + $0x348] sm:$0xff]
    %v6086 = vld [vmem:[#allocation16 + $0x350] sm:$0xff]
    %v6087 = vld [vmem:[#allocation16 + $0x358] sm:$0xff]
    %v6088 = vld [vmem:[#allocation16 + $0x360] sm:$0xff]
    %v6089 = vld [vmem:[#allocation16 + $0x368] sm:$0xff]
    %v6090 = vld [vmem:[#allocation16 + $0x370] sm:$0xff]
    %v6091 = vld [vmem:[#allocation16 + $0x378] sm:$0xff]
    %v6092 = vld [vmem:[#allocation16 + $0x380] sm:$0xff]
    %v6093 = vld [vmem:[#allocation16 + $0x388] sm:$0xff]
    %v6094 = vld [vmem:[#allocation16 + $0x390] sm:$0xff]
    %v6095 = vld [vmem:[#allocation16 + $0x398] sm:$0xff]
    %v6096 = vld [vmem:[#allocation16 + $0x3a0] sm:$0xff]
    %v6097 = vld [vmem:[#allocation16 + $0x3a8] sm:$0xff]
    %v6098 = vld [vmem:[#allocation16 + $0x3b0] sm:$0xff]
    %v6099 = vld [vmem:[#allocation16 + $0x3b8] sm:$0xff]
    %v6100 = vld [vmem:[#allocation16 + $0x3c0] sm:$0xff]
    %v6101 = vld [vmem:[#allocation16 + $0x3c8] sm:$0xff]
    %v6102 = vld [vmem:[#allocation16 + $0x3d0] sm:$0xff]
    %v6103 = vld [vmem:[#allocation16 + $0x3d8] sm:$0xff]
    %v6104 = vld [vmem:[#allocation16 + $0x3e0] sm:$0xff]
    %v6105 = vld [vmem:[#allocation16 + $0x3e8] sm:$0xff]
    %v6106 = vld [vmem:[#allocation16 + $0x3f0] sm:$0xff]
    %v6107 = vld [vmem:[#allocation16 + $0x3f8] sm:$0xff]
    %v6108 = vld [vmem:[#allocation16 + $0x400] sm:$0xff]
    %v6109 = vld [vmem:[#allocation16 + $0x408] sm:$0xff]
    %v6110 = vld [vmem:[#allocation16 + $0x410] sm:$0xff]
    %v6111 = vld [vmem:[#allocation16 + $0x418] sm:$0xff]
    %v6112 = vld [vmem:[#allocation16 + $0x420] sm:$0xff]
    %v6113 = vld [vmem:[#allocation16 + $0x428] sm:$0xff]
    %v6114 = vld [vmem:[#allocation16 + $0x430] sm:$0xff]
    %v6115 = vld [vmem:[#allocation16 + $0x438] sm:$0xff]
    %v6116 = vld [vmem:[#allocation16 + $0x440] sm:$0xff]
    %v6117 = vld [vmem:[#allocation16 + $0x448] sm:$0xff]
    %v6118 = vld [vmem:[#allocation16 + $0x450] sm:$0xff]
    %v6119 = vld [vmem:[#allocation16 + $0x458] sm:$0xff]
    %v6120 = vld [vmem:[#allocation16 + $0x460] sm:$0xff]
    %v6121 = vld [vmem:[#allocation16 + $0x468] sm:$0xff]
    %v6122 = vld [vmem:[#allocation16 + $0x470] sm:$0xff]
    %v6123 = vld [vmem:[#allocation16 + $0x478] sm:$0xff]
    %v6124 = vld [vmem:[#allocation16 + $0x480] sm:$0xff]
    %v6125 = vld [vmem:[#allocation16 + $0x488] sm:$0xff]
    %v6126 = vld [vmem:[#allocation16 + $0x490] sm:$0xff]
    %v6127 = vld [vmem:[#allocation16 + $0x498] sm:$0xff]
    %v6128 = vld [vmem:[#allocation16 + $0x4a0] sm:$0xff]
    %v6129 = vld [vmem:[#allocation16 + $0x4a8] sm:$0xff]
    %v6130 = vld [vmem:[#allocation16 + $0x4b0] sm:$0xff]
    %v6131 = vld [vmem:[#allocation16 + $0x4b8] sm:$0xff]
    %v6132 = vld [vmem:[#allocation16 + $0x4c0] sm:$0xff]
    %v6133 = vld [vmem:[#allocation16 + $0x4c8] sm:$0xff]
    %v6134 = vld [vmem:[#allocation16 + $0x4d0] sm:$0xff]
    %v6135 = vld [vmem:[#allocation16 + $0x4d8] sm:$0xff]
    %v6136 = vld [vmem:[#allocation16 + $0x4e0] sm:$0xff]
    %v6137 = vld [vmem:[#allocation16 + $0x4e8] sm:$0xff]
    %v6138 = vld [vmem:[#allocation16 + $0x4f0] sm:$0xff]
    %v6139 = vld [vmem:[#allocation16 + $0x4f8] sm:$0xff]
    %v6140 = vld [vmem:[#allocation16 + $0x500] sm:$0xff]
    %v6141 = vld [vmem:[#allocation16 + $0x508] sm:$0xff]
    %v6142 = vld [vmem:[#allocation16 + $0x510] sm:$0xff]
    %v6143 = vld [vmem:[#allocation16 + $0x518] sm:$0xff]
    %v6144 = vld [vmem:[#allocation16 + $0x520] sm:$0xff]
    %v6145 = vld [vmem:[#allocation16 + $0x528] sm:$0xff]
    %v6146 = vld [vmem:[#allocation16 + $0x530] sm:$0xff]
    %v6147 = vld [vmem:[#allocation16 + $0x538] sm:$0xff]
    %v6148 = vld [vmem:[#allocation16 + $0x540] sm:$0xff]
    %v6149 = vld [vmem:[#allocation16 + $0x548] sm:$0xff]
    %v6150 = vld [vmem:[#allocation16 + $0x550] sm:$0xff]
    %v6151 = vld [vmem:[#allocation16 + $0x558] sm:$0xff]
    %v6152 = vld [vmem:[#allocation16 + $0x560] sm:$0xff]
    %v6153 = vld [vmem:[#allocation16 + $0x568] sm:$0xff]
    %v6154 = vld [vmem:[#allocation16 + $0x570] sm:$0xff]
    %v6155 = vld [vmem:[#allocation16 + $0x578] sm:$0xff]
    %v6156 = vld [vmem:[#allocation16 + $0x580] sm:$0xff]
    %v6157 = vld [vmem:[#allocation16 + $0x588] sm:$0xff]
    %v6158 = vld [vmem:[#allocation16 + $0x590] sm:$0xff]
    %v6159 = vld [vmem:[#allocation16 + $0x598] sm:$0xff]
    %v6160 = vld [vmem:[#allocation16 + $0x5a0] sm:$0xff]
    %v6161 = vld [vmem:[#allocation16 + $0x5a8] sm:$0xff]
    %v6162 = vld [vmem:[#allocation16 + $0x5b0] sm:$0xff]
    %v6163 = vld [vmem:[#allocation16 + $0x5b8] sm:$0xff]
    %v6164 = vld [vmem:[#allocation16 + $0x5c0] sm:$0xff]
    %v6165 = vld [vmem:[#allocation16 + $0x5c8] sm:$0xff]
    %v6166 = vld [vmem:[#allocation16 + $0x5d0] sm:$0xff]
    %v6167 = vld [vmem:[#allocation16 + $0x5d8] sm:$0xff]
    %v6168 = vld [vmem:[#allocation16 + $0x5e0] sm:$0xff]
    %v6169 = vld [vmem:[#allocation16 + $0x5e8] sm:$0xff]
    %v6170 = vld [vmem:[#allocation16 + $0x5f0] sm:$0xff]
    %v6171 = vld [vmem:[#allocation16 + $0x5f8] sm:$0xff]
    %v6172 = vld [vmem:[#allocation16 + $0x600] sm:$0xff]
    %v6173 = vld [vmem:[#allocation16 + $0x608] sm:$0xff]
    %v6174 = vld [vmem:[#allocation16 + $0x610] sm:$0xff]
    %v6175 = vld [vmem:[#allocation16 + $0x618] sm:$0xff]
    %v6176 = vld [vmem:[#allocation16 + $0x620] sm:$0xff]
    %v6177 = vld [vmem:[#allocation16 + $0x628] sm:$0xff]
    %v6178 = vld [vmem:[#allocation16 + $0x630] sm:$0xff]
    %v6179 = vld [vmem:[#allocation16 + $0x638] sm:$0xff]
    %v6180 = vld [vmem:[#allocation16 + $0x640] sm:$0xff]
    %v6181 = vld [vmem:[#allocation16 + $0x648] sm:$0xff]
    %v6182 = vld [vmem:[#allocation16 + $0x650] sm:$0xff]
    %v6183 = vld [vmem:[#allocation16 + $0x658] sm:$0xff]
    %v6184 = vld [vmem:[#allocation16 + $0x660] sm:$0xff]
    %v6185 = vld [vmem:[#allocation16 + $0x668] sm:$0xff]
    %v6186 = vld [vmem:[#allocation16 + $0x670] sm:$0xff]
    %v6187 = vld [vmem:[#allocation16 + $0x678] sm:$0xff]
    %v6188 = vld [vmem:[#allocation16 + $0x680] sm:$0xff]
    %v6189 = vld [vmem:[#allocation16 + $0x688] sm:$0xff]
    %v6190 = vld [vmem:[#allocation16 + $0x690] sm:$0xff]
    %v6191 = vld [vmem:[#allocation16 + $0x698] sm:$0xff]
    %v6192 = vld [vmem:[#allocation16 + $0x6a0] sm:$0xff]
    %v6193 = vld [vmem:[#allocation16 + $0x6a8] sm:$0xff]
    %v6194 = vld [vmem:[#allocation16 + $0x6b0] sm:$0xff]
    %v6195 = vld [vmem:[#allocation16 + $0x6b8] sm:$0xff]
    %v6196 = vld [vmem:[#allocation16 + $0x6c0] sm:$0xff]
    %v6197 = vld [vmem:[#allocation16 + $0x6c8] sm:$0xff]
    %v6198 = vld [vmem:[#allocation16 + $0x6d0] sm:$0xff]
    %v6199 = vld [vmem:[#allocation16 + $0x6d8] sm:$0xff]
    %v6200 = vld [vmem:[#allocation16 + $0x6e0] sm:$0xff]
    %v6201 = vld [vmem:[#allocation16 + $0x6e8] sm:$0xff]
    %v6202 = vld [vmem:[#allocation16 + $0x6f0] sm:$0xff]
    %v6203 = vld [vmem:[#allocation16 + $0x6f8] sm:$0xff]
    %v6204 = vld [vmem:[#allocation16 + $0x700] sm:$0xff]
    %v6205 = vld [vmem:[#allocation16 + $0x708] sm:$0xff]
    %v6206 = vld [vmem:[#allocation16 + $0x710] sm:$0xff]
    %v6207 = vld [vmem:[#allocation16 + $0x718] sm:$0xff]
    %v6208 = vld [vmem:[#allocation16 + $0x720] sm:$0xff]
    %v6209 = vld [vmem:[#allocation16 + $0x728] sm:$0xff]
    %v6210 = vld [vmem:[#allocation16 + $0x730] sm:$0xff]
    %v6211 = vld [vmem:[#allocation16 + $0x738] sm:$0xff]
    %v6212 = vld [vmem:[#allocation16 + $0x740] sm:$0xff]
    %v6213 = vld [vmem:[#allocation16 + $0x748] sm:$0xff]
    %v6214 = vld [vmem:[#allocation16 + $0x750] sm:$0xff]
    %v6215 = vld [vmem:[#allocation16 + $0x758] sm:$0xff]
    %v6216 = vld [vmem:[#allocation16 + $0x760] sm:$0xff]
    %v6217 = vld [vmem:[#allocation16 + $0x768] sm:$0xff]
    %v6218 = vld [vmem:[#allocation16 + $0x770] sm:$0xff]
    %v6219 = vld [vmem:[#allocation16 + $0x778] sm:$0xff]
    %v6220 = vld [vmem:[#allocation16 + $0x780] sm:$0xff]
    %v6221 = vld [vmem:[#allocation16 + $0x788] sm:$0xff]
    %v6222 = vld [vmem:[#allocation16 + $0x790] sm:$0xff]
    %v6223 = vld [vmem:[#allocation16 + $0x798] sm:$0xff]
    %v6224 = vld [vmem:[#allocation16 + $0x7a0] sm:$0xff]
    %v6225 = vld [vmem:[#allocation16 + $0x7a8] sm:$0xff]
    %v6226 = vld [vmem:[#allocation16 + $0x7b0] sm:$0xff]
    %v6227 = vld [vmem:[#allocation16 + $0x7b8] sm:$0xff]
    %v6228 = vld [vmem:[#allocation16 + $0x7c0] sm:$0xff]
    %v6229 = vld [vmem:[#allocation16 + $0x7c8] sm:$0xff]
    %v6230 = vld [vmem:[#allocation16 + $0x7d0] sm:$0xff]
    %v6231 = vld [vmem:[#allocation16 + $0x7d8] sm:$0xff]
    %v6232 = vld [vmem:[#allocation16 + $0x7e0] sm:$0xff]
    %v6233 = vld [vmem:[#allocation16 + $0x7e8] sm:$0xff]
    %v6234 = vld [vmem:[#allocation16 + $0x7f0] sm:$0xff]
    %v6235 = vld [vmem:[#allocation16 + $0x7f8] sm:$0xff]
    %v6236 = vld [vmem:[#allocation16 + $0x800] sm:$0xff]
    %v6237 = vld [vmem:[#allocation16 + $0x808] sm:$0xff]
    %v6238 = vld [vmem:[#allocation16 + $0x810] sm:$0xff]
    %v6239 = vld [vmem:[#allocation16 + $0x818] sm:$0xff]
    %v6240 = vld [vmem:[#allocation16 + $0x820] sm:$0xff]
    %v6241 = vld [vmem:[#allocation16 + $0x828] sm:$0xff]
    %v6242 = vld [vmem:[#allocation16 + $0x830] sm:$0xff]
    %v6243 = vld [vmem:[#allocation16 + $0x838] sm:$0xff]
    %v6244 = vld [vmem:[#allocation16 + $0x840] sm:$0xff]
    %v6245 = vld [vmem:[#allocation16 + $0x848] sm:$0xff]
    %v6246 = vld [vmem:[#allocation16 + $0x850] sm:$0xff]
    %v6247 = vld [vmem:[#allocation16 + $0x858] sm:$0xff]
    %v6248 = vld [vmem:[#allocation16 + $0x860] sm:$0xff]
    %v6249 = vld [vmem:[#allocation16 + $0x868] sm:$0xff]
    %v6250 = vld [vmem:[#allocation16 + $0x870] sm:$0xff]
    %v6251 = vld [vmem:[#allocation16 + $0x878] sm:$0xff]
    %v6252 = vld [vmem:[#allocation16 + $0x880] sm:$0xff]
    %v6253 = vld [vmem:[#allocation16 + $0x888] sm:$0xff]
    %v6254 = vld [vmem:[#allocation16 + $0x890] sm:$0xff]
    %v6255 = vld [vmem:[#allocation16 + $0x898] sm:$0xff]
    %v6256 = vld [vmem:[#allocation16 + $0x8a0] sm:$0xff]
    %v6257 = vld [vmem:[#allocation16 + $0x8a8] sm:$0xff]
    %v6258 = vld [vmem:[#allocation16 + $0x8b0] sm:$0xff]
    %v6259 = vld [vmem:[#allocation16 + $0x8b8] sm:$0xff]
    %v6260 = vld [vmem:[#allocation16 + $0x8c0] sm:$0xff]
    %v6261 = vld [vmem:[#allocation16 + $0x8c8] sm:$0xff]
    %v6262 = vld [vmem:[#allocation16 + $0x8d0] sm:$0xff]
    %v6263 = vld [vmem:[#allocation16 + $0x8d8] sm:$0xff]
    %v6264 = vld [vmem:[#allocation16 + $0x8e0] sm:$0xff]
    %v6265 = vld [vmem:[#allocation16 + $0x8e8] sm:$0xff]
    %v6266 = vld [vmem:[#allocation16 + $0x8f0] sm:$0xff]
    %v6267 = vld [vmem:[#allocation16 + $0x8f8] sm:$0xff]
    %v6268 = vld [vmem:[#allocation17] sm:$0xff]
    %v6269 = vld [vmem:[#allocation17 + $0x8] sm:$0xf]
    %v6272 = vlaneseq
    %v6273 = vshrl.u32 %v6272, 7
    %v6274 = vsub.s32 0, %v6273
    %v6275 = vrot.slane %v6268, %v6274
    %v6276 = vlaneseq
    %v6277 = vshrl.u32 %v6276, 7
    %v6278 = vsub.s32 1, %v6277
    %v6279 = vrot.slane %v6268, %v6278
    %v6280 = vlaneseq
    %v6281 = vshrl.u32 %v6280, 7
    %v6282 = vsub.s32 2, %v6281
    %v6283 = vrot.slane %v6268, %v6282
    %v6284 = vlaneseq
    %v6285 = vshrl.u32 %v6284, 7
    %v6286 = vsub.s32 3, %v6285
    %v6287 = vrot.slane %v6268, %v6286
    %v6288 = vlaneseq
    %v6289 = vshrl.u32 %v6288, 7
    %v6290 = vsub.s32 4, %v6289
    %v6291 = vrot.slane %v6268, %v6290
    %v6292 = vlaneseq
    %v6293 = vshrl.u32 %v6292, 7
    %v6294 = vsub.s32 5, %v6293
    %v6295 = vrot.slane %v6268, %v6294
    %v6296 = vlaneseq
    %v6297 = vshrl.u32 %v6296, 7
    %v6298 = vsub.s32 6, %v6297
    %v6299 = vrot.slane %v6268, %v6298
    %v6300 = vlaneseq
    %v6301 = vshrl.u32 %v6300, 7
    %v6302 = vsub.s32 7, %v6301
    %v6303 = vrot.slane %v6268, %v6302
    %v6304 = vlaneseq
    %v6305 = vshrl.u32 %v6304, 7
    %v6306 = vsub.s32 0, %v6305
    %v6307 = vrot.slane %v6269, %v6306
    %v6308 = vlaneseq
    %v6309 = vshrl.u32 %v6308, 7
    %v6310 = vsub.s32 1, %v6309
    %v6311 = vrot.slane %v6269, %v6310
    %v6312 = vlaneseq
    %v6313 = vshrl.u32 %v6312, 7
    %v6314 = vsub.s32 2, %v6313
    %v6315 = vrot.slane %v6269, %v6314
    %v6316 = vlaneseq
    %v6317 = vshrl.u32 %v6316, 7
    %v6318 = vsub.s32 3, %v6317
    %v6319 = vrot.slane %v6269, %v6318
    %v6620 = vunpack.c.l.b16 %v5980
    %v6621 = vunpack.c.h.b16 %v5980
    %v6622 = vunpack.c.l.b16 %v5981
    %v6623 = vunpack.c.h.b16 %v5981
    %v6624 = vunpack.c.l.b16 %v5982
    %v6625 = vunpack.c.h.b16 %v5982
    %v6626 = vunpack.c.l.b16 %v5983
    %v6627 = vunpack.c.h.b16 %v5983
    %v6628 = vunpack.c.l.b16 %v5984
    %v6629 = vunpack.c.h.b16 %v5984
    %v6630 = vunpack.c.l.b16 %v5985
    %v6631 = vunpack.c.h.b16 %v5985
    %v6632 = vunpack.c.l.b16 %v5986
    %v6633 = vunpack.c.h.b16 %v5986
    %v6634 = vunpack.c.l.b16 %v5987
    %v6635 = vunpack.c.h.b16 %v5987
    %v6636 = vunpack.c.l.b16 %v5988
    %v6637 = vunpack.c.h.b16 %v5988
    %v6638 = vunpack.c.l.b16 %v5989
    %v6639 = vunpack.c.h.b16 %v5989
    %v6640 = vunpack.c.l.b16 %v5990
    %v6641 = vunpack.c.h.b16 %v5990
    %v6642 = vunpack.c.l.b16 %v5991
    %v6643 = vunpack.c.h.b16 %v5991
    %v6644 = vunpack.c.l.b16 %v5992
    %v6645 = vunpack.c.h.b16 %v5992
    %v6646 = vunpack.c.l.b16 %v5993
    %v6647 = vunpack.c.h.b16 %v5993
    %v6648 = vunpack.c.l.b16 %v5994
    %v6649 = vunpack.c.h.b16 %v5994
    %v6650 = vunpack.c.l.b16 %v5995
    %v6651 = vunpack.c.h.b16 %v5995
    %v6652 = vunpack.c.l.b16 %v5996
    %v6653 = vunpack.c.h.b16 %v5996
    %v6654 = vunpack.c.l.b16 %v5997
    %v6655 = vunpack.c.h.b16 %v5997
    %v6656 = vunpack.c.l.b16 %v5998
    %v6657 = vunpack.c.h.b16 %v5998
    %v6658 = vunpack.c.l.b16 %v5999
    %v6659 = vunpack.c.h.b16 %v5999
    %v6660 = vunpack.c.l.b16 %v6000
    %v6661 = vunpack.c.h.b16 %v6000
    %v6662 = vunpack.c.l.b16 %v6001
    %v6663 = vunpack.c.h.b16 %v6001
    %v6664 = vunpack.c.l.b16 %v6002
    %v6665 = vunpack.c.h.b16 %v6002
    %v6666 = vunpack.c.l.b16 %v6003
    %v6667 = vunpack.c.h.b16 %v6003
    %v6668 = vunpack.c.l.b16 %v6004
    %v6669 = vunpack.c.h.b16 %v6004
    %v6670 = vunpack.c.l.b16 %v6005
    %v6671 = vunpack.c.h.b16 %v6005
    %v6672 = vunpack.c.l.b16 %v6006
    %v6673 = vunpack.c.h.b16 %v6006
    %v6674 = vunpack.c.l.b16 %v6007
    %v6675 = vunpack.c.h.b16 %v6007
    %v6676 = vunpack.c.l.b16 %v6008
    %v6677 = vunpack.c.h.b16 %v6008
    %v6678 = vunpack.c.l.b16 %v6009
    %v6679 = vunpack.c.h.b16 %v6009
    %v6680 = vunpack.c.l.b16 %v6010
    %v6681 = vunpack.c.h.b16 %v6010
    %v6682 = vunpack.c.l.b16 %v6011
    %v6683 = vunpack.c.h.b16 %v6011
    %v6684 = vunpack.c.l.b16 %v6012
    %v6685 = vunpack.c.h.b16 %v6012
    %v6686 = vunpack.c.l.b16 %v6013
    %v6687 = vunpack.c.h.b16 %v6013
    %v6688 = vunpack.c.l.b16 %v6014
    %v6689 = vunpack.c.h.b16 %v6014
    %v6690 = vunpack.c.l.b16 %v6015
    %v6691 = vunpack.c.h.b16 %v6015
    %v6692 = vunpack.c.l.b16 %v6016
    %v6693 = vunpack.c.h.b16 %v6016
    %v6694 = vunpack.c.l.b16 %v6017
    %v6695 = vunpack.c.h.b16 %v6017
    %v6696 = vunpack.c.l.b16 %v6018
    %v6697 = vunpack.c.h.b16 %v6018
    %v6698 = vunpack.c.l.b16 %v6019
    %v6699 = vunpack.c.h.b16 %v6019
    %v6700 = vunpack.c.l.b16 %v6020
    %v6701 = vunpack.c.h.b16 %v6020
    %v6702 = vunpack.c.l.b16 %v6021
    %v6703 = vunpack.c.h.b16 %v6021
    %v6704 = vunpack.c.l.b16 %v6022
    %v6705 = vunpack.c.h.b16 %v6022
    %v6706 = vunpack.c.l.b16 %v6023
    %v6707 = vunpack.c.h.b16 %v6023
    %v6708 = vunpack.c.l.b16 %v6024
    %v6709 = vunpack.c.h.b16 %v6024
    %v6710 = vunpack.c.l.b16 %v6025
    %v6711 = vunpack.c.h.b16 %v6025
    %v6712 = vunpack.c.l.b16 %v6026
    %v6713 = vunpack.c.h.b16 %v6026
    %v6714 = vunpack.c.l.b16 %v6027
    %v6715 = vunpack.c.h.b16 %v6027
    %v6716 = vunpack.c.l.b16 %v6028
    %v6717 = vunpack.c.h.b16 %v6028
    %v6718 = vunpack.c.l.b16 %v6029
    %v6719 = vunpack.c.h.b16 %v6029
    %v6720 = vunpack.c.l.b16 %v6030
    %v6721 = vunpack.c.h.b16 %v6030
    %v6722 = vunpack.c.l.b16 %v6031
    %v6723 = vunpack.c.h.b16 %v6031
    %v6724 = vunpack.c.l.b16 %v6032
    %v6725 = vunpack.c.h.b16 %v6032
    %v6726 = vunpack.c.l.b16 %v6033
    %v6727 = vunpack.c.h.b16 %v6033
    %v6728 = vunpack.c.l.b16 %v6034
    %v6729 = vunpack.c.h.b16 %v6034
    %v6730 = vunpack.c.l.b16 %v6035
    %v6731 = vunpack.c.h.b16 %v6035
    %v6732 = vunpack.c.l.b16 %v6036
    %v6733 = vunpack.c.h.b16 %v6036
    %v6734 = vunpack.c.l.b16 %v6037
    %v6735 = vunpack.c.h.b16 %v6037
    %v6736 = vunpack.c.l.b16 %v6038
    %v6737 = vunpack.c.h.b16 %v6038
    %v6738 = vunpack.c.l.b16 %v6039
    %v6739 = vunpack.c.h.b16 %v6039
    %v6740 = vunpack.c.l.b16 %v6040
    %v6741 = vunpack.c.h.b16 %v6040
    %v6742 = vunpack.c.l.b16 %v6041
    %v6743 = vunpack.c.h.b16 %v6041
    %v6744 = vunpack.c.l.b16 %v6042
    %v6745 = vunpack.c.h.b16 %v6042
    %v6746 = vunpack.c.l.b16 %v6043
    %v6747 = vunpack.c.h.b16 %v6043
    %v6748 = vunpack.c.l.b16 %v6044
    %v6749 = vunpack.c.h.b16 %v6044
    %v6750 = vunpack.c.l.b16 %v6045
    %v6751 = vunpack.c.h.b16 %v6045
    %v6752 = vunpack.c.l.b16 %v6046
    %v6753 = vunpack.c.h.b16 %v6046
    %v6754 = vunpack.c.l.b16 %v6047
    %v6755 = vunpack.c.h.b16 %v6047
    %v6756 = vunpack.c.l.b16 %v6048
    %v6757 = vunpack.c.h.b16 %v6048
    %v6758 = vunpack.c.l.b16 %v6049
    %v6759 = vunpack.c.h.b16 %v6049
    %v6760 = vunpack.c.l.b16 %v6050
    %v6761 = vunpack.c.h.b16 %v6050
    %v6762 = vunpack.c.l.b16 %v6051
    %v6763 = vunpack.c.h.b16 %v6051
    %v6764 = vunpack.c.l.b16 %v6052
    %v6765 = vunpack.c.h.b16 %v6052
    %v6766 = vunpack.c.l.b16 %v6053
    %v6767 = vunpack.c.h.b16 %v6053
    %v6768 = vunpack.c.l.b16 %v6054
    %v6769 = vunpack.c.h.b16 %v6054
    %v6770 = vunpack.c.l.b16 %v6055
    %v6771 = vunpack.c.h.b16 %v6055
    %v6772 = vunpack.c.l.b16 %v6056
    %v6773 = vunpack.c.h.b16 %v6056
    %v6774 = vunpack.c.l.b16 %v6057
    %v6775 = vunpack.c.h.b16 %v6057
    %v6776 = vunpack.c.l.b16 %v6058
    %v6777 = vunpack.c.h.b16 %v6058
    %v6778 = vunpack.c.l.b16 %v6059
    %v6779 = vunpack.c.h.b16 %v6059
    %v6780 = vunpack.c.l.b16 %v6060
    %v6781 = vunpack.c.h.b16 %v6060
    %v6782 = vunpack.c.l.b16 %v6061
    %v6783 = vunpack.c.h.b16 %v6061
    %v6784 = vunpack.c.l.b16 %v6062
    %v6785 = vunpack.c.h.b16 %v6062
    %v6786 = vunpack.c.l.b16 %v6063
    %v6787 = vunpack.c.h.b16 %v6063
    %v6788 = vunpack.c.l.b16 %v6064
    %v6789 = vunpack.c.h.b16 %v6064
    %v6790 = vunpack.c.l.b16 %v6065
    %v6791 = vunpack.c.h.b16 %v6065
    %v6792 = vunpack.c.l.b16 %v6066
    %v6793 = vunpack.c.h.b16 %v6066
    %v6794 = vunpack.c.l.b16 %v6067
    %v6795 = vunpack.c.h.b16 %v6067
    %v6796 = vunpack.c.l.b16 %v6068
    %v6797 = vunpack.c.h.b16 %v6068
    %v6798 = vunpack.c.l.b16 %v6069
    %v6799 = vunpack.c.h.b16 %v6069
    %v6800 = vunpack.c.l.b16 %v6070
    %v6801 = vunpack.c.h.b16 %v6070
    %v6802 = vunpack.c.l.b16 %v6071
    %v6803 = vunpack.c.h.b16 %v6071
    %v6804 = vunpack.c.l.b16 %v6072
    %v6805 = vunpack.c.h.b16 %v6072
    %v6806 = vunpack.c.l.b16 %v6073
    %v6807 = vunpack.c.h.b16 %v6073
    %v6808 = vunpack.c.l.b16 %v6074
    %v6809 = vunpack.c.h.b16 %v6074
    %v6810 = vunpack.c.l.b16 %v6075
    %v6811 = vunpack.c.h.b16 %v6075
    %v6812 = vunpack.c.l.b16 %v6076
    %v6813 = vunpack.c.h.b16 %v6076
    %v6814 = vunpack.c.l.b16 %v6077
    %v6815 = vunpack.c.h.b16 %v6077
    %v6816 = vunpack.c.l.b16 %v6078
    %v6817 = vunpack.c.h.b16 %v6078
    %v6818 = vunpack.c.l.b16 %v6079
    %v6819 = vunpack.c.h.b16 %v6079
    %v6820 = vunpack.c.l.b16 %v6080
    %v6821 = vunpack.c.h.b16 %v6080
    %v6822 = vunpack.c.l.b16 %v6081
    %v6823 = vunpack.c.h.b16 %v6081
    %v6824 = vunpack.c.l.b16 %v6082
    %v6825 = vunpack.c.h.b16 %v6082
    %v6826 = vunpack.c.l.b16 %v6083
    %v6827 = vunpack.c.h.b16 %v6083
    %v6828 = vunpack.c.l.b16 %v6084
    %v6829 = vunpack.c.h.b16 %v6084
    %v6830 = vunpack.c.l.b16 %v6085
    %v6831 = vunpack.c.h.b16 %v6085
    %v6832 = vunpack.c.l.b16 %v6086
    %v6833 = vunpack.c.h.b16 %v6086
    %v6834 = vunpack.c.l.b16 %v6087
    %v6835 = vunpack.c.h.b16 %v6087
    %v6836 = vunpack.c.l.b16 %v6088
    %v6837 = vunpack.c.h.b16 %v6088
    %v6838 = vunpack.c.l.b16 %v6089
    %v6839 = vunpack.c.h.b16 %v6089
    %v6840 = vunpack.c.l.b16 %v6090
    %v6841 = vunpack.c.h.b16 %v6090
    %v6842 = vunpack.c.l.b16 %v6091
    %v6843 = vunpack.c.h.b16 %v6091
    %v6844 = vunpack.c.l.b16 %v6092
    %v6845 = vunpack.c.h.b16 %v6092
    %v6846 = vunpack.c.l.b16 %v6093
    %v6847 = vunpack.c.h.b16 %v6093
    %v6848 = vunpack.c.l.b16 %v6094
    %v6849 = vunpack.c.h.b16 %v6094
    %v6850 = vunpack.c.l.b16 %v6095
    %v6851 = vunpack.c.h.b16 %v6095
    %v6852 = vunpack.c.l.b16 %v6096
    %v6853 = vunpack.c.h.b16 %v6096
    %v6854 = vunpack.c.l.b16 %v6097
    %v6855 = vunpack.c.h.b16 %v6097
    %v6856 = vunpack.c.l.b16 %v6098
    %v6857 = vunpack.c.h.b16 %v6098
    %v6858 = vunpack.c.l.b16 %v6099
    %v6859 = vunpack.c.h.b16 %v6099
    %v6860 = vunpack.c.l.b16 %v6100
    %v6861 = vunpack.c.h.b16 %v6100
    %v6862 = vunpack.c.l.b16 %v6101
    %v6863 = vunpack.c.h.b16 %v6101
    %v6864 = vunpack.c.l.b16 %v6102
    %v6865 = vunpack.c.h.b16 %v6102
    %v6866 = vunpack.c.l.b16 %v6103
    %v6867 = vunpack.c.h.b16 %v6103
    %v6868 = vunpack.c.l.b16 %v6104
    %v6869 = vunpack.c.h.b16 %v6104
    %v6870 = vunpack.c.l.b16 %v6105
    %v6871 = vunpack.c.h.b16 %v6105
    %v6872 = vunpack.c.l.b16 %v6106
    %v6873 = vunpack.c.h.b16 %v6106
    %v6874 = vunpack.c.l.b16 %v6107
    %v6875 = vunpack.c.h.b16 %v6107
    %v6876 = vunpack.c.l.b16 %v6108
    %v6877 = vunpack.c.h.b16 %v6108
    %v6878 = vunpack.c.l.b16 %v6109
    %v6879 = vunpack.c.h.b16 %v6109
    %v6880 = vunpack.c.l.b16 %v6110
    %v6881 = vunpack.c.h.b16 %v6110
    %v6882 = vunpack.c.l.b16 %v6111
    %v6883 = vunpack.c.h.b16 %v6111
    %v6884 = vunpack.c.l.b16 %v6112
    %v6885 = vunpack.c.h.b16 %v6112
    %v6886 = vunpack.c.l.b16 %v6113
    %v6887 = vunpack.c.h.b16 %v6113
    %v6888 = vunpack.c.l.b16 %v6114
    %v6889 = vunpack.c.h.b16 %v6114
    %v6890 = vunpack.c.l.b16 %v6115
    %v6891 = vunpack.c.h.b16 %v6115
    %v6892 = vunpack.c.l.b16 %v6116
    %v6893 = vunpack.c.h.b16 %v6116
    %v6894 = vunpack.c.l.b16 %v6117
    %v6895 = vunpack.c.h.b16 %v6117
    %v6896 = vunpack.c.l.b16 %v6118
    %v6897 = vunpack.c.h.b16 %v6118
    %v6898 = vunpack.c.l.b16 %v6119
    %v6899 = vunpack.c.h.b16 %v6119
    %v6900 = vunpack.c.l.b16 %v6120
    %v6901 = vunpack.c.h.b16 %v6120
    %v6902 = vunpack.c.l.b16 %v6121
    %v6903 = vunpack.c.h.b16 %v6121
    %v6904 = vunpack.c.l.b16 %v6122
    %v6905 = vunpack.c.h.b16 %v6122
    %v6906 = vunpack.c.l.b16 %v6123
    %v6907 = vunpack.c.h.b16 %v6123
    %v6908 = vunpack.c.l.b16 %v6124
    %v6909 = vunpack.c.h.b16 %v6124
    %v6910 = vunpack.c.l.b16 %v6125
    %v6911 = vunpack.c.h.b16 %v6125
    %v6912 = vunpack.c.l.b16 %v6126
    %v6913 = vunpack.c.h.b16 %v6126
    %v6914 = vunpack.c.l.b16 %v6127
    %v6915 = vunpack.c.h.b16 %v6127
    %v6916 = vunpack.c.l.b16 %v6128
    %v6917 = vunpack.c.h.b16 %v6128
    %v6918 = vunpack.c.l.b16 %v6129
    %v6919 = vunpack.c.h.b16 %v6129
    %v6920 = vunpack.c.l.b16 %v6130
    %v6921 = vunpack.c.h.b16 %v6130
    %v6922 = vunpack.c.l.b16 %v6131
    %v6923 = vunpack.c.h.b16 %v6131
    %v6924 = vunpack.c.l.b16 %v6132
    %v6925 = vunpack.c.h.b16 %v6132
    %v6926 = vunpack.c.l.b16 %v6133
    %v6927 = vunpack.c.h.b16 %v6133
    %v6928 = vunpack.c.l.b16 %v6134
    %v6929 = vunpack.c.h.b16 %v6134
    %v6930 = vunpack.c.l.b16 %v6135
    %v6931 = vunpack.c.h.b16 %v6135
    %v6932 = vunpack.c.l.b16 %v6136
    %v6933 = vunpack.c.h.b16 %v6136
    %v6934 = vunpack.c.l.b16 %v6137
    %v6935 = vunpack.c.h.b16 %v6137
    %v6936 = vunpack.c.l.b16 %v6138
    %v6937 = vunpack.c.h.b16 %v6138
    %v6938 = vunpack.c.l.b16 %v6139
    %v6939 = vunpack.c.h.b16 %v6139
    %v6940 = vunpack.c.l.b16 %v6140
    %v6941 = vunpack.c.h.b16 %v6140
    %v6942 = vunpack.c.l.b16 %v6141
    %v6943 = vunpack.c.h.b16 %v6141
    %v6944 = vunpack.c.l.b16 %v6142
    %v6945 = vunpack.c.h.b16 %v6142
    %v6946 = vunpack.c.l.b16 %v6143
    %v6947 = vunpack.c.h.b16 %v6143
    %v6948 = vunpack.c.l.b16 %v6144
    %v6949 = vunpack.c.h.b16 %v6144
    %v6950 = vunpack.c.l.b16 %v6145
    %v6951 = vunpack.c.h.b16 %v6145
    %v6952 = vunpack.c.l.b16 %v6146
    %v6953 = vunpack.c.h.b16 %v6146
    %v6954 = vunpack.c.l.b16 %v6147
    %v6955 = vunpack.c.h.b16 %v6147
    %v6956 = vunpack.c.l.b16 %v6148
    %v6957 = vunpack.c.h.b16 %v6148
    %v6958 = vunpack.c.l.b16 %v6149
    %v6959 = vunpack.c.h.b16 %v6149
    %v6960 = vunpack.c.l.b16 %v6150
    %v6961 = vunpack.c.h.b16 %v6150
    %v6962 = vunpack.c.l.b16 %v6151
    %v6963 = vunpack.c.h.b16 %v6151
    %v6964 = vunpack.c.l.b16 %v6152
    %v6965 = vunpack.c.h.b16 %v6152
    %v6966 = vunpack.c.l.b16 %v6153
    %v6967 = vunpack.c.h.b16 %v6153
    %v6968 = vunpack.c.l.b16 %v6154
    %v6969 = vunpack.c.h.b16 %v6154
    %v6970 = vunpack.c.l.b16 %v6155
    %v6971 = vunpack.c.h.b16 %v6155
    %v6972 = vunpack.c.l.b16 %v6156
    %v6973 = vunpack.c.h.b16 %v6156
    %v6974 = vunpack.c.l.b16 %v6157
    %v6975 = vunpack.c.h.b16 %v6157
    %v6976 = vunpack.c.l.b16 %v6158
    %v6977 = vunpack.c.h.b16 %v6158
    %v6978 = vunpack.c.l.b16 %v6159
    %v6979 = vunpack.c.h.b16 %v6159
    %v6980 = vunpack.c.l.b16 %v6160
    %v6981 = vunpack.c.h.b16 %v6160
    %v6982 = vunpack.c.l.b16 %v6161
    %v6983 = vunpack.c.h.b16 %v6161
    %v6984 = vunpack.c.l.b16 %v6162
    %v6985 = vunpack.c.h.b16 %v6162
    %v6986 = vunpack.c.l.b16 %v6163
    %v6987 = vunpack.c.h.b16 %v6163
    %v6988 = vunpack.c.l.b16 %v6164
    %v6989 = vunpack.c.h.b16 %v6164
    %v6990 = vunpack.c.l.b16 %v6165
    %v6991 = vunpack.c.h.b16 %v6165
    %v6992 = vunpack.c.l.b16 %v6166
    %v6993 = vunpack.c.h.b16 %v6166
    %v6994 = vunpack.c.l.b16 %v6167
    %v6995 = vunpack.c.h.b16 %v6167
    %v6996 = vunpack.c.l.b16 %v6168
    %v6997 = vunpack.c.h.b16 %v6168
    %v6998 = vunpack.c.l.b16 %v6169
    %v6999 = vunpack.c.h.b16 %v6169
    %v7000 = vunpack.c.l.b16 %v6170
    %v7001 = vunpack.c.h.b16 %v6170
    %v7002 = vunpack.c.l.b16 %v6171
    %v7003 = vunpack.c.h.b16 %v6171
    %v7004 = vunpack.c.l.b16 %v6172
    %v7005 = vunpack.c.h.b16 %v6172
    %v7006 = vunpack.c.l.b16 %v6173
    %v7007 = vunpack.c.h.b16 %v6173
    %v7008 = vunpack.c.l.b16 %v6174
    %v7009 = vunpack.c.h.b16 %v6174
    %v7010 = vunpack.c.l.b16 %v6175
    %v7011 = vunpack.c.h.b16 %v6175
    %v7012 = vunpack.c.l.b16 %v6176
    %v7013 = vunpack.c.h.b16 %v6176
    %v7014 = vunpack.c.l.b16 %v6177
    %v7015 = vunpack.c.h.b16 %v6177
    %v7016 = vunpack.c.l.b16 %v6178
    %v7017 = vunpack.c.h.b16 %v6178
    %v7018 = vunpack.c.l.b16 %v6179
    %v7019 = vunpack.c.h.b16 %v6179
    %v7020 = vunpack.c.l.b16 %v6180
    %v7021 = vunpack.c.h.b16 %v6180
    %v7022 = vunpack.c.l.b16 %v6181
    %v7023 = vunpack.c.h.b16 %v6181
    %v7024 = vunpack.c.l.b16 %v6182
    %v7025 = vunpack.c.h.b16 %v6182
    %v7026 = vunpack.c.l.b16 %v6183
    %v7027 = vunpack.c.h.b16 %v6183
    %v7028 = vunpack.c.l.b16 %v6184
    %v7029 = vunpack.c.h.b16 %v6184
    %v7030 = vunpack.c.l.b16 %v6185
    %v7031 = vunpack.c.h.b16 %v6185
    %v7032 = vunpack.c.l.b16 %v6186
    %v7033 = vunpack.c.h.b16 %v6186
    %v7034 = vunpack.c.l.b16 %v6187
    %v7035 = vunpack.c.h.b16 %v6187
    %v7036 = vunpack.c.l.b16 %v6188
    %v7037 = vunpack.c.h.b16 %v6188
    %v7038 = vunpack.c.l.b16 %v6189
    %v7039 = vunpack.c.h.b16 %v6189
    %v7040 = vunpack.c.l.b16 %v6190
    %v7041 = vunpack.c.h.b16 %v6190
    %v7042 = vunpack.c.l.b16 %v6191
    %v7043 = vunpack.c.h.b16 %v6191
    %v7044 = vunpack.c.l.b16 %v6192
    %v7045 = vunpack.c.h.b16 %v6192
    %v7046 = vunpack.c.l.b16 %v6193
    %v7047 = vunpack.c.h.b16 %v6193
    %v7048 = vunpack.c.l.b16 %v6194
    %v7049 = vunpack.c.h.b16 %v6194
    %v7050 = vunpack.c.l.b16 %v6195
    %v7051 = vunpack.c.h.b16 %v6195
    %v7052 = vunpack.c.l.b16 %v6196
    %v7053 = vunpack.c.h.b16 %v6196
    %v7054 = vunpack.c.l.b16 %v6197
    %v7055 = vunpack.c.h.b16 %v6197
    %v7056 = vunpack.c.l.b16 %v6198
    %v7057 = vunpack.c.h.b16 %v6198
    %v7058 = vunpack.c.l.b16 %v6199
    %v7059 = vunpack.c.h.b16 %v6199
    %v7060 = vunpack.c.l.b16 %v6200
    %v7061 = vunpack.c.h.b16 %v6200
    %v7062 = vunpack.c.l.b16 %v6201
    %v7063 = vunpack.c.h.b16 %v6201
    %v7064 = vunpack.c.l.b16 %v6202
    %v7065 = vunpack.c.h.b16 %v6202
    %v7066 = vunpack.c.l.b16 %v6203
    %v7067 = vunpack.c.h.b16 %v6203
    %v7068 = vunpack.c.l.b16 %v6204
    %v7069 = vunpack.c.h.b16 %v6204
    %v7070 = vunpack.c.l.b16 %v6205
    %v7071 = vunpack.c.h.b16 %v6205
    %v7072 = vunpack.c.l.b16 %v6206
    %v7073 = vunpack.c.h.b16 %v6206
    %v7074 = vunpack.c.l.b16 %v6207
    %v7075 = vunpack.c.h.b16 %v6207
    %v7076 = vunpack.c.l.b16 %v6208
    %v7077 = vunpack.c.h.b16 %v6208
    %v7078 = vunpack.c.l.b16 %v6209
    %v7079 = vunpack.c.h.b16 %v6209
    %v7080 = vunpack.c.l.b16 %v6210
    %v7081 = vunpack.c.h.b16 %v6210
    %v7082 = vunpack.c.l.b16 %v6211
    %v7083 = vunpack.c.h.b16 %v6211
    %v7084 = vunpack.c.l.b16 %v6212
    %v7085 = vunpack.c.h.b16 %v6212
    %v7086 = vunpack.c.l.b16 %v6213
    %v7087 = vunpack.c.h.b16 %v6213
    %v7088 = vunpack.c.l.b16 %v6214
    %v7089 = vunpack.c.h.b16 %v6214
    %v7090 = vunpack.c.l.b16 %v6215
    %v7091 = vunpack.c.h.b16 %v6215
    %v7092 = vunpack.c.l.b16 %v6216
    %v7093 = vunpack.c.h.b16 %v6216
    %v7094 = vunpack.c.l.b16 %v6217
    %v7095 = vunpack.c.h.b16 %v6217
    %v7096 = vunpack.c.l.b16 %v6218
    %v7097 = vunpack.c.h.b16 %v6218
    %v7098 = vunpack.c.l.b16 %v6219
    %v7099 = vunpack.c.h.b16 %v6219
    %v7100 = vunpack.c.l.b16 %v6220
    %v7101 = vunpack.c.h.b16 %v6220
    %v7102 = vunpack.c.l.b16 %v6221
    %v7103 = vunpack.c.h.b16 %v6221
    %v7104 = vunpack.c.l.b16 %v6222
    %v7105 = vunpack.c.h.b16 %v6222
    %v7106 = vunpack.c.l.b16 %v6223
    %v7107 = vunpack.c.h.b16 %v6223
    %v7108 = vunpack.c.l.b16 %v6224
    %v7109 = vunpack.c.h.b16 %v6224
    %v7110 = vunpack.c.l.b16 %v6225
    %v7111 = vunpack.c.h.b16 %v6225
    %v7112 = vunpack.c.l.b16 %v6226
    %v7113 = vunpack.c.h.b16 %v6226
    %v7114 = vunpack.c.l.b16 %v6227
    %v7115 = vunpack.c.h.b16 %v6227
    %v7116 = vunpack.c.l.b16 %v6228
    %v7117 = vunpack.c.h.b16 %v6228
    %v7118 = vunpack.c.l.b16 %v6229
    %v7119 = vunpack.c.h.b16 %v6229
    %v7120 = vunpack.c.l.b16 %v6230
    %v7121 = vunpack.c.h.b16 %v6230
    %v7122 = vunpack.c.l.b16 %v6231
    %v7123 = vunpack.c.h.b16 %v6231
    %v7124 = vunpack.c.l.b16 %v6232
    %v7125 = vunpack.c.h.b16 %v6232
    %v7126 = vunpack.c.l.b16 %v6233
    %v7127 = vunpack.c.h.b16 %v6233
    %v7128 = vunpack.c.l.b16 %v6234
    %v7129 = vunpack.c.h.b16 %v6234
    %v7130 = vunpack.c.l.b16 %v6235
    %v7131 = vunpack.c.h.b16 %v6235
    %v7132 = vunpack.c.l.b16 %v6236
    %v7133 = vunpack.c.h.b16 %v6236
    %v7134 = vunpack.c.l.b16 %v6237
    %v7135 = vunpack.c.h.b16 %v6237
    %v7136 = vunpack.c.l.b16 %v6238
    %v7137 = vunpack.c.h.b16 %v6238
    %v7138 = vunpack.c.l.b16 %v6239
    %v7139 = vunpack.c.h.b16 %v6239
    %v7140 = vunpack.c.l.b16 %v6240
    %v7141 = vunpack.c.h.b16 %v6240
    %v7142 = vunpack.c.l.b16 %v6241
    %v7143 = vunpack.c.h.b16 %v6241
    %v7144 = vunpack.c.l.b16 %v6242
    %v7145 = vunpack.c.h.b16 %v6242
    %v7146 = vunpack.c.l.b16 %v6243
    %v7147 = vunpack.c.h.b16 %v6243
    %v7148 = vunpack.c.l.b16 %v6244
    %v7149 = vunpack.c.h.b16 %v6244
    %v7150 = vunpack.c.l.b16 %v6245
    %v7151 = vunpack.c.h.b16 %v6245
    %v7152 = vunpack.c.l.b16 %v6246
    %v7153 = vunpack.c.h.b16 %v6246
    %v7154 = vunpack.c.l.b16 %v6247
    %v7155 = vunpack.c.h.b16 %v6247
    %v7156 = vunpack.c.l.b16 %v6248
    %v7157 = vunpack.c.h.b16 %v6248
    %v7158 = vunpack.c.l.b16 %v6249
    %v7159 = vunpack.c.h.b16 %v6249
    %v7160 = vunpack.c.l.b16 %v6250
    %v7161 = vunpack.c.h.b16 %v6250
    %v7162 = vunpack.c.l.b16 %v6251
    %v7163 = vunpack.c.h.b16 %v6251
    %v7164 = vunpack.c.l.b16 %v6252
    %v7165 = vunpack.c.h.b16 %v6252
    %v7166 = vunpack.c.l.b16 %v6253
    %v7167 = vunpack.c.h.b16 %v6253
    %v7168 = vunpack.c.l.b16 %v6254
    %v7169 = vunpack.c.h.b16 %v6254
    %v7170 = vunpack.c.l.b16 %v6255
    %v7171 = vunpack.c.h.b16 %v6255
    %v7172 = vunpack.c.l.b16 %v6256
    %v7173 = vunpack.c.h.b16 %v6256
    %v7174 = vunpack.c.l.b16 %v6257
    %v7175 = vunpack.c.h.b16 %v6257
    %v7176 = vunpack.c.l.b16 %v6258
    %v7177 = vunpack.c.h.b16 %v6258
    %v7178 = vunpack.c.l.b16 %v6259
    %v7179 = vunpack.c.h.b16 %v6259
    %v7180 = vunpack.c.l.b16 %v6260
    %v7181 = vunpack.c.h.b16 %v6260
    %v7182 = vunpack.c.l.b16 %v6261
    %v7183 = vunpack.c.h.b16 %v6261
    %v7184 = vunpack.c.l.b16 %v6262
    %v7185 = vunpack.c.h.b16 %v6262
    %v7186 = vunpack.c.l.b16 %v6263
    %v7187 = vunpack.c.h.b16 %v6263
    %v7188 = vunpack.c.l.b16 %v6264
    %v7189 = vunpack.c.h.b16 %v6264
    %v7190 = vunpack.c.l.b16 %v6265
    %v7191 = vunpack.c.h.b16 %v6265
    %v7192 = vunpack.c.l.b16 %v6266
    %v7193 = vunpack.c.h.b16 %v6266
    %v7194 = vunpack.c.l.b16 %v6267
    %v7195 = vunpack.c.h.b16 %v6267
    %v7196 = vpack.c.b16 %v6632, %v6620
    %v7197 = vpack.c.b16 %v6633, %v6621
    %v7198 = vpack.c.b16 %v6634, %v6622
    %v7199 = vpack.c.b16 %v6635, %v6623
    %v7200 = vpack.c.b16 %v6636, %v6624
    %v7201 = vpack.c.b16 %v6637, %v6625
    %v7202 = vpack.c.b16 %v6638, %v6626
    %v7203 = vpack.c.b16 %v6639, %v6627
    %v7204 = vpack.c.b16 %v6640, %v6628
    %v7205 = vpack.c.b16 %v6641, %v6629
    %v7206 = vpack.c.b16 %v6642, %v6630
    %v7207 = vpack.c.b16 %v6643, %v6631
    %v7208 = vpack.c.b16 %v6656, %v6644
    %v7209 = vpack.c.b16 %v6657, %v6645
    %v7210 = vpack.c.b16 %v6658, %v6646
    %v7211 = vpack.c.b16 %v6659, %v6647
    %v7212 = vpack.c.b16 %v6660, %v6648
    %v7213 = vpack.c.b16 %v6661, %v6649
    %v7214 = vpack.c.b16 %v6662, %v6650
    %v7215 = vpack.c.b16 %v6663, %v6651
    %v7216 = vpack.c.b16 %v6664, %v6652
    %v7217 = vpack.c.b16 %v6665, %v6653
    %v7218 = vpack.c.b16 %v6666, %v6654
    %v7219 = vpack.c.b16 %v6667, %v6655
    %v7220 = vpack.c.b16 %v6680, %v6668
    %v7221 = vpack.c.b16 %v6681, %v6669
    %v7222 = vpack.c.b16 %v6682, %v6670
    %v7223 = vpack.c.b16 %v6683, %v6671
    %v7224 = vpack.c.b16 %v6684, %v6672
    %v7225 = vpack.c.b16 %v6685, %v6673
    %v7226 = vpack.c.b16 %v6686, %v6674
    %v7227 = vpack.c.b16 %v6687, %v6675
    %v7228 = vpack.c.b16 %v6688, %v6676
    %v7229 = vpack.c.b16 %v6689, %v6677
    %v7230 = vpack.c.b16 %v6690, %v6678
    %v7231 = vpack.c.b16 %v6691, %v6679
    %v7232 = vpack.c.b16 %v6704, %v6692
    %v7233 = vpack.c.b16 %v6705, %v6693
    %v7234 = vpack.c.b16 %v6706, %v6694
    %v7235 = vpack.c.b16 %v6707, %v6695
    %v7236 = vpack.c.b16 %v6708, %v6696
    %v7237 = vpack.c.b16 %v6709, %v6697
    %v7238 = vpack.c.b16 %v6710, %v6698
    %v7239 = vpack.c.b16 %v6711, %v6699
    %v7240 = vpack.c.b16 %v6712, %v6700
    %v7241 = vpack.c.b16 %v6713, %v6701
    %v7242 = vpack.c.b16 %v6714, %v6702
    %v7243 = vpack.c.b16 %v6715, %v6703
    %v7244 = vpack.c.b16 %v6728, %v6716
    %v7245 = vpack.c.b16 %v6729, %v6717
    %v7246 = vpack.c.b16 %v6730, %v6718
    %v7247 = vpack.c.b16 %v6731, %v6719
    %v7248 = vpack.c.b16 %v6732, %v6720
    %v7249 = vpack.c.b16 %v6733, %v6721
    %v7250 = vpack.c.b16 %v6734, %v6722
    %v7251 = vpack.c.b16 %v6735, %v6723
    %v7252 = vpack.c.b16 %v6736, %v6724
    %v7253 = vpack.c.b16 %v6737, %v6725
    %v7254 = vpack.c.b16 %v6738, %v6726
    %v7255 = vpack.c.b16 %v6739, %v6727
    %v7256 = vpack.c.b16 %v6752, %v6740
    %v7257 = vpack.c.b16 %v6753, %v6741
    %v7258 = vpack.c.b16 %v6754, %v6742
    %v7259 = vpack.c.b16 %v6755, %v6743
    %v7260 = vpack.c.b16 %v6756, %v6744
    %v7261 = vpack.c.b16 %v6757, %v6745
    %v7262 = vpack.c.b16 %v6758, %v6746
    %v7263 = vpack.c.b16 %v6759, %v6747
    %v7264 = vpack.c.b16 %v6760, %v6748
    %v7265 = vpack.c.b16 %v6761, %v6749
    %v7266 = vpack.c.b16 %v6762, %v6750
    %v7267 = vpack.c.b16 %v6763, %v6751
    %v7268 = vpack.c.b16 %v6776, %v6764
    %v7269 = vpack.c.b16 %v6777, %v6765
    %v7270 = vpack.c.b16 %v6778, %v6766
    %v7271 = vpack.c.b16 %v6779, %v6767
    %v7272 = vpack.c.b16 %v6780, %v6768
    %v7273 = vpack.c.b16 %v6781, %v6769
    %v7274 = vpack.c.b16 %v6782, %v6770
    %v7275 = vpack.c.b16 %v6783, %v6771
    %v7276 = vpack.c.b16 %v6784, %v6772
    %v7277 = vpack.c.b16 %v6785, %v6773
    %v7278 = vpack.c.b16 %v6786, %v6774
    %v7279 = vpack.c.b16 %v6787, %v6775
    %v7280 = vpack.c.b16 %v6800, %v6788
    %v7281 = vpack.c.b16 %v6801, %v6789
    %v7282 = vpack.c.b16 %v6802, %v6790
    %v7283 = vpack.c.b16 %v6803, %v6791
    %v7284 = vpack.c.b16 %v6804, %v6792
    %v7285 = vpack.c.b16 %v6805, %v6793
    %v7286 = vpack.c.b16 %v6806, %v6794
    %v7287 = vpack.c.b16 %v6807, %v6795
    %v7288 = vpack.c.b16 %v6808, %v6796
    %v7289 = vpack.c.b16 %v6809, %v6797
    %v7290 = vpack.c.b16 %v6810, %v6798
    %v7291 = vpack.c.b16 %v6811, %v6799
    %v7292 = vpack.c.b16 %v6824, %v6812
    %v7293 = vpack.c.b16 %v6825, %v6813
    %v7294 = vpack.c.b16 %v6826, %v6814
    %v7295 = vpack.c.b16 %v6827, %v6815
    %v7296 = vpack.c.b16 %v6828, %v6816
    %v7297 = vpack.c.b16 %v6829, %v6817
    %v7298 = vpack.c.b16 %v6830, %v6818
    %v7299 = vpack.c.b16 %v6831, %v6819
    %v7300 = vpack.c.b16 %v6832, %v6820
    %v7301 = vpack.c.b16 %v6833, %v6821
    %v7302 = vpack.c.b16 %v6834, %v6822
    %v7303 = vpack.c.b16 %v6835, %v6823
    %v7304 = vpack.c.b16 %v6848, %v6836
    %v7305 = vpack.c.b16 %v6849, %v6837
    %v7306 = vpack.c.b16 %v6850, %v6838
    %v7307 = vpack.c.b16 %v6851, %v6839
    %v7308 = vpack.c.b16 %v6852, %v6840
    %v7309 = vpack.c.b16 %v6853, %v6841
    %v7310 = vpack.c.b16 %v6854, %v6842
    %v7311 = vpack.c.b16 %v6855, %v6843
    %v7312 = vpack.c.b16 %v6856, %v6844
    %v7313 = vpack.c.b16 %v6857, %v6845
    %v7314 = vpack.c.b16 %v6858, %v6846
    %v7315 = vpack.c.b16 %v6859, %v6847
    %v7316 = vpack.c.b16 %v6872, %v6860
    %v7317 = vpack.c.b16 %v6873, %v6861
    %v7318 = vpack.c.b16 %v6874, %v6862
    %v7319 = vpack.c.b16 %v6875, %v6863
    %v7320 = vpack.c.b16 %v6876, %v6864
    %v7321 = vpack.c.b16 %v6877, %v6865
    %v7322 = vpack.c.b16 %v6878, %v6866
    %v7323 = vpack.c.b16 %v6879, %v6867
    %v7324 = vpack.c.b16 %v6880, %v6868
    %v7325 = vpack.c.b16 %v6881, %v6869
    %v7326 = vpack.c.b16 %v6882, %v6870
    %v7327 = vpack.c.b16 %v6883, %v6871
    %v7328 = vpack.c.b16 %v6896, %v6884
    %v7329 = vpack.c.b16 %v6897, %v6885
    %v7330 = vpack.c.b16 %v6898, %v6886
    %v7331 = vpack.c.b16 %v6899, %v6887
    %v7332 = vpack.c.b16 %v6900, %v6888
    %v7333 = vpack.c.b16 %v6901, %v6889
    %v7334 = vpack.c.b16 %v6902, %v6890
    %v7335 = vpack.c.b16 %v6903, %v6891
    %v7336 = vpack.c.b16 %v6904, %v6892
    %v7337 = vpack.c.b16 %v6905, %v6893
    %v7338 = vpack.c.b16 %v6906, %v6894
    %v7339 = vpack.c.b16 %v6907, %v6895
    %v7340 = vpack.c.b16 %v6920, %v6908
    %v7341 = vpack.c.b16 %v6921, %v6909
    %v7342 = vpack.c.b16 %v6922, %v6910
    %v7343 = vpack.c.b16 %v6923, %v6911
    %v7344 = vpack.c.b16 %v6924, %v6912
    %v7345 = vpack.c.b16 %v6925, %v6913
    %v7346 = vpack.c.b16 %v6926, %v6914
    %v7347 = vpack.c.b16 %v6927, %v6915
    %v7348 = vpack.c.b16 %v6928, %v6916
    %v7349 = vpack.c.b16 %v6929, %v6917
    %v7350 = vpack.c.b16 %v6930, %v6918
    %v7351 = vpack.c.b16 %v6931, %v6919
    %v7352 = vpack.c.b16 %v6944, %v6932
    %v7353 = vpack.c.b16 %v6945, %v6933
    %v7354 = vpack.c.b16 %v6946, %v6934
    %v7355 = vpack.c.b16 %v6947, %v6935
    %v7356 = vpack.c.b16 %v6948, %v6936
    %v7357 = vpack.c.b16 %v6949, %v6937
    %v7358 = vpack.c.b16 %v6950, %v6938
    %v7359 = vpack.c.b16 %v6951, %v6939
    %v7360 = vpack.c.b16 %v6952, %v6940
    %v7361 = vpack.c.b16 %v6953, %v6941
    %v7362 = vpack.c.b16 %v6954, %v6942
    %v7363 = vpack.c.b16 %v6955, %v6943
    %v7364 = vpack.c.b16 %v6968, %v6956
    %v7365 = vpack.c.b16 %v6969, %v6957
    %v7366 = vpack.c.b16 %v6970, %v6958
    %v7367 = vpack.c.b16 %v6971, %v6959
    %v7368 = vpack.c.b16 %v6972, %v6960
    %v7369 = vpack.c.b16 %v6973, %v6961
    %v7370 = vpack.c.b16 %v6974, %v6962
    %v7371 = vpack.c.b16 %v6975, %v6963
    %v7372 = vpack.c.b16 %v6976, %v6964
    %v7373 = vpack.c.b16 %v6977, %v6965
    %v7374 = vpack.c.b16 %v6978, %v6966
    %v7375 = vpack.c.b16 %v6979, %v6967
    %v7376 = vpack.c.b16 %v6992, %v6980
    %v7377 = vpack.c.b16 %v6993, %v6981
    %v7378 = vpack.c.b16 %v6994, %v6982
    %v7379 = vpack.c.b16 %v6995, %v6983
    %v7380 = vpack.c.b16 %v6996, %v6984
    %v7381 = vpack.c.b16 %v6997, %v6985
    %v7382 = vpack.c.b16 %v6998, %v6986
    %v7383 = vpack.c.b16 %v6999, %v6987
    %v7384 = vpack.c.b16 %v7000, %v6988
    %v7385 = vpack.c.b16 %v7001, %v6989
    %v7386 = vpack.c.b16 %v7002, %v6990
    %v7387 = vpack.c.b16 %v7003, %v6991
    %v7388 = vpack.c.b16 %v7016, %v7004
    %v7389 = vpack.c.b16 %v7017, %v7005
    %v7390 = vpack.c.b16 %v7018, %v7006
    %v7391 = vpack.c.b16 %v7019, %v7007
    %v7392 = vpack.c.b16 %v7020, %v7008
    %v7393 = vpack.c.b16 %v7021, %v7009
    %v7394 = vpack.c.b16 %v7022, %v7010
    %v7395 = vpack.c.b16 %v7023, %v7011
    %v7396 = vpack.c.b16 %v7024, %v7012
    %v7397 = vpack.c.b16 %v7025, %v7013
    %v7398 = vpack.c.b16 %v7026, %v7014
    %v7399 = vpack.c.b16 %v7027, %v7015
    %v7400 = vpack.c.b16 %v7040, %v7028
    %v7401 = vpack.c.b16 %v7041, %v7029
    %v7402 = vpack.c.b16 %v7042, %v7030
    %v7403 = vpack.c.b16 %v7043, %v7031
    %v7404 = vpack.c.b16 %v7044, %v7032
    %v7405 = vpack.c.b16 %v7045, %v7033
    %v7406 = vpack.c.b16 %v7046, %v7034
    %v7407 = vpack.c.b16 %v7047, %v7035
    %v7408 = vpack.c.b16 %v7048, %v7036
    %v7409 = vpack.c.b16 %v7049, %v7037
    %v7410 = vpack.c.b16 %v7050, %v7038
    %v7411 = vpack.c.b16 %v7051, %v7039
    %v7412 = vpack.c.b16 %v7064, %v7052
    %v7413 = vpack.c.b16 %v7065, %v7053
    %v7414 = vpack.c.b16 %v7066, %v7054
    %v7415 = vpack.c.b16 %v7067, %v7055
    %v7416 = vpack.c.b16 %v7068, %v7056
    %v7417 = vpack.c.b16 %v7069, %v7057
    %v7418 = vpack.c.b16 %v7070, %v7058
    %v7419 = vpack.c.b16 %v7071, %v7059
    %v7420 = vpack.c.b16 %v7072, %v7060
    %v7421 = vpack.c.b16 %v7073, %v7061
    %v7422 = vpack.c.b16 %v7074, %v7062
    %v7423 = vpack.c.b16 %v7075, %v7063
    %v7424 = vpack.c.b16 %v7088, %v7076
    %v7425 = vpack.c.b16 %v7089, %v7077
    %v7426 = vpack.c.b16 %v7090, %v7078
    %v7427 = vpack.c.b16 %v7091, %v7079
    %v7428 = vpack.c.b16 %v7092, %v7080
    %v7429 = vpack.c.b16 %v7093, %v7081
    %v7430 = vpack.c.b16 %v7094, %v7082
    %v7431 = vpack.c.b16 %v7095, %v7083
    %v7432 = vpack.c.b16 %v7096, %v7084
    %v7433 = vpack.c.b16 %v7097, %v7085
    %v7434 = vpack.c.b16 %v7098, %v7086
    %v7435 = vpack.c.b16 %v7099, %v7087
    %v7436 = vpack.c.b16 %v7112, %v7100
    %v7437 = vpack.c.b16 %v7113, %v7101
    %v7438 = vpack.c.b16 %v7114, %v7102
    %v7439 = vpack.c.b16 %v7115, %v7103
    %v7440 = vpack.c.b16 %v7116, %v7104
    %v7441 = vpack.c.b16 %v7117, %v7105
    %v7442 = vpack.c.b16 %v7118, %v7106
    %v7443 = vpack.c.b16 %v7119, %v7107
    %v7444 = vpack.c.b16 %v7120, %v7108
    %v7445 = vpack.c.b16 %v7121, %v7109
    %v7446 = vpack.c.b16 %v7122, %v7110
    %v7447 = vpack.c.b16 %v7123, %v7111
    %v7448 = vpack.c.b16 %v7136, %v7124
    %v7449 = vpack.c.b16 %v7137, %v7125
    %v7450 = vpack.c.b16 %v7138, %v7126
    %v7451 = vpack.c.b16 %v7139, %v7127
    %v7452 = vpack.c.b16 %v7140, %v7128
    %v7453 = vpack.c.b16 %v7141, %v7129
    %v7454 = vpack.c.b16 %v7142, %v7130
    %v7455 = vpack.c.b16 %v7143, %v7131
    %v7456 = vpack.c.b16 %v7144, %v7132
    %v7457 = vpack.c.b16 %v7145, %v7133
    %v7458 = vpack.c.b16 %v7146, %v7134
    %v7459 = vpack.c.b16 %v7147, %v7135
    %v7460 = vpack.c.b16 %v7160, %v7148
    %v7461 = vpack.c.b16 %v7161, %v7149
    %v7462 = vpack.c.b16 %v7162, %v7150
    %v7463 = vpack.c.b16 %v7163, %v7151
    %v7464 = vpack.c.b16 %v7164, %v7152
    %v7465 = vpack.c.b16 %v7165, %v7153
    %v7466 = vpack.c.b16 %v7166, %v7154
    %v7467 = vpack.c.b16 %v7167, %v7155
    %v7468 = vpack.c.b16 %v7168, %v7156
    %v7469 = vpack.c.b16 %v7169, %v7157
    %v7470 = vpack.c.b16 %v7170, %v7158
    %v7471 = vpack.c.b16 %v7171, %v7159
    %v7472 = vpack.c.b16 %v7184, %v7172
    %v7473 = vpack.c.b16 %v7185, %v7173
    %v7474 = vpack.c.b16 %v7186, %v7174
    %v7475 = vpack.c.b16 %v7187, %v7175
    %v7476 = vpack.c.b16 %v7188, %v7176
    %v7477 = vpack.c.b16 %v7189, %v7177
    %v7478 = vpack.c.b16 %v7190, %v7178
    %v7479 = vpack.c.b16 %v7191, %v7179
    %v7480 = vpack.c.b16 %v7192, %v7180
    %v7481 = vpack.c.b16 %v7193, %v7181
    %v7482 = vpack.c.b16 %v7194, %v7182
    %v7483 = vpack.c.b16 %v7195, %v7183
    %7772 = vmatprep.subr.bf16.mxu0 %v7281
    %7773 = vmatpush1.bf16.msra.mxu0 %v7280
    %7774 = vmatprep.subr.bf16.mxu0 %v7269
    %7775 = vmatpush1.bf16.msra.mxu0 %v7268
    %7776 = vmatprep.subr.bf16.mxu0 %v7257
    %7777 = vmatpush1.bf16.msra.mxu0 %v7256
    %7778 = vmatprep.subr.bf16.mxu0 %v7245
    %7779 = vmatpush1.bf16.msra.mxu0 %v7244
    %7780 = vmatprep.subr.bf16.mxu0 %v7233
    %7781 = vmatpush1.bf16.msra.mxu0 %v7232
    %7782 = vmatprep.subr.bf16.mxu0 %v7221
    %7783 = vmatpush1.bf16.msra.mxu0 %v7220
    %7784 = vmatprep.subr.bf16.mxu0 %v7209
    %7785 = vmatpush1.bf16.msra.mxu0 %v7208
    %7786 = vmatprep.subr.bf16.mxu0 %v7197
    %7787 = vmatpush1.bf16.msra.mxu0 %v7196
    %7788 = vmatprep.subr.bf16.mxu0 %v7377
    %7789 = vmatpush2.bf16.msra.mxu0 %v7376
    %7790 = vmatprep.subr.bf16.mxu0 %v7365
    %7791 = vmatpush2.bf16.msra.mxu0 %v7364
    %7792 = vmatprep.subr.bf16.mxu0 %v7353
    %7793 = vmatpush2.bf16.msra.mxu0 %v7352
    %7794 = vmatprep.subr.bf16.mxu0 %v7341
    %7795 = vmatpush2.bf16.msra.mxu0 %v7340
    %7796 = vmatprep.subr.bf16.mxu0 %v7329
    %7797 = vmatpush2.bf16.msra.mxu0 %v7328
    %7798 = vmatprep.subr.bf16.mxu0 %v7317
    %7799 = vmatpush2.bf16.msra.mxu0 %v7316
    %7800 = vmatprep.subr.bf16.mxu0 %v7305
    %7801 = vmatpush2.bf16.msra.mxu0 %v7304
    %7802 = vmatprep.subr.bf16.mxu0 %v7293
    %7803 = vmatpush2.bf16.msra.mxu0 %v7292
    %7804 = vmatprep.mubr.bf16.mxu0 %v5975
    %7805 = vmatmul.mubr.bf16.gmra.mxu0 %v5974
    %v7806 = vpop.f32.mrf.mxu0
    %v7807 = vadd.f32 %v6275, %v7806
    %v7808 = vpop.f32.mrf.mxu0
    %v7809 = vadd.f32 %v6279, %v7808
    %v7810 = vpop.f32.mrf.mxu0
    %v7811 = vadd.f32 %v6275, %v7810
    %v7812 = vpop.f32.mrf.mxu0
    %v7813 = vadd.f32 %v6279, %v7812
    %7814 = vmatprep.mubr.bf16.mxu0 %v5978
    %7815 = vmatmul.mubr.bf16.gmra.mxu0 %v5977
    %v7816 = vpop.f32.mrf.mxu0
    %v7817 = vadd.f32 %v6275, %v7816
    %v7818 = vpop.f32.mrf.mxu0
    %v7819 = vadd.f32 %v6279, %v7818
    %v7820 = vpop.f32.mrf.mxu0
    %v7821 = vadd.f32 %v6275, %v7820
    %v7822 = vpop.f32.mrf.mxu0
    %v7823 = vadd.f32 %v6279, %v7822
    %7824 = vdwg.mxu0
    %7825 = vmatprep.subr.bf16.mxu0 %v7473
    %7826 = vmatpush1.bf16.msra.mxu0 %v7472
    %7827 = vmatprep.subr.bf16.mxu0 %v7461
    %7828 = vmatpush1.bf16.msra.mxu0 %v7460
    %7829 = vmatprep.subr.bf16.mxu0 %v7449
    %7830 = vmatpush1.bf16.msra.mxu0 %v7448
    %7831 = vmatprep.subr.bf16.mxu0 %v7437
    %7832 = vmatpush1.bf16.msra.mxu0 %v7436
    %7833 = vmatprep.subr.bf16.mxu0 %v7425
    %7834 = vmatpush1.bf16.msra.mxu0 %v7424
    %7835 = vmatprep.subr.bf16.mxu0 %v7413
    %7836 = vmatpush1.bf16.msra.mxu0 %v7412
    %7837 = vmatprep.subr.bf16.mxu0 %v7401
    %7838 = vmatpush1.bf16.msra.mxu0 %v7400
    %7839 = vmatprep.subr.bf16.mxu0 %v7389
    %7840 = vmatpush1.bf16.msra.mxu0 %v7388
    %7841 = vmatprep.subr.bf16.mxu0 0
    %7842 = vmatpush2.bf16.msra.mxu0 0
    %7843 = vmatprep.subr.bf16.mxu0 0
    %7844 = vmatpush2.bf16.msra.mxu0 0
    %7845 = vmatprep.subr.bf16.mxu0 0
    %7846 = vmatpush2.bf16.msra.mxu0 0
    %7847 = vmatprep.subr.bf16.mxu0 0
    %7848 = vmatpush2.bf16.msra.mxu0 0
    %7849 = vmatprep.subr.bf16.mxu0 0
    %7850 = vmatpush2.bf16.msra.mxu0 0
    %7851 = vmatprep.subr.bf16.mxu0 0
    %7852 = vmatpush2.bf16.msra.mxu0 0
    %7853 = vmatprep.subr.bf16.mxu0 0
    %7854 = vmatpush2.bf16.msra.mxu0 0
    %7855 = vmatprep.subr.bf16.mxu0 0
    %7856 = vmatpush2.bf16.msra.mxu0 0
    %7857 = vmatprep.mubr.bf16.mxu0 0
    %7858 = vmatmul.mubr.bf16.gmra.mxu0 %v5976
    %v7859 = vpop.f32.mrf.mxu0
    %v7860 = vadd.f32 %v7807, %v7859
    %v7861 = vpop.f32.mrf.mxu0
    %v7862 = vadd.f32 %v7809, %v7861
    %v7863 = vpop.f32.mrf.mxu0
    %v7864 = vadd.f32 %v7811, %v7863
    %v7865 = vpop.f32.mrf.mxu0
    %v7866 = vadd.f32 %v7813, %v7865
    %7867 = vmatprep.mubr.bf16.mxu0 0
    %7868 = vmatmul.mubr.bf16.gmra.mxu0 %v5979
    %v7869 = vpop.f32.mrf.mxu0
    %v7870 = vadd.f32 %v7817, %v7869
    %v7871 = vpop.f32.mrf.mxu0
    %v7872 = vadd.f32 %v7819, %v7871
    %v7873 = vpop.f32.mrf.mxu0
    %v7874 = vadd.f32 %v7821, %v7873
    %v7875 = vpop.f32.mrf.mxu0
    %v7876 = vadd.f32 %v7823, %v7875
    %7877 = vdwg.mxu0
    %7878 = vmatprep.subr.bf16.mxu0 %v7283
    %7879 = vmatpush1.bf16.msra.mxu0 %v7282
    %7880 = vmatprep.subr.bf16.mxu0 %v7271
    %7881 = vmatpush1.bf16.msra.mxu0 %v7270
    %7882 = vmatprep.subr.bf16.mxu0 %v7259
    %7883 = vmatpush1.bf16.msra.mxu0 %v7258
    %7884 = vmatprep.subr.bf16.mxu0 %v7247
    %7885 = vmatpush1.bf16.msra.mxu0 %v7246
    %7886 = vmatprep.subr.bf16.mxu0 %v7235
    %7887 = vmatpush1.bf16.msra.mxu0 %v7234
    %7888 = vmatprep.subr.bf16.mxu0 %v7223
    %7889 = vmatpush1.bf16.msra.mxu0 %v7222
    %7890 = vmatprep.subr.bf16.mxu0 %v7211
    %7891 = vmatpush1.bf16.msra.mxu0 %v7210
    %7892 = vmatprep.subr.bf16.mxu0 %v7199
    %7893 = vmatpush1.bf16.msra.mxu0 %v7198
    %7894 = vmatprep.subr.bf16.mxu0 %v7379
    %7895 = vmatpush2.bf16.msra.mxu0 %v7378
    %7896 = vmatprep.subr.bf16.mxu0 %v7367
    %7897 = vmatpush2.bf16.msra.mxu0 %v7366
    %7898 = vmatprep.subr.bf16.mxu0 %v7355
    %7899 = vmatpush2.bf16.msra.mxu0 %v7354
    %7900 = vmatprep.subr.bf16.mxu0 %v7343
    %7901 = vmatpush2.bf16.msra.mxu0 %v7342
    %7902 = vmatprep.subr.bf16.mxu0 %v7331
    %7903 = vmatpush2.bf16.msra.mxu0 %v7330
    %7904 = vmatprep.subr.bf16.mxu0 %v7319
    %7905 = vmatpush2.bf16.msra.mxu0 %v7318
    %7906 = vmatprep.subr.bf16.mxu0 %v7307
    %7907 = vmatpush2.bf16.msra.mxu0 %v7306
    %7908 = vmatprep.subr.bf16.mxu0 %v7295
    %7909 = vmatpush2.bf16.msra.mxu0 %v7294
    %7910 = vmatprep.mubr.bf16.mxu0 %v5975
    %7911 = vmatmul.mubr.bf16.gmra.mxu0 %v5974
    %v7912 = vpop.f32.mrf.mxu0
    %v7913 = vadd.f32 %v6283, %v7912
    %v7914 = vpop.f32.mrf.mxu0
    %v7915 = vadd.f32 %v6287, %v7914
    %v7916 = vpop.f32.mrf.mxu0
    %v7917 = vadd.f32 %v6283, %v7916
    %v7918 = vpop.f32.mrf.mxu0
    %v7919 = vadd.f32 %v6287, %v7918
    %7920 = vmatprep.mubr.bf16.mxu0 %v5978
    %7921 = vmatmul.mubr.bf16.gmra.mxu0 %v5977
    %v7922 = vpop.f32.mrf.mxu0
    %v7923 = vadd.f32 %v6283, %v7922
    %v7924 = vpop.f32.mrf.mxu0
    %v7925 = vadd.f32 %v6287, %v7924
    %v7926 = vpop.f32.mrf.mxu0
    %v7927 = vadd.f32 %v6283, %v7926
    %v7928 = vpop.f32.mrf.mxu0
    %v7929 = vadd.f32 %v6287, %v7928
    %7930 = vdwg.mxu0
    %7931 = vmatprep.subr.bf16.mxu0 %v7475
    %7932 = vmatpush1.bf16.msra.mxu0 %v7474
    %7933 = vmatprep.subr.bf16.mxu0 %v7463
    %7934 = vmatpush1.bf16.msra.mxu0 %v7462
    %7935 = vmatprep.subr.bf16.mxu0 %v7451
    %7936 = vmatpush1.bf16.msra.mxu0 %v7450
    %7937 = vmatprep.subr.bf16.mxu0 %v7439
    %7938 = vmatpush1.bf16.msra.mxu0 %v7438
    %7939 = vmatprep.subr.bf16.mxu0 %v7427
    %7940 = vmatpush1.bf16.msra.mxu0 %v7426
    %7941 = vmatprep.subr.bf16.mxu0 %v7415
    %7942 = vmatpush1.bf16.msra.mxu0 %v7414
    %7943 = vmatprep.subr.bf16.mxu0 %v7403
    %7944 = vmatpush1.bf16.msra.mxu0 %v7402
    %7945 = vmatprep.subr.bf16.mxu0 %v7391
    %7946 = vmatpush1.bf16.msra.mxu0 %v7390
    %7947 = vmatprep.subr.bf16.mxu0 0
    %7948 = vmatpush2.bf16.msra.mxu0 0
    %7949 = vmatprep.subr.bf16.mxu0 0
    %7950 = vmatpush2.bf16.msra.mxu0 0
    %7951 = vmatprep.subr.bf16.mxu0 0
    %7952 = vmatpush2.bf16.msra.mxu0 0
    %7953 = vmatprep.subr.bf16.mxu0 0
    %7954 = vmatpush2.bf16.msra.mxu0 0
    %7955 = vmatprep.subr.bf16.mxu0 0
    %7956 = vmatpush2.bf16.msra.mxu0 0
    %7957 = vmatprep.subr.bf16.mxu0 0
    %7958 = vmatpush2.bf16.msra.mxu0 0
    %7959 = vmatprep.subr.bf16.mxu0 0
    %7960 = vmatpush2.bf16.msra.mxu0 0
    %7961 = vmatprep.subr.bf16.mxu0 0
    %7962 = vmatpush2.bf16.msra.mxu0 0
    %7963 = vmatprep.mubr.bf16.mxu0 0
    %7964 = vmatmul.mubr.bf16.gmra.mxu0 %v5976
    %v7965 = vpop.f32.mrf.mxu0
    %v7966 = vadd.f32 %v7913, %v7965
    %v7967 = vpop.f32.mrf.mxu0
    %v7968 = vadd.f32 %v7915, %v7967
    %v7969 = vpop.f32.mrf.mxu0
    %v7970 = vadd.f32 %v7917, %v7969
    %v7971 = vpop.f32.mrf.mxu0
    %v7972 = vadd.f32 %v7919, %v7971
    %7973 = vmatprep.mubr.bf16.mxu0 0
    %7974 = vmatmul.mubr.bf16.gmra.mxu0 %v5979
    %v7975 = vpop.f32.mrf.mxu0
    %v7976 = vadd.f32 %v7923, %v7975
    %v7977 = vpop.f32.mrf.mxu0
    %v7978 = vadd.f32 %v7925, %v7977
    %v7979 = vpop.f32.mrf.mxu0
    %v7980 = vadd.f32 %v7927, %v7979
    %v7981 = vpop.f32.mrf.mxu0
    %v7982 = vadd.f32 %v7929, %v7981
    %7983 = vdwg.mxu0
    %7984 = vmatprep.subr.bf16.mxu0 %v7285
    %7985 = vmatpush1.bf16.msra.mxu0 %v7284
    %7986 = vmatprep.subr.bf16.mxu0 %v7273
    %7987 = vmatpush1.bf16.msra.mxu0 %v7272
    %7988 = vmatprep.subr.bf16.mxu0 %v7261
    %7989 = vmatpush1.bf16.msra.mxu0 %v7260
    %7990 = vmatprep.subr.bf16.mxu0 %v7249
    %7991 = vmatpush1.bf16.msra.mxu0 %v7248
    %7992 = vmatprep.subr.bf16.mxu0 %v7237
    %7993 = vmatpush1.bf16.msra.mxu0 %v7236
    %7994 = vmatprep.subr.bf16.mxu0 %v7225
    %7995 = vmatpush1.bf16.msra.mxu0 %v7224
    %7996 = vmatprep.subr.bf16.mxu0 %v7213
    %7997 = vmatpush1.bf16.msra.mxu0 %v7212
    %7998 = vmatprep.subr.bf16.mxu0 %v7201
    %7999 = vmatpush1.bf16.msra.mxu0 %v7200
    %8000 = vmatprep.subr.bf16.mxu0 %v7381
    %8001 = vmatpush2.bf16.msra.mxu0 %v7380
    %8002 = vmatprep.subr.bf16.mxu0 %v7369
    %8003 = vmatpush2.bf16.msra.mxu0 %v7368
    %8004 = vmatprep.subr.bf16.mxu0 %v7357
    %8005 = vmatpush2.bf16.msra.mxu0 %v7356
    %8006 = vmatprep.subr.bf16.mxu0 %v7345
    %8007 = vmatpush2.bf16.msra.mxu0 %v7344
    %8008 = vmatprep.subr.bf16.mxu0 %v7333
    %8009 = vmatpush2.bf16.msra.mxu0 %v7332
    %8010 = vmatprep.subr.bf16.mxu0 %v7321
    %8011 = vmatpush2.bf16.msra.mxu0 %v7320
    %8012 = vmatprep.subr.bf16.mxu0 %v7309
    %8013 = vmatpush2.bf16.msra.mxu0 %v7308
    %8014 = vmatprep.subr.bf16.mxu0 %v7297
    %8015 = vmatpush2.bf16.msra.mxu0 %v7296
    %8016 = vmatprep.mubr.bf16.mxu0 %v5975
    %8017 = vmatmul.mubr.bf16.gmra.mxu0 %v5974
    %v8018 = vpop.f32.mrf.mxu0
    %v8019 = vadd.f32 %v6291, %v8018
    %v8020 = vpop.f32.mrf.mxu0
    %v8021 = vadd.f32 %v6295, %v8020
    %v8022 = vpop.f32.mrf.mxu0
    %v8023 = vadd.f32 %v6291, %v8022
    %v8024 = vpop.f32.mrf.mxu0
    %v8025 = vadd.f32 %v6295, %v8024
    %8026 = vmatprep.mubr.bf16.mxu0 %v5978
    %8027 = vmatmul.mubr.bf16.gmra.mxu0 %v5977
    %v8028 = vpop.f32.mrf.mxu0
    %v8029 = vadd.f32 %v6291, %v8028
    %v8030 = vpop.f32.mrf.mxu0
    %v8031 = vadd.f32 %v6295, %v8030
    %v8032 = vpop.f32.mrf.mxu0
    %v8033 = vadd.f32 %v6291, %v8032
    %v8034 = vpop.f32.mrf.mxu0
    %v8035 = vadd.f32 %v6295, %v8034
    %8036 = vdwg.mxu0
    %8037 = vmatprep.subr.bf16.mxu0 %v7477
    %8038 = vmatpush1.bf16.msra.mxu0 %v7476
    %8039 = vmatprep.subr.bf16.mxu0 %v7465
    %8040 = vmatpush1.bf16.msra.mxu0 %v7464
    %8041 = vmatprep.subr.bf16.mxu0 %v7453
    %8042 = vmatpush1.bf16.msra.mxu0 %v7452
    %8043 = vmatprep.subr.bf16.mxu0 %v7441
    %8044 = vmatpush1.bf16.msra.mxu0 %v7440
    %8045 = vmatprep.subr.bf16.mxu0 %v7429
    %8046 = vmatpush1.bf16.msra.mxu0 %v7428
    %8047 = vmatprep.subr.bf16.mxu0 %v7417
    %8048 = vmatpush1.bf16.msra.mxu0 %v7416
    %8049 = vmatprep.subr.bf16.mxu0 %v7405
    %8050 = vmatpush1.bf16.msra.mxu0 %v7404
    %8051 = vmatprep.subr.bf16.mxu0 %v7393
    %8052 = vmatpush1.bf16.msra.mxu0 %v7392
    %8053 = vmatprep.subr.bf16.mxu0 0
    %8054 = vmatpush2.bf16.msra.mxu0 0
    %8055 = vmatprep.subr.bf16.mxu0 0
    %8056 = vmatpush2.bf16.msra.mxu0 0
    %8057 = vmatprep.subr.bf16.mxu0 0
    %8058 = vmatpush2.bf16.msra.mxu0 0
    %8059 = vmatprep.subr.bf16.mxu0 0
    %8060 = vmatpush2.bf16.msra.mxu0 0
    %8061 = vmatprep.subr.bf16.mxu0 0
    %8062 = vmatpush2.bf16.msra.mxu0 0
    %8063 = vmatprep.subr.bf16.mxu0 0
    %8064 = vmatpush2.bf16.msra.mxu0 0
    %8065 = vmatprep.subr.bf16.mxu0 0
    %8066 = vmatpush2.bf16.msra.mxu0 0
    %8067 = vmatprep.subr.bf16.mxu0 0
    %8068 = vmatpush2.bf16.msra.mxu0 0
    %8069 = vmatprep.mubr.bf16.mxu0 0
    %8070 = vmatmul.mubr.bf16.gmra.mxu0 %v5976
    %v8071 = vpop.f32.mrf.mxu0
    %v8072 = vadd.f32 %v8019, %v8071
    %v8073 = vpop.f32.mrf.mxu0
    %v8074 = vadd.f32 %v8021, %v8073
    %v8075 = vpop.f32.mrf.mxu0
    %v8076 = vadd.f32 %v8023, %v8075
    %v8077 = vpop.f32.mrf.mxu0
    %v8078 = vadd.f32 %v8025, %v8077
    %8079 = vmatprep.mubr.bf16.mxu0 0
    %8080 = vmatmul.mubr.bf16.gmra.mxu0 %v5979
    %v8081 = vpop.f32.mrf.mxu0
    %v8082 = vadd.f32 %v8029, %v8081
    %v8083 = vpop.f32.mrf.mxu0
    %v8084 = vadd.f32 %v8031, %v8083
    %v8085 = vpop.f32.mrf.mxu0
    %v8086 = vadd.f32 %v8033, %v8085
    %v8087 = vpop.f32.mrf.mxu0
    %v8088 = vadd.f32 %v8035, %v8087
    %8089 = vdwg.mxu0
    %8090 = vmatprep.subr.bf16.mxu0 %v7287
    %8091 = vmatpush1.bf16.msra.mxu0 %v7286
    %8092 = vmatprep.subr.bf16.mxu0 %v7275
    %8093 = vmatpush1.bf16.msra.mxu0 %v7274
    %8094 = vmatprep.subr.bf16.mxu0 %v7263
    %8095 = vmatpush1.bf16.msra.mxu0 %v7262
    %8096 = vmatprep.subr.bf16.mxu0 %v7251
    %8097 = vmatpush1.bf16.msra.mxu0 %v7250
    %8098 = vmatprep.subr.bf16.mxu0 %v7239
    %8099 = vmatpush1.bf16.msra.mxu0 %v7238
    %8100 = vmatprep.subr.bf16.mxu0 %v7227
    %8101 = vmatpush1.bf16.msra.mxu0 %v7226
    %8102 = vmatprep.subr.bf16.mxu0 %v7215
    %8103 = vmatpush1.bf16.msra.mxu0 %v7214
    %8104 = vmatprep.subr.bf16.mxu0 %v7203
    %8105 = vmatpush1.bf16.msra.mxu0 %v7202
    %8106 = vmatprep.subr.bf16.mxu0 %v7383
    %8107 = vmatpush2.bf16.msra.mxu0 %v7382
    %8108 = vmatprep.subr.bf16.mxu0 %v7371
    %8109 = vmatpush2.bf16.msra.mxu0 %v7370
    %8110 = vmatprep.subr.bf16.mxu0 %v7359
    %8111 = vmatpush2.bf16.msra.mxu0 %v7358
    %8112 = vmatprep.subr.bf16.mxu0 %v7347
    %8113 = vmatpush2.bf16.msra.mxu0 %v7346
    %8114 = vmatprep.subr.bf16.mxu0 %v7335
    %8115 = vmatpush2.bf16.msra.mxu0 %v7334
    %8116 = vmatprep.subr.bf16.mxu0 %v7323
    %8117 = vmatpush2.bf16.msra.mxu0 %v7322
    %8118 = vmatprep.subr.bf16.mxu0 %v7311
    %8119 = vmatpush2.bf16.msra.mxu0 %v7310
    %8120 = vmatprep.subr.bf16.mxu0 %v7299
    %8121 = vmatpush2.bf16.msra.mxu0 %v7298
    %8122 = vmatprep.mubr.bf16.mxu0 %v5975
    %8123 = vmatmul.mubr.bf16.gmra.mxu0 %v5974
    %v8124 = vpop.f32.mrf.mxu0
    %v8125 = vadd.f32 %v6299, %v8124
    %v8126 = vpop.f32.mrf.mxu0
    %v8127 = vadd.f32 %v6303, %v8126
    %v8128 = vpop.f32.mrf.mxu0
    %v8129 = vadd.f32 %v6299, %v8128
    %v8130 = vpop.f32.mrf.mxu0
    %v8131 = vadd.f32 %v6303, %v8130
    %8132 = vmatprep.mubr.bf16.mxu0 %v5978
    %8133 = vmatmul.mubr.bf16.gmra.mxu0 %v5977
    %v8134 = vpop.f32.mrf.mxu0
    %v8135 = vadd.f32 %v6299, %v8134
    %v8136 = vpop.f32.mrf.mxu0
    %v8137 = vadd.f32 %v6303, %v8136
    %v8138 = vpop.f32.mrf.mxu0
    %v8139 = vadd.f32 %v6299, %v8138
    %v8140 = vpop.f32.mrf.mxu0
    %v8141 = vadd.f32 %v6303, %v8140
    %8142 = vdwg.mxu0
    %8143 = vmatprep.subr.bf16.mxu0 %v7479
    %8144 = vmatpush1.bf16.msra.mxu0 %v7478
    %8145 = vmatprep.subr.bf16.mxu0 %v7467
    %8146 = vmatpush1.bf16.msra.mxu0 %v7466
    %8147 = vmatprep.subr.bf16.mxu0 %v7455
    %8148 = vmatpush1.bf16.msra.mxu0 %v7454
    %8149 = vmatprep.subr.bf16.mxu0 %v7443
    %8150 = vmatpush1.bf16.msra.mxu0 %v7442
    %8151 = vmatprep.subr.bf16.mxu0 %v7431
    %8152 = vmatpush1.bf16.msra.mxu0 %v7430
    %8153 = vmatprep.subr.bf16.mxu0 %v7419
    %8154 = vmatpush1.bf16.msra.mxu0 %v7418
    %8155 = vmatprep.subr.bf16.mxu0 %v7407
    %8156 = vmatpush1.bf16.msra.mxu0 %v7406
    %8157 = vmatprep.subr.bf16.mxu0 %v7395
    %8158 = vmatpush1.bf16.msra.mxu0 %v7394
    %8159 = vmatprep.subr.bf16.mxu0 0
    %8160 = vmatpush2.bf16.msra.mxu0 0
    %8161 = vmatprep.subr.bf16.mxu0 0
    %8162 = vmatpush2.bf16.msra.mxu0 0
    %8163 = vmatprep.subr.bf16.mxu0 0
    %8164 = vmatpush2.bf16.msra.mxu0 0
    %8165 = vmatprep.subr.bf16.mxu0 0
    %8166 = vmatpush2.bf16.msra.mxu0 0
    %8167 = vmatprep.subr.bf16.mxu0 0
    %8168 = vmatpush2.bf16.msra.mxu0 0
    %8169 = vmatprep.subr.bf16.mxu0 0
    %8170 = vmatpush2.bf16.msra.mxu0 0
    %8171 = vmatprep.subr.bf16.mxu0 0
    %8172 = vmatpush2.bf16.msra.mxu0 0
    %8173 = vmatprep.subr.bf16.mxu0 0
    %8174 = vmatpush2.bf16.msra.mxu0 0
    %8175 = vmatprep.mubr.bf16.mxu0 0
    %8176 = vmatmul.mubr.bf16.gmra.mxu0 %v5976
    %v8177 = vpop.f32.mrf.mxu0
    %v8178 = vadd.f32 %v8125, %v8177
    %v8179 = vpop.f32.mrf.mxu0
    %v8180 = vadd.f32 %v8127, %v8179
    %v8181 = vpop.f32.mrf.mxu0
    %v8182 = vadd.f32 %v8129, %v8181
    %v8183 = vpop.f32.mrf.mxu0
    %v8184 = vadd.f32 %v8131, %v8183
    %8185 = vmatprep.mubr.bf16.mxu0 0
    %8186 = vmatmul.mubr.bf16.gmra.mxu0 %v5979
    %v8187 = vpop.f32.mrf.mxu0
    %v8188 = vadd.f32 %v8135, %v8187
    %v8189 = vpop.f32.mrf.mxu0
    %v8190 = vadd.f32 %v8137, %v8189
    %v8191 = vpop.f32.mrf.mxu0
    %v8192 = vadd.f32 %v8139, %v8191
    %v8193 = vpop.f32.mrf.mxu0
    %v8194 = vadd.f32 %v8141, %v8193
    %8195 = vdwg.mxu0
    %8196 = vmatprep.subr.bf16.mxu0 %v7289
    %8197 = vmatpush1.bf16.msra.mxu0 %v7288
    %8198 = vmatprep.subr.bf16.mxu0 %v7277
    %8199 = vmatpush1.bf16.msra.mxu0 %v7276
    %8200 = vmatprep.subr.bf16.mxu0 %v7265
    %8201 = vmatpush1.bf16.msra.mxu0 %v7264
    %8202 = vmatprep.subr.bf16.mxu0 %v7253
    %8203 = vmatpush1.bf16.msra.mxu0 %v7252
    %8204 = vmatprep.subr.bf16.mxu0 %v7241
    %8205 = vmatpush1.bf16.msra.mxu0 %v7240
    %8206 = vmatprep.subr.bf16.mxu0 %v7229
    %8207 = vmatpush1.bf16.msra.mxu0 %v7228
    %8208 = vmatprep.subr.bf16.mxu0 %v7217
    %8209 = vmatpush1.bf16.msra.mxu0 %v7216
    %8210 = vmatprep.subr.bf16.mxu0 %v7205
    %8211 = vmatpush1.bf16.msra.mxu0 %v7204
    %8212 = vmatprep.subr.bf16.mxu0 %v7385
    %8213 = vmatpush2.bf16.msra.mxu0 %v7384
    %8214 = vmatprep.subr.bf16.mxu0 %v7373
    %8215 = vmatpush2.bf16.msra.mxu0 %v7372
    %8216 = vmatprep.subr.bf16.mxu0 %v7361
    %8217 = vmatpush2.bf16.msra.mxu0 %v7360
    %8218 = vmatprep.subr.bf16.mxu0 %v7349
    %8219 = vmatpush2.bf16.msra.mxu0 %v7348
    %8220 = vmatprep.subr.bf16.mxu0 %v7337
    %8221 = vmatpush2.bf16.msra.mxu0 %v7336
    %8222 = vmatprep.subr.bf16.mxu0 %v7325
    %8223 = vmatpush2.bf16.msra.mxu0 %v7324
    %8224 = vmatprep.subr.bf16.mxu0 %v7313
    %8225 = vmatpush2.bf16.msra.mxu0 %v7312
    %8226 = vmatprep.subr.bf16.mxu0 %v7301
    %8227 = vmatpush2.bf16.msra.mxu0 %v7300
    %8228 = vmatprep.mubr.bf16.mxu0 %v5975
    %8229 = vmatmul.mubr.bf16.gmra.mxu0 %v5974
    %v8230 = vpop.f32.mrf.mxu0
    %v8231 = vadd.f32 %v6307, %v8230
    %v8232 = vpop.f32.mrf.mxu0
    %v8233 = vadd.f32 %v6311, %v8232
    %v8234 = vpop.f32.mrf.mxu0
    %v8235 = vadd.f32 %v6307, %v8234
    %v8236 = vpop.f32.mrf.mxu0
    %v8237 = vadd.f32 %v6311, %v8236
    %8238 = vmatprep.mubr.bf16.mxu0 %v5978
    %8239 = vmatmul.mubr.bf16.gmra.mxu0 %v5977
    %v8240 = vpop.f32.mrf.mxu0
    %v8241 = vadd.f32 %v6307, %v8240
    %v8242 = vpop.f32.mrf.mxu0
    %v8243 = vadd.f32 %v6311, %v8242
    %v8244 = vpop.f32.mrf.mxu0
    %v8245 = vadd.f32 %v6307, %v8244
    %v8246 = vpop.f32.mrf.mxu0
    %v8247 = vadd.f32 %v6311, %v8246
    %8248 = vdwg.mxu0
    %8249 = vmatprep.subr.bf16.mxu0 %v7481
    %8250 = vmatpush1.bf16.msra.mxu0 %v7480
    %8251 = vmatprep.subr.bf16.mxu0 %v7469
    %8252 = vmatpush1.bf16.msra.mxu0 %v7468
    %8253 = vmatprep.subr.bf16.mxu0 %v7457
    %8254 = vmatpush1.bf16.msra.mxu0 %v7456
    %8255 = vmatprep.subr.bf16.mxu0 %v7445
    %8256 = vmatpush1.bf16.msra.mxu0 %v7444
    %8257 = vmatprep.subr.bf16.mxu0 %v7433
    %8258 = vmatpush1.bf16.msra.mxu0 %v7432
    %8259 = vmatprep.subr.bf16.mxu0 %v7421
    %8260 = vmatpush1.bf16.msra.mxu0 %v7420
    %8261 = vmatprep.subr.bf16.mxu0 %v7409
    %8262 = vmatpush1.bf16.msra.mxu0 %v7408
    %8263 = vmatprep.subr.bf16.mxu0 %v7397
    %8264 = vmatpush1.bf16.msra.mxu0 %v7396
    %8265 = vmatprep.subr.bf16.mxu0 0
    %8266 = vmatpush2.bf16.msra.mxu0 0
    %8267 = vmatprep.subr.bf16.mxu0 0
    %8268 = vmatpush2.bf16.msra.mxu0 0
    %8269 = vmatprep.subr.bf16.mxu0 0
    %8270 = vmatpush2.bf16.msra.mxu0 0
    %8271 = vmatprep.subr.bf16.mxu0 0
    %8272 = vmatpush2.bf16.msra.mxu0 0
    %8273 = vmatprep.subr.bf16.mxu0 0
    %8274 = vmatpush2.bf16.msra.mxu0 0
    %8275 = vmatprep.subr.bf16.mxu0 0
    %8276 = vmatpush2.bf16.msra.mxu0 0
    %8277 = vmatprep.subr.bf16.mxu0 0
    %8278 = vmatpush2.bf16.msra.mxu0 0
    %8279 = vmatprep.subr.bf16.mxu0 0
    %8280 = vmatpush2.bf16.msra.mxu0 0
    %8281 = vmatprep.mubr.bf16.mxu0 0
    %8282 = vmatmul.mubr.bf16.gmra.mxu0 %v5976
    %v8283 = vpop.f32.mrf.mxu0
    %v8284 = vadd.f32 %v8231, %v8283
    %v8285 = vpop.f32.mrf.mxu0
    %v8286 = vadd.f32 %v8233, %v8285
    %v8287 = vpop.f32.mrf.mxu0
    %v8288 = vadd.f32 %v8235, %v8287
    %v8289 = vpop.f32.mrf.mxu0
    %v8290 = vadd.f32 %v8237, %v8289
    %8291 = vmatprep.mubr.bf16.mxu0 0
    %8292 = vmatmul.mubr.bf16.gmra.mxu0 %v5979
    %v8293 = vpop.f32.mrf.mxu0
    %v8294 = vadd.f32 %v8241, %v8293
    %v8295 = vpop.f32.mrf.mxu0
    %v8296 = vadd.f32 %v8243, %v8295
    %v8297 = vpop.f32.mrf.mxu0
    %v8298 = vadd.f32 %v8245, %v8297
    %v8299 = vpop.f32.mrf.mxu0
    %v8300 = vadd.f32 %v8247, %v8299
    %8301 = vdwg.mxu0
    %8302 = vmatprep.subr.bf16.mxu0 %v7291
    %8303 = vmatpush1.bf16.msra.mxu0 %v7290
    %8304 = vmatprep.subr.bf16.mxu0 %v7279
    %8305 = vmatpush1.bf16.msra.mxu0 %v7278
    %8306 = vmatprep.subr.bf16.mxu0 %v7267
    %8307 = vmatpush1.bf16.msra.mxu0 %v7266
    %8308 = vmatprep.subr.bf16.mxu0 %v7255
    %8309 = vmatpush1.bf16.msra.mxu0 %v7254
    %8310 = vmatprep.subr.bf16.mxu0 %v7243
    %8311 = vmatpush1.bf16.msra.mxu0 %v7242
    %8312 = vmatprep.subr.bf16.mxu0 %v7231
    %8313 = vmatpush1.bf16.msra.mxu0 %v7230
    %8314 = vmatprep.subr.bf16.mxu0 %v7219
    %8315 = vmatpush1.bf16.msra.mxu0 %v7218
    %8316 = vmatprep.subr.bf16.mxu0 %v7207
    %8317 = vmatpush1.bf16.msra.mxu0 %v7206
    %8318 = vmatprep.subr.bf16.mxu0 %v7387
    %8319 = vmatpush2.bf16.msra.mxu0 %v7386
    %8320 = vmatprep.subr.bf16.mxu0 %v7375
    %8321 = vmatpush2.bf16.msra.mxu0 %v7374
    %8322 = vmatprep.subr.bf16.mxu0 %v7363
    %8323 = vmatpush2.bf16.msra.mxu0 %v7362
    %8324 = vmatprep.subr.bf16.mxu0 %v7351
    %8325 = vmatpush2.bf16.msra.mxu0 %v7350
    %8326 = vmatprep.subr.bf16.mxu0 %v7339
    %8327 = vmatpush2.bf16.msra.mxu0 %v7338
    %8328 = vmatprep.subr.bf16.mxu0 %v7327
    %8329 = vmatpush2.bf16.msra.mxu0 %v7326
    %8330 = vmatprep.subr.bf16.mxu0 %v7315
    %8331 = vmatpush2.bf16.msra.mxu0 %v7314
    %8332 = vmatprep.subr.bf16.mxu0 %v7303
    %8333 = vmatpush2.bf16.msra.mxu0 %v7302
    %8334 = vmatprep.mubr.bf16.mxu0 %v5975
    %8335 = vmatmul.mubr.bf16.gmra.mxu0 %v5974
    %v8336 = vpop.f32.mrf.mxu0
    %v8337 = vadd.f32 %v6315, %v8336
    %v8338 = vpop.f32.mrf.mxu0
    %v8339 = vadd.f32 %v6319, %v8338
    %v8340 = vpop.f32.mrf.mxu0
    %v8341 = vadd.f32 %v6315, %v8340
    %v8342 = vpop.f32.mrf.mxu0
    %v8343 = vadd.f32 %v6319, %v8342
    %8344 = vmatprep.mubr.bf16.mxu0 %v5978
    %8345 = vmatmul.mubr.bf16.gmra.mxu0 %v5977
    %v8346 = vpop.f32.mrf.mxu0
    %v8347 = vadd.f32 %v6315, %v8346
    %v8348 = vpop.f32.mrf.mxu0
    %v8349 = vadd.f32 %v6319, %v8348
    %v8350 = vpop.f32.mrf.mxu0
    %v8351 = vadd.f32 %v6315, %v8350
    %v8352 = vpop.f32.mrf.mxu0
    %v8353 = vadd.f32 %v6319, %v8352
    %8354 = vdwg.mxu0
    %8355 = vmatprep.subr.bf16.mxu0 %v7483
    %8356 = vmatpush1.bf16.msra.mxu0 %v7482
    %8357 = vmatprep.subr.bf16.mxu0 %v7471
    %8358 = vmatpush1.bf16.msra.mxu0 %v7470
    %8359 = vmatprep.subr.bf16.mxu0 %v7459
    %8360 = vmatpush1.bf16.msra.mxu0 %v7458
    %8361 = vmatprep.subr.bf16.mxu0 %v7447
    %8362 = vmatpush1.bf16.msra.mxu0 %v7446
    %8363 = vmatprep.subr.bf16.mxu0 %v7435
    %8364 = vmatpush1.bf16.msra.mxu0 %v7434
    %8365 = vmatprep.subr.bf16.mxu0 %v7423
    %8366 = vmatpush1.bf16.msra.mxu0 %v7422
    %8367 = vmatprep.subr.bf16.mxu0 %v7411
    %8368 = vmatpush1.bf16.msra.mxu0 %v7410
    %8369 = vmatprep.subr.bf16.mxu0 %v7399
    %8370 = vmatpush1.bf16.msra.mxu0 %v7398
    %8371 = vmatprep.subr.bf16.mxu0 0
    %8372 = vmatpush2.bf16.msra.mxu0 0
    %8373 = vmatprep.subr.bf16.mxu0 0
    %8374 = vmatpush2.bf16.msra.mxu0 0
    %8375 = vmatprep.subr.bf16.mxu0 0
    %8376 = vmatpush2.bf16.msra.mxu0 0
    %8377 = vmatprep.subr.bf16.mxu0 0
    %8378 = vmatpush2.bf16.msra.mxu0 0
    %8379 = vmatprep.subr.bf16.mxu0 0
    %8380 = vmatpush2.bf16.msra.mxu0 0
    %8381 = vmatprep.subr.bf16.mxu0 0
    %8382 = vmatpush2.bf16.msra.mxu0 0
    %8383 = vmatprep.subr.bf16.mxu0 0
    %8384 = vmatpush2.bf16.msra.mxu0 0
    %8385 = vmatprep.subr.bf16.mxu0 0
    %8386 = vmatpush2.bf16.msra.mxu0 0
    %8387 = vmatprep.mubr.bf16.mxu0 0
    %8388 = vmatmul.mubr.bf16.gmra.mxu0 %v5976
    %v8389 = vpop.f32.mrf.mxu0
    %v8390 = vadd.f32 %v8337, %v8389
    %v8391 = vpop.f32.mrf.mxu0
    %v8392 = vadd.f32 %v8339, %v8391
    %v8393 = vpop.f32.mrf.mxu0
    %v8394 = vadd.f32 %v8341, %v8393
    %v8395 = vpop.f32.mrf.mxu0
    %v8396 = vadd.f32 %v8343, %v8395
    %8397 = vmatprep.mubr.bf16.mxu0 0
    %8398 = vmatmul.mubr.bf16.gmra.mxu0 %v5979
    %v8399 = vpop.f32.mrf.mxu0
    %v8400 = vadd.f32 %v8347, %v8399
    %v8401 = vpop.f32.mrf.mxu0
    %v8402 = vadd.f32 %v8349, %v8401
    %v8403 = vpop.f32.mrf.mxu0
    %v8404 = vadd.f32 %v8351, %v8403
    %v8405 = vpop.f32.mrf.mxu0
    %v8406 = vadd.f32 %v8353, %v8405
    %8407 = vdwg.mxu0
    %v8408 = vmax.f32 %v7860, 0.0
    %v8409 = vmax.f32 %v7862, 0.0
    %v8410 = vmax.f32 %v7966, 0.0
    %v8411 = vmax.f32 %v7968, 0.0
    %v8412 = vmax.f32 %v8072, 0.0
    %v8413 = vmax.f32 %v8074, 0.0
    %v8414 = vmax.f32 %v8178, 0.0
    %v8415 = vmax.f32 %v8180, 0.0
    %v8416 = vmax.f32 %v8284, 0.0
    %v8417 = vmax.f32 %v8286, 0.0
    %v8418 = vmax.f32 %v8390, 0.0
    %v8419 = vmax.f32 %v8392, 0.0
    %v8420 = vmax.f32 %v7864, 0.0
    %v8421 = vmax.f32 %v7866, 0.0
    %v8422 = vmax.f32 %v7970, 0.0
    %v8423 = vmax.f32 %v7972, 0.0
    %v8424 = vmax.f32 %v8076, 0.0
    %v8425 = vmax.f32 %v8078, 0.0
    %v8426 = vmax.f32 %v8182, 0.0
    %v8427 = vmax.f32 %v8184, 0.0
    %v8428 = vmax.f32 %v8288, 0.0
    %v8429 = vmax.f32 %v8290, 0.0
    %v8430 = vmax.f32 %v8394, 0.0
    %v8431 = vmax.f32 %v8396, 0.0
    %v8432 = vmax.f32 %v7870, 0.0
    %v8433 = vmax.f32 %v7872, 0.0
    %v8434 = vmax.f32 %v7976, 0.0
    %v8435 = vmax.f32 %v7978, 0.0
    %v8436 = vmax.f32 %v8082, 0.0
    %v8437 = vmax.f32 %v8084, 0.0
    %v8438 = vmax.f32 %v8188, 0.0
    %v8439 = vmax.f32 %v8190, 0.0
    %v8440 = vmax.f32 %v8294, 0.0
    %v8441 = vmax.f32 %v8296, 0.0
    %v8442 = vmax.f32 %v8400, 0.0
    %v8443 = vmax.f32 %v8402, 0.0
    %v8444 = vmax.f32 %v7874, 0.0
    %v8445 = vmax.f32 %v7876, 0.0
    %v8446 = vmax.f32 %v7980, 0.0
    %v8447 = vmax.f32 %v7982, 0.0
    %v8448 = vmax.f32 %v8086, 0.0
    %v8449 = vmax.f32 %v8088, 0.0
    %v8450 = vmax.f32 %v8192, 0.0
    %v8451 = vmax.f32 %v8194, 0.0
    %v8452 = vmax.f32 %v8298, 0.0
    %v8453 = vmax.f32 %v8300, 0.0
    %v8454 = vmax.f32 %v8404, 0.0
    %v8455 = vmax.f32 %v8406, 0.0
    %v8456 = vpack.c.bf16 %v8420, %v8408
    %v8457 = vpack.c.bf16 %v8421, %v8409
    %v8458 = vpack.c.bf16 %v8422, %v8410
    %v8459 = vpack.c.bf16 %v8423, %v8411
    %v8460 = vpack.c.bf16 %v8424, %v8412
    %v8461 = vpack.c.bf16 %v8425, %v8413
    %v8462 = vpack.c.bf16 %v8426, %v8414
    %v8463 = vpack.c.bf16 %v8427, %v8415
    %v8464 = vpack.c.bf16 %v8428, %v8416
    %v8465 = vpack.c.bf16 %v8429, %v8417
    %v8466 = vpack.c.bf16 %v8430, %v8418
    %v8467 = vpack.c.bf16 %v8431, %v8419
    %v8468 = vpack.c.bf16 %v8444, %v8432
    %v8469 = vpack.c.bf16 %v8445, %v8433
    %v8470 = vpack.c.bf16 %v8446, %v8434
    %v8471 = vpack.c.bf16 %v8447, %v8435
    %v8472 = vpack.c.bf16 %v8448, %v8436
    %v8473 = vpack.c.bf16 %v8449, %v8437
    %v8474 = vpack.c.bf16 %v8450, %v8438
    %v8475 = vpack.c.bf16 %v8451, %v8439
    %v8476 = vpack.c.bf16 %v8452, %v8440
    %v8477 = vpack.c.bf16 %v8453, %v8441
    %v8478 = vpack.c.bf16 %v8454, %v8442
    %v8479 = vpack.c.bf16 %v8455, %v8443
    %v8480 = vld [vmem:[#allocation19] sm:$0xff]
    %v8481 = vld [vmem:[#allocation19 + $0x8] sm:$0xf]
    %v8482 = vld [vmem:[#allocation19 + $0xc] sm:$0xff]
    %v8483 = vld [vmem:[#allocation19 + $0x14] sm:$0xf]
    %v8484 = vld [vmem:[#allocation19 + $0x18] sm:$0xff]
    %v8485 = vld [vmem:[#allocation19 + $0x20] sm:$0xf]
    %v8486 = vld [vmem:[#allocation19 + $0x24] sm:$0xff]
    %v8487 = vld [vmem:[#allocation19 + $0x2c] sm:$0xf]
    %v8488 = vld [vmem:[#allocation19 + $0x30] sm:$0xff]
    %v8489 = vld [vmem:[#allocation19 + $0x38] sm:$0xf]
    %v8490 = vld [vmem:[#allocation19 + $0x3c] sm:$0xff]
    %v8491 = vld [vmem:[#allocation19 + $0x44] sm:$0xf]
    %v8492 = vld [vmem:[#allocation19 + $0x48] sm:$0xff]
    %v8493 = vld [vmem:[#allocation19 + $0x50] sm:$0xf]
    %v8494 = vld [vmem:[#allocation19 + $0x54] sm:$0xff]
    %v8495 = vld [vmem:[#allocation19 + $0x5c] sm:$0xf]
    %v8496 = vld [vmem:[#allocation19 + $0x60] sm:$0xff]
    %v8497 = vld [vmem:[#allocation19 + $0x68] sm:$0xf]
    %v8498 = vld [vmem:[#allocation19 + $0x6c] sm:$0xff]
    %v8499 = vld [vmem:[#allocation19 + $0x74] sm:$0xf]
    %v8500 = vld [vmem:[#allocation19 + $0x78] sm:$0xff]
    %v8501 = vld [vmem:[#allocation19 + $0x80] sm:$0xf]
    %v8502 = vld [vmem:[#allocation19 + $0x84] sm:$0xff]
    %v8503 = vld [vmem:[#allocation19 + $0x8c] sm:$0xf]
    %v8504 = vld [vmem:[#allocation19 + $0x90] sm:$0xff]
    %v8505 = vld [vmem:[#allocation19 + $0x98] sm:$0xf]
    %v8506 = vld [vmem:[#allocation19 + $0x9c] sm:$0xff]
    %v8507 = vld [vmem:[#allocation19 + $0xa4] sm:$0xf]
    %v8508 = vld [vmem:[#allocation19 + $0xa8] sm:$0xff]
    %v8509 = vld [vmem:[#allocation19 + $0xb0] sm:$0xf]
    %v8510 = vld [vmem:[#allocation19 + $0xb4] sm:$0xff]
    %v8511 = vld [vmem:[#allocation19 + $0xbc] sm:$0xf]
    %v8512 = vld [vmem:[#allocation19 + $0xc0] sm:$0xff]
    %v8513 = vld [vmem:[#allocation19 + $0xc8] sm:$0xf]
    %v8514 = vld [vmem:[#allocation19 + $0xcc] sm:$0xff]
    %v8515 = vld [vmem:[#allocation19 + $0xd4] sm:$0xf]
    %v8516 = vld [vmem:[#allocation19 + $0xd8] sm:$0xff]
    %v8517 = vld [vmem:[#allocation19 + $0xe0] sm:$0xf]
    %v8518 = vld [vmem:[#allocation19 + $0xe4] sm:$0xff]
    %v8519 = vld [vmem:[#allocation19 + $0xec] sm:$0xf]
    %v8520 = vld [vmem:[#allocation19 + $0xf0] sm:$0xff]
    %v8521 = vld [vmem:[#allocation19 + $0xf8] sm:$0xf]
    %v8522 = vld [vmem:[#allocation19 + $0xfc] sm:$0xff]
    %v8523 = vld [vmem:[#allocation19 + $0x104] sm:$0xf]
    %v8524 = vld [vmem:[#allocation19 + $0x108] sm:$0xff]
    %v8525 = vld [vmem:[#allocation19 + $0x110] sm:$0xf]
    %v8526 = vld [vmem:[#allocation19 + $0x114] sm:$0xff]
    %v8527 = vld [vmem:[#allocation19 + $0x11c] sm:$0xf]
    %v8528 = vld [vmem:[#allocation19 + $0x120] sm:$0xff]
    %v8529 = vld [vmem:[#allocation19 + $0x128] sm:$0xf]
    %v8530 = vld [vmem:[#allocation19 + $0x12c] sm:$0xff]
    %v8531 = vld [vmem:[#allocation19 + $0x134] sm:$0xf]
    %v8532 = vld [vmem:[#allocation19 + $0x138] sm:$0xff]
    %v8533 = vld [vmem:[#allocation19 + $0x140] sm:$0xf]
    %v8534 = vld [vmem:[#allocation19 + $0x144] sm:$0xff]
    %v8535 = vld [vmem:[#allocation19 + $0x14c] sm:$0xf]
    %v8536 = vld [vmem:[#allocation19 + $0x150] sm:$0xff]
    %v8537 = vld [vmem:[#allocation19 + $0x158] sm:$0xf]
    %v8538 = vld [vmem:[#allocation19 + $0x15c] sm:$0xff]
    %v8539 = vld [vmem:[#allocation19 + $0x164] sm:$0xf]
    %v8540 = vld [vmem:[#allocation19 + $0x168] sm:$0xff]
    %v8541 = vld [vmem:[#allocation19 + $0x170] sm:$0xf]
    %v8542 = vld [vmem:[#allocation19 + $0x174] sm:$0xff]
    %v8543 = vld [vmem:[#allocation19 + $0x17c] sm:$0xf]
    %v8544 = vld [vmem:[#allocation19 + $0x180] sm:$0xff]
    %v8545 = vld [vmem:[#allocation19 + $0x188] sm:$0xf]
    %v8546 = vld [vmem:[#allocation19 + $0x18c] sm:$0xff]
    %v8547 = vld [vmem:[#allocation19 + $0x194] sm:$0xf]
    %v8548 = vld [vmem:[#allocation19 + $0x198] sm:$0xff]
    %v8549 = vld [vmem:[#allocation19 + $0x1a0] sm:$0xf]
    %v8550 = vld [vmem:[#allocation19 + $0x1a4] sm:$0xff]
    %v8551 = vld [vmem:[#allocation19 + $0x1ac] sm:$0xf]
    %v8552 = vld [vmem:[#allocation19 + $0x1b0] sm:$0xff]
    %v8553 = vld [vmem:[#allocation19 + $0x1b8] sm:$0xf]
    %v8554 = vld [vmem:[#allocation19 + $0x1bc] sm:$0xff]
    %v8555 = vld [vmem:[#allocation19 + $0x1c4] sm:$0xf]
    %v8556 = vld [vmem:[#allocation19 + $0x1c8] sm:$0xff]
    %v8557 = vld [vmem:[#allocation19 + $0x1d0] sm:$0xf]
    %v8558 = vld [vmem:[#allocation19 + $0x1d4] sm:$0xff]
    %v8559 = vld [vmem:[#allocation19 + $0x1dc] sm:$0xf]
    %v8560 = vld [vmem:[#allocation19 + $0x1e0] sm:$0xff]
    %v8561 = vld [vmem:[#allocation19 + $0x1e8] sm:$0xf]
    %v8562 = vld [vmem:[#allocation19 + $0x1ec] sm:$0xff]
    %v8563 = vld [vmem:[#allocation19 + $0x1f4] sm:$0xf]
    %v8564 = vld [vmem:[#allocation19 + $0x1f8] sm:$0xff]
    %v8565 = vld [vmem:[#allocation19 + $0x200] sm:$0xf]
    %v8566 = vld [vmem:[#allocation19 + $0x204] sm:$0xff]
    %v8567 = vld [vmem:[#allocation19 + $0x20c] sm:$0xf]
    %v8568 = vld [vmem:[#allocation19 + $0x210] sm:$0xff]
    %v8569 = vld [vmem:[#allocation19 + $0x218] sm:$0xf]
    %v8570 = vld [vmem:[#allocation19 + $0x21c] sm:$0xff]
    %v8571 = vld [vmem:[#allocation19 + $0x224] sm:$0xf]
    %v8572 = vld [vmem:[#allocation19 + $0x228] sm:$0xff]
    %v8573 = vld [vmem:[#allocation19 + $0x230] sm:$0xf]
    %v8574 = vld [vmem:[#allocation19 + $0x234] sm:$0xff]
    %v8575 = vld [vmem:[#allocation19 + $0x23c] sm:$0xf]
    %v8576 = vld [vmem:[#allocation19 + $0x240] sm:$0xff]
    %v8577 = vld [vmem:[#allocation19 + $0x248] sm:$0xf]
    %v8578 = vld [vmem:[#allocation19 + $0x24c] sm:$0xff]
    %v8579 = vld [vmem:[#allocation19 + $0x254] sm:$0xf]
    %v8580 = vld [vmem:[#allocation19 + $0x258] sm:$0xff]
    %v8581 = vld [vmem:[#allocation19 + $0x260] sm:$0xf]
    %v8582 = vld [vmem:[#allocation19 + $0x264] sm:$0xff]
    %v8583 = vld [vmem:[#allocation19 + $0x26c] sm:$0xf]
    %v8584 = vld [vmem:[#allocation19 + $0x270] sm:$0xff]
    %v8585 = vld [vmem:[#allocation19 + $0x278] sm:$0xf]
    %v8586 = vld [vmem:[#allocation19 + $0x27c] sm:$0xff]
    %v8587 = vld [vmem:[#allocation19 + $0x284] sm:$0xf]
    %v8588 = vld [vmem:[#allocation19 + $0x288] sm:$0xff]
    %v8589 = vld [vmem:[#allocation19 + $0x290] sm:$0xf]
    %v8590 = vld [vmem:[#allocation19 + $0x294] sm:$0xff]
    %v8591 = vld [vmem:[#allocation19 + $0x29c] sm:$0xf]
    %v8592 = vld [vmem:[#allocation19 + $0x2a0] sm:$0xff]
    %v8593 = vld [vmem:[#allocation19 + $0x2a8] sm:$0xf]
    %v8594 = vld [vmem:[#allocation19 + $0x2ac] sm:$0xff]
    %v8595 = vld [vmem:[#allocation19 + $0x2b4] sm:$0xf]
    %v8596 = vld [vmem:[#allocation19 + $0x2b8] sm:$0xff]
    %v8597 = vld [vmem:[#allocation19 + $0x2c0] sm:$0xf]
    %v8598 = vld [vmem:[#allocation19 + $0x2c4] sm:$0xff]
    %v8599 = vld [vmem:[#allocation19 + $0x2cc] sm:$0xf]
    %v8600 = vld [vmem:[#allocation19 + $0x2d0] sm:$0xff]
    %v8601 = vld [vmem:[#allocation19 + $0x2d8] sm:$0xf]
    %v8602 = vld [vmem:[#allocation19 + $0x2dc] sm:$0xff]
    %v8603 = vld [vmem:[#allocation19 + $0x2e4] sm:$0xf]
    %v8604 = vld [vmem:[#allocation19 + $0x2e8] sm:$0xff]
    %v8605 = vld [vmem:[#allocation19 + $0x2f0] sm:$0xf]
    %v8606 = vld [vmem:[#allocation19 + $0x2f4] sm:$0xff]
    %v8607 = vld [vmem:[#allocation19 + $0x2fc] sm:$0xf]
    %v8608 = vld [vmem:[#allocation19 + $0x300] sm:$0xff]
    %v8609 = vld [vmem:[#allocation19 + $0x308] sm:$0xf]
    %v8610 = vld [vmem:[#allocation19 + $0x30c] sm:$0xff]
    %v8611 = vld [vmem:[#allocation19 + $0x314] sm:$0xf]
    %v8612 = vld [vmem:[#allocation19 + $0x318] sm:$0xff]
    %v8613 = vld [vmem:[#allocation19 + $0x320] sm:$0xf]
    %v8614 = vld [vmem:[#allocation19 + $0x324] sm:$0xff]
    %v8615 = vld [vmem:[#allocation19 + $0x32c] sm:$0xf]
    %v8616 = vld [vmem:[#allocation19 + $0x330] sm:$0xff]
    %v8617 = vld [vmem:[#allocation19 + $0x338] sm:$0xf]
    %v8618 = vld [vmem:[#allocation19 + $0x33c] sm:$0xff]
    %v8619 = vld [vmem:[#allocation19 + $0x344] sm:$0xf]
    %v8620 = vld [vmem:[#allocation19 + $0x348] sm:$0xff]
    %v8621 = vld [vmem:[#allocation19 + $0x350] sm:$0xf]
    %v8622 = vld [vmem:[#allocation19 + $0x354] sm:$0xff]
    %v8623 = vld [vmem:[#allocation19 + $0x35c] sm:$0xf]
    %v8624 = vld [vmem:[#allocation19 + $0x360] sm:$0xff]
    %v8625 = vld [vmem:[#allocation19 + $0x368] sm:$0xf]
    %v8626 = vld [vmem:[#allocation19 + $0x36c] sm:$0xff]
    %v8627 = vld [vmem:[#allocation19 + $0x374] sm:$0xf]
    %v8628 = vld [vmem:[#allocation19 + $0x378] sm:$0xff]
    %v8629 = vld [vmem:[#allocation19 + $0x380] sm:$0xf]
    %v8630 = vld [vmem:[#allocation19 + $0x384] sm:$0xff]
    %v8631 = vld [vmem:[#allocation19 + $0x38c] sm:$0xf]
    %v8632 = vld [vmem:[#allocation19 + $0x390] sm:$0xff]
    %v8633 = vld [vmem:[#allocation19 + $0x398] sm:$0xf]
    %v8634 = vld [vmem:[#allocation19 + $0x39c] sm:$0xff]
    %v8635 = vld [vmem:[#allocation19 + $0x3a4] sm:$0xf]
    %v8636 = vld [vmem:[#allocation19 + $0x3a8] sm:$0xff]
    %v8637 = vld [vmem:[#allocation19 + $0x3b0] sm:$0xf]
    %v8638 = vld [vmem:[#allocation19 + $0x3b4] sm:$0xff]
    %v8639 = vld [vmem:[#allocation19 + $0x3bc] sm:$0xf]
    %v8640 = vld [vmem:[#allocation19 + $0x3c0] sm:$0xff]
    %v8641 = vld [vmem:[#allocation19 + $0x3c8] sm:$0xf]
    %v8642 = vld [vmem:[#allocation19 + $0x3cc] sm:$0xff]
    %v8643 = vld [vmem:[#allocation19 + $0x3d4] sm:$0xf]
    %v8644 = vld [vmem:[#allocation19 + $0x3d8] sm:$0xff]
    %v8645 = vld [vmem:[#allocation19 + $0x3e0] sm:$0xf]
    %v8646 = vld [vmem:[#allocation19 + $0x3e4] sm:$0xff]
    %v8647 = vld [vmem:[#allocation19 + $0x3ec] sm:$0xf]
    %v8648 = vld [vmem:[#allocation19 + $0x3f0] sm:$0xff]
    %v8649 = vld [vmem:[#allocation19 + $0x3f8] sm:$0xf]
    %v8650 = vld [vmem:[#allocation19 + $0x3fc] sm:$0xff]
    %v8651 = vld [vmem:[#allocation19 + $0x404] sm:$0xf]
    %v8652 = vld [vmem:[#allocation19 + $0x408] sm:$0xff]
    %v8653 = vld [vmem:[#allocation19 + $0x410] sm:$0xf]
    %v8654 = vld [vmem:[#allocation19 + $0x414] sm:$0xff]
    %v8655 = vld [vmem:[#allocation19 + $0x41c] sm:$0xf]
    %v8656 = vld [vmem:[#allocation19 + $0x420] sm:$0xff]
    %v8657 = vld [vmem:[#allocation19 + $0x428] sm:$0xf]
    %v8658 = vld [vmem:[#allocation19 + $0x42c] sm:$0xff]
    %v8659 = vld [vmem:[#allocation19 + $0x434] sm:$0xf]
    %v8660 = vld [vmem:[#allocation19 + $0x438] sm:$0xff]
    %v8661 = vld [vmem:[#allocation19 + $0x440] sm:$0xf]
    %v8662 = vld [vmem:[#allocation19 + $0x444] sm:$0xff]
    %v8663 = vld [vmem:[#allocation19 + $0x44c] sm:$0xf]
    %v8664 = vld [vmem:[#allocation19 + $0x450] sm:$0xff]
    %v8665 = vld [vmem:[#allocation19 + $0x458] sm:$0xf]
    %v8666 = vld [vmem:[#allocation19 + $0x45c] sm:$0xff]
    %v8667 = vld [vmem:[#allocation19 + $0x464] sm:$0xf]
    %v8668 = vld [vmem:[#allocation19 + $0x468] sm:$0xff]
    %v8669 = vld [vmem:[#allocation19 + $0x470] sm:$0xf]
    %v8670 = vld [vmem:[#allocation19 + $0x474] sm:$0xff]
    %v8671 = vld [vmem:[#allocation19 + $0x47c] sm:$0xf]
    %v8672 = vld [vmem:[#allocation19 + $0x480] sm:$0xff]
    %v8673 = vld [vmem:[#allocation19 + $0x488] sm:$0xf]
    %v8674 = vld [vmem:[#allocation19 + $0x48c] sm:$0xff]
    %v8675 = vld [vmem:[#allocation19 + $0x494] sm:$0xf]
    %v8676 = vld [vmem:[#allocation19 + $0x498] sm:$0xff]
    %v8677 = vld [vmem:[#allocation19 + $0x4a0] sm:$0xf]
    %v8678 = vld [vmem:[#allocation19 + $0x4a4] sm:$0xff]
    %v8679 = vld [vmem:[#allocation19 + $0x4ac] sm:$0xf]
    %v8680 = vld [vmem:[#allocation19 + $0x4b0] sm:$0xff]
    %v8681 = vld [vmem:[#allocation19 + $0x4b8] sm:$0xf]
    %v8682 = vld [vmem:[#allocation19 + $0x4bc] sm:$0xff]
    %v8683 = vld [vmem:[#allocation19 + $0x4c4] sm:$0xf]
    %v8684 = vld [vmem:[#allocation19 + $0x4c8] sm:$0xff]
    %v8685 = vld [vmem:[#allocation19 + $0x4d0] sm:$0xf]
    %v8686 = vld [vmem:[#allocation19 + $0x4d4] sm:$0xff]
    %v8687 = vld [vmem:[#allocation19 + $0x4dc] sm:$0xf]
    %v8688 = vld [vmem:[#allocation19 + $0x4e0] sm:$0xff]
    %v8689 = vld [vmem:[#allocation19 + $0x4e8] sm:$0xf]
    %v8690 = vld [vmem:[#allocation19 + $0x4ec] sm:$0xff]
    %v8691 = vld [vmem:[#allocation19 + $0x4f4] sm:$0xf]
    %v8692 = vld [vmem:[#allocation19 + $0x4f8] sm:$0xff]
    %v8693 = vld [vmem:[#allocation19 + $0x500] sm:$0xf]
    %v8694 = vld [vmem:[#allocation19 + $0x504] sm:$0xff]
    %v8695 = vld [vmem:[#allocation19 + $0x50c] sm:$0xf]
    %v8696 = vld [vmem:[#allocation19 + $0x510] sm:$0xff]
    %v8697 = vld [vmem:[#allocation19 + $0x518] sm:$0xf]
    %v8698 = vld [vmem:[#allocation19 + $0x51c] sm:$0xff]
    %v8699 = vld [vmem:[#allocation19 + $0x524] sm:$0xf]
    %v8700 = vld [vmem:[#allocation19 + $0x528] sm:$0xff]
    %v8701 = vld [vmem:[#allocation19 + $0x530] sm:$0xf]
    %v8702 = vld [vmem:[#allocation19 + $0x534] sm:$0xff]
    %v8703 = vld [vmem:[#allocation19 + $0x53c] sm:$0xf]
    %v8704 = vld [vmem:[#allocation19 + $0x540] sm:$0xff]
    %v8705 = vld [vmem:[#allocation19 + $0x548] sm:$0xf]
    %v8706 = vld [vmem:[#allocation19 + $0x54c] sm:$0xff]
    %v8707 = vld [vmem:[#allocation19 + $0x554] sm:$0xf]
    %v8708 = vld [vmem:[#allocation19 + $0x558] sm:$0xff]
    %v8709 = vld [vmem:[#allocation19 + $0x560] sm:$0xf]
    %v8710 = vld [vmem:[#allocation19 + $0x564] sm:$0xff]
    %v8711 = vld [vmem:[#allocation19 + $0x56c] sm:$0xf]
    %v8712 = vld [vmem:[#allocation19 + $0x570] sm:$0xff]
    %v8713 = vld [vmem:[#allocation19 + $0x578] sm:$0xf]
    %v8714 = vld [vmem:[#allocation19 + $0x57c] sm:$0xff]
    %v8715 = vld [vmem:[#allocation19 + $0x584] sm:$0xf]
    %v8716 = vld [vmem:[#allocation19 + $0x588] sm:$0xff]
    %v8717 = vld [vmem:[#allocation19 + $0x590] sm:$0xf]
    %v8718 = vld [vmem:[#allocation19 + $0x594] sm:$0xff]
    %v8719 = vld [vmem:[#allocation19 + $0x59c] sm:$0xf]
    %v8720 = vld [vmem:[#allocation19 + $0x5a0] sm:$0xff]
    %v8721 = vld [vmem:[#allocation19 + $0x5a8] sm:$0xf]
    %v8722 = vld [vmem:[#allocation19 + $0x5ac] sm:$0xff]
    %v8723 = vld [vmem:[#allocation19 + $0x5b4] sm:$0xf]
    %v8724 = vld [vmem:[#allocation19 + $0x5b8] sm:$0xff]
    %v8725 = vld [vmem:[#allocation19 + $0x5c0] sm:$0xf]
    %v8726 = vld [vmem:[#allocation19 + $0x5c4] sm:$0xff]
    %v8727 = vld [vmem:[#allocation19 + $0x5cc] sm:$0xf]
    %v8728 = vld [vmem:[#allocation19 + $0x5d0] sm:$0xff]
    %v8729 = vld [vmem:[#allocation19 + $0x5d8] sm:$0xf]
    %v8730 = vld [vmem:[#allocation19 + $0x5dc] sm:$0xff]
    %v8731 = vld [vmem:[#allocation19 + $0x5e4] sm:$0xf]
    %v8732 = vld [vmem:[#allocation19 + $0x5e8] sm:$0xff]
    %v8733 = vld [vmem:[#allocation19 + $0x5f0] sm:$0xf]
    %v8734 = vld [vmem:[#allocation19 + $0x5f4] sm:$0xff]
    %v8735 = vld [vmem:[#allocation19 + $0x5fc] sm:$0xf]
    %v8736 = vld [vmem:[#allocation19 + $0x600] sm:$0xff]
    %v8737 = vld [vmem:[#allocation19 + $0x608] sm:$0xf]
    %v8738 = vld [vmem:[#allocation19 + $0x60c] sm:$0xff]
    %v8739 = vld [vmem:[#allocation19 + $0x614] sm:$0xf]
    %v8740 = vld [vmem:[#allocation19 + $0x618] sm:$0xff]
    %v8741 = vld [vmem:[#allocation19 + $0x620] sm:$0xf]
    %v8742 = vld [vmem:[#allocation19 + $0x624] sm:$0xff]
    %v8743 = vld [vmem:[#allocation19 + $0x62c] sm:$0xf]
    %v8744 = vld [vmem:[#allocation19 + $0x630] sm:$0xff]
    %v8745 = vld [vmem:[#allocation19 + $0x638] sm:$0xf]
    %v8746 = vld [vmem:[#allocation19 + $0x63c] sm:$0xff]
    %v8747 = vld [vmem:[#allocation19 + $0x644] sm:$0xf]
    %v8748 = vld [vmem:[#allocation19 + $0x648] sm:$0xff]
    %v8749 = vld [vmem:[#allocation19 + $0x650] sm:$0xf]
    %v8750 = vld [vmem:[#allocation19 + $0x654] sm:$0xff]
    %v8751 = vld [vmem:[#allocation19 + $0x65c] sm:$0xf]
    %v8752 = vld [vmem:[#allocation19 + $0x660] sm:$0xff]
    %v8753 = vld [vmem:[#allocation19 + $0x668] sm:$0xf]
    %v8754 = vld [vmem:[#allocation19 + $0x66c] sm:$0xff]
    %v8755 = vld [vmem:[#allocation19 + $0x674] sm:$0xf]
    %v8756 = vld [vmem:[#allocation19 + $0x678] sm:$0xff]
    %v8757 = vld [vmem:[#allocation19 + $0x680] sm:$0xf]
    %v8758 = vld [vmem:[#allocation19 + $0x684] sm:$0xff]
    %v8759 = vld [vmem:[#allocation19 + $0x68c] sm:$0xf]
    %v8760 = vld [vmem:[#allocation19 + $0x690] sm:$0xff]
    %v8761 = vld [vmem:[#allocation19 + $0x698] sm:$0xf]
    %v8762 = vld [vmem:[#allocation19 + $0x69c] sm:$0xff]
    %v8763 = vld [vmem:[#allocation19 + $0x6a4] sm:$0xf]
    %v8764 = vld [vmem:[#allocation19 + $0x6a8] sm:$0xff]
    %v8765 = vld [vmem:[#allocation19 + $0x6b0] sm:$0xf]
    %v8766 = vld [vmem:[#allocation19 + $0x6b4] sm:$0xff]
    %v8767 = vld [vmem:[#allocation19 + $0x6bc] sm:$0xf]
    %v8768 = vld [vmem:[#allocation19 + $0x6c0] sm:$0xff]
    %v8769 = vld [vmem:[#allocation19 + $0x6c8] sm:$0xf]
    %v8770 = vld [vmem:[#allocation19 + $0x6cc] sm:$0xff]
    %v8771 = vld [vmem:[#allocation19 + $0x6d4] sm:$0xf]
    %v8772 = vld [vmem:[#allocation19 + $0x6d8] sm:$0xff]
    %v8773 = vld [vmem:[#allocation19 + $0x6e0] sm:$0xf]
    %v8774 = vld [vmem:[#allocation19 + $0x6e4] sm:$0xff]
    %v8775 = vld [vmem:[#allocation19 + $0x6ec] sm:$0xf]
    %v8776 = vld [vmem:[#allocation19 + $0x6f0] sm:$0xff]
    %v8777 = vld [vmem:[#allocation19 + $0x6f8] sm:$0xf]
    %v8778 = vld [vmem:[#allocation19 + $0x6fc] sm:$0xff]
    %v8779 = vld [vmem:[#allocation19 + $0x704] sm:$0xf]
    %v8780 = vld [vmem:[#allocation19 + $0x708] sm:$0xff]
    %v8781 = vld [vmem:[#allocation19 + $0x710] sm:$0xf]
    %v8782 = vld [vmem:[#allocation19 + $0x714] sm:$0xff]
    %v8783 = vld [vmem:[#allocation19 + $0x71c] sm:$0xf]
    %v8784 = vld [vmem:[#allocation19 + $0x720] sm:$0xff]
    %v8785 = vld [vmem:[#allocation19 + $0x728] sm:$0xf]
    %v8786 = vld [vmem:[#allocation19 + $0x72c] sm:$0xff]
    %v8787 = vld [vmem:[#allocation19 + $0x734] sm:$0xf]
    %v8788 = vld [vmem:[#allocation19 + $0x738] sm:$0xff]
    %v8789 = vld [vmem:[#allocation19 + $0x740] sm:$0xf]
    %v8790 = vld [vmem:[#allocation19 + $0x744] sm:$0xff]
    %v8791 = vld [vmem:[#allocation19 + $0x74c] sm:$0xf]
    %v8792 = vld [vmem:[#allocation19 + $0x750] sm:$0xff]
    %v8793 = vld [vmem:[#allocation19 + $0x758] sm:$0xf]
    %v8794 = vld [vmem:[#allocation19 + $0x75c] sm:$0xff]
    %v8795 = vld [vmem:[#allocation19 + $0x764] sm:$0xf]
    %v8796 = vld [vmem:[#allocation19 + $0x768] sm:$0xff]
    %v8797 = vld [vmem:[#allocation19 + $0x770] sm:$0xf]
    %v8798 = vld [vmem:[#allocation19 + $0x774] sm:$0xff]
    %v8799 = vld [vmem:[#allocation19 + $0x77c] sm:$0xf]
    %v8800 = vld [vmem:[#allocation19 + $0x780] sm:$0xff]
    %v8801 = vld [vmem:[#allocation19 + $0x788] sm:$0xf]
    %v8802 = vld [vmem:[#allocation19 + $0x78c] sm:$0xff]
    %v8803 = vld [vmem:[#allocation19 + $0x794] sm:$0xf]
    %v8804 = vld [vmem:[#allocation19 + $0x798] sm:$0xff]
    %v8805 = vld [vmem:[#allocation19 + $0x7a0] sm:$0xf]
    %v8806 = vld [vmem:[#allocation19 + $0x7a4] sm:$0xff]
    %v8807 = vld [vmem:[#allocation19 + $0x7ac] sm:$0xf]
    %v8808 = vld [vmem:[#allocation19 + $0x7b0] sm:$0xff]
    %v8809 = vld [vmem:[#allocation19 + $0x7b8] sm:$0xf]
    %v8810 = vld [vmem:[#allocation19 + $0x7bc] sm:$0xff]
    %v8811 = vld [vmem:[#allocation19 + $0x7c4] sm:$0xf]
    %v8812 = vld [vmem:[#allocation19 + $0x7c8] sm:$0xff]
    %v8813 = vld [vmem:[#allocation19 + $0x7d0] sm:$0xf]
    %v8814 = vld [vmem:[#allocation19 + $0x7d4] sm:$0xff]
    %v8815 = vld [vmem:[#allocation19 + $0x7dc] sm:$0xf]
    %v8816 = vld [vmem:[#allocation19 + $0x7e0] sm:$0xff]
    %v8817 = vld [vmem:[#allocation19 + $0x7e8] sm:$0xf]
    %v8818 = vld [vmem:[#allocation19 + $0x7ec] sm:$0xff]
    %v8819 = vld [vmem:[#allocation19 + $0x7f4] sm:$0xf]
    %v8820 = vld [vmem:[#allocation19 + $0x7f8] sm:$0xff]
    %v8821 = vld [vmem:[#allocation19 + $0x800] sm:$0xf]
    %v8822 = vld [vmem:[#allocation19 + $0x804] sm:$0xff]
    %v8823 = vld [vmem:[#allocation19 + $0x80c] sm:$0xf]
    %v8824 = vld [vmem:[#allocation19 + $0x810] sm:$0xff]
    %v8825 = vld [vmem:[#allocation19 + $0x818] sm:$0xf]
    %v8826 = vld [vmem:[#allocation19 + $0x81c] sm:$0xff]
    %v8827 = vld [vmem:[#allocation19 + $0x824] sm:$0xf]
    %v8828 = vld [vmem:[#allocation19 + $0x828] sm:$0xff]
    %v8829 = vld [vmem:[#allocation19 + $0x830] sm:$0xf]
    %v8830 = vld [vmem:[#allocation19 + $0x834] sm:$0xff]
    %v8831 = vld [vmem:[#allocation19 + $0x83c] sm:$0xf]
    %v8832 = vld [vmem:[#allocation19 + $0x840] sm:$0xff]
    %v8833 = vld [vmem:[#allocation19 + $0x848] sm:$0xf]
    %v8834 = vld [vmem:[#allocation19 + $0x84c] sm:$0xff]
    %v8835 = vld [vmem:[#allocation19 + $0x854] sm:$0xf]
    %v8836 = vld [vmem:[#allocation19 + $0x858] sm:$0xff]
    %v8837 = vld [vmem:[#allocation19 + $0x860] sm:$0xf]
    %v8838 = vld [vmem:[#allocation19 + $0x864] sm:$0xff]
    %v8839 = vld [vmem:[#allocation19 + $0x86c] sm:$0xf]
    %v8840 = vld [vmem:[#allocation19 + $0x870] sm:$0xff]
    %v8841 = vld [vmem:[#allocation19 + $0x878] sm:$0xf]
    %v8842 = vld [vmem:[#allocation19 + $0x87c] sm:$0xff]
    %v8843 = vld [vmem:[#allocation19 + $0x884] sm:$0xf]
    %v8844 = vld [vmem:[#allocation19 + $0x888] sm:$0xff]
    %v8845 = vld [vmem:[#allocation19 + $0x890] sm:$0xf]
    %v8846 = vld [vmem:[#allocation19 + $0x894] sm:$0xff]
    %v8847 = vld [vmem:[#allocation19 + $0x89c] sm:$0xf]
    %v8848 = vld [vmem:[#allocation19 + $0x8a0] sm:$0xff]
    %v8849 = vld [vmem:[#allocation19 + $0x8a8] sm:$0xf]
    %v8850 = vld [vmem:[#allocation19 + $0x8ac] sm:$0xff]
    %v8851 = vld [vmem:[#allocation19 + $0x8b4] sm:$0xf]
    %v8852 = vld [vmem:[#allocation19 + $0x8b8] sm:$0xff]
    %v8853 = vld [vmem:[#allocation19 + $0x8c0] sm:$0xf]
    %v8854 = vld [vmem:[#allocation19 + $0x8c4] sm:$0xff]
    %v8855 = vld [vmem:[#allocation19 + $0x8cc] sm:$0xf]
    %v8856 = vld [vmem:[#allocation19 + $0x8d0] sm:$0xff]
    %v8857 = vld [vmem:[#allocation19 + $0x8d8] sm:$0xf]
    %v8858 = vld [vmem:[#allocation19 + $0x8dc] sm:$0xff]
    %v8859 = vld [vmem:[#allocation19 + $0x8e4] sm:$0xf]
    %v8860 = vld [vmem:[#allocation19 + $0x8e8] sm:$0xff]
    %v8861 = vld [vmem:[#allocation19 + $0x8f0] sm:$0xf]
    %v8862 = vld [vmem:[#allocation19 + $0x8f4] sm:$0xff]
    %v8863 = vld [vmem:[#allocation19 + $0x8fc] sm:$0xf]
    %v8864 = vld [vmem:[#allocation20] sm:$0x7]
    %v8866 = vlaneseq
    %v8867 = vshrl.u32 %v8866, 7
    %v8868 = vsub.s32 0, %v8867
    %v8869 = vrot.slane %v8864, %v8868
    %v8870 = vlaneseq
    %v8871 = vshrl.u32 %v8870, 7
    %v8872 = vsub.s32 1, %v8871
    %v8873 = vrot.slane %v8864, %v8872
    %v8874 = vlaneseq
    %v8875 = vshrl.u32 %v8874, 7
    %v8876 = vsub.s32 2, %v8875
    %v8877 = vrot.slane %v8864, %v8876
    %v9265 = vunpack.c.l.b16 %v8480
    %v9266 = vunpack.c.h.b16 %v8480
    %v9267 = vunpack.c.l.b16 %v8481
    %v9268 = vunpack.c.l.b16 %v8482
    %v9269 = vunpack.c.h.b16 %v8482
    %v9270 = vunpack.c.l.b16 %v8483
    %v9271 = vunpack.c.l.b16 %v8484
    %v9272 = vunpack.c.h.b16 %v8484
    %v9273 = vunpack.c.l.b16 %v8485
    %v9274 = vunpack.c.l.b16 %v8486
    %v9275 = vunpack.c.h.b16 %v8486
    %v9276 = vunpack.c.l.b16 %v8487
    %v9277 = vunpack.c.l.b16 %v8488
    %v9278 = vunpack.c.h.b16 %v8488
    %v9279 = vunpack.c.l.b16 %v8489
    %v9280 = vunpack.c.l.b16 %v8490
    %v9281 = vunpack.c.h.b16 %v8490
    %v9282 = vunpack.c.l.b16 %v8491
    %v9283 = vunpack.c.l.b16 %v8492
    %v9284 = vunpack.c.h.b16 %v8492
    %v9285 = vunpack.c.l.b16 %v8493
    %v9286 = vunpack.c.l.b16 %v8494
    %v9287 = vunpack.c.h.b16 %v8494
    %v9288 = vunpack.c.l.b16 %v8495
    %v9289 = vunpack.c.l.b16 %v8496
    %v9290 = vunpack.c.h.b16 %v8496
    %v9291 = vunpack.c.l.b16 %v8497
    %v9292 = vunpack.c.l.b16 %v8498
    %v9293 = vunpack.c.h.b16 %v8498
    %v9294 = vunpack.c.l.b16 %v8499
    %v9295 = vunpack.c.l.b16 %v8500
    %v9296 = vunpack.c.h.b16 %v8500
    %v9297 = vunpack.c.l.b16 %v8501
    %v9298 = vunpack.c.l.b16 %v8502
    %v9299 = vunpack.c.h.b16 %v8502
    %v9300 = vunpack.c.l.b16 %v8503
    %v9301 = vunpack.c.l.b16 %v8504
    %v9302 = vunpack.c.h.b16 %v8504
    %v9303 = vunpack.c.l.b16 %v8505
    %v9304 = vunpack.c.l.b16 %v8506
    %v9305 = vunpack.c.h.b16 %v8506
    %v9306 = vunpack.c.l.b16 %v8507
    %v9307 = vunpack.c.l.b16 %v8508
    %v9308 = vunpack.c.h.b16 %v8508
    %v9309 = vunpack.c.l.b16 %v8509
    %v9310 = vunpack.c.l.b16 %v8510
    %v9311 = vunpack.c.h.b16 %v8510
    %v9312 = vunpack.c.l.b16 %v8511
    %v9313 = vunpack.c.l.b16 %v8512
    %v9314 = vunpack.c.h.b16 %v8512
    %v9315 = vunpack.c.l.b16 %v8513
    %v9316 = vunpack.c.l.b16 %v8514
    %v9317 = vunpack.c.h.b16 %v8514
    %v9318 = vunpack.c.l.b16 %v8515
    %v9319 = vunpack.c.l.b16 %v8516
    %v9320 = vunpack.c.h.b16 %v8516
    %v9321 = vunpack.c.l.b16 %v8517
    %v9322 = vunpack.c.l.b16 %v8518
    %v9323 = vunpack.c.h.b16 %v8518
    %v9324 = vunpack.c.l.b16 %v8519
    %v9325 = vunpack.c.l.b16 %v8520
    %v9326 = vunpack.c.h.b16 %v8520
    %v9327 = vunpack.c.l.b16 %v8521
    %v9328 = vunpack.c.l.b16 %v8522
    %v9329 = vunpack.c.h.b16 %v8522
    %v9330 = vunpack.c.l.b16 %v8523
    %v9331 = vunpack.c.l.b16 %v8524
    %v9332 = vunpack.c.h.b16 %v8524
    %v9333 = vunpack.c.l.b16 %v8525
    %v9334 = vunpack.c.l.b16 %v8526
    %v9335 = vunpack.c.h.b16 %v8526
    %v9336 = vunpack.c.l.b16 %v8527
    %v9337 = vunpack.c.l.b16 %v8528
    %v9338 = vunpack.c.h.b16 %v8528
    %v9339 = vunpack.c.l.b16 %v8529
    %v9340 = vunpack.c.l.b16 %v8530
    %v9341 = vunpack.c.h.b16 %v8530
    %v9342 = vunpack.c.l.b16 %v8531
    %v9343 = vunpack.c.l.b16 %v8532
    %v9344 = vunpack.c.h.b16 %v8532
    %v9345 = vunpack.c.l.b16 %v8533
    %v9346 = vunpack.c.l.b16 %v8534
    %v9347 = vunpack.c.h.b16 %v8534
    %v9348 = vunpack.c.l.b16 %v8535
    %v9349 = vunpack.c.l.b16 %v8536
    %v9350 = vunpack.c.h.b16 %v8536
    %v9351 = vunpack.c.l.b16 %v8537
    %v9352 = vunpack.c.l.b16 %v8538
    %v9353 = vunpack.c.h.b16 %v8538
    %v9354 = vunpack.c.l.b16 %v8539
    %v9355 = vunpack.c.l.b16 %v8540
    %v9356 = vunpack.c.h.b16 %v8540
    %v9357 = vunpack.c.l.b16 %v8541
    %v9358 = vunpack.c.l.b16 %v8542
    %v9359 = vunpack.c.h.b16 %v8542
    %v9360 = vunpack.c.l.b16 %v8543
    %v9361 = vunpack.c.l.b16 %v8544
    %v9362 = vunpack.c.h.b16 %v8544
    %v9363 = vunpack.c.l.b16 %v8545
    %v9364 = vunpack.c.l.b16 %v8546
    %v9365 = vunpack.c.h.b16 %v8546
    %v9366 = vunpack.c.l.b16 %v8547
    %v9367 = vunpack.c.l.b16 %v8548
    %v9368 = vunpack.c.h.b16 %v8548
    %v9369 = vunpack.c.l.b16 %v8549
    %v9370 = vunpack.c.l.b16 %v8550
    %v9371 = vunpack.c.h.b16 %v8550
    %v9372 = vunpack.c.l.b16 %v8551
    %v9373 = vunpack.c.l.b16 %v8552
    %v9374 = vunpack.c.h.b16 %v8552
    %v9375 = vunpack.c.l.b16 %v8553
    %v9376 = vunpack.c.l.b16 %v8554
    %v9377 = vunpack.c.h.b16 %v8554
    %v9378 = vunpack.c.l.b16 %v8555
    %v9379 = vunpack.c.l.b16 %v8556
    %v9380 = vunpack.c.h.b16 %v8556
    %v9381 = vunpack.c.l.b16 %v8557
    %v9382 = vunpack.c.l.b16 %v8558
    %v9383 = vunpack.c.h.b16 %v8558
    %v9384 = vunpack.c.l.b16 %v8559
    %v9385 = vunpack.c.l.b16 %v8560
    %v9386 = vunpack.c.h.b16 %v8560
    %v9387 = vunpack.c.l.b16 %v8561
    %v9388 = vunpack.c.l.b16 %v8562
    %v9389 = vunpack.c.h.b16 %v8562
    %v9390 = vunpack.c.l.b16 %v8563
    %v9391 = vunpack.c.l.b16 %v8564
    %v9392 = vunpack.c.h.b16 %v8564
    %v9393 = vunpack.c.l.b16 %v8565
    %v9394 = vunpack.c.l.b16 %v8566
    %v9395 = vunpack.c.h.b16 %v8566
    %v9396 = vunpack.c.l.b16 %v8567
    %v9397 = vunpack.c.l.b16 %v8568
    %v9398 = vunpack.c.h.b16 %v8568
    %v9399 = vunpack.c.l.b16 %v8569
    %v9400 = vunpack.c.l.b16 %v8570
    %v9401 = vunpack.c.h.b16 %v8570
    %v9402 = vunpack.c.l.b16 %v8571
    %v9403 = vunpack.c.l.b16 %v8572
    %v9404 = vunpack.c.h.b16 %v8572
    %v9405 = vunpack.c.l.b16 %v8573
    %v9406 = vunpack.c.l.b16 %v8574
    %v9407 = vunpack.c.h.b16 %v8574
    %v9408 = vunpack.c.l.b16 %v8575
    %v9409 = vunpack.c.l.b16 %v8576
    %v9410 = vunpack.c.h.b16 %v8576
    %v9411 = vunpack.c.l.b16 %v8577
    %v9412 = vunpack.c.l.b16 %v8578
    %v9413 = vunpack.c.h.b16 %v8578
    %v9414 = vunpack.c.l.b16 %v8579
    %v9415 = vunpack.c.l.b16 %v8580
    %v9416 = vunpack.c.h.b16 %v8580
    %v9417 = vunpack.c.l.b16 %v8581
    %v9418 = vunpack.c.l.b16 %v8582
    %v9419 = vunpack.c.h.b16 %v8582
    %v9420 = vunpack.c.l.b16 %v8583
    %v9421 = vunpack.c.l.b16 %v8584
    %v9422 = vunpack.c.h.b16 %v8584
    %v9423 = vunpack.c.l.b16 %v8585
    %v9424 = vunpack.c.l.b16 %v8586
    %v9425 = vunpack.c.h.b16 %v8586
    %v9426 = vunpack.c.l.b16 %v8587
    %v9427 = vunpack.c.l.b16 %v8588
    %v9428 = vunpack.c.h.b16 %v8588
    %v9429 = vunpack.c.l.b16 %v8589
    %v9430 = vunpack.c.l.b16 %v8590
    %v9431 = vunpack.c.h.b16 %v8590
    %v9432 = vunpack.c.l.b16 %v8591
    %v9433 = vunpack.c.l.b16 %v8592
    %v9434 = vunpack.c.h.b16 %v8592
    %v9435 = vunpack.c.l.b16 %v8593
    %v9436 = vunpack.c.l.b16 %v8594
    %v9437 = vunpack.c.h.b16 %v8594
    %v9438 = vunpack.c.l.b16 %v8595
    %v9439 = vunpack.c.l.b16 %v8596
    %v9440 = vunpack.c.h.b16 %v8596
    %v9441 = vunpack.c.l.b16 %v8597
    %v9442 = vunpack.c.l.b16 %v8598
    %v9443 = vunpack.c.h.b16 %v8598
    %v9444 = vunpack.c.l.b16 %v8599
    %v9445 = vunpack.c.l.b16 %v8600
    %v9446 = vunpack.c.h.b16 %v8600
    %v9447 = vunpack.c.l.b16 %v8601
    %v9448 = vunpack.c.l.b16 %v8602
    %v9449 = vunpack.c.h.b16 %v8602
    %v9450 = vunpack.c.l.b16 %v8603
    %v9451 = vunpack.c.l.b16 %v8604
    %v9452 = vunpack.c.h.b16 %v8604
    %v9453 = vunpack.c.l.b16 %v8605
    %v9454 = vunpack.c.l.b16 %v8606
    %v9455 = vunpack.c.h.b16 %v8606
    %v9456 = vunpack.c.l.b16 %v8607
    %v9457 = vunpack.c.l.b16 %v8608
    %v9458 = vunpack.c.h.b16 %v8608
    %v9459 = vunpack.c.l.b16 %v8609
    %v9460 = vunpack.c.l.b16 %v8610
    %v9461 = vunpack.c.h.b16 %v8610
    %v9462 = vunpack.c.l.b16 %v8611
    %v9463 = vunpack.c.l.b16 %v8612
    %v9464 = vunpack.c.h.b16 %v8612
    %v9465 = vunpack.c.l.b16 %v8613
    %v9466 = vunpack.c.l.b16 %v8614
    %v9467 = vunpack.c.h.b16 %v8614
    %v9468 = vunpack.c.l.b16 %v8615
    %v9469 = vunpack.c.l.b16 %v8616
    %v9470 = vunpack.c.h.b16 %v8616
    %v9471 = vunpack.c.l.b16 %v8617
    %v9472 = vunpack.c.l.b16 %v8618
    %v9473 = vunpack.c.h.b16 %v8618
    %v9474 = vunpack.c.l.b16 %v8619
    %v9475 = vunpack.c.l.b16 %v8620
    %v9476 = vunpack.c.h.b16 %v8620
    %v9477 = vunpack.c.l.b16 %v8621
    %v9478 = vunpack.c.l.b16 %v8622
    %v9479 = vunpack.c.h.b16 %v8622
    %v9480 = vunpack.c.l.b16 %v8623
    %v9481 = vunpack.c.l.b16 %v8624
    %v9482 = vunpack.c.h.b16 %v8624
    %v9483 = vunpack.c.l.b16 %v8625
    %v9484 = vunpack.c.l.b16 %v8626
    %v9485 = vunpack.c.h.b16 %v8626
    %v9486 = vunpack.c.l.b16 %v8627
    %v9487 = vunpack.c.l.b16 %v8628
    %v9488 = vunpack.c.h.b16 %v8628
    %v9489 = vunpack.c.l.b16 %v8629
    %v9490 = vunpack.c.l.b16 %v8630
    %v9491 = vunpack.c.h.b16 %v8630
    %v9492 = vunpack.c.l.b16 %v8631
    %v9493 = vunpack.c.l.b16 %v8632
    %v9494 = vunpack.c.h.b16 %v8632
    %v9495 = vunpack.c.l.b16 %v8633
    %v9496 = vunpack.c.l.b16 %v8634
    %v9497 = vunpack.c.h.b16 %v8634
    %v9498 = vunpack.c.l.b16 %v8635
    %v9499 = vunpack.c.l.b16 %v8636
    %v9500 = vunpack.c.h.b16 %v8636
    %v9501 = vunpack.c.l.b16 %v8637
    %v9502 = vunpack.c.l.b16 %v8638
    %v9503 = vunpack.c.h.b16 %v8638
    %v9504 = vunpack.c.l.b16 %v8639
    %v9505 = vunpack.c.l.b16 %v8640
    %v9506 = vunpack.c.h.b16 %v8640
    %v9507 = vunpack.c.l.b16 %v8641
    %v9508 = vunpack.c.l.b16 %v8642
    %v9509 = vunpack.c.h.b16 %v8642
    %v9510 = vunpack.c.l.b16 %v8643
    %v9511 = vunpack.c.l.b16 %v8644
    %v9512 = vunpack.c.h.b16 %v8644
    %v9513 = vunpack.c.l.b16 %v8645
    %v9514 = vunpack.c.l.b16 %v8646
    %v9515 = vunpack.c.h.b16 %v8646
    %v9516 = vunpack.c.l.b16 %v8647
    %v9517 = vunpack.c.l.b16 %v8648
    %v9518 = vunpack.c.h.b16 %v8648
    %v9519 = vunpack.c.l.b16 %v8649
    %v9520 = vunpack.c.l.b16 %v8650
    %v9521 = vunpack.c.h.b16 %v8650
    %v9522 = vunpack.c.l.b16 %v8651
    %v9523 = vunpack.c.l.b16 %v8652
    %v9524 = vunpack.c.h.b16 %v8652
    %v9525 = vunpack.c.l.b16 %v8653
    %v9526 = vunpack.c.l.b16 %v8654
    %v9527 = vunpack.c.h.b16 %v8654
    %v9528 = vunpack.c.l.b16 %v8655
    %v9529 = vunpack.c.l.b16 %v8656
    %v9530 = vunpack.c.h.b16 %v8656
    %v9531 = vunpack.c.l.b16 %v8657
    %v9532 = vunpack.c.l.b16 %v8658
    %v9533 = vunpack.c.h.b16 %v8658
    %v9534 = vunpack.c.l.b16 %v8659
    %v9535 = vunpack.c.l.b16 %v8660
    %v9536 = vunpack.c.h.b16 %v8660
    %v9537 = vunpack.c.l.b16 %v8661
    %v9538 = vunpack.c.l.b16 %v8662
    %v9539 = vunpack.c.h.b16 %v8662
    %v9540 = vunpack.c.l.b16 %v8663
    %v9541 = vunpack.c.l.b16 %v8664
    %v9542 = vunpack.c.h.b16 %v8664
    %v9543 = vunpack.c.l.b16 %v8665
    %v9544 = vunpack.c.l.b16 %v8666
    %v9545 = vunpack.c.h.b16 %v8666
    %v9546 = vunpack.c.l.b16 %v8667
    %v9547 = vunpack.c.l.b16 %v8668
    %v9548 = vunpack.c.h.b16 %v8668
    %v9549 = vunpack.c.l.b16 %v8669
    %v9550 = vunpack.c.l.b16 %v8670
    %v9551 = vunpack.c.h.b16 %v8670
    %v9552 = vunpack.c.l.b16 %v8671
    %v9553 = vunpack.c.l.b16 %v8672
    %v9554 = vunpack.c.h.b16 %v8672
    %v9555 = vunpack.c.l.b16 %v8673
    %v9556 = vunpack.c.l.b16 %v8674
    %v9557 = vunpack.c.h.b16 %v8674
    %v9558 = vunpack.c.l.b16 %v8675
    %v9559 = vunpack.c.l.b16 %v8676
    %v9560 = vunpack.c.h.b16 %v8676
    %v9561 = vunpack.c.l.b16 %v8677
    %v9562 = vunpack.c.l.b16 %v8678
    %v9563 = vunpack.c.h.b16 %v8678
    %v9564 = vunpack.c.l.b16 %v8679
    %v9565 = vunpack.c.l.b16 %v8680
    %v9566 = vunpack.c.h.b16 %v8680
    %v9567 = vunpack.c.l.b16 %v8681
    %v9568 = vunpack.c.l.b16 %v8682
    %v9569 = vunpack.c.h.b16 %v8682
    %v9570 = vunpack.c.l.b16 %v8683
    %v9571 = vunpack.c.l.b16 %v8684
    %v9572 = vunpack.c.h.b16 %v8684
    %v9573 = vunpack.c.l.b16 %v8685
    %v9574 = vunpack.c.l.b16 %v8686
    %v9575 = vunpack.c.h.b16 %v8686
    %v9576 = vunpack.c.l.b16 %v8687
    %v9577 = vunpack.c.l.b16 %v8688
    %v9578 = vunpack.c.h.b16 %v8688
    %v9579 = vunpack.c.l.b16 %v8689
    %v9580 = vunpack.c.l.b16 %v8690
    %v9581 = vunpack.c.h.b16 %v8690
    %v9582 = vunpack.c.l.b16 %v8691
    %v9583 = vunpack.c.l.b16 %v8692
    %v9584 = vunpack.c.h.b16 %v8692
    %v9585 = vunpack.c.l.b16 %v8693
    %v9586 = vunpack.c.l.b16 %v8694
    %v9587 = vunpack.c.h.b16 %v8694
    %v9588 = vunpack.c.l.b16 %v8695
    %v9589 = vunpack.c.l.b16 %v8696
    %v9590 = vunpack.c.h.b16 %v8696
    %v9591 = vunpack.c.l.b16 %v8697
    %v9592 = vunpack.c.l.b16 %v8698
    %v9593 = vunpack.c.h.b16 %v8698
    %v9594 = vunpack.c.l.b16 %v8699
    %v9595 = vunpack.c.l.b16 %v8700
    %v9596 = vunpack.c.h.b16 %v8700
    %v9597 = vunpack.c.l.b16 %v8701
    %v9598 = vunpack.c.l.b16 %v8702
    %v9599 = vunpack.c.h.b16 %v8702
    %v9600 = vunpack.c.l.b16 %v8703
    %v9601 = vunpack.c.l.b16 %v8704
    %v9602 = vunpack.c.h.b16 %v8704
    %v9603 = vunpack.c.l.b16 %v8705
    %v9604 = vunpack.c.l.b16 %v8706
    %v9605 = vunpack.c.h.b16 %v8706
    %v9606 = vunpack.c.l.b16 %v8707
    %v9607 = vunpack.c.l.b16 %v8708
    %v9608 = vunpack.c.h.b16 %v8708
    %v9609 = vunpack.c.l.b16 %v8709
    %v9610 = vunpack.c.l.b16 %v8710
    %v9611 = vunpack.c.h.b16 %v8710
    %v9612 = vunpack.c.l.b16 %v8711
    %v9613 = vunpack.c.l.b16 %v8712
    %v9614 = vunpack.c.h.b16 %v8712
    %v9615 = vunpack.c.l.b16 %v8713
    %v9616 = vunpack.c.l.b16 %v8714
    %v9617 = vunpack.c.h.b16 %v8714
    %v9618 = vunpack.c.l.b16 %v8715
    %v9619 = vunpack.c.l.b16 %v8716
    %v9620 = vunpack.c.h.b16 %v8716
    %v9621 = vunpack.c.l.b16 %v8717
    %v9622 = vunpack.c.l.b16 %v8718
    %v9623 = vunpack.c.h.b16 %v8718
    %v9624 = vunpack.c.l.b16 %v8719
    %v9625 = vunpack.c.l.b16 %v8720
    %v9626 = vunpack.c.h.b16 %v8720
    %v9627 = vunpack.c.l.b16 %v8721
    %v9628 = vunpack.c.l.b16 %v8722
    %v9629 = vunpack.c.h.b16 %v8722
    %v9630 = vunpack.c.l.b16 %v8723
    %v9631 = vunpack.c.l.b16 %v8724
    %v9632 = vunpack.c.h.b16 %v8724
    %v9633 = vunpack.c.l.b16 %v8725
    %v9634 = vunpack.c.l.b16 %v8726
    %v9635 = vunpack.c.h.b16 %v8726
    %v9636 = vunpack.c.l.b16 %v8727
    %v9637 = vunpack.c.l.b16 %v8728
    %v9638 = vunpack.c.h.b16 %v8728
    %v9639 = vunpack.c.l.b16 %v8729
    %v9640 = vunpack.c.l.b16 %v8730
    %v9641 = vunpack.c.h.b16 %v8730
    %v9642 = vunpack.c.l.b16 %v8731
    %v9643 = vunpack.c.l.b16 %v8732
    %v9644 = vunpack.c.h.b16 %v8732
    %v9645 = vunpack.c.l.b16 %v8733
    %v9646 = vunpack.c.l.b16 %v8734
    %v9647 = vunpack.c.h.b16 %v8734
    %v9648 = vunpack.c.l.b16 %v8735
    %v9649 = vunpack.c.l.b16 %v8736
    %v9650 = vunpack.c.h.b16 %v8736
    %v9651 = vunpack.c.l.b16 %v8737
    %v9652 = vunpack.c.l.b16 %v8738
    %v9653 = vunpack.c.h.b16 %v8738
    %v9654 = vunpack.c.l.b16 %v8739
    %v9655 = vunpack.c.l.b16 %v8740
    %v9656 = vunpack.c.h.b16 %v8740
    %v9657 = vunpack.c.l.b16 %v8741
    %v9658 = vunpack.c.l.b16 %v8742
    %v9659 = vunpack.c.h.b16 %v8742
    %v9660 = vunpack.c.l.b16 %v8743
    %v9661 = vunpack.c.l.b16 %v8744
    %v9662 = vunpack.c.h.b16 %v8744
    %v9663 = vunpack.c.l.b16 %v8745
    %v9664 = vunpack.c.l.b16 %v8746
    %v9665 = vunpack.c.h.b16 %v8746
    %v9666 = vunpack.c.l.b16 %v8747
    %v9667 = vunpack.c.l.b16 %v8748
    %v9668 = vunpack.c.h.b16 %v8748
    %v9669 = vunpack.c.l.b16 %v8749
    %v9670 = vunpack.c.l.b16 %v8750
    %v9671 = vunpack.c.h.b16 %v8750
    %v9672 = vunpack.c.l.b16 %v8751
    %v9673 = vunpack.c.l.b16 %v8752
    %v9674 = vunpack.c.h.b16 %v8752
    %v9675 = vunpack.c.l.b16 %v8753
    %v9676 = vunpack.c.l.b16 %v8754
    %v9677 = vunpack.c.h.b16 %v8754
    %v9678 = vunpack.c.l.b16 %v8755
    %v9679 = vunpack.c.l.b16 %v8756
    %v9680 = vunpack.c.h.b16 %v8756
    %v9681 = vunpack.c.l.b16 %v8757
    %v9682 = vunpack.c.l.b16 %v8758
    %v9683 = vunpack.c.h.b16 %v8758
    %v9684 = vunpack.c.l.b16 %v8759
    %v9685 = vunpack.c.l.b16 %v8760
    %v9686 = vunpack.c.h.b16 %v8760
    %v9687 = vunpack.c.l.b16 %v8761
    %v9688 = vunpack.c.l.b16 %v8762
    %v9689 = vunpack.c.h.b16 %v8762
    %v9690 = vunpack.c.l.b16 %v8763
    %v9691 = vunpack.c.l.b16 %v8764
    %v9692 = vunpack.c.h.b16 %v8764
    %v9693 = vunpack.c.l.b16 %v8765
    %v9694 = vunpack.c.l.b16 %v8766
    %v9695 = vunpack.c.h.b16 %v8766
    %v9696 = vunpack.c.l.b16 %v8767
    %v9697 = vunpack.c.l.b16 %v8768
    %v9698 = vunpack.c.h.b16 %v8768
    %v9699 = vunpack.c.l.b16 %v8769
    %v9700 = vunpack.c.l.b16 %v8770
    %v9701 = vunpack.c.h.b16 %v8770
    %v9702 = vunpack.c.l.b16 %v8771
    %v9703 = vunpack.c.l.b16 %v8772
    %v9704 = vunpack.c.h.b16 %v8772
    %v9705 = vunpack.c.l.b16 %v8773
    %v9706 = vunpack.c.l.b16 %v8774
    %v9707 = vunpack.c.h.b16 %v8774
    %v9708 = vunpack.c.l.b16 %v8775
    %v9709 = vunpack.c.l.b16 %v8776
    %v9710 = vunpack.c.h.b16 %v8776
    %v9711 = vunpack.c.l.b16 %v8777
    %v9712 = vunpack.c.l.b16 %v8778
    %v9713 = vunpack.c.h.b16 %v8778
    %v9714 = vunpack.c.l.b16 %v8779
    %v9715 = vunpack.c.l.b16 %v8780
    %v9716 = vunpack.c.h.b16 %v8780
    %v9717 = vunpack.c.l.b16 %v8781
    %v9718 = vunpack.c.l.b16 %v8782
    %v9719 = vunpack.c.h.b16 %v8782
    %v9720 = vunpack.c.l.b16 %v8783
    %v9721 = vunpack.c.l.b16 %v8784
    %v9722 = vunpack.c.h.b16 %v8784
    %v9723 = vunpack.c.l.b16 %v8785
    %v9724 = vunpack.c.l.b16 %v8786
    %v9725 = vunpack.c.h.b16 %v8786
    %v9726 = vunpack.c.l.b16 %v8787
    %v9727 = vunpack.c.l.b16 %v8788
    %v9728 = vunpack.c.h.b16 %v8788
    %v9729 = vunpack.c.l.b16 %v8789
    %v9730 = vunpack.c.l.b16 %v8790
    %v9731 = vunpack.c.h.b16 %v8790
    %v9732 = vunpack.c.l.b16 %v8791
    %v9733 = vunpack.c.l.b16 %v8792
    %v9734 = vunpack.c.h.b16 %v8792
    %v9735 = vunpack.c.l.b16 %v8793
    %v9736 = vunpack.c.l.b16 %v8794
    %v9737 = vunpack.c.h.b16 %v8794
    %v9738 = vunpack.c.l.b16 %v8795
    %v9739 = vunpack.c.l.b16 %v8796
    %v9740 = vunpack.c.h.b16 %v8796
    %v9741 = vunpack.c.l.b16 %v8797
    %v9742 = vunpack.c.l.b16 %v8798
    %v9743 = vunpack.c.h.b16 %v8798
    %v9744 = vunpack.c.l.b16 %v8799
    %v9745 = vunpack.c.l.b16 %v8800
    %v9746 = vunpack.c.h.b16 %v8800
    %v9747 = vunpack.c.l.b16 %v8801
    %v9748 = vunpack.c.l.b16 %v8802
    %v9749 = vunpack.c.h.b16 %v8802
    %v9750 = vunpack.c.l.b16 %v8803
    %v9751 = vunpack.c.l.b16 %v8804
    %v9752 = vunpack.c.h.b16 %v8804
    %v9753 = vunpack.c.l.b16 %v8805
    %v9754 = vunpack.c.l.b16 %v8806
    %v9755 = vunpack.c.h.b16 %v8806
    %v9756 = vunpack.c.l.b16 %v8807
    %v9757 = vunpack.c.l.b16 %v8808
    %v9758 = vunpack.c.h.b16 %v8808
    %v9759 = vunpack.c.l.b16 %v8809
    %v9760 = vunpack.c.l.b16 %v8810
    %v9761 = vunpack.c.h.b16 %v8810
    %v9762 = vunpack.c.l.b16 %v8811
    %v9763 = vunpack.c.l.b16 %v8812
    %v9764 = vunpack.c.h.b16 %v8812
    %v9765 = vunpack.c.l.b16 %v8813
    %v9766 = vunpack.c.l.b16 %v8814
    %v9767 = vunpack.c.h.b16 %v8814
    %v9768 = vunpack.c.l.b16 %v8815
    %v9769 = vunpack.c.l.b16 %v8816
    %v9770 = vunpack.c.h.b16 %v8816
    %v9771 = vunpack.c.l.b16 %v8817
    %v9772 = vunpack.c.l.b16 %v8818
    %v9773 = vunpack.c.h.b16 %v8818
    %v9774 = vunpack.c.l.b16 %v8819
    %v9775 = vunpack.c.l.b16 %v8820
    %v9776 = vunpack.c.h.b16 %v8820
    %v9777 = vunpack.c.l.b16 %v8821
    %v9778 = vunpack.c.l.b16 %v8822
    %v9779 = vunpack.c.h.b16 %v8822
    %v9780 = vunpack.c.l.b16 %v8823
    %v9781 = vunpack.c.l.b16 %v8824
    %v9782 = vunpack.c.h.b16 %v8824
    %v9783 = vunpack.c.l.b16 %v8825
    %v9784 = vunpack.c.l.b16 %v8826
    %v9785 = vunpack.c.h.b16 %v8826
    %v9786 = vunpack.c.l.b16 %v8827
    %v9787 = vunpack.c.l.b16 %v8828
    %v9788 = vunpack.c.h.b16 %v8828
    %v9789 = vunpack.c.l.b16 %v8829
    %v9790 = vunpack.c.l.b16 %v8830
    %v9791 = vunpack.c.h.b16 %v8830
    %v9792 = vunpack.c.l.b16 %v8831
    %v9793 = vunpack.c.l.b16 %v8832
    %v9794 = vunpack.c.h.b16 %v8832
    %v9795 = vunpack.c.l.b16 %v8833
    %v9796 = vunpack.c.l.b16 %v8834
    %v9797 = vunpack.c.h.b16 %v8834
    %v9798 = vunpack.c.l.b16 %v8835
    %v9799 = vunpack.c.l.b16 %v8836
    %v9800 = vunpack.c.h.b16 %v8836
    %v9801 = vunpack.c.l.b16 %v8837
    %v9802 = vunpack.c.l.b16 %v8838
    %v9803 = vunpack.c.h.b16 %v8838
    %v9804 = vunpack.c.l.b16 %v8839
    %v9805 = vunpack.c.l.b16 %v8840
    %v9806 = vunpack.c.h.b16 %v8840
    %v9807 = vunpack.c.l.b16 %v8841
    %v9808 = vunpack.c.l.b16 %v8842
    %v9809 = vunpack.c.h.b16 %v8842
    %v9810 = vunpack.c.l.b16 %v8843
    %v9811 = vunpack.c.l.b16 %v8844
    %v9812 = vunpack.c.h.b16 %v8844
    %v9813 = vunpack.c.l.b16 %v8845
    %v9814 = vunpack.c.l.b16 %v8846
    %v9815 = vunpack.c.h.b16 %v8846
    %v9816 = vunpack.c.l.b16 %v8847
    %v9817 = vunpack.c.l.b16 %v8848
    %v9818 = vunpack.c.h.b16 %v8848
    %v9819 = vunpack.c.l.b16 %v8849
    %v9820 = vunpack.c.l.b16 %v8850
    %v9821 = vunpack.c.h.b16 %v8850
    %v9822 = vunpack.c.l.b16 %v8851
    %v9823 = vunpack.c.l.b16 %v8852
    %v9824 = vunpack.c.h.b16 %v8852
    %v9825 = vunpack.c.l.b16 %v8853
    %v9826 = vunpack.c.l.b16 %v8854
    %v9827 = vunpack.c.h.b16 %v8854
    %v9828 = vunpack.c.l.b16 %v8855
    %v9829 = vunpack.c.l.b16 %v8856
    %v9830 = vunpack.c.h.b16 %v8856
    %v9831 = vunpack.c.l.b16 %v8857
    %v9832 = vunpack.c.l.b16 %v8858
    %v9833 = vunpack.c.h.b16 %v8858
    %v9834 = vunpack.c.l.b16 %v8859
    %v9835 = vunpack.c.l.b16 %v8860
    %v9836 = vunpack.c.h.b16 %v8860
    %v9837 = vunpack.c.l.b16 %v8861
    %v9838 = vunpack.c.l.b16 %v8862
    %v9839 = vunpack.c.h.b16 %v8862
    %v9840 = vunpack.c.l.b16 %v8863
    %v9841 = vpack.c.b16 %v9268, %v9265
    %v9842 = vpack.c.b16 %v9269, %v9266
    %v9843 = vpack.c.b16 %v9270, %v9267
    %v9844 = vpack.c.b16 %v9274, %v9271
    %v9845 = vpack.c.b16 %v9275, %v9272
    %v9846 = vpack.c.b16 %v9276, %v9273
    %v9847 = vpack.c.b16 %v9280, %v9277
    %v9848 = vpack.c.b16 %v9281, %v9278
    %v9849 = vpack.c.b16 %v9282, %v9279
    %v9850 = vpack.c.b16 %v9286, %v9283
    %v9851 = vpack.c.b16 %v9287, %v9284
    %v9852 = vpack.c.b16 %v9288, %v9285
    %v9853 = vpack.c.b16 %v9292, %v9289
    %v9854 = vpack.c.b16 %v9293, %v9290
    %v9855 = vpack.c.b16 %v9294, %v9291
    %v9856 = vpack.c.b16 %v9298, %v9295
    %v9857 = vpack.c.b16 %v9299, %v9296
    %v9858 = vpack.c.b16 %v9300, %v9297
    %v9859 = vpack.c.b16 %v9304, %v9301
    %v9860 = vpack.c.b16 %v9305, %v9302
    %v9861 = vpack.c.b16 %v9306, %v9303
    %v9862 = vpack.c.b16 %v9310, %v9307
    %v9863 = vpack.c.b16 %v9311, %v9308
    %v9864 = vpack.c.b16 %v9312, %v9309
    %v9865 = vpack.c.b16 %v9316, %v9313
    %v9866 = vpack.c.b16 %v9317, %v9314
    %v9867 = vpack.c.b16 %v9318, %v9315
    %v9868 = vpack.c.b16 %v9322, %v9319
    %v9869 = vpack.c.b16 %v9323, %v9320
    %v9870 = vpack.c.b16 %v9324, %v9321
    %v9871 = vpack.c.b16 %v9328, %v9325
    %v9872 = vpack.c.b16 %v9329, %v9326
    %v9873 = vpack.c.b16 %v9330, %v9327
    %v9874 = vpack.c.b16 %v9334, %v9331
    %v9875 = vpack.c.b16 %v9335, %v9332
    %v9876 = vpack.c.b16 %v9336, %v9333
    %v9877 = vpack.c.b16 %v9340, %v9337
    %v9878 = vpack.c.b16 %v9341, %v9338
    %v9879 = vpack.c.b16 %v9342, %v9339
    %v9880 = vpack.c.b16 %v9346, %v9343
    %v9881 = vpack.c.b16 %v9347, %v9344
    %v9882 = vpack.c.b16 %v9348, %v9345
    %v9883 = vpack.c.b16 %v9352, %v9349
    %v9884 = vpack.c.b16 %v9353, %v9350
    %v9885 = vpack.c.b16 %v9354, %v9351
    %v9886 = vpack.c.b16 %v9358, %v9355
    %v9887 = vpack.c.b16 %v9359, %v9356
    %v9888 = vpack.c.b16 %v9360, %v9357
    %v9889 = vpack.c.b16 %v9364, %v9361
    %v9890 = vpack.c.b16 %v9365, %v9362
    %v9891 = vpack.c.b16 %v9366, %v9363
    %v9892 = vpack.c.b16 %v9370, %v9367
    %v9893 = vpack.c.b16 %v9371, %v9368
    %v9894 = vpack.c.b16 %v9372, %v9369
    %v9895 = vpack.c.b16 %v9376, %v9373
    %v9896 = vpack.c.b16 %v9377, %v9374
    %v9897 = vpack.c.b16 %v9378, %v9375
    %v9898 = vpack.c.b16 %v9382, %v9379
    %v9899 = vpack.c.b16 %v9383, %v9380
    %v9900 = vpack.c.b16 %v9384, %v9381
    %v9901 = vpack.c.b16 %v9388, %v9385
    %v9902 = vpack.c.b16 %v9389, %v9386
    %v9903 = vpack.c.b16 %v9390, %v9387
    %v9904 = vpack.c.b16 %v9394, %v9391
    %v9905 = vpack.c.b16 %v9395, %v9392
    %v9906 = vpack.c.b16 %v9396, %v9393
    %v9907 = vpack.c.b16 %v9400, %v9397
    %v9908 = vpack.c.b16 %v9401, %v9398
    %v9909 = vpack.c.b16 %v9402, %v9399
    %v9910 = vpack.c.b16 %v9406, %v9403
    %v9911 = vpack.c.b16 %v9407, %v9404
    %v9912 = vpack.c.b16 %v9408, %v9405
    %v9913 = vpack.c.b16 %v9412, %v9409
    %v9914 = vpack.c.b16 %v9413, %v9410
    %v9915 = vpack.c.b16 %v9414, %v9411
    %v9916 = vpack.c.b16 %v9418, %v9415
    %v9917 = vpack.c.b16 %v9419, %v9416
    %v9918 = vpack.c.b16 %v9420, %v9417
    %v9919 = vpack.c.b16 %v9424, %v9421
    %v9920 = vpack.c.b16 %v9425, %v9422
    %v9921 = vpack.c.b16 %v9426, %v9423
    %v9922 = vpack.c.b16 %v9430, %v9427
    %v9923 = vpack.c.b16 %v9431, %v9428
    %v9924 = vpack.c.b16 %v9432, %v9429
    %v9925 = vpack.c.b16 %v9436, %v9433
    %v9926 = vpack.c.b16 %v9437, %v9434
    %v9927 = vpack.c.b16 %v9438, %v9435
    %v9928 = vpack.c.b16 %v9442, %v9439
    %v9929 = vpack.c.b16 %v9443, %v9440
    %v9930 = vpack.c.b16 %v9444, %v9441
    %v9931 = vpack.c.b16 %v9448, %v9445
    %v9932 = vpack.c.b16 %v9449, %v9446
    %v9933 = vpack.c.b16 %v9450, %v9447
    %v9934 = vpack.c.b16 %v9454, %v9451
    %v9935 = vpack.c.b16 %v9455, %v9452
    %v9936 = vpack.c.b16 %v9456, %v9453
    %v9937 = vpack.c.b16 %v9460, %v9457
    %v9938 = vpack.c.b16 %v9461, %v9458
    %v9939 = vpack.c.b16 %v9462, %v9459
    %v9940 = vpack.c.b16 %v9466, %v9463
    %v9941 = vpack.c.b16 %v9467, %v9464
    %v9942 = vpack.c.b16 %v9468, %v9465
    %v9943 = vpack.c.b16 %v9472, %v9469
    %v9944 = vpack.c.b16 %v9473, %v9470
    %v9945 = vpack.c.b16 %v9474, %v9471
    %v9946 = vpack.c.b16 %v9478, %v9475
    %v9947 = vpack.c.b16 %v9479, %v9476
    %v9948 = vpack.c.b16 %v9480, %v9477
    %v9949 = vpack.c.b16 %v9484, %v9481
    %v9950 = vpack.c.b16 %v9485, %v9482
    %v9951 = vpack.c.b16 %v9486, %v9483
    %v9952 = vpack.c.b16 %v9490, %v9487
    %v9953 = vpack.c.b16 %v9491, %v9488
    %v9954 = vpack.c.b16 %v9492, %v9489
    %v9955 = vpack.c.b16 %v9496, %v9493
    %v9956 = vpack.c.b16 %v9497, %v9494
    %v9957 = vpack.c.b16 %v9498, %v9495
    %v9958 = vpack.c.b16 %v9502, %v9499
    %v9959 = vpack.c.b16 %v9503, %v9500
    %v9960 = vpack.c.b16 %v9504, %v9501
    %v9961 = vpack.c.b16 %v9508, %v9505
    %v9962 = vpack.c.b16 %v9509, %v9506
    %v9963 = vpack.c.b16 %v9510, %v9507
    %v9964 = vpack.c.b16 %v9514, %v9511
    %v9965 = vpack.c.b16 %v9515, %v9512
    %v9966 = vpack.c.b16 %v9516, %v9513
    %v9967 = vpack.c.b16 %v9520, %v9517
    %v9968 = vpack.c.b16 %v9521, %v9518
    %v9969 = vpack.c.b16 %v9522, %v9519
    %v9970 = vpack.c.b16 %v9526, %v9523
    %v9971 = vpack.c.b16 %v9527, %v9524
    %v9972 = vpack.c.b16 %v9528, %v9525
    %v9973 = vpack.c.b16 %v9532, %v9529
    %v9974 = vpack.c.b16 %v9533, %v9530
    %v9975 = vpack.c.b16 %v9534, %v9531
    %v9976 = vpack.c.b16 %v9538, %v9535
    %v9977 = vpack.c.b16 %v9539, %v9536
    %v9978 = vpack.c.b16 %v9540, %v9537
    %v9979 = vpack.c.b16 %v9544, %v9541
    %v9980 = vpack.c.b16 %v9545, %v9542
    %v9981 = vpack.c.b16 %v9546, %v9543
    %v9982 = vpack.c.b16 %v9550, %v9547
    %v9983 = vpack.c.b16 %v9551, %v9548
    %v9984 = vpack.c.b16 %v9552, %v9549
    %v9985 = vpack.c.b16 %v9556, %v9553
    %v9986 = vpack.c.b16 %v9557, %v9554
    %v9987 = vpack.c.b16 %v9558, %v9555
    %v9988 = vpack.c.b16 %v9562, %v9559
    %v9989 = vpack.c.b16 %v9563, %v9560
    %v9990 = vpack.c.b16 %v9564, %v9561
    %v9991 = vpack.c.b16 %v9568, %v9565
    %v9992 = vpack.c.b16 %v9569, %v9566
    %v9993 = vpack.c.b16 %v9570, %v9567
    %v9994 = vpack.c.b16 %v9574, %v9571
    %v9995 = vpack.c.b16 %v9575, %v9572
    %v9996 = vpack.c.b16 %v9576, %v9573
    %v9997 = vpack.c.b16 %v9580, %v9577
    %v9998 = vpack.c.b16 %v9581, %v9578
    %v9999 = vpack.c.b16 %v9582, %v9579
    %v10000 = vpack.c.b16 %v9586, %v9583
    %v10001 = vpack.c.b16 %v9587, %v9584
    %v10002 = vpack.c.b16 %v9588, %v9585
    %v10003 = vpack.c.b16 %v9592, %v9589
    %v10004 = vpack.c.b16 %v9593, %v9590
    %v10005 = vpack.c.b16 %v9594, %v9591
    %v10006 = vpack.c.b16 %v9598, %v9595
    %v10007 = vpack.c.b16 %v9599, %v9596
    %v10008 = vpack.c.b16 %v9600, %v9597
    %v10009 = vpack.c.b16 %v9604, %v9601
    %v10010 = vpack.c.b16 %v9605, %v9602
    %v10011 = vpack.c.b16 %v9606, %v9603
    %v10012 = vpack.c.b16 %v9610, %v9607
    %v10013 = vpack.c.b16 %v9611, %v9608
    %v10014 = vpack.c.b16 %v9612, %v9609
    %v10015 = vpack.c.b16 %v9616, %v9613
    %v10016 = vpack.c.b16 %v9617, %v9614
    %v10017 = vpack.c.b16 %v9618, %v9615
    %v10018 = vpack.c.b16 %v9622, %v9619
    %v10019 = vpack.c.b16 %v9623, %v9620
    %v10020 = vpack.c.b16 %v9624, %v9621
    %v10021 = vpack.c.b16 %v9628, %v9625
    %v10022 = vpack.c.b16 %v9629, %v9626
    %v10023 = vpack.c.b16 %v9630, %v9627
    %v10024 = vpack.c.b16 %v9634, %v9631
    %v10025 = vpack.c.b16 %v9635, %v9632
    %v10026 = vpack.c.b16 %v9636, %v9633
    %v10027 = vpack.c.b16 %v9640, %v9637
    %v10028 = vpack.c.b16 %v9641, %v9638
    %v10029 = vpack.c.b16 %v9642, %v9639
    %v10030 = vpack.c.b16 %v9646, %v9643
    %v10031 = vpack.c.b16 %v9647, %v9644
    %v10032 = vpack.c.b16 %v9648, %v9645
    %v10033 = vpack.c.b16 %v9652, %v9649
    %v10034 = vpack.c.b16 %v9653, %v9650
    %v10035 = vpack.c.b16 %v9654, %v9651
    %v10036 = vpack.c.b16 %v9658, %v9655
    %v10037 = vpack.c.b16 %v9659, %v9656
    %v10038 = vpack.c.b16 %v9660, %v9657
    %v10039 = vpack.c.b16 %v9664, %v9661
    %v10040 = vpack.c.b16 %v9665, %v9662
    %v10041 = vpack.c.b16 %v9666, %v9663
    %v10042 = vpack.c.b16 %v9670, %v9667
    %v10043 = vpack.c.b16 %v9671, %v9668
    %v10044 = vpack.c.b16 %v9672, %v9669
    %v10045 = vpack.c.b16 %v9676, %v9673
    %v10046 = vpack.c.b16 %v9677, %v9674
    %v10047 = vpack.c.b16 %v9678, %v9675
    %v10048 = vpack.c.b16 %v9682, %v9679
    %v10049 = vpack.c.b16 %v9683, %v9680
    %v10050 = vpack.c.b16 %v9684, %v9681
    %v10051 = vpack.c.b16 %v9688, %v9685
    %v10052 = vpack.c.b16 %v9689, %v9686
    %v10053 = vpack.c.b16 %v9690, %v9687
    %v10054 = vpack.c.b16 %v9694, %v9691
    %v10055 = vpack.c.b16 %v9695, %v9692
    %v10056 = vpack.c.b16 %v9696, %v9693
    %v10057 = vpack.c.b16 %v9700, %v9697
    %v10058 = vpack.c.b16 %v9701, %v9698
    %v10059 = vpack.c.b16 %v9702, %v9699
    %v10060 = vpack.c.b16 %v9706, %v9703
    %v10061 = vpack.c.b16 %v9707, %v9704
    %v10062 = vpack.c.b16 %v9708, %v9705
    %v10063 = vpack.c.b16 %v9712, %v9709
    %v10064 = vpack.c.b16 %v9713, %v9710
    %v10065 = vpack.c.b16 %v9714, %v9711
    %v10066 = vpack.c.b16 %v9718, %v9715
    %v10067 = vpack.c.b16 %v9719, %v9716
    %v10068 = vpack.c.b16 %v9720, %v9717
    %v10069 = vpack.c.b16 %v9724, %v9721
    %v10070 = vpack.c.b16 %v9725, %v9722
    %v10071 = vpack.c.b16 %v9726, %v9723
    %v10072 = vpack.c.b16 %v9730, %v9727
    %v10073 = vpack.c.b16 %v9731, %v9728
    %v10074 = vpack.c.b16 %v9732, %v9729
    %v10075 = vpack.c.b16 %v9736, %v9733
    %v10076 = vpack.c.b16 %v9737, %v9734
    %v10077 = vpack.c.b16 %v9738, %v9735
    %v10078 = vpack.c.b16 %v9742, %v9739
    %v10079 = vpack.c.b16 %v9743, %v9740
    %v10080 = vpack.c.b16 %v9744, %v9741
    %v10081 = vpack.c.b16 %v9748, %v9745
    %v10082 = vpack.c.b16 %v9749, %v9746
    %v10083 = vpack.c.b16 %v9750, %v9747
    %v10084 = vpack.c.b16 %v9754, %v9751
    %v10085 = vpack.c.b16 %v9755, %v9752
    %v10086 = vpack.c.b16 %v9756, %v9753
    %v10087 = vpack.c.b16 %v9760, %v9757
    %v10088 = vpack.c.b16 %v9761, %v9758
    %v10089 = vpack.c.b16 %v9762, %v9759
    %v10090 = vpack.c.b16 %v9766, %v9763
    %v10091 = vpack.c.b16 %v9767, %v9764
    %v10092 = vpack.c.b16 %v9768, %v9765
    %v10093 = vpack.c.b16 %v9772, %v9769
    %v10094 = vpack.c.b16 %v9773, %v9770
    %v10095 = vpack.c.b16 %v9774, %v9771
    %v10096 = vpack.c.b16 %v9778, %v9775
    %v10097 = vpack.c.b16 %v9779, %v9776
    %v10098 = vpack.c.b16 %v9780, %v9777
    %v10099 = vpack.c.b16 %v9784, %v9781
    %v10100 = vpack.c.b16 %v9785, %v9782
    %v10101 = vpack.c.b16 %v9786, %v9783
    %v10102 = vpack.c.b16 %v9790, %v9787
    %v10103 = vpack.c.b16 %v9791, %v9788
    %v10104 = vpack.c.b16 %v9792, %v9789
    %v10105 = vpack.c.b16 %v9796, %v9793
    %v10106 = vpack.c.b16 %v9797, %v9794
    %v10107 = vpack.c.b16 %v9798, %v9795
    %v10108 = vpack.c.b16 %v9802, %v9799
    %v10109 = vpack.c.b16 %v9803, %v9800
    %v10110 = vpack.c.b16 %v9804, %v9801
    %v10111 = vpack.c.b16 %v9808, %v9805
    %v10112 = vpack.c.b16 %v9809, %v9806
    %v10113 = vpack.c.b16 %v9810, %v9807
    %v10114 = vpack.c.b16 %v9814, %v9811
    %v10115 = vpack.c.b16 %v9815, %v9812
    %v10116 = vpack.c.b16 %v9816, %v9813
    %v10117 = vpack.c.b16 %v9820, %v9817
    %v10118 = vpack.c.b16 %v9821, %v9818
    %v10119 = vpack.c.b16 %v9822, %v9819
    %v10120 = vpack.c.b16 %v9826, %v9823
    %v10121 = vpack.c.b16 %v9827, %v9824
    %v10122 = vpack.c.b16 %v9828, %v9825
    %v10123 = vpack.c.b16 %v9832, %v9829
    %v10124 = vpack.c.b16 %v9833, %v9830
    %v10125 = vpack.c.b16 %v9834, %v9831
    %v10126 = vpack.c.b16 %v9838, %v9835
    %v10127 = vpack.c.b16 %v9839, %v9836
    %v10128 = vpack.c.b16 %v9840, %v9837
    %10417 = vmatprep.subr.bf16.mxu0 %v9863
    %10418 = vmatpush1.bf16.msra.mxu0 %v9862
    %10419 = vmatprep.subr.bf16.mxu0 %v9860
    %10420 = vmatpush1.bf16.msra.mxu0 %v9859
    %10421 = vmatprep.subr.bf16.mxu0 %v9857
    %10422 = vmatpush1.bf16.msra.mxu0 %v9856
    %10423 = vmatprep.subr.bf16.mxu0 %v9854
    %10424 = vmatpush1.bf16.msra.mxu0 %v9853
    %10425 = vmatprep.subr.bf16.mxu0 %v9851
    %10426 = vmatpush1.bf16.msra.mxu0 %v9850
    %10427 = vmatprep.subr.bf16.mxu0 %v9848
    %10428 = vmatpush1.bf16.msra.mxu0 %v9847
    %10429 = vmatprep.subr.bf16.mxu0 %v9845
    %10430 = vmatpush1.bf16.msra.mxu0 %v9844
    %10431 = vmatprep.subr.bf16.mxu0 %v9842
    %10432 = vmatpush1.bf16.msra.mxu0 %v9841
    %10433 = vmatprep.subr.bf16.mxu0 %v9887
    %10434 = vmatpush2.bf16.msra.mxu0 %v9886
    %10435 = vmatprep.subr.bf16.mxu0 %v9884
    %10436 = vmatpush2.bf16.msra.mxu0 %v9883
    %10437 = vmatprep.subr.bf16.mxu0 %v9881
    %10438 = vmatpush2.bf16.msra.mxu0 %v9880
    %10439 = vmatprep.subr.bf16.mxu0 %v9878
    %10440 = vmatpush2.bf16.msra.mxu0 %v9877
    %10441 = vmatprep.subr.bf16.mxu0 %v9875
    %10442 = vmatpush2.bf16.msra.mxu0 %v9874
    %10443 = vmatprep.subr.bf16.mxu0 %v9872
    %10444 = vmatpush2.bf16.msra.mxu0 %v9871
    %10445 = vmatprep.subr.bf16.mxu0 %v9869
    %10446 = vmatpush2.bf16.msra.mxu0 %v9868
    %10447 = vmatprep.subr.bf16.mxu0 %v9866
    %10448 = vmatpush2.bf16.msra.mxu0 %v9865
    %10449 = vmatprep.mubr.bf16.mxu0 %v8457
    %10450 = vmatmul.mubr.bf16.gmra.mxu0 %v8456
    %v10451 = vpop.f32.mrf.mxu0
    %v10452 = vadd.f32 %v8869, %v10451
    %v10453 = vpop.f32.mrf.mxu0
    %v10454 = vadd.f32 %v8873, %v10453
    %v10455 = vpop.f32.mrf.mxu0
    %v10456 = vadd.f32 %v8869, %v10455
    %v10457 = vpop.f32.mrf.mxu0
    %v10458 = vadd.f32 %v8873, %v10457
    %10459 = vmatprep.mubr.bf16.mxu0 %v8469
    %10460 = vmatmul.mubr.bf16.gmra.mxu0 %v8468
    %v10461 = vpop.f32.mrf.mxu0
    %v10462 = vadd.f32 %v8869, %v10461
    %v10463 = vpop.f32.mrf.mxu0
    %v10464 = vadd.f32 %v8873, %v10463
    %v10465 = vpop.f32.mrf.mxu0
    %v10466 = vadd.f32 %v8869, %v10465
    %v10467 = vpop.f32.mrf.mxu0
    %v10468 = vadd.f32 %v8873, %v10467
    %10469 = vdwg.mxu0
    %10470 = vmatprep.subr.bf16.mxu0 %v9911
    %10471 = vmatpush1.bf16.msra.mxu0 %v9910
    %10472 = vmatprep.subr.bf16.mxu0 %v9908
    %10473 = vmatpush1.bf16.msra.mxu0 %v9907
    %10474 = vmatprep.subr.bf16.mxu0 %v9905
    %10475 = vmatpush1.bf16.msra.mxu0 %v9904
    %10476 = vmatprep.subr.bf16.mxu0 %v9902
    %10477 = vmatpush1.bf16.msra.mxu0 %v9901
    %10478 = vmatprep.subr.bf16.mxu0 %v9899
    %10479 = vmatpush1.bf16.msra.mxu0 %v9898
    %10480 = vmatprep.subr.bf16.mxu0 %v9896
    %10481 = vmatpush1.bf16.msra.mxu0 %v9895
    %10482 = vmatprep.subr.bf16.mxu0 %v9893
    %10483 = vmatpush1.bf16.msra.mxu0 %v9892
    %10484 = vmatprep.subr.bf16.mxu0 %v9890
    %10485 = vmatpush1.bf16.msra.mxu0 %v9889
    %10486 = vmatprep.subr.bf16.mxu0 %v9935
    %10487 = vmatpush2.bf16.msra.mxu0 %v9934
    %10488 = vmatprep.subr.bf16.mxu0 %v9932
    %10489 = vmatpush2.bf16.msra.mxu0 %v9931
    %10490 = vmatprep.subr.bf16.mxu0 %v9929
    %10491 = vmatpush2.bf16.msra.mxu0 %v9928
    %10492 = vmatprep.subr.bf16.mxu0 %v9926
    %10493 = vmatpush2.bf16.msra.mxu0 %v9925
    %10494 = vmatprep.subr.bf16.mxu0 %v9923
    %10495 = vmatpush2.bf16.msra.mxu0 %v9922
    %10496 = vmatprep.subr.bf16.mxu0 %v9920
    %10497 = vmatpush2.bf16.msra.mxu0 %v9919
    %10498 = vmatprep.subr.bf16.mxu0 %v9917
    %10499 = vmatpush2.bf16.msra.mxu0 %v9916
    %10500 = vmatprep.subr.bf16.mxu0 %v9914
    %10501 = vmatpush2.bf16.msra.mxu0 %v9913
    %10502 = vmatprep.mubr.bf16.mxu0 %v8459
    %10503 = vmatmul.mubr.bf16.gmra.mxu0 %v8458
    %v10504 = vpop.f32.mrf.mxu0
    %v10505 = vadd.f32 %v10452, %v10504
    %v10506 = vpop.f32.mrf.mxu0
    %v10507 = vadd.f32 %v10454, %v10506
    %v10508 = vpop.f32.mrf.mxu0
    %v10509 = vadd.f32 %v10456, %v10508
    %v10510 = vpop.f32.mrf.mxu0
    %v10511 = vadd.f32 %v10458, %v10510
    %10512 = vmatprep.mubr.bf16.mxu0 %v8471
    %10513 = vmatmul.mubr.bf16.gmra.mxu0 %v8470
    %v10514 = vpop.f32.mrf.mxu0
    %v10515 = vadd.f32 %v10462, %v10514
    %v10516 = vpop.f32.mrf.mxu0
    %v10517 = vadd.f32 %v10464, %v10516
    %v10518 = vpop.f32.mrf.mxu0
    %v10519 = vadd.f32 %v10466, %v10518
    %v10520 = vpop.f32.mrf.mxu0
    %v10521 = vadd.f32 %v10468, %v10520
    %10522 = vdwg.mxu0
    %10523 = vmatprep.subr.bf16.mxu0 %v9959
    %10524 = vmatpush1.bf16.msra.mxu0 %v9958
    %10525 = vmatprep.subr.bf16.mxu0 %v9956
    %10526 = vmatpush1.bf16.msra.mxu0 %v9955
    %10527 = vmatprep.subr.bf16.mxu0 %v9953
    %10528 = vmatpush1.bf16.msra.mxu0 %v9952
    %10529 = vmatprep.subr.bf16.mxu0 %v9950
    %10530 = vmatpush1.bf16.msra.mxu0 %v9949
    %10531 = vmatprep.subr.bf16.mxu0 %v9947
    %10532 = vmatpush1.bf16.msra.mxu0 %v9946
    %10533 = vmatprep.subr.bf16.mxu0 %v9944
    %10534 = vmatpush1.bf16.msra.mxu0 %v9943
    %10535 = vmatprep.subr.bf16.mxu0 %v9941
    %10536 = vmatpush1.bf16.msra.mxu0 %v9940
    %10537 = vmatprep.subr.bf16.mxu0 %v9938
    %10538 = vmatpush1.bf16.msra.mxu0 %v9937
    %10539 = vmatprep.subr.bf16.mxu0 %v9983
    %10540 = vmatpush2.bf16.msra.mxu0 %v9982
    %10541 = vmatprep.subr.bf16.mxu0 %v9980
    %10542 = vmatpush2.bf16.msra.mxu0 %v9979
    %10543 = vmatprep.subr.bf16.mxu0 %v9977
    %10544 = vmatpush2.bf16.msra.mxu0 %v9976
    %10545 = vmatprep.subr.bf16.mxu0 %v9974
    %10546 = vmatpush2.bf16.msra.mxu0 %v9973
    %10547 = vmatprep.subr.bf16.mxu0 %v9971
    %10548 = vmatpush2.bf16.msra.mxu0 %v9970
    %10549 = vmatprep.subr.bf16.mxu0 %v9968
    %10550 = vmatpush2.bf16.msra.mxu0 %v9967
    %10551 = vmatprep.subr.bf16.mxu0 %v9965
    %10552 = vmatpush2.bf16.msra.mxu0 %v9964
    %10553 = vmatprep.subr.bf16.mxu0 %v9962
    %10554 = vmatpush2.bf16.msra.mxu0 %v9961
    %10555 = vmatprep.mubr.bf16.mxu0 %v8461
    %10556 = vmatmul.mubr.bf16.gmra.mxu0 %v8460
    %v10557 = vpop.f32.mrf.mxu0
    %v10558 = vadd.f32 %v10505, %v10557
    %v10559 = vpop.f32.mrf.mxu0
    %v10560 = vadd.f32 %v10507, %v10559
    %v10561 = vpop.f32.mrf.mxu0
    %v10562 = vadd.f32 %v10509, %v10561
    %v10563 = vpop.f32.mrf.mxu0
    %v10564 = vadd.f32 %v10511, %v10563
    %10565 = vmatprep.mubr.bf16.mxu0 %v8473
    %10566 = vmatmul.mubr.bf16.gmra.mxu0 %v8472
    %v10567 = vpop.f32.mrf.mxu0
    %v10568 = vadd.f32 %v10515, %v10567
    %v10569 = vpop.f32.mrf.mxu0
    %v10570 = vadd.f32 %v10517, %v10569
    %v10571 = vpop.f32.mrf.mxu0
    %v10572 = vadd.f32 %v10519, %v10571
    %v10573 = vpop.f32.mrf.mxu0
    %v10574 = vadd.f32 %v10521, %v10573
    %10575 = vdwg.mxu0
    %10576 = vmatprep.subr.bf16.mxu0 %v10007
    %10577 = vmatpush1.bf16.msra.mxu0 %v10006
    %10578 = vmatprep.subr.bf16.mxu0 %v10004
    %10579 = vmatpush1.bf16.msra.mxu0 %v10003
    %10580 = vmatprep.subr.bf16.mxu0 %v10001
    %10581 = vmatpush1.bf16.msra.mxu0 %v10000
    %10582 = vmatprep.subr.bf16.mxu0 %v9998
    %10583 = vmatpush1.bf16.msra.mxu0 %v9997
    %10584 = vmatprep.subr.bf16.mxu0 %v9995
    %10585 = vmatpush1.bf16.msra.mxu0 %v9994
    %10586 = vmatprep.subr.bf16.mxu0 %v9992
    %10587 = vmatpush1.bf16.msra.mxu0 %v9991
    %10588 = vmatprep.subr.bf16.mxu0 %v9989
    %10589 = vmatpush1.bf16.msra.mxu0 %v9988
    %10590 = vmatprep.subr.bf16.mxu0 %v9986
    %10591 = vmatpush1.bf16.msra.mxu0 %v9985
    %10592 = vmatprep.subr.bf16.mxu0 %v10031
    %10593 = vmatpush2.bf16.msra.mxu0 %v10030
    %10594 = vmatprep.subr.bf16.mxu0 %v10028
    %10595 = vmatpush2.bf16.msra.mxu0 %v10027
    %10596 = vmatprep.subr.bf16.mxu0 %v10025
    %10597 = vmatpush2.bf16.msra.mxu0 %v10024
    %10598 = vmatprep.subr.bf16.mxu0 %v10022
    %10599 = vmatpush2.bf16.msra.mxu0 %v10021
    %10600 = vmatprep.subr.bf16.mxu0 %v10019
    %10601 = vmatpush2.bf16.msra.mxu0 %v10018
    %10602 = vmatprep.subr.bf16.mxu0 %v10016
    %10603 = vmatpush2.bf16.msra.mxu0 %v10015
    %10604 = vmatprep.subr.bf16.mxu0 %v10013
    %10605 = vmatpush2.bf16.msra.mxu0 %v10012
    %10606 = vmatprep.subr.bf16.mxu0 %v10010
    %10607 = vmatpush2.bf16.msra.mxu0 %v10009
    %10608 = vmatprep.mubr.bf16.mxu0 %v8463
    %10609 = vmatmul.mubr.bf16.gmra.mxu0 %v8462
    %v10610 = vpop.f32.mrf.mxu0
    %v10611 = vadd.f32 %v10558, %v10610
    %v10612 = vpop.f32.mrf.mxu0
    %v10613 = vadd.f32 %v10560, %v10612
    %v10614 = vpop.f32.mrf.mxu0
    %v10615 = vadd.f32 %v10562, %v10614
    %v10616 = vpop.f32.mrf.mxu0
    %v10617 = vadd.f32 %v10564, %v10616
    %10618 = vmatprep.mubr.bf16.mxu0 %v8475
    %10619 = vmatmul.mubr.bf16.gmra.mxu0 %v8474
    %v10620 = vpop.f32.mrf.mxu0
    %v10621 = vadd.f32 %v10568, %v10620
    %v10622 = vpop.f32.mrf.mxu0
    %v10623 = vadd.f32 %v10570, %v10622
    %v10624 = vpop.f32.mrf.mxu0
    %v10625 = vadd.f32 %v10572, %v10624
    %v10626 = vpop.f32.mrf.mxu0
    %v10627 = vadd.f32 %v10574, %v10626
    %10628 = vdwg.mxu0
    %10629 = vmatprep.subr.bf16.mxu0 %v10055
    %10630 = vmatpush1.bf16.msra.mxu0 %v10054
    %10631 = vmatprep.subr.bf16.mxu0 %v10052
    %10632 = vmatpush1.bf16.msra.mxu0 %v10051
    %10633 = vmatprep.subr.bf16.mxu0 %v10049
    %10634 = vmatpush1.bf16.msra.mxu0 %v10048
    %10635 = vmatprep.subr.bf16.mxu0 %v10046
    %10636 = vmatpush1.bf16.msra.mxu0 %v10045
    %10637 = vmatprep.subr.bf16.mxu0 %v10043
    %10638 = vmatpush1.bf16.msra.mxu0 %v10042
    %10639 = vmatprep.subr.bf16.mxu0 %v10040
    %10640 = vmatpush1.bf16.msra.mxu0 %v10039
    %10641 = vmatprep.subr.bf16.mxu0 %v10037
    %10642 = vmatpush1.bf16.msra.mxu0 %v10036
    %10643 = vmatprep.subr.bf16.mxu0 %v10034
    %10644 = vmatpush1.bf16.msra.mxu0 %v10033
    %10645 = vmatprep.subr.bf16.mxu0 %v10079
    %10646 = vmatpush2.bf16.msra.mxu0 %v10078
    %10647 = vmatprep.subr.bf16.mxu0 %v10076
    %10648 = vmatpush2.bf16.msra.mxu0 %v10075
    %10649 = vmatprep.subr.bf16.mxu0 %v10073
    %10650 = vmatpush2.bf16.msra.mxu0 %v10072
    %10651 = vmatprep.subr.bf16.mxu0 %v10070
    %10652 = vmatpush2.bf16.msra.mxu0 %v10069
    %10653 = vmatprep.subr.bf16.mxu0 %v10067
    %10654 = vmatpush2.bf16.msra.mxu0 %v10066
    %10655 = vmatprep.subr.bf16.mxu0 %v10064
    %10656 = vmatpush2.bf16.msra.mxu0 %v10063
    %10657 = vmatprep.subr.bf16.mxu0 %v10061
    %10658 = vmatpush2.bf16.msra.mxu0 %v10060
    %10659 = vmatprep.subr.bf16.mxu0 %v10058
    %10660 = vmatpush2.bf16.msra.mxu0 %v10057
    %10661 = vmatprep.mubr.bf16.mxu0 %v8465
    %10662 = vmatmul.mubr.bf16.gmra.mxu0 %v8464
    %v10663 = vpop.f32.mrf.mxu0
    %v10664 = vadd.f32 %v10611, %v10663
    %v10665 = vpop.f32.mrf.mxu0
    %v10666 = vadd.f32 %v10613, %v10665
    %v10667 = vpop.f32.mrf.mxu0
    %v10668 = vadd.f32 %v10615, %v10667
    %v10669 = vpop.f32.mrf.mxu0
    %v10670 = vadd.f32 %v10617, %v10669
    %10671 = vmatprep.mubr.bf16.mxu0 %v8477
    %10672 = vmatmul.mubr.bf16.gmra.mxu0 %v8476
    %v10673 = vpop.f32.mrf.mxu0
    %v10674 = vadd.f32 %v10621, %v10673
    %v10675 = vpop.f32.mrf.mxu0
    %v10676 = vadd.f32 %v10623, %v10675
    %v10677 = vpop.f32.mrf.mxu0
    %v10678 = vadd.f32 %v10625, %v10677
    %v10679 = vpop.f32.mrf.mxu0
    %v10680 = vadd.f32 %v10627, %v10679
    %10681 = vdwg.mxu0
    %10682 = vmatprep.subr.bf16.mxu0 %v10103
    %10683 = vmatpush1.bf16.msra.mxu0 %v10102
    %10684 = vmatprep.subr.bf16.mxu0 %v10100
    %10685 = vmatpush1.bf16.msra.mxu0 %v10099
    %10686 = vmatprep.subr.bf16.mxu0 %v10097
    %10687 = vmatpush1.bf16.msra.mxu0 %v10096
    %10688 = vmatprep.subr.bf16.mxu0 %v10094
    %10689 = vmatpush1.bf16.msra.mxu0 %v10093
    %10690 = vmatprep.subr.bf16.mxu0 %v10091
    %10691 = vmatpush1.bf16.msra.mxu0 %v10090
    %10692 = vmatprep.subr.bf16.mxu0 %v10088
    %10693 = vmatpush1.bf16.msra.mxu0 %v10087
    %10694 = vmatprep.subr.bf16.mxu0 %v10085
    %10695 = vmatpush1.bf16.msra.mxu0 %v10084
    %10696 = vmatprep.subr.bf16.mxu0 %v10082
    %10697 = vmatpush1.bf16.msra.mxu0 %v10081
    %10698 = vmatprep.subr.bf16.mxu0 %v10127
    %10699 = vmatpush2.bf16.msra.mxu0 %v10126
    %10700 = vmatprep.subr.bf16.mxu0 %v10124
    %10701 = vmatpush2.bf16.msra.mxu0 %v10123
    %10702 = vmatprep.subr.bf16.mxu0 %v10121
    %10703 = vmatpush2.bf16.msra.mxu0 %v10120
    %10704 = vmatprep.subr.bf16.mxu0 %v10118
    %10705 = vmatpush2.bf16.msra.mxu0 %v10117
    %10706 = vmatprep.subr.bf16.mxu0 %v10115
    %10707 = vmatpush2.bf16.msra.mxu0 %v10114
    %10708 = vmatprep.subr.bf16.mxu0 %v10112
    %10709 = vmatpush2.bf16.msra.mxu0 %v10111
    %10710 = vmatprep.subr.bf16.mxu0 %v10109
    %10711 = vmatpush2.bf16.msra.mxu0 %v10108
    %10712 = vmatprep.subr.bf16.mxu0 %v10106
    %10713 = vmatpush2.bf16.msra.mxu0 %v10105
    %10714 = vmatprep.mubr.bf16.mxu0 %v8467
    %10715 = vmatmul.mubr.bf16.gmra.mxu0 %v8466
    %v10716 = vpop.f32.mrf.mxu0
    %v10717 = vadd.f32 %v10664, %v10716
    %v10718 = vpop.f32.mrf.mxu0
    %v10719 = vadd.f32 %v10666, %v10718
    %v10720 = vpop.f32.mrf.mxu0
    %v10721 = vadd.f32 %v10668, %v10720
    %v10722 = vpop.f32.mrf.mxu0
    %v10723 = vadd.f32 %v10670, %v10722
    %10724 = vmatprep.mubr.bf16.mxu0 %v8479
    %10725 = vmatmul.mubr.bf16.gmra.mxu0 %v8478
    %v10726 = vpop.f32.mrf.mxu0
    %v10727 = vadd.f32 %v10674, %v10726
    %v10728 = vpop.f32.mrf.mxu0
    %v10729 = vadd.f32 %v10676, %v10728
    %v10730 = vpop.f32.mrf.mxu0
    %v10731 = vadd.f32 %v10678, %v10730
    %v10732 = vpop.f32.mrf.mxu0
    %v10733 = vadd.f32 %v10680, %v10732
    %10734 = vdwg.mxu0
    %10735 = vmatprep.subr.bf16.mxu0 0
    %10736 = vmatpush1.bf16.msra.mxu0 %v9864
    %10737 = vmatprep.subr.bf16.mxu0 0
    %10738 = vmatpush1.bf16.msra.mxu0 %v9861
    %10739 = vmatprep.subr.bf16.mxu0 0
    %10740 = vmatpush1.bf16.msra.mxu0 %v9858
    %10741 = vmatprep.subr.bf16.mxu0 0
    %10742 = vmatpush1.bf16.msra.mxu0 %v9855
    %10743 = vmatprep.subr.bf16.mxu0 0
    %10744 = vmatpush1.bf16.msra.mxu0 %v9852
    %10745 = vmatprep.subr.bf16.mxu0 0
    %10746 = vmatpush1.bf16.msra.mxu0 %v9849
    %10747 = vmatprep.subr.bf16.mxu0 0
    %10748 = vmatpush1.bf16.msra.mxu0 %v9846
    %10749 = vmatprep.subr.bf16.mxu0 0
    %10750 = vmatpush1.bf16.msra.mxu0 %v9843
    %10751 = vmatprep.subr.bf16.mxu0 0
    %10752 = vmatpush2.bf16.msra.mxu0 %v9888
    %10753 = vmatprep.subr.bf16.mxu0 0
    %10754 = vmatpush2.bf16.msra.mxu0 %v9885
    %10755 = vmatprep.subr.bf16.mxu0 0
    %10756 = vmatpush2.bf16.msra.mxu0 %v9882
    %10757 = vmatprep.subr.bf16.mxu0 0
    %10758 = vmatpush2.bf16.msra.mxu0 %v9879
    %10759 = vmatprep.subr.bf16.mxu0 0
    %10760 = vmatpush2.bf16.msra.mxu0 %v9876
    %10761 = vmatprep.subr.bf16.mxu0 0
    %10762 = vmatpush2.bf16.msra.mxu0 %v9873
    %10763 = vmatprep.subr.bf16.mxu0 0
    %10764 = vmatpush2.bf16.msra.mxu0 %v9870
    %10765 = vmatprep.subr.bf16.mxu0 0
    %10766 = vmatpush2.bf16.msra.mxu0 %v9867
    %10767 = vmatprep.mubr.bf16.mxu0 %v8457
    %10768 = vmatmul.mubr.bf16.gmra.mxu0 %v8456
    %v10769 = vpop.f32.mrf.mxu0
    %v10770 = vadd.f32 %v8877, %v10769
    %v10771 = vpop.f32.mrf.mxu0
    %v10772 = vpop.f32.mrf.mxu0
    %v10773 = vadd.f32 %v8877, %v10772
    %v10774 = vpop.f32.mrf.mxu0
    %10775 = vmatprep.mubr.bf16.mxu0 %v8469
    %10776 = vmatmul.mubr.bf16.gmra.mxu0 %v8468
    %v10777 = vpop.f32.mrf.mxu0
    %v10778 = vadd.f32 %v8877, %v10777
    %v10779 = vpop.f32.mrf.mxu0
    %v10780 = vpop.f32.mrf.mxu0
    %v10781 = vadd.f32 %v8877, %v10780
    %v10782 = vpop.f32.mrf.mxu0
    %10783 = vdwg.mxu0
    %10784 = vmatprep.subr.bf16.mxu0 0
    %10785 = vmatpush1.bf16.msra.mxu0 %v9912
    %10786 = vmatprep.subr.bf16.mxu0 0
    %10787 = vmatpush1.bf16.msra.mxu0 %v9909
    %10788 = vmatprep.subr.bf16.mxu0 0
    %10789 = vmatpush1.bf16.msra.mxu0 %v9906
    %10790 = vmatprep.subr.bf16.mxu0 0
    %10791 = vmatpush1.bf16.msra.mxu0 %v9903
    %10792 = vmatprep.subr.bf16.mxu0 0
    %10793 = vmatpush1.bf16.msra.mxu0 %v9900
    %10794 = vmatprep.subr.bf16.mxu0 0
    %10795 = vmatpush1.bf16.msra.mxu0 %v9897
    %10796 = vmatprep.subr.bf16.mxu0 0
    %10797 = vmatpush1.bf16.msra.mxu0 %v9894
    %10798 = vmatprep.subr.bf16.mxu0 0
    %10799 = vmatpush1.bf16.msra.mxu0 %v9891
    %10800 = vmatprep.subr.bf16.mxu0 0
    %10801 = vmatpush2.bf16.msra.mxu0 %v9936
    %10802 = vmatprep.subr.bf16.mxu0 0
    %10803 = vmatpush2.bf16.msra.mxu0 %v9933
    %10804 = vmatprep.subr.bf16.mxu0 0
    %10805 = vmatpush2.bf16.msra.mxu0 %v9930
    %10806 = vmatprep.subr.bf16.mxu0 0
    %10807 = vmatpush2.bf16.msra.mxu0 %v9927
    %10808 = vmatprep.subr.bf16.mxu0 0
    %10809 = vmatpush2.bf16.msra.mxu0 %v9924
    %10810 = vmatprep.subr.bf16.mxu0 0
    %10811 = vmatpush2.bf16.msra.mxu0 %v9921
    %10812 = vmatprep.subr.bf16.mxu0 0
    %10813 = vmatpush2.bf16.msra.mxu0 %v9918
    %10814 = vmatprep.subr.bf16.mxu0 0
    %10815 = vmatpush2.bf16.msra.mxu0 %v9915
    %10816 = vmatprep.mubr.bf16.mxu0 %v8459
    %10817 = vmatmul.mubr.bf16.gmra.mxu0 %v8458
    %v10818 = vpop.f32.mrf.mxu0
    %v10819 = vadd.f32 %v10770, %v10818
    %v10820 = vpop.f32.mrf.mxu0
    %v10821 = vpop.f32.mrf.mxu0
    %v10822 = vadd.f32 %v10773, %v10821
    %v10823 = vpop.f32.mrf.mxu0
    %10824 = vmatprep.mubr.bf16.mxu0 %v8471
    %10825 = vmatmul.mubr.bf16.gmra.mxu0 %v8470
    %v10826 = vpop.f32.mrf.mxu0
    %v10827 = vadd.f32 %v10778, %v10826
    %v10828 = vpop.f32.mrf.mxu0
    %v10829 = vpop.f32.mrf.mxu0
    %v10830 = vadd.f32 %v10781, %v10829
    %v10831 = vpop.f32.mrf.mxu0
    %10832 = vdwg.mxu0
    %10833 = vmatprep.subr.bf16.mxu0 0
    %10834 = vmatpush1.bf16.msra.mxu0 %v9960
    %10835 = vmatprep.subr.bf16.mxu0 0
    %10836 = vmatpush1.bf16.msra.mxu0 %v9957
    %10837 = vmatprep.subr.bf16.mxu0 0
    %10838 = vmatpush1.bf16.msra.mxu0 %v9954
    %10839 = vmatprep.subr.bf16.mxu0 0
    %10840 = vmatpush1.bf16.msra.mxu0 %v9951
    %10841 = vmatprep.subr.bf16.mxu0 0
    %10842 = vmatpush1.bf16.msra.mxu0 %v9948
    %10843 = vmatprep.subr.bf16.mxu0 0
    %10844 = vmatpush1.bf16.msra.mxu0 %v9945
    %10845 = vmatprep.subr.bf16.mxu0 0
    %10846 = vmatpush1.bf16.msra.mxu0 %v9942
    %10847 = vmatprep.subr.bf16.mxu0 0
    %10848 = vmatpush1.bf16.msra.mxu0 %v9939
    %10849 = vmatprep.subr.bf16.mxu0 0
    %10850 = vmatpush2.bf16.msra.mxu0 %v9984
    %10851 = vmatprep.subr.bf16.mxu0 0
    %10852 = vmatpush2.bf16.msra.mxu0 %v9981
    %10853 = vmatprep.subr.bf16.mxu0 0
    %10854 = vmatpush2.bf16.msra.mxu0 %v9978
    %10855 = vmatprep.subr.bf16.mxu0 0
    %10856 = vmatpush2.bf16.msra.mxu0 %v9975
    %10857 = vmatprep.subr.bf16.mxu0 0
    %10858 = vmatpush2.bf16.msra.mxu0 %v9972
    %10859 = vmatprep.subr.bf16.mxu0 0
    %10860 = vmatpush2.bf16.msra.mxu0 %v9969
    %10861 = vmatprep.subr.bf16.mxu0 0
    %10862 = vmatpush2.bf16.msra.mxu0 %v9966
    %10863 = vmatprep.subr.bf16.mxu0 0
    %10864 = vmatpush2.bf16.msra.mxu0 %v9963
    %10865 = vmatprep.mubr.bf16.mxu0 %v8461
    %10866 = vmatmul.mubr.bf16.gmra.mxu0 %v8460
    %v10867 = vpop.f32.mrf.mxu0
    %v10868 = vadd.f32 %v10819, %v10867
    %v10869 = vpop.f32.mrf.mxu0
    %v10870 = vpop.f32.mrf.mxu0
    %v10871 = vadd.f32 %v10822, %v10870
    %v10872 = vpop.f32.mrf.mxu0
    %10873 = vmatprep.mubr.bf16.mxu0 %v8473
    %10874 = vmatmul.mubr.bf16.gmra.mxu0 %v8472
    %v10875 = vpop.f32.mrf.mxu0
    %v10876 = vadd.f32 %v10827, %v10875
    %v10877 = vpop.f32.mrf.mxu0
    %v10878 = vpop.f32.mrf.mxu0
    %v10879 = vadd.f32 %v10830, %v10878
    %v10880 = vpop.f32.mrf.mxu0
    %10881 = vdwg.mxu0
    %10882 = vmatprep.subr.bf16.mxu0 0
    %10883 = vmatpush1.bf16.msra.mxu0 %v10008
    %10884 = vmatprep.subr.bf16.mxu0 0
    %10885 = vmatpush1.bf16.msra.mxu0 %v10005
    %10886 = vmatprep.subr.bf16.mxu0 0
    %10887 = vmatpush1.bf16.msra.mxu0 %v10002
    %10888 = vmatprep.subr.bf16.mxu0 0
    %10889 = vmatpush1.bf16.msra.mxu0 %v9999
    %10890 = vmatprep.subr.bf16.mxu0 0
    %10891 = vmatpush1.bf16.msra.mxu0 %v9996
    %10892 = vmatprep.subr.bf16.mxu0 0
    %10893 = vmatpush1.bf16.msra.mxu0 %v9993
    %10894 = vmatprep.subr.bf16.mxu0 0
    %10895 = vmatpush1.bf16.msra.mxu0 %v9990
    %10896 = vmatprep.subr.bf16.mxu0 0
    %10897 = vmatpush1.bf16.msra.mxu0 %v9987
    %10898 = vmatprep.subr.bf16.mxu0 0
    %10899 = vmatpush2.bf16.msra.mxu0 %v10032
    %10900 = vmatprep.subr.bf16.mxu0 0
    %10901 = vmatpush2.bf16.msra.mxu0 %v10029
    %10902 = vmatprep.subr.bf16.mxu0 0
    %10903 = vmatpush2.bf16.msra.mxu0 %v10026
    %10904 = vmatprep.subr.bf16.mxu0 0
    %10905 = vmatpush2.bf16.msra.mxu0 %v10023
    %10906 = vmatprep.subr.bf16.mxu0 0
    %10907 = vmatpush2.bf16.msra.mxu0 %v10020
    %10908 = vmatprep.subr.bf16.mxu0 0
    %10909 = vmatpush2.bf16.msra.mxu0 %v10017
    %10910 = vmatprep.subr.bf16.mxu0 0
    %10911 = vmatpush2.bf16.msra.mxu0 %v10014
    %10912 = vmatprep.subr.bf16.mxu0 0
    %10913 = vmatpush2.bf16.msra.mxu0 %v10011
    %10914 = vmatprep.mubr.bf16.mxu0 %v8463
    %10915 = vmatmul.mubr.bf16.gmra.mxu0 %v8462
    %v10916 = vpop.f32.mrf.mxu0
    %v10917 = vadd.f32 %v10868, %v10916
    %v10918 = vpop.f32.mrf.mxu0
    %v10919 = vpop.f32.mrf.mxu0
    %v10920 = vadd.f32 %v10871, %v10919
    %v10921 = vpop.f32.mrf.mxu0
    %10922 = vmatprep.mubr.bf16.mxu0 %v8475
    %10923 = vmatmul.mubr.bf16.gmra.mxu0 %v8474
    %v10924 = vpop.f32.mrf.mxu0
    %v10925 = vadd.f32 %v10876, %v10924
    %v10926 = vpop.f32.mrf.mxu0
    %v10927 = vpop.f32.mrf.mxu0
    %v10928 = vadd.f32 %v10879, %v10927
    %v10929 = vpop.f32.mrf.mxu0
    %10930 = vdwg.mxu0
    %10931 = vmatprep.subr.bf16.mxu0 0
    %10932 = vmatpush1.bf16.msra.mxu0 %v10056
    %10933 = vmatprep.subr.bf16.mxu0 0
    %10934 = vmatpush1.bf16.msra.mxu0 %v10053
    %10935 = vmatprep.subr.bf16.mxu0 0
    %10936 = vmatpush1.bf16.msra.mxu0 %v10050
    %10937 = vmatprep.subr.bf16.mxu0 0
    %10938 = vmatpush1.bf16.msra.mxu0 %v10047
    %10939 = vmatprep.subr.bf16.mxu0 0
    %10940 = vmatpush1.bf16.msra.mxu0 %v10044
    %10941 = vmatprep.subr.bf16.mxu0 0
    %10942 = vmatpush1.bf16.msra.mxu0 %v10041
    %10943 = vmatprep.subr.bf16.mxu0 0
    %10944 = vmatpush1.bf16.msra.mxu0 %v10038
    %10945 = vmatprep.subr.bf16.mxu0 0
    %10946 = vmatpush1.bf16.msra.mxu0 %v10035
    %10947 = vmatprep.subr.bf16.mxu0 0
    %10948 = vmatpush2.bf16.msra.mxu0 %v10080
    %10949 = vmatprep.subr.bf16.mxu0 0
    %10950 = vmatpush2.bf16.msra.mxu0 %v10077
    %10951 = vmatprep.subr.bf16.mxu0 0
    %10952 = vmatpush2.bf16.msra.mxu0 %v10074
    %10953 = vmatprep.subr.bf16.mxu0 0
    %10954 = vmatpush2.bf16.msra.mxu0 %v10071
    %10955 = vmatprep.subr.bf16.mxu0 0
    %10956 = vmatpush2.bf16.msra.mxu0 %v10068
    %10957 = vmatprep.subr.bf16.mxu0 0
    %10958 = vmatpush2.bf16.msra.mxu0 %v10065
    %10959 = vmatprep.subr.bf16.mxu0 0
    %10960 = vmatpush2.bf16.msra.mxu0 %v10062
    %10961 = vmatprep.subr.bf16.mxu0 0
    %10962 = vmatpush2.bf16.msra.mxu0 %v10059
    %10963 = vmatprep.mubr.bf16.mxu0 %v8465
    %10964 = vmatmul.mubr.bf16.gmra.mxu0 %v8464
    %v10965 = vpop.f32.mrf.mxu0
    %v10966 = vadd.f32 %v10917, %v10965
    %v10967 = vpop.f32.mrf.mxu0
    %v10968 = vpop.f32.mrf.mxu0
    %v10969 = vadd.f32 %v10920, %v10968
    %v10970 = vpop.f32.mrf.mxu0
    %10971 = vmatprep.mubr.bf16.mxu0 %v8477
    %10972 = vmatmul.mubr.bf16.gmra.mxu0 %v8476
    %v10973 = vpop.f32.mrf.mxu0
    %v10974 = vadd.f32 %v10925, %v10973
    %v10975 = vpop.f32.mrf.mxu0
    %v10976 = vpop.f32.mrf.mxu0
    %v10977 = vadd.f32 %v10928, %v10976
    %v10978 = vpop.f32.mrf.mxu0
    %10979 = vdwg.mxu0
    %10980 = vmatprep.subr.bf16.mxu0 0
    %10981 = vmatpush1.bf16.msra.mxu0 %v10104
    %10982 = vmatprep.subr.bf16.mxu0 0
    %10983 = vmatpush1.bf16.msra.mxu0 %v10101
    %10984 = vmatprep.subr.bf16.mxu0 0
    %10985 = vmatpush1.bf16.msra.mxu0 %v10098
    %10986 = vmatprep.subr.bf16.mxu0 0
    %10987 = vmatpush1.bf16.msra.mxu0 %v10095
    %10988 = vmatprep.subr.bf16.mxu0 0
    %10989 = vmatpush1.bf16.msra.mxu0 %v10092
    %10990 = vmatprep.subr.bf16.mxu0 0
    %10991 = vmatpush1.bf16.msra.mxu0 %v10089
    %10992 = vmatprep.subr.bf16.mxu0 0
    %10993 = vmatpush1.bf16.msra.mxu0 %v10086
    %10994 = vmatprep.subr.bf16.mxu0 0
    %10995 = vmatpush1.bf16.msra.mxu0 %v10083
    %10996 = vmatprep.subr.bf16.mxu0 0
    %10997 = vmatpush2.bf16.msra.mxu0 %v10128
    %10998 = vmatprep.subr.bf16.mxu0 0
    %10999 = vmatpush2.bf16.msra.mxu0 %v10125
    %11000 = vmatprep.subr.bf16.mxu0 0
    %11001 = vmatpush2.bf16.msra.mxu0 %v10122
    %11002 = vmatprep.subr.bf16.mxu0 0
    %11003 = vmatpush2.bf16.msra.mxu0 %v10119
    %11004 = vmatprep.subr.bf16.mxu0 0
    %11005 = vmatpush2.bf16.msra.mxu0 %v10116
    %11006 = vmatprep.subr.bf16.mxu0 0
    %11007 = vmatpush2.bf16.msra.mxu0 %v10113
    %11008 = vmatprep.subr.bf16.mxu0 0
    %11009 = vmatpush2.bf16.msra.mxu0 %v10110
    %11010 = vmatprep.subr.bf16.mxu0 0
    %11011 = vmatpush2.bf16.msra.mxu0 %v10107
    %11012 = vmatprep.mubr.bf16.mxu0 %v8467
    %11013 = vmatmul.mubr.bf16.gmra.mxu0 %v8466
    %v11014 = vpop.f32.mrf.mxu0
    %v11015 = vadd.f32 %v10966, %v11014
    %v11016 = vpop.f32.mrf.mxu0
    %v11017 = vpop.f32.mrf.mxu0
    %v11018 = vadd.f32 %v10969, %v11017
    %v11019 = vpop.f32.mrf.mxu0
    %11020 = vmatprep.mubr.bf16.mxu0 %v8479
    %11021 = vmatmul.mubr.bf16.gmra.mxu0 %v8478
    %v11022 = vpop.f32.mrf.mxu0
    %v11023 = vadd.f32 %v10974, %v11022
    %v11024 = vpop.f32.mrf.mxu0
    %v11025 = vpop.f32.mrf.mxu0
    %v11026 = vadd.f32 %v10977, %v11025
    %v11027 = vpop.f32.mrf.mxu0
    %11028 = vdwg.mxu0
    %v11029 = vadd.f32 %v5820, %v10717
    %v11030 = vadd.f32 %v5821, %v10719
    %v11031 = vadd.f32 %v5822, %v11015
    %v11032 = vadd.f32 %v5823, %v10721
    %v11033 = vadd.f32 %v5824, %v10723
    %v11034 = vadd.f32 %v5825, %v11018
    %v11035 = vadd.f32 %v5826, %v10727
    %v11036 = vadd.f32 %v5827, %v10729
    %v11037 = vadd.f32 %v5828, %v11023
    %v11038 = vadd.f32 %v5829, %v10731
    %v11039 = vadd.f32 %v5830, %v10733
    %v11040 = vadd.f32 %v5831, %v11026
    %11041 = vst [vmem:[#allocation22] sm:$0xff] %v11029
    %11042 = vst [vmem:[#allocation22 + $0x8] sm:$0xff] %v11030
    %11043 = vst [vmem:[#allocation22 + $0x10] sm:$0xff] %v11031
    %11044 = vst [vmem:[#allocation22 + $0x18] sm:$0xff] %v11032
    %11045 = vst [vmem:[#allocation22 + $0x20] sm:$0xff] %v11033
    %11046 = vst [vmem:[#allocation22 + $0x28] sm:$0xff] %v11034
    %11047 = vst [vmem:[#allocation22 + $0x30] sm:$0xff] %v11035
    %11048 = vst [vmem:[#allocation22 + $0x38] sm:$0xff] %v11036
    %11049 = vst [vmem:[#allocation22 + $0x40] sm:$0xff] %v11037
    %11050 = vst [vmem:[#allocation22 + $0x48] sm:$0xff] %v11038
    %11051 = vst [vmem:[#allocation22 + $0x50] sm:$0xff] %v11039
    %11052 = vst [vmem:[#allocation22 + $0x58] sm:$0xff] %v11040
    // Predicated region
    $region98: #{tpu_custom_call.1} parent=1 // pred_check
      _
    $region99: #{tpu_custom_call.1} parent=1 // pred_check_branch
      %11054 = sbr.rel (0) target = $region101
    $region100: #{tpu_custom_call.1} parent=1 // pred_region
      %s11056 = ssub.s32 1536, 1536
      %11057 = vsyncadd [#allocation4], %s11056
      %s11058 = sshll.u32 [#allocation22], 4
      %s11059 = int_to_ptr.vmem [resolvable:$true] %s11058
      %11064 = dma.vmem_to_hbm [thread:$0]  %s11059, 1536, %s12, [#allocation4], 384, 384, 24
    $region101: #{tpu_custom_call.1} parent=1 // pred_fallthru
      _
    // Predicated region
    $region102: #{tpu_custom_call.1} parent=1 // pred_check
      _
    $region103: #{tpu_custom_call.1} parent=1 // pred_check_branch
      %11066 = sbr.rel (0) target = $region105
    $region104: #{tpu_custom_call.1} parent=1 // pred_region
      %11067 = dma.done [#allocation4], 1536
    $region105: #{tpu_custom_call.1} parent=1 // pred_fallthru
      _
    %11068 = vsyncpa [#allocation3], 1
    %11069 = vsyncpa [#allocation6], 1
    %11070 = vsyncpa [#allocation9], 1
    %11071 = vsyncpa [#allocation12], 1
    %11072 = vsyncpa [#allocation15], 1
    %11073 = vsyncpa [#allocation18], 1
    %11074 = vsyncpa [#allocation21], 1
    %11075 = vsyncpa [#allocation4], 1

</llo_original>
